<compile_context>
chip_gen: v5e
topology: v5e:2x2
jax: 0.10.0
libtpu: 0.0.40
codegen_flags: <defaults>
</compile_context>

<pallas_src>
import functools

import jax
import jax.numpy as jnp
from jax.experimental import pallas as pl
from jax.experimental.pallas import tpu as pltpu

BN_EPS = 1e-5
LEAKY_SLOPE = 0.01          # F.leaky_relu default negative_slope
LANE = 128


# ---------------------------------------------------------------------------
# helpers
# ---------------------------------------------------------------------------
def _round_up(x, m):
    return ((x + m - 1) // m) * m


def _vmem_limit_bytes():
    """Generation-aware VMEM limit: ~75% of physical, capped, safe fallback."""
    try:
        cap = pltpu.get_tpu_info().vmem_capacity_bytes
        return int(min(cap * 3 // 4, 100 * 1024 * 1024))
    except Exception:
        return 48 * 1024 * 1024


def _weight_to_mat(w_oihw, cp):
    """(Cout, Cin, 3, 3) -> (9*Cp, Cp) bf16; row block t = ky*3+kx holds that
    tap's (Cin->Cp padded) x (Cout->Cp padded) matrix."""
    cout, cin, kh, kw = w_oihw.shape
    w = jnp.transpose(w_oihw, (2, 3, 1, 0)).reshape(kh * kw, cin, cout)
    w = jnp.pad(w, ((0, 0), (0, cp - cin), (0, cp - cout)))
    return w.reshape(kh * kw * cp, cp).astype(jnp.bfloat16)


# ---------------------------------------------------------------------------
# kernel 1: [optional fused BN+LeakyReLU on the input] -> 3x3 conv (single
#           K=9*Cp matmul on an in-VMEM im2col) -> bf16 output + BN partials
# ---------------------------------------------------------------------------
def _conv_bn_stats_kernel(x_ref, scale_ref, shift_ref, w_ref, y_ref, stats_ref,
                          patch_ref, *, h, w, cp, apply_bn_act):
    if apply_bn_act:
        # Fused BN1 + LeakyReLU on the (zero-padded) conv1 output tile.
        a = x_ref[0].astype(jnp.float32) * scale_ref[0] + shift_ref[0]
        a = jnp.where(a >= 0.0, a, LEAKY_SLOPE * a)
        # Re-zero the 1-pixel padding border (conv2 "SAME" padding must be
        # zeros of the *activated* tensor, not leaky(shift)).
        row = jax.lax.broadcasted_iota(jnp.int32, (h + 2, w + 2, 1), 0)
        col = jax.lax.broadcasted_iota(jnp.int32, (h + 2, w + 2, 1), 1)
        interior = (row >= 1) & (row <= h) & (col >= 1) & (col <= w)
        xb = jnp.where(interior, a, 0.0).astype(jnp.bfloat16)
    else:
        xb = x_ref[0]                                     # (H+2, W+2, Cp) bf16

    # In-VMEM im2col: pack the nine shifted taps side-by-side along lanes.
    for ky in range(3):
        for kx in range(3):
            t = ky * 3 + kx
            tap = xb[ky:ky + h, kx:kx + w, :].reshape(h * w, cp)
            patch_ref[:, t * cp:(t + 1) * cp] = tap

    # One wide matmul: (H*W, 9*Cp) @ (9*Cp, Cp) with f32 accumulation.
    acc = jnp.dot(patch_ref[...], w_ref[...], preferred_element_type=jnp.float32)

    y_ref[0] = acc.astype(y_ref.dtype)                    # bf16 intermediate
    s = jnp.sum(acc, axis=0, keepdims=True)               # (1, Cp)
    sq = jnp.sum(acc * acc, axis=0, keepdims=True)        # (1, Cp)
    stats_ref[0] = jnp.concatenate([s, sq], axis=0)       # (2, Cp)


def _conv_bn_stats(xp, scale, shift, w_flat, *, h, w, cp, apply_bn_act,
                   vmem_limit):
    n = xp.shape[0]
    kernel = functools.partial(_conv_bn_stats_kernel, h=h, w=w, cp=cp,
                               apply_bn_act=apply_bn_act)
    return pl.pallas_call(
        kernel,
        out_shape=(
            jax.ShapeDtypeStruct((n, h * w, cp), jnp.bfloat16),   # conv output
            jax.ShapeDtypeStruct((n, 2, cp), jnp.float32),        # BN partials
        ),
        grid=(n,),
        in_specs=[
            pl.BlockSpec((1, h + 2, w + 2, cp), lambda i: (i, 0, 0, 0)),
            pl.BlockSpec((1, cp), lambda i: (0, 0)),              # scale (resident)
            pl.BlockSpec((1, cp), lambda i: (0, 0)),              # shift (resident)
            pl.BlockSpec((9 * cp, cp), lambda i: (0, 0)),         # weights (resident)
        ],
        out_specs=(
            pl.BlockSpec((1, h * w, cp), lambda i: (i, 0, 0)),
            pl.BlockSpec((1, 2, cp), lambda i: (i, 0, 0)),
        ),
        scratch_shapes=[pltpu.VMEM((h * w, 9 * cp), jnp.bfloat16)],
        compiler_params=pltpu.CompilerParams(
            dimension_semantics=("parallel",),
            vmem_limit_bytes=vmem_limit,
        ),
    )(xp, scale, shift, w_flat)


# ---------------------------------------------------------------------------
# kernel 2: final folded BatchNorm (FMA) + LeakyReLU, lane-dense
# ---------------------------------------------------------------------------
def _bn_act_kernel(y_ref, scale_ref, shift_ref, o_ref):
    a = y_ref[0].astype(jnp.float32) * scale_ref[0] + shift_ref[0]
    o_ref[0] = jnp.where(a >= 0.0, a, LEAKY_SLOPE * a).astype(o_ref.dtype)


def _bn_act(y, scale, shift, out_dtype, vmem_limit):
    n, hw, cp = y.shape
    return pl.pallas_call(
        _bn_act_kernel,
        out_shape=jax.ShapeDtypeStruct((n, hw, cp), out_dtype),
        grid=(n,),
        in_specs=[
            pl.BlockSpec((1, hw, cp), lambda i: (i, 0, 0)),
            pl.BlockSpec((1, cp), lambda i: (0, 0)),
            pl.BlockSpec((1, cp), lambda i: (0, 0)),
        ],
        out_specs=pl.BlockSpec((1, hw, cp), lambda i: (i, 0, 0)),
        compiler_params=pltpu.CompilerParams(
            dimension_semantics=("parallel",),
            vmem_limit_bytes=vmem_limit,
        ),
    )(y, scale, shift)


def _fold_bn(stats, gamma, beta, count, c, cp):
    """Per-image (sum, sumsq) partials -> per-channel (scale, shift) f32."""
    s = jnp.sum(stats, axis=0)                             # (2, Cp)
    mean = s[0] / count
    var = jnp.maximum(s[1] / count - mean * mean, 0.0)     # biased batch variance
    inv_std = jax.lax.rsqrt(var + BN_EPS)
    g = jnp.pad(gamma.astype(jnp.float32), (0, cp - c), constant_values=1.0)
    b = jnp.pad(beta.astype(jnp.float32), (0, cp - c))
    scale = g * inv_std
    shift = b - mean * scale
    return scale.reshape(1, cp), shift.reshape(1, cp)


# ---------------------------------------------------------------------------
# forward pass (NCHW in -> NCHW out), equivalent to FGFunction.forward
# ---------------------------------------------------------------------------
def fg_function_forward(x_nchw, params):
    n, c, h, w = x_nchw.shape
    cp = _round_up(c, LANE)
    count = float(n * h * w)
    vmem_limit = _vmem_limit_bytes()

    # NCHW -> NHWC, lane-pad channels, 1-px spatial zero pad, bf16 for the MXU.
    x = jnp.transpose(x_nchw, (0, 2, 3, 1)).astype(jnp.float32)
    x = jnp.pad(x, ((0, 0), (1, 1), (1, 1), (0, cp - c))).astype(jnp.bfloat16)

    w1 = _weight_to_mat(params["conv1_w"], cp)
    w2 = _weight_to_mat(params["conv2_w"], cp)

    ones = jnp.ones((1, cp), jnp.float32)
    zeros = jnp.zeros((1, cp), jnp.float32)

    # --- layer 1: conv1 + batch statistics (BN1/act applied fused in conv2) --
    y1, st1 = _conv_bn_stats(x, ones, zeros, w1, h=h, w=w, cp=cp,
                             apply_bn_act=False, vmem_limit=vmem_limit)
    sc1, sh1 = _fold_bn(st1, params["bn1_gamma"], params["bn1_beta"], count, c, cp)

    # --- layer 2: fused BN1+LeakyReLU -> conv2 + batch statistics ------------
    y1p = jnp.pad(y1.reshape(n, h, w, cp), ((0, 0), (1, 1), (1, 1), (0, 0)))
    y2, st2 = _conv_bn_stats(y1p, sc1, sh1, w2, h=h, w=w, cp=cp,
                             apply_bn_act=True, vmem_limit=vmem_limit)
    sc2, sh2 = _fold_bn(st2, params["bn2_gamma"], params["bn2_beta"], count, c, cp)

    # --- final BN2 + LeakyReLU (needs global stats -> separate pass) ---------
    out = _bn_act(y2, sc2, sh2, jnp.float32, vmem_limit)
    out = out.reshape(n, h, w, cp)[..., :c]
    return jnp.transpose(out, (0, 3, 1, 2))               # NHWC -> NCHW


# ---------------------------------------------------------------------------
# pure-JAX reference (mirrors the bf16-operand / f32-accumulate math)
# ---------------------------------------------------------------------------
def _reference_forward(x_nchw, params):
    x = jnp.transpose(x_nchw, (0, 2, 3, 1)).astype(jnp.float32)

    def layer(inp, w_oihw, gamma, beta):
        wk = jnp.transpose(w_oihw, (2, 3, 1, 0)).astype(jnp.bfloat16)  # HWIO
        y = jax.lax.conv_general_dilated(
            inp.astype(jnp.bfloat16), wk, window_strides=(1, 1), padding="SAME",
            dimension_numbers=("NHWC", "HWIO", "NHWC"),
            preferred_element_type=jnp.float32)
        mean = jnp.mean(y, axis=(0, 1, 2))
        var = jnp.maximum(jnp.mean(y * y, axis=(0, 1, 2)) - mean * mean, 0.0)
        inv = jax.lax.rsqrt(var + BN_EPS)
        a = (y - mean) * inv * gamma + beta
        return jnp.where(a >= 0.0, a, LEAKY_SLOPE * a)

    y1 = layer(x, params["conv1_w"], params["bn1_gamma"], params["bn1_beta"])
    y2 = layer(y1, params["conv2_w"], params["bn2_gamma"], params["bn2_beta"])
    return jnp.transpose(y2, (0, 3, 1, 2))


def init_params(key, channels):
    k1, k2, k3, k4, k5, k6 = jax.random.split(key, 6)
    bound = 1.0 / jnp.sqrt(float(channels * 9))
    return {
        "conv1_w": jax.random.uniform(
            k1, (channels, channels, 3, 3), jnp.float32, -bound, bound),
        "conv2_w": jax.random.uniform(
            k2, (channels, channels, 3, 3), jnp.float32, -bound, bound),
        "bn1_gamma": 1.0 + 0.1 * jax.random.normal(k3, (channels,), jnp.float32),
        "bn1_beta": 0.1 * jax.random.normal(k4, (channels,), jnp.float32),
        "bn2_gamma": 1.0 + 0.1 * jax.random.normal(k5, (channels,), jnp.float32),
        "bn2_beta": 0.1 * jax.random.normal(k6, (channels,), jnp.float32),
    }


if __name__ == "__main__":
    N, C, H, W = 2, 8, 16, 16
    key = jax.random.PRNGKey(0)
    kx, kp = jax.random.split(key)

    x = jax.random.normal(kx, (N, C, H, W), jnp.float32)
    params = init_params(kp, C)

    out = jax.jit(fg_function_forward)(x, params)
    out = jax.block_until_ready(out)

    assert out.shape == (N, C, H, W), out.shape
    assert bool(jnp.all(jnp.isfinite(out)))

    ref = jax.jit(_reference_forward)(x, params)
    ref = jax.block_until_ready(ref)
    assert bool(jnp.allclose(out, ref, atol=3e-2, rtol=3e-2)), float(
        jnp.max(jnp.abs(out - ref)))

    print("KERNEL_OK")
</pallas_src>

<mosaic_0001>
module attributes {stable_mosaic.version = 11 : i64} {
  func.func @_conv_bn_stats_kernel(%arg0: i32, %arg1: memref<1x18x18x128xbf16, #tpu.memory_space<vmem>>, %arg2: memref<1x128xf32, #tpu.memory_space<vmem>>, %arg3: memref<1x128xf32, #tpu.memory_space<vmem>>, %arg4: memref<1152x128xbf16, #tpu.memory_space<vmem>>, %arg5: memref<1x256x128xbf16, #tpu.memory_space<vmem>>, %arg6: memref<1x2x128xf32, #tpu.memory_space<vmem>>, %arg7: memref<256x1152xbf16, #tpu.memory_space<vmem>>) attributes {dimension_semantics = [#tpu.dimension_semantics<parallel>], iteration_bounds = array<i64: 2>, scalar_prefetch = 0 : i64, scratch_operands = 1 : i64, tpu.core_type = #tpu.core_type<tc>, window_params = [{transform_indices = @transform_0, window_bounds = array<i64: 1, 18, 18, 128>}, {pipeline_mode = #tpu.pipeline_mode<synchronous>, transform_indices = @transform_1, window_bounds = array<i64: 1, 128>}, {pipeline_mode = #tpu.pipeline_mode<synchronous>, transform_indices = @transform_2, window_bounds = array<i64: 1, 128>}, {pipeline_mode = #tpu.pipeline_mode<synchronous>, transform_indices = @transform_3, window_bounds = array<i64: 1152, 128>}, {transform_indices = @transform_4, window_bounds = array<i64: 1, 256, 128>}, {transform_indices = @transform_5, window_bounds = array<i64: 1, 2, 128>}]} {
    %c0 = arith.constant 0 : index
    %c0_0 = arith.constant 0 : index
    %c0_1 = arith.constant 0 : index
    %c0_2 = arith.constant 0 : index
    %0 = vector.load %arg1[%c0, %c0_0, %c0_1, %c0_2] : memref<1x18x18x128xbf16, #tpu.memory_space<vmem>>, vector<1x18x18x128xbf16>
    %1 = vector.shape_cast %0 : vector<1x18x18x128xbf16> to vector<18x18x128xbf16>
    %2 = vector.extract_strided_slice %1 {offsets = [0, 0, 0], sizes = [16, 16, 128], strides = [1, 1, 1]} : vector<18x18x128xbf16> to vector<16x16x128xbf16>
    %3 = vector.shape_cast %2 : vector<16x16x128xbf16> to vector<256x128xbf16>
    %c0_3 = arith.constant 0 : index
    %c0_4 = arith.constant 0 : index
    %4 = vector.load %arg7[%c0_3, %c0_4] : memref<256x1152xbf16, #tpu.memory_space<vmem>>, vector<256x128xbf16>
    tpu.vector_store %arg7[%c0_3, %c0_4], %3 {strides = array<i32>} : memref<256x1152xbf16, #tpu.memory_space<vmem>>, vector<256x128xbf16>,
    %5 = vector.extract_strided_slice %1 {offsets = [0, 1, 0], sizes = [16, 16, 128], strides = [1, 1, 1]} : vector<18x18x128xbf16> to vector<16x16x128xbf16>
    %6 = vector.shape_cast %5 : vector<16x16x128xbf16> to vector<256x128xbf16>
    %c0_5 = arith.constant 0 : index
    %c128 = arith.constant 128 : index
    %7 = vector.load %arg7[%c0_5, %c128] : memref<256x1152xbf16, #tpu.memory_space<vmem>>, vector<256x128xbf16>
    tpu.vector_store %arg7[%c0_5, %c128], %6 {strides = array<i32>} : memref<256x1152xbf16, #tpu.memory_space<vmem>>, vector<256x128xbf16>,
    %8 = vector.extract_strided_slice %1 {offsets = [0, 2, 0], sizes = [16, 16, 128], strides = [1, 1, 1]} : vector<18x18x128xbf16> to vector<16x16x128xbf16>
    %9 = vector.shape_cast %8 : vector<16x16x128xbf16> to vector<256x128xbf16>
    %c0_6 = arith.constant 0 : index
    %c256 = arith.constant 256 : index
    %10 = vector.load %arg7[%c0_6, %c256] : memref<256x1152xbf16, #tpu.memory_space<vmem>>, vector<256x128xbf16>
    tpu.vector_store %arg7[%c0_6, %c256], %9 {strides = array<i32>} : memref<256x1152xbf16, #tpu.memory_space<vmem>>, vector<256x128xbf16>,
    %11 = vector.extract_strided_slice %1 {offsets = [1, 0, 0], sizes = [16, 16, 128], strides = [1, 1, 1]} : vector<18x18x128xbf16> to vector<16x16x128xbf16>
    %12 = vector.shape_cast %11 : vector<16x16x128xbf16> to vector<256x128xbf16>
    %c0_7 = arith.constant 0 : index
    %c384 = arith.constant 384 : index
    %13 = vector.load %arg7[%c0_7, %c384] : memref<256x1152xbf16, #tpu.memory_space<vmem>>, vector<256x128xbf16>
    tpu.vector_store %arg7[%c0_7, %c384], %12 {strides = array<i32>} : memref<256x1152xbf16, #tpu.memory_space<vmem>>, vector<256x128xbf16>,
    %14 = vector.extract_strided_slice %1 {offsets = [1, 1, 0], sizes = [16, 16, 128], strides = [1, 1, 1]} : vector<18x18x128xbf16> to vector<16x16x128xbf16>
    %15 = vector.shape_cast %14 : vector<16x16x128xbf16> to vector<256x128xbf16>
    %c0_8 = arith.constant 0 : index
    %c512 = arith.constant 512 : index
    %16 = vector.load %arg7[%c0_8, %c512] : memref<256x1152xbf16, #tpu.memory_space<vmem>>, vector<256x128xbf16>
    tpu.vector_store %arg7[%c0_8, %c512], %15 {strides = array<i32>} : memref<256x1152xbf16, #tpu.memory_space<vmem>>, vector<256x128xbf16>,
    %17 = vector.extract_strided_slice %1 {offsets = [1, 2, 0], sizes = [16, 16, 128], strides = [1, 1, 1]} : vector<18x18x128xbf16> to vector<16x16x128xbf16>
    %18 = vector.shape_cast %17 : vector<16x16x128xbf16> to vector<256x128xbf16>
    %c0_9 = arith.constant 0 : index
    %c640 = arith.constant 640 : index
    %19 = vector.load %arg7[%c0_9, %c640] : memref<256x1152xbf16, #tpu.memory_space<vmem>>, vector<256x128xbf16>
    tpu.vector_store %arg7[%c0_9, %c640], %18 {strides = array<i32>} : memref<256x1152xbf16, #tpu.memory_space<vmem>>, vector<256x128xbf16>,
    %20 = vector.extract_strided_slice %1 {offsets = [2, 0, 0], sizes = [16, 16, 128], strides = [1, 1, 1]} : vector<18x18x128xbf16> to vector<16x16x128xbf16>
    %21 = vector.shape_cast %20 : vector<16x16x128xbf16> to vector<256x128xbf16>
    %c0_10 = arith.constant 0 : index
    %c768 = arith.constant 768 : index
    %22 = vector.load %arg7[%c0_10, %c768] : memref<256x1152xbf16, #tpu.memory_space<vmem>>, vector<256x128xbf16>
    tpu.vector_store %arg7[%c0_10, %c768], %21 {strides = array<i32>} : memref<256x1152xbf16, #tpu.memory_space<vmem>>, vector<256x128xbf16>,
    %23 = vector.extract_strided_slice %1 {offsets = [2, 1, 0], sizes = [16, 16, 128], strides = [1, 1, 1]} : vector<18x18x128xbf16> to vector<16x16x128xbf16>
    %24 = vector.shape_cast %23 : vector<16x16x128xbf16> to vector<256x128xbf16>
    %c0_11 = arith.constant 0 : index
    %c896 = arith.constant 896 : index
    %25 = vector.load %arg7[%c0_11, %c896] : memref<256x1152xbf16, #tpu.memory_space<vmem>>, vector<256x128xbf16>
    tpu.vector_store %arg7[%c0_11, %c896], %24 {strides = array<i32>} : memref<256x1152xbf16, #tpu.memory_space<vmem>>, vector<256x128xbf16>,
    %26 = vector.extract_strided_slice %1 {offsets = [2, 2, 0], sizes = [16, 16, 128], strides = [1, 1, 1]} : vector<18x18x128xbf16> to vector<16x16x128xbf16>
    %27 = vector.shape_cast %26 : vector<16x16x128xbf16> to vector<256x128xbf16>
    %c0_12 = arith.constant 0 : index
    %c1024 = arith.constant 1024 : index
    %28 = vector.load %arg7[%c0_12, %c1024] : memref<256x1152xbf16, #tpu.memory_space<vmem>>, vector<256x128xbf16>
    tpu.vector_store %arg7[%c0_12, %c1024], %27 {strides = array<i32>} : memref<256x1152xbf16, #tpu.memory_space<vmem>>, vector<256x128xbf16>,
    %c0_13 = arith.constant 0 : index
    %c0_14 = arith.constant 0 : index
    %29 = vector.load %arg7[%c0_13, %c0_14] : memref<256x1152xbf16, #tpu.memory_space<vmem>>, vector<256x1152xbf16>
    %c0_15 = arith.constant 0 : index
    %c0_16 = arith.constant 0 : index
    %30 = vector.load %arg4[%c0_15, %c0_16] : memref<1152x128xbf16, #tpu.memory_space<vmem>>, vector<1152x128xbf16>
    %cst = arith.constant dense<0.000000e+00> : vector<256x128xf32>
    %31 = tpu.matmul %29, %30, %cst {dimension_numbers = #tpu.dot_dimension_numbers<[1], [0], [0], [1], [0, 0, 1, 1], [], []>} : vector<256x1152xbf16>, vector<1152x128xbf16>, vector<256x128xf32> -> vector<256x128xf32>
    %32 = arith.truncf %31 : vector<256x128xf32> to vector<256x128xbf16>
    %c0_17 = arith.constant 0 : index
    %c0_18 = arith.constant 0 : index
    %c0_19 = arith.constant 0 : index
    %33 = vector.load %arg5[%c0_17, %c0_18, %c0_19] : memref<1x256x128xbf16, #tpu.memory_space<vmem>>, vector<1x256x128xbf16>
    %34 = vector.shape_cast %33 : vector<1x256x128xbf16> to vector<256x128xbf16>
    %35 = vector.shape_cast %32 : vector<256x128xbf16> to vector<1x256x128xbf16>
    tpu.vector_store %arg5[%c0_17, %c0_18, %c0_19], %35 {strides = array<i32>} : memref<1x256x128xbf16, #tpu.memory_space<vmem>>, vector<1x256x128xbf16>,
    %cst_20 = arith.constant dense<0.000000e+00> : vector<128xf32>
    %36 = vector.multi_reduction <add>, %31, %cst_20 [0] : vector<256x128xf32> to vector<128xf32>
    %37 = vector.shape_cast %36 : vector<128xf32> to vector<1x128xf32>
    %38 = arith.mulf %31, %31 : vector<256x128xf32>
    %cst_21 = arith.constant dense<0.000000e+00> : vector<128xf32>
    %39 = vector.multi_reduction <add>, %38, %cst_21 [0] : vector<256x128xf32> to vector<128xf32>
    %40 = vector.shape_cast %39 : vector<128xf32> to vector<1x128xf32>
    %41 = tpu.concatenate %37, %40 in 0 : vector<1x128xf32>, vector<1x128xf32> -> vector<2x128xf32>
    %c0_22 = arith.constant 0 : index
    %c0_23 = arith.constant 0 : index
    %c0_24 = arith.constant 0 : index
    %42 = vector.load %arg6[%c0_22, %c0_23, %c0_24] : memref<1x2x128xf32, #tpu.memory_space<vmem>>, vector<1x2x128xf32>
    %43 = vector.shape_cast %42 : vector<1x2x128xf32> to vector<2x128xf32>
    %44 = vector.shape_cast %41 : vector<2x128xf32> to vector<1x2x128xf32>
    tpu.vector_store %arg6[%c0_22, %c0_23, %c0_24], %44 {strides = array<i32>} : memref<1x2x128xf32, #tpu.memory_space<vmem>>, vector<1x2x128xf32>,
    return
  }
  func.func @transform_0(%arg0: i32) -> (i32, i32, i32, i32) {
    %c0_i32 = arith.constant 0 : i32
    %c0_i32_0 = arith.constant 0 : i32
    %c0_i32_1 = arith.constant 0 : i32
    %c0_i32_2 = arith.constant 0 : i32
    return %arg0, %c0_i32, %c0_i32_0, %c0_i32_1 : i32, i32, i32, i32
  }
  func.func @transform_1(%arg0: i32) -> (i32, i32) {
    %c0_i32 = arith.constant 0 : i32
    %c0_i32_0 = arith.constant 0 : i32
    %c0_i32_1 = arith.constant 0 : i32
    return %c0_i32, %c0_i32_0 : i32, i32
  }
  func.func @transform_2(%arg0: i32) -> (i32, i32) {
    %c0_i32 = arith.constant 0 : i32
    %c0_i32_0 = arith.constant 0 : i32
    %c0_i32_1 = arith.constant 0 : i32
    return %c0_i32, %c0_i32_0 : i32, i32
  }
  func.func @transform_3(%arg0: i32) -> (i32, i32) {
    %c0_i32 = arith.constant 0 : i32
    %c0_i32_0 = arith.constant 0 : i32
    %c0_i32_1 = arith.constant 0 : i32
    return %c0_i32, %c0_i32_0 : i32, i32
  }
  func.func @transform_4(%arg0: i32) -> (i32, i32, i32) {
    %c0_i32 = arith.constant 0 : i32
    %c0_i32_0 = arith.constant 0 : i32
    %c0_i32_1 = arith.constant 0 : i32
    return %arg0, %c0_i32, %c0_i32_0 : i32, i32, i32
  }
  func.func @transform_5(%arg0: i32) -> (i32, i32, i32) {
    %c0_i32 = arith.constant 0 : i32
    %c0_i32_0 = arith.constant 0 : i32
    %c0_i32_1 = arith.constant 0 : i32
    return %arg0, %c0_i32, %c0_i32_0 : i32, i32, i32
  }
}

module attributes {stable_mosaic.version = 11 : i64} {
  func.func @_conv_bn_stats_kernel(%arg0: i32, %arg1: memref<1x18x18x128xbf16, #tpu.memory_space<vmem>>, %arg2: memref<1x128xf32, #tpu.memory_space<vmem>>, %arg3: memref<1x128xf32, #tpu.memory_space<vmem>>, %arg4: memref<1152x128xbf16, #tpu.memory_space<vmem>>, %arg5: memref<1x256x128xbf16, #tpu.memory_space<vmem>>, %arg6: memref<1x2x128xf32, #tpu.memory_space<vmem>>, %arg7: memref<256x1152xbf16, #tpu.memory_space<vmem>>) attributes {dimension_semantics = [#tpu.dimension_semantics<parallel>], iteration_bounds = array<i64: 2>, scalar_prefetch = 0 : i64, scratch_operands = 1 : i64, tpu.core_type = #tpu.core_type<tc>, window_params = [{transform_indices = @transform_0, window_bounds = array<i64: 1, 18, 18, 128>}, {pipeline_mode = #tpu.pipeline_mode<synchronous>, transform_indices = @transform_1, window_bounds = array<i64: 1, 128>}, {pipeline_mode = #tpu.pipeline_mode<synchronous>, transform_indices = @transform_2, window_bounds = array<i64: 1, 128>}, {pipeline_mode = #tpu.pipeline_mode<synchronous>, transform_indices = @transform_3, window_bounds = array<i64: 1152, 128>}, {transform_indices = @transform_4, window_bounds = array<i64: 1, 256, 128>}, {transform_indices = @transform_5, window_bounds = array<i64: 1, 2, 128>}]} {
    %c0 = arith.constant 0 : index
    %c0_0 = arith.constant 0 : index
    %c0_1 = arith.constant 0 : index
    %c0_2 = arith.constant 0 : index
    %0 = vector.load %arg1[%c0, %c0_0, %c0_1, %c0_2] : memref<1x18x18x128xbf16, #tpu.memory_space<vmem>>, vector<1x18x18x128xbf16>
    %1 = vector.shape_cast %0 : vector<1x18x18x128xbf16> to vector<18x18x128xbf16>
    %2 = arith.extf %1 : vector<18x18x128xbf16> to vector<18x18x128xf32>
    %c0_3 = arith.constant 0 : index
    %c0_4 = arith.constant 0 : index
    %3 = vector.load %arg2[%c0_3, %c0_4] : memref<1x128xf32, #tpu.memory_space<vmem>>, vector<1x128xf32>
    %4 = vector.shape_cast %3 : vector<1x128xf32> to vector<128xf32>
    %5 = vector.shape_cast %4 : vector<128xf32> to vector<1x1x128xf32>
    %6 = vector.broadcast %5 : vector<1x1x128xf32> to vector<18x18x128xf32>
    %7 = arith.mulf %2, %6 : vector<18x18x128xf32>
    %c0_5 = arith.constant 0 : index
    %c0_6 = arith.constant 0 : index
    %8 = vector.load %arg3[%c0_5, %c0_6] : memref<1x128xf32, #tpu.memory_space<vmem>>, vector<1x128xf32>
    %9 = vector.shape_cast %8 : vector<1x128xf32> to vector<128xf32>
    %10 = vector.shape_cast %9 : vector<128xf32> to vector<1x1x128xf32>
    %11 = vector.broadcast %10 : vector<1x1x128xf32> to vector<18x18x128xf32>
    %12 = arith.addf %7, %11 : vector<18x18x128xf32>
    %cst = arith.constant 0.000000e+00 : f32
    %13 = vector.broadcast %cst : f32 to vector<18x18x128xf32>
    %14 = arith.cmpf oge, %12, %13 : vector<18x18x128xf32>
    %cst_7 = arith.constant 0.00999999977 : f32
    %15 = vector.broadcast %cst_7 : f32 to vector<18x18x128xf32>
    %16 = arith.mulf %15, %12 : vector<18x18x128xf32>
    %17 = arith.select %14, %12, %16 : vector<18x18x128xi1>, vector<18x18x128xf32>
    %18 = tpu.iota {dimensions = array<i32: 0>} : vector<18x18x1xi32>
    %19 = tpu.iota {dimensions = array<i32: 1>} : vector<18x18x1xi32>
    %c1_i32 = arith.constant 1 : i32
    %20 = vector.broadcast %c1_i32 : i32 to vector<18x18x1xi32>
    %21 = arith.cmpi sge, %18, %20 : vector<18x18x1xi32>
    %c16_i32 = arith.constant 16 : i32
    %22 = vector.broadcast %c16_i32 : i32 to vector<18x18x1xi32>
    %23 = arith.cmpi sle, %18, %22 : vector<18x18x1xi32>
    %24 = arith.andi %21, %23 : vector<18x18x1xi1>
    %c1_i32_8 = arith.constant 1 : i32
    %25 = vector.broadcast %c1_i32_8 : i32 to vector<18x18x1xi32>
    %26 = arith.cmpi sge, %19, %25 : vector<18x18x1xi32>
    %27 = arith.andi %24, %26 : vector<18x18x1xi1>
    %c16_i32_9 = arith.constant 16 : i32
    %28 = vector.broadcast %c16_i32_9 : i32 to vector<18x18x1xi32>
    %29 = arith.cmpi sle, %19, %28 : vector<18x18x1xi32>
    %30 = arith.andi %27, %29 : vector<18x18x1xi1>
    %cst_10 = arith.constant 0.000000e+00 : f32
    %31 = vector.shape_cast %30 : vector<18x18x1xi1> to vector<18x18x1xi1>
    %32 = vector.broadcast %31 : vector<18x18x1xi1> to vector<18x18x128xi1>
    %33 = vector.broadcast %cst_10 : f32 to vector<18x18x128xf32>
    %34 = arith.select %32, %17, %33 : vector<18x18x128xi1>, vector<18x18x128xf32>
    %35 = arith.truncf %34 : vector<18x18x128xf32> to vector<18x18x128xbf16>
    %36 = vector.extract_strided_slice %35 {offsets = [0, 0, 0], sizes = [16, 16, 128], strides = [1, 1, 1]} : vector<18x18x128xbf16> to vector<16x16x128xbf16>
    %37 = vector.shape_cast %36 : vector<16x16x128xbf16> to vector<256x128xbf16>
    %c0_11 = arith.constant 0 : index
    %c0_12 = arith.constant 0 : index
    %38 = vector.load %arg7[%c0_11, %c0_12] : memref<256x1152xbf16, #tpu.memory_space<vmem>>, vector<256x128xbf16>
    tpu.vector_store %arg7[%c0_11, %c0_12], %37 {strides = array<i32>} : memref<256x1152xbf16, #tpu.memory_space<vmem>>, vector<256x128xbf16>,
    %39 = vector.extract_strided_slice %35 {offsets = [0, 1, 0], sizes = [16, 16, 128], strides = [1, 1, 1]} : vector<18x18x128xbf16> to vector<16x16x128xbf16>
    %40 = vector.shape_cast %39 : vector<16x16x128xbf16> to vector<256x128xbf16>
    %c0_13 = arith.constant 0 : index
    %c128 = arith.constant 128 : index
    %41 = vector.load %arg7[%c0_13, %c128] : memref<256x1152xbf16, #tpu.memory_space<vmem>>, vector<256x128xbf16>
    tpu.vector_store %arg7[%c0_13, %c128], %40 {strides = array<i32>} : memref<256x1152xbf16, #tpu.memory_space<vmem>>, vector<256x128xbf16>,
    %42 = vector.extract_strided_slice %35 {offsets = [0, 2, 0], sizes = [16, 16, 128], strides = [1, 1, 1]} : vector<18x18x128xbf16> to vector<16x16x128xbf16>
    %43 = vector.shape_cast %42 : vector<16x16x128xbf16> to vector<256x128xbf16>
    %c0_14 = arith.constant 0 : index
    %c256 = arith.constant 256 : index
    %44 = vector.load %arg7[%c0_14, %c256] : memref<256x1152xbf16, #tpu.memory_space<vmem>>, vector<256x128xbf16>
    tpu.vector_store %arg7[%c0_14, %c256], %43 {strides = array<i32>} : memref<256x1152xbf16, #tpu.memory_space<vmem>>, vector<256x128xbf16>,
    %45 = vector.extract_strided_slice %35 {offsets = [1, 0, 0], sizes = [16, 16, 128], strides = [1, 1, 1]} : vector<18x18x128xbf16> to vector<16x16x128xbf16>
    %46 = vector.shape_cast %45 : vector<16x16x128xbf16> to vector<256x128xbf16>
    %c0_15 = arith.constant 0 : index
    %c384 = arith.constant 384 : index
    %47 = vector.load %arg7[%c0_15, %c384] : memref<256x1152xbf16, #tpu.memory_space<vmem>>, vector<256x128xbf16>
    tpu.vector_store %arg7[%c0_15, %c384], %46 {strides = array<i32>} : memref<256x1152xbf16, #tpu.memory_space<vmem>>, vector<256x128xbf16>,
    %48 = vector.extract_strided_slice %35 {offsets = [1, 1, 0], sizes = [16, 16, 128], strides = [1, 1, 1]} : vector<18x18x128xbf16> to vector<16x16x128xbf16>
    %49 = vector.shape_cast %48 : vector<16x16x128xbf16> to vector<256x128xbf16>
    %c0_16 = arith.constant 0 : index
    %c512 = arith.constant 512 : index
    %50 = vector.load %arg7[%c0_16, %c512] : memref<256x1152xbf16, #tpu.memory_space<vmem>>, vector<256x128xbf16>
    tpu.vector_store %arg7[%c0_16, %c512], %49 {strides = array<i32>} : memref<256x1152xbf16, #tpu.memory_space<vmem>>, vector<256x128xbf16>,
    %51 = vector.extract_strided_slice %35 {offsets = [1, 2, 0], sizes = [16, 16, 128], strides = [1, 1, 1]} : vector<18x18x128xbf16> to vector<16x16x128xbf16>
    %52 = vector.shape_cast %51 : vector<16x16x128xbf16> to vector<256x128xbf16>
    %c0_17 = arith.constant 0 : index
    %c640 = arith.constant 640 : index
    %53 = vector.load %arg7[%c0_17, %c640] : memref<256x1152xbf16, #tpu.memory_space<vmem>>, vector<256x128xbf16>
    tpu.vector_store %arg7[%c0_17, %c640], %52 {strides = array<i32>} : memref<256x1152xbf16, #tpu.memory_space<vmem>>, vector<256x128xbf16>,
    %54 = vector.extract_strided_slice %35 {offsets = [2, 0, 0], sizes = [16, 16, 128], strides = [1, 1, 1]} : vector<18x18x128xbf16> to vector<16x16x128xbf16>
    %55 = vector.shape_cast %54 : vector<16x16x128xbf16> to vector<256x128xbf16>
    %c0_18 = arith.constant 0 : index
    %c768 = arith.constant 768 : index
    %56 = vector.load %arg7[%c0_18, %c768] : memref<256x1152xbf16, #tpu.memory_space<vmem>>, vector<256x128xbf16>
    tpu.vector_store %arg7[%c0_18, %c768], %55 {strides = array<i32>} : memref<256x1152xbf16, #tpu.memory_space<vmem>>, vector<256x128xbf16>,
    %57 = vector.extract_strided_slice %35 {offsets = [2, 1, 0], sizes = [16, 16, 128], strides = [1, 1, 1]} : vector<18x18x128xbf16> to vector<16x16x128xbf16>
    %58 = vector.shape_cast %57 : vector<16x16x128xbf16> to vector<256x128xbf16>
    %c0_19 = arith.constant 0 : index
    %c896 = arith.constant 896 : index
    %59 = vector.load %arg7[%c0_19, %c896] : memref<256x1152xbf16, #tpu.memory_space<vmem>>, vector<256x128xbf16>
    tpu.vector_store %arg7[%c0_19, %c896], %58 {strides = array<i32>} : memref<256x1152xbf16, #tpu.memory_space<vmem>>, vector<256x128xbf16>,
    %60 = vector.extract_strided_slice %35 {offsets = [2, 2, 0], sizes = [16, 16, 128], strides = [1, 1, 1]} : vector<18x18x128xbf16> to vector<16x16x128xbf16>
    %61 = vector.shape_cast %60 : vector<16x16x128xbf16> to vector<256x128xbf16>
    %c0_20 = arith.constant 0 : index
    %c1024 = arith.constant 1024 : index
    %62 = vector.load %arg7[%c0_20, %c1024] : memref<256x1152xbf16, #tpu.memory_space<vmem>>, vector<256x128xbf16>
    tpu.vector_store %arg7[%c0_20, %c1024], %61 {strides = array<i32>} : memref<256x1152xbf16, #tpu.memory_space<vmem>>, vector<256x128xbf16>,
    %c0_21 = arith.constant 0 : index
    %c0_22 = arith.constant 0 : index
    %63 = vector.load %arg7[%c0_21, %c0_22] : memref<256x1152xbf16, #tpu.memory_space<vmem>>, vector<256x1152xbf16>
    %c0_23 = arith.constant 0 : index
    %c0_24 = arith.constant 0 : index
    %64 = vector.load %arg4[%c0_23, %c0_24] : memref<1152x128xbf16, #tpu.memory_space<vmem>>, vector<1152x128xbf16>
    %cst_25 = arith.constant dense<0.000000e+00> : vector<256x128xf32>
    %65 = tpu.matmul %63, %64, %cst_25 {dimension_numbers = #tpu.dot_dimension_numbers<[1], [0], [0], [1], [0, 0, 1, 1], [], []>} : vector<256x1152xbf16>, vector<1152x128xbf16>, vector<256x128xf32> -> vector<256x128xf32>
    %66 = arith.truncf %65 : vector<256x128xf32> to vector<256x128xbf16>
    %c0_26 = arith.constant 0 : index
    %c0_27 = arith.constant 0 : index
    %c0_28 = arith.constant 0 : index
    %67 = vector.load %arg5[%c0_26, %c0_27, %c0_28] : memref<1x256x128xbf16, #tpu.memory_space<vmem>>, vector<1x256x128xbf16>
    %68 = vector.shape_cast %67 : vector<1x256x128xbf16> to vector<256x128xbf16>
    %69 = vector.shape_cast %66 : vector<256x128xbf16> to vector<1x256x128xbf16>
    tpu.vector_store %arg5[%c0_26, %c0_27, %c0_28], %69 {strides = array<i32>} : memref<1x256x128xbf16, #tpu.memory_space<vmem>>, vector<1x256x128xbf16>,
    %cst_29 = arith.constant dense<0.000000e+00> : vector<128xf32>
    %70 = vector.multi_reduction <add>, %65, %cst_29 [0] : vector<256x128xf32> to vector<128xf32>
    %71 = vector.shape_cast %70 : vector<128xf32> to vector<1x128xf32>
    %72 = arith.mulf %65, %65 : vector<256x128xf32>
    %cst_30 = arith.constant dense<0.000000e+00> : vector<128xf32>
    %73 = vector.multi_reduction <add>, %72, %cst_30 [0] : vector<256x128xf32> to vector<128xf32>
    %74 = vector.shape_cast %73 : vector<128xf32> to vector<1x128xf32>
    %75 = tpu.concatenate %71, %74 in 0 : vector<1x128xf32>, vector<1x128xf32> -> vector<2x128xf32>
    %c0_31 = arith.constant 0 : index
    %c0_32 = arith.constant 0 : index
    %c0_33 = arith.constant 0 : index
    %76 = vector.load %arg6[%c0_31, %c0_32, %c0_33] : memref<1x2x128xf32, #tpu.memory_space<vmem>>, vector<1x2x128xf32>
    %77 = vector.shape_cast %76 : vector<1x2x128xf32> to vector<2x128xf32>
    %78 = vector.shape_cast %75 : vector<2x128xf32> to vector<1x2x128xf32>
    tpu.vector_store %arg6[%c0_31, %c0_32, %c0_33], %78 {strides = array<i32>} : memref<1x2x128xf32, #tpu.memory_space<vmem>>, vector<1x2x128xf32>,
    return
  }
  func.func @transform_0(%arg0: i32) -> (i32, i32, i32, i32) {
    %c0_i32 = arith.constant 0 : i32
    %c0_i32_0 = arith.constant 0 : i32
    %c0_i32_1 = arith.constant 0 : i32
    %c0_i32_2 = arith.constant 0 : i32
    return %arg0, %c0_i32, %c0_i32_0, %c0_i32_1 : i32, i32, i32, i32
  }
  func.func @transform_1(%arg0: i32) -> (i32, i32) {
    %c0_i32 = arith.constant 0 : i32
    %c0_i32_0 = arith.constant 0 : i32
    %c0_i32_1 = arith.constant 0 : i32
    return %c0_i32, %c0_i32_0 : i32, i32
  }
  func.func @transform_2(%arg0: i32) -> (i32, i32) {
    %c0_i32 = arith.constant 0 : i32
    %c0_i32_0 = arith.constant 0 : i32
    %c0_i32_1 = arith.constant 0 : i32
    return %c0_i32, %c0_i32_0 : i32, i32
  }
  func.func @transform_3(%arg0: i32) -> (i32, i32) {
    %c0_i32 = arith.constant 0 : i32
    %c0_i32_0 = arith.constant 0 : i32
    %c0_i32_1 = arith.constant 0 : i32
    return %c0_i32, %c0_i32_0 : i32, i32
  }
  func.func @transform_4(%arg0: i32) -> (i32, i32, i32) {
    %c0_i32 = arith.constant 0 : i32
    %c0_i32_0 = arith.constant 0 : i32
    %c0_i32_1 = arith.constant 0 : i32
    return %arg0, %c0_i32, %c0_i32_0 : i32, i32, i32
  }
  func.func @transform_5(%arg0: i32) -> (i32, i32, i32) {
    %c0_i32 = arith.constant 0 : i32
    %c0_i32_0 = arith.constant 0 : i32
    %c0_i32_1 = arith.constant 0 : i32
    return %arg0, %c0_i32, %c0_i32_0 : i32, i32, i32
  }
}

module attributes {stable_mosaic.version = 11 : i64} {
  func.func @_bn_act_kernel(%arg0: i32, %arg1: memref<1x256x128xbf16, #tpu.memory_space<vmem>>, %arg2: memref<1x128xf32, #tpu.memory_space<vmem>>, %arg3: memref<1x128xf32, #tpu.memory_space<vmem>>, %arg4: memref<1x256x128xf32, #tpu.memory_space<vmem>>) attributes {dimension_semantics = [#tpu.dimension_semantics<parallel>], iteration_bounds = array<i64: 2>, scalar_prefetch = 0 : i64, scratch_operands = 0 : i64, tpu.core_type = #tpu.core_type<tc>, window_params = [{transform_indices = @transform_0, window_bounds = array<i64: 1, 256, 128>}, {pipeline_mode = #tpu.pipeline_mode<synchronous>, transform_indices = @transform_1, window_bounds = array<i64: 1, 128>}, {pipeline_mode = #tpu.pipeline_mode<synchronous>, transform_indices = @transform_2, window_bounds = array<i64: 1, 128>}, {transform_indices = @transform_3, window_bounds = array<i64: 1, 256, 128>}]} {
    %c0 = arith.constant 0 : index
    %c0_0 = arith.constant 0 : index
    %c0_1 = arith.constant 0 : index
    %0 = vector.load %arg1[%c0, %c0_0, %c0_1] : memref<1x256x128xbf16, #tpu.memory_space<vmem>>, vector<1x256x128xbf16>
    %1 = vector.shape_cast %0 : vector<1x256x128xbf16> to vector<256x128xbf16>
    %2 = arith.extf %1 : vector<256x128xbf16> to vector<256x128xf32>
    %c0_2 = arith.constant 0 : index
    %c0_3 = arith.constant 0 : index
    %3 = vector.load %arg2[%c0_2, %c0_3] : memref<1x128xf32, #tpu.memory_space<vmem>>, vector<1x128xf32>
    %4 = vector.shape_cast %3 : vector<1x128xf32> to vector<128xf32>
    %5 = vector.shape_cast %4 : vector<128xf32> to vector<1x128xf32>
    %6 = vector.broadcast %5 : vector<1x128xf32> to vector<256x128xf32>
    %7 = arith.mulf %2, %6 : vector<256x128xf32>
    %c0_4 = arith.constant 0 : index
    %c0_5 = arith.constant 0 : index
    %8 = vector.load %arg3[%c0_4, %c0_5] : memref<1x128xf32, #tpu.memory_space<vmem>>, vector<1x128xf32>
    %9 = vector.shape_cast %8 : vector<1x128xf32> to vector<128xf32>
    %10 = vector.shape_cast %9 : vector<128xf32> to vector<1x128xf32>
    %11 = vector.broadcast %10 : vector<1x128xf32> to vector<256x128xf32>
    %12 = arith.addf %7, %11 : vector<256x128xf32>
    %cst = arith.constant 0.000000e+00 : f32
    %13 = vector.broadcast %cst : f32 to vector<256x128xf32>
    %14 = arith.cmpf oge, %12, %13 : vector<256x128xf32>
    %cst_6 = arith.constant 0.00999999977 : f32
    %15 = vector.broadcast %cst_6 : f32 to vector<256x128xf32>
    %16 = arith.mulf %15, %12 : vector<256x128xf32>
    %17 = arith.select %14, %12, %16 : vector<256x128xi1>, vector<256x128xf32>
    %c0_7 = arith.constant 0 : index
    %c0_8 = arith.constant 0 : index
    %c0_9 = arith.constant 0 : index
    %18 = vector.load %arg4[%c0_7, %c0_8, %c0_9] : memref<1x256x128xf32, #tpu.memory_space<vmem>>, vector<1x256x128xf32>
    %19 = vector.shape_cast %18 : vector<1x256x128xf32> to vector<256x128xf32>
    %20 = vector.shape_cast %17 : vector<256x128xf32> to vector<1x256x128xf32>
    tpu.vector_store %arg4[%c0_7, %c0_8, %c0_9], %20 {strides = array<i32>} : memref<1x256x128xf32, #tpu.memory_space<vmem>>, vector<1x256x128xf32>,
    return
  }
  func.func @transform_0(%arg0: i32) -> (i32, i32, i32) {
    %c0_i32 = arith.constant 0 : i32
    %c0_i32_0 = arith.constant 0 : i32
    %c0_i32_1 = arith.constant 0 : i32
    return %arg0, %c0_i32, %c0_i32_0 : i32, i32, i32
  }
  func.func @transform_1(%arg0: i32) -> (i32, i32) {
    %c0_i32 = arith.constant 0 : i32
    %c0_i32_0 = arith.constant 0 : i32
    %c0_i32_1 = arith.constant 0 : i32
    return %c0_i32, %c0_i32_0 : i32, i32
  }
  func.func @transform_2(%arg0: i32) -> (i32, i32) {
    %c0_i32 = arith.constant 0 : i32
    %c0_i32_0 = arith.constant 0 : i32
    %c0_i32_1 = arith.constant 0 : i32
    return %c0_i32, %c0_i32_0 : i32, i32
  }
  func.func @transform_3(%arg0: i32) -> (i32, i32, i32) {
    %c0_i32 = arith.constant 0 : i32
    %c0_i32_0 = arith.constant 0 : i32
    %c0_i32_1 = arith.constant 0 : i32
    return %arg0, %c0_i32, %c0_i32_0 : i32, i32, i32
  }
}

</mosaic_0001>

<llo_original>
// kernel: fg_function_forward.5
$region0: #{fg_function_forward.5}
  #allocation0 [shape = 'u32[]', space=smem, size = 0x4, offset = 0x4, fixed_abs, tag = 'smem constant byte address 0x4 - core index']
  #allocation1 [shape = 'u32[72,128]{1,0:T(1,128)}', space=vmem, size = 0x9000, scoped, tag = 'internal scratch']
  %s0 = inlined_call_operand.vmem [shape: bf16[2,256,128], index: 0, kind: input, shape index: {}]
  %s1 = inlined_call_operand.vmem [shape: f32[1,128], index: 1, kind: input, shape index: {}]
  %s2 = inlined_call_operand.vmem [shape: f32[1,128], index: 2, kind: input, shape index: {}]
  %s3 = inlined_call_operand.vmem [shape: f32[2,256,128], index: 3, kind: output, shape index: {}]
  %s4 = sld [smem:[#allocation0]]
  $region45: #{fg_function_forward.5} parent=0
    _
  %s6 = ssub.s32 1, %s4
  %s7 = scalar_select 0, %s6, %s4
  loop: start=0, step=1, limit=4
  $region2: #{fg_function_forward.5} parent=0 // loop_pre_header
    _
  $region3: #{fg_function_forward.5} parent=0 // loop_header
    %s9 = sphi 0, %s13
    %p10 = scmp.ge.s32.totalorder %s9, 4
    %s19 = sphi 0, %s21
    %s22 = sphi 0, %s19
    %s23 = sphi 0, %s22
    %s39 = sphi 0, %s23
    %s43 = sphi 0, %s43
    %s45 = sphi 0, %s43
    %s46 = sphi 0, %s45
    %s60 = sphi 0, %s46
    %s64 = sphi 0, %s64
    %s66 = sphi 0, %s64
    %s67 = sphi 0, %s66
    %s81 = sphi 0, %s67
    %s87 = sphi 0, %s89
    %s90 = sphi 0, %s87
    %s91 = sphi 0, %s90
    %s107 = sphi 0, %s91
  $region4: #{fg_function_forward.5} parent=0 // loop_header_branch
    %12 = sbr.rel (%p10) target = $region8
  $region5: #{fg_function_forward.5} parent=0 // loop_body
    %s14 = ssub.s32 %s9, 1
    %s15 = ssub.s32 %s9, 2
    %s16 = sadd.s32 %s9, 1
    %s17 = ssub.s32 %s9, %s16
    %p18 = scmp.eq.s32.totalorder %s17, 0
    %s20 = sadd.s32 %s19, 1
    %s21 = scalar_select %p18, %s19, %s20
    %p24 = pneg %p18
    %p25 = scmp.eq.s32.totalorder %s9, 1
    %p26 = por %p24, %p25
    %p27 = scmp.ne.s32.totalorder %s19, %s22
    %p28 = scmp.eq.s32.totalorder %s9, 0
    %p29 = por %p27, %p28
    %p30 = scmp.ne.s32.totalorder %s19, %s22
    %p31 = scmp.eq.s32.totalorder %s14, 1
    %p32 = por %p30, %p31
    %p33 = scmp.ne.s32.totalorder %s22, %s23
    %p34 = scmp.eq.s32.totalorder %s14, 0
    %p35 = por %p33, %p34
    %p36 = scmp.ne.s32.totalorder %s22, %s23
    %p37 = scmp.eq.s32.totalorder %s15, 1
    %p38 = por %p36, %p37
    %p40 = scmp.ne.s32.totalorder %s23, %s39
    %p41 = scmp.eq.s32.totalorder %s15, 0
    %p42 = por %p40, %p41
    %s44 = sadd.s32 %s43, 1
    %p47 = scmp.eq.s32.totalorder %s9, 1
    %p48 = scmp.ne.s32.totalorder %s43, %s45
    %p49 = scmp.eq.s32.totalorder %s9, 0
    %p50 = por %p48, %p49
    %p51 = scmp.ne.s32.totalorder %s43, %s45
    %p52 = scmp.eq.s32.totalorder %s14, 1
    %p53 = por %p51, %p52
    %p54 = scmp.ne.s32.totalorder %s45, %s46
    %p55 = scmp.eq.s32.totalorder %s14, 0
    %p56 = por %p54, %p55
    %p57 = scmp.ne.s32.totalorder %s45, %s46
    %p58 = scmp.eq.s32.totalorder %s15, 1
    %p59 = por %p57, %p58
    %p61 = scmp.ne.s32.totalorder %s46, %s60
    %p62 = scmp.eq.s32.totalorder %s15, 0
    %p63 = por %p61, %p62
    %s65 = sadd.s32 %s64, 1
    %p68 = scmp.eq.s32.totalorder %s9, 1
    %p69 = scmp.ne.s32.totalorder %s64, %s66
    %p70 = scmp.eq.s32.totalorder %s9, 0
    %p71 = por %p69, %p70
    %p72 = scmp.ne.s32.totalorder %s64, %s66
    %p73 = scmp.eq.s32.totalorder %s14, 1
    %p74 = por %p72, %p73
    %p75 = scmp.ne.s32.totalorder %s66, %s67
    %p76 = scmp.eq.s32.totalorder %s14, 0
    %p77 = por %p75, %p76
    %p78 = scmp.ne.s32.totalorder %s66, %s67
    %p79 = scmp.eq.s32.totalorder %s15, 1
    %p80 = por %p78, %p79
    %p82 = scmp.ne.s32.totalorder %s67, %s81
    %p83 = scmp.eq.s32.totalorder %s15, 0
    %p84 = por %p82, %p83
    %s85 = ssub.s32 %s9, %s16
    %p86 = scmp.eq.s32.totalorder %s85, 0
    %s88 = sadd.s32 %s87, 1
    %s89 = scalar_select %p86, %s87, %s88
    %p92 = pneg %p86
    %p93 = scmp.eq.s32.totalorder %s9, 1
    %p94 = por %p92, %p93
    %p95 = scmp.ne.s32.totalorder %s87, %s90
    %p96 = scmp.eq.s32.totalorder %s9, 0
    %p97 = por %p95, %p96
    %p98 = scmp.ne.s32.totalorder %s87, %s90
    %p99 = scmp.eq.s32.totalorder %s14, 1
    %p100 = por %p98, %p99
    %p101 = scmp.ne.s32.totalorder %s90, %s91
    %p102 = scmp.eq.s32.totalorder %s14, 0
    %p103 = por %p101, %p102
    %p104 = scmp.ne.s32.totalorder %s90, %s91
    %p105 = scmp.eq.s32.totalorder %s15, 1
    %p106 = por %p104, %p105
    %p108 = scmp.ne.s32.totalorder %s91, %s107
    %p109 = scmp.eq.s32.totalorder %s15, 0
    %p110 = por %p108, %p109
    %p111 = scmp.le.s32.totalorder 1, %s9
    %p112 = scmp.lt.s32.totalorder %s9, 3
    %p113 = pnand %p111, %p112
    %p114 = pneg %p113
    // Predicated region
    $region9: #{fg_function_forward.5} parent=5 // pred_check
      _
    $region10: #{fg_function_forward.5} parent=5 // pred_check_branch
      %116 = sbr.rel (%p113) target = $region12
    $region11: #{fg_function_forward.5} parent=5 // pred_region
      %s117 = ssub.s32 %s9, 1
      // Predicated region
      $region13: #{fg_function_forward.5} parent=11 // pred_check
        %p118 = pneg %p56
      $region14: #{fg_function_forward.5} parent=11 // pred_check_branch
        %120 = sbr.rel (%p118) target = $region16
      $region15: #{fg_function_forward.5} parent=11 // pred_region
        _
      $region16: #{fg_function_forward.5} parent=11 // pred_fallthru
        _
      // Predicated region
      $region17: #{fg_function_forward.5} parent=11 // pred_check
        %p121 = pneg %p77
      $region18: #{fg_function_forward.5} parent=11 // pred_check_branch
        %123 = sbr.rel (%p121) target = $region20
      $region19: #{fg_function_forward.5} parent=11 // pred_region
        _
      $region20: #{fg_function_forward.5} parent=11 // pred_fallthru
        _
    $region12: #{fg_function_forward.5} parent=5 // pred_fallthru
      _
    %p124 = scmp.lt.s32.totalorder %s9, 2
    // Predicated region
    $region21: #{fg_function_forward.5} parent=5 // pred_check
      %p125 = pneg %p124
    $region22: #{fg_function_forward.5} parent=5 // pred_check_branch
      %127 = sbr.rel (%p125) target = $region24
    $region23: #{fg_function_forward.5} parent=5 // pred_region
      // Predicated region
      $region25: #{fg_function_forward.5} parent=23 // pred_check
        %p128 = pneg %p29
      $region26: #{fg_function_forward.5} parent=23 // pred_check_branch
        %130 = sbr.rel (%p128) target = $region28
      $region27: #{fg_function_forward.5} parent=23 // pred_region
        %p131 = scmp.lt.s32.totalorder %s9, 1
        %s132 = scalar_select %p131, %s9, 1
        %s133 = smul.addr %s132, 32
        %s134 = smul.addr %s133, 4
        %s135 = scalar_lea.vmem %s0, %s134
      $region28: #{fg_function_forward.5} parent=23 // pred_fallthru
        _
    $region24: #{fg_function_forward.5} parent=5 // pred_fallthru
      _
    %p136 = scmp.le.s32.totalorder 1, %s9
    %p137 = scmp.lt.s32.totalorder %s9, 3
    %p138 = pnand %p136, %p137
    %p139 = pneg %p138
    // Predicated region
    $region29: #{fg_function_forward.5} parent=5 // pred_check
      _
    $region30: #{fg_function_forward.5} parent=5 // pred_check_branch
      %141 = sbr.rel (%p138) target = $region32
    $region31: #{fg_function_forward.5} parent=5 // pred_region
      %s142 = ssub.s32 %s9, 1
      %p143 = scmp.lt.s32.totalorder %s14, 1
      %s144 = scalar_select %p143, %s14, 1
      %s145 = smul.addr %s144, 32
      %s146 = smul.addr %s145, 4
      %s147 = scalar_lea.vmem %s0, %s146
      %p148 = pneg %p35
      %p149 = pneg %p32
      %p150 = pneg %p56
      %p151 = pneg %p53
      %p152 = pneg %p77
      %p153 = pneg %p74
      %p154 = pneg %p103
      %p155 = pneg %p100
      %p156 = scmp.lt.s32.totalorder %s14, 1
      %s157 = scalar_select %p156, %s14, 1
      %s158 = smul.addr %s157, 32
      %s159 = smul.addr %s158, 8
      %s160 = scalar_lea.vmem %s3, %s159
      %p161 = scmp.lt.s32.totalorder %s14, 1
      %s162 = scalar_select %p161, %s14, 1
      %s163 = smul.addr %s162, 32
      %s164 = smul.addr %s163, 4
      %s165 = scalar_lea.vmem %s0, %s164
      %p166 = scmp.lt.s32.totalorder %s14, 1
      %s167 = scalar_select %p166, %s14, 1
      %s168 = smul.addr %s167, 32
      %s169 = smul.addr %s168, 8
      %s170 = scalar_lea.vmem %s3, %s169
      %v171 = vld [vmem:[%s165] sm:$0xf]
      %v172 = vld [vmem:[%s165 + $0x4] sm:$0xf]
      %v173 = vld [vmem:[%s165 + $0x8] sm:$0xf]
      %v174 = vld [vmem:[%s165 + $0xc] sm:$0xf]
      %v175 = vld [vmem:[%s165 + $0x10] sm:$0xf]
      %v176 = vld [vmem:[%s165 + $0x14] sm:$0xf]
      %v177 = vld [vmem:[%s165 + $0x18] sm:$0xf]
      %v178 = vld [vmem:[%s165 + $0x1c] sm:$0xf]
      %v179 = vld [vmem:[%s165 + $0x20] sm:$0xf]
      %v180 = vld [vmem:[%s165 + $0x24] sm:$0xf]
      %v181 = vld [vmem:[%s165 + $0x28] sm:$0xf]
      %v182 = vld [vmem:[%s165 + $0x2c] sm:$0xf]
      %v183 = vld [vmem:[%s165 + $0x30] sm:$0xf]
      %v184 = vld [vmem:[%s165 + $0x34] sm:$0xf]
      %v185 = vld [vmem:[%s165 + $0x38] sm:$0xf]
      %v186 = vld [vmem:[%s165 + $0x3c] sm:$0xf]
      %v187 = vld [vmem:[%s165 + $0x40] sm:$0xf]
      %v188 = vld [vmem:[%s165 + $0x44] sm:$0xf]
      %v189 = vld [vmem:[%s165 + $0x48] sm:$0xf]
      %v190 = vld [vmem:[%s165 + $0x4c] sm:$0xf]
      %v191 = vld [vmem:[%s165 + $0x50] sm:$0xf]
      %v192 = vld [vmem:[%s165 + $0x54] sm:$0xf]
      %v193 = vld [vmem:[%s165 + $0x58] sm:$0xf]
      %v194 = vld [vmem:[%s165 + $0x5c] sm:$0xf]
      %v195 = vld [vmem:[%s165 + $0x60] sm:$0xf]
      %v196 = vld [vmem:[%s165 + $0x64] sm:$0xf]
      %v197 = vld [vmem:[%s165 + $0x68] sm:$0xf]
      %v198 = vld [vmem:[%s165 + $0x6c] sm:$0xf]
      %v199 = vld [vmem:[%s165 + $0x70] sm:$0xf]
      %v200 = vld [vmem:[%s165 + $0x74] sm:$0xf]
      %v201 = vld [vmem:[%s165 + $0x78] sm:$0xf]
      %v202 = vld [vmem:[%s165 + $0x7c] sm:$0xf]
      %v203 = vunpack.c.l.bf16 %v171
      %v204 = vunpack.c.l.bf16 %v172
      %v205 = vunpack.c.l.bf16 %v173
      %v206 = vunpack.c.l.bf16 %v174
      %v207 = vunpack.c.l.bf16 %v175
      %v208 = vunpack.c.l.bf16 %v176
      %v209 = vunpack.c.l.bf16 %v177
      %v210 = vunpack.c.l.bf16 %v178
      %v211 = vunpack.c.l.bf16 %v179
      %v212 = vunpack.c.l.bf16 %v180
      %v213 = vunpack.c.l.bf16 %v181
      %v214 = vunpack.c.l.bf16 %v182
      %v215 = vunpack.c.l.bf16 %v183
      %v216 = vunpack.c.l.bf16 %v184
      %v217 = vunpack.c.l.bf16 %v185
      %v218 = vunpack.c.l.bf16 %v186
      %v219 = vunpack.c.l.bf16 %v187
      %v220 = vunpack.c.l.bf16 %v188
      %v221 = vunpack.c.l.bf16 %v189
      %v222 = vunpack.c.l.bf16 %v190
      %v223 = vunpack.c.l.bf16 %v191
      %v224 = vunpack.c.l.bf16 %v192
      %v225 = vunpack.c.l.bf16 %v193
      %v226 = vunpack.c.l.bf16 %v194
      %v227 = vunpack.c.l.bf16 %v195
      %v228 = vunpack.c.l.bf16 %v196
      %v229 = vunpack.c.l.bf16 %v197
      %v230 = vunpack.c.l.bf16 %v198
      %v231 = vunpack.c.l.bf16 %v199
      %v232 = vunpack.c.l.bf16 %v200
      %v233 = vunpack.c.l.bf16 %v201
      %v234 = vunpack.c.l.bf16 %v202
      %v235 = vld [vmem:[%s1] sm:$0x1]
      %v237 = vperm.slane %v235, 0
      %v239 = vmul.f32 %v203, %v237
      %v240 = vmul.f32 %v204, %v237
      %v241 = vmul.f32 %v205, %v237
      %v242 = vmul.f32 %v206, %v237
      %v243 = vmul.f32 %v207, %v237
      %v244 = vmul.f32 %v208, %v237
      %v245 = vmul.f32 %v209, %v237
      %v246 = vmul.f32 %v210, %v237
      %v247 = vmul.f32 %v211, %v237
      %v248 = vmul.f32 %v212, %v237
      %v249 = vmul.f32 %v213, %v237
      %v250 = vmul.f32 %v214, %v237
      %v251 = vmul.f32 %v215, %v237
      %v252 = vmul.f32 %v216, %v237
      %v253 = vmul.f32 %v217, %v237
      %v254 = vmul.f32 %v218, %v237
      %v255 = vmul.f32 %v219, %v237
      %v256 = vmul.f32 %v220, %v237
      %v257 = vmul.f32 %v221, %v237
      %v258 = vmul.f32 %v222, %v237
      %v259 = vmul.f32 %v223, %v237
      %v260 = vmul.f32 %v224, %v237
      %v261 = vmul.f32 %v225, %v237
      %v262 = vmul.f32 %v226, %v237
      %v263 = vmul.f32 %v227, %v237
      %v264 = vmul.f32 %v228, %v237
      %v265 = vmul.f32 %v229, %v237
      %v266 = vmul.f32 %v230, %v237
      %v267 = vmul.f32 %v231, %v237
      %v268 = vmul.f32 %v232, %v237
      %v269 = vmul.f32 %v233, %v237
      %v270 = vmul.f32 %v234, %v237
      %v271 = vld [vmem:[%s2] sm:$0x1]
      %v273 = vperm.slane %v271, 0
      %v275 = vadd.f32 %v239, %v273
      %v276 = vadd.f32 %v240, %v273
      %v277 = vadd.f32 %v241, %v273
      %v278 = vadd.f32 %v242, %v273
      %v279 = vadd.f32 %v243, %v273
      %v280 = vadd.f32 %v244, %v273
      %v281 = vadd.f32 %v245, %v273
      %v282 = vadd.f32 %v246, %v273
      %v283 = vadd.f32 %v247, %v273
      %v284 = vadd.f32 %v248, %v273
      %v285 = vadd.f32 %v249, %v273
      %v286 = vadd.f32 %v250, %v273
      %v287 = vadd.f32 %v251, %v273
      %v288 = vadd.f32 %v252, %v273
      %v289 = vadd.f32 %v253, %v273
      %v290 = vadd.f32 %v254, %v273
      %v291 = vadd.f32 %v255, %v273
      %v292 = vadd.f32 %v256, %v273
      %v293 = vadd.f32 %v257, %v273
      %v294 = vadd.f32 %v258, %v273
      %v295 = vadd.f32 %v259, %v273
      %v296 = vadd.f32 %v260, %v273
      %v297 = vadd.f32 %v261, %v273
      %v298 = vadd.f32 %v262, %v273
      %v299 = vadd.f32 %v263, %v273
      %v300 = vadd.f32 %v264, %v273
      %v301 = vadd.f32 %v265, %v273
      %v302 = vadd.f32 %v266, %v273
      %v303 = vadd.f32 %v267, %v273
      %v304 = vadd.f32 %v268, %v273
      %v305 = vadd.f32 %v269, %v273
      %v306 = vadd.f32 %v270, %v273
      %vm307 = vcmp.ge.f32.partialorder %v275, 0.0
      %vm308 = vcmp.ge.f32.partialorder %v276, 0.0
      %vm309 = vcmp.ge.f32.partialorder %v277, 0.0
      %vm310 = vcmp.ge.f32.partialorder %v278, 0.0
      %vm311 = vcmp.ge.f32.partialorder %v279, 0.0
      %vm312 = vcmp.ge.f32.partialorder %v280, 0.0
      %vm313 = vcmp.ge.f32.partialorder %v281, 0.0
      %vm314 = vcmp.ge.f32.partialorder %v282, 0.0
      %vm315 = vcmp.ge.f32.partialorder %v283, 0.0
      %vm316 = vcmp.ge.f32.partialorder %v284, 0.0
      %vm317 = vcmp.ge.f32.partialorder %v285, 0.0
      %vm318 = vcmp.ge.f32.partialorder %v286, 0.0
      %vm319 = vcmp.ge.f32.partialorder %v287, 0.0
      %vm320 = vcmp.ge.f32.partialorder %v288, 0.0
      %vm321 = vcmp.ge.f32.partialorder %v289, 0.0
      %vm322 = vcmp.ge.f32.partialorder %v290, 0.0
      %vm323 = vcmp.ge.f32.partialorder %v291, 0.0
      %vm324 = vcmp.ge.f32.partialorder %v292, 0.0
      %vm325 = vcmp.ge.f32.partialorder %v293, 0.0
      %vm326 = vcmp.ge.f32.partialorder %v294, 0.0
      %vm327 = vcmp.ge.f32.partialorder %v295, 0.0
      %vm328 = vcmp.ge.f32.partialorder %v296, 0.0
      %vm329 = vcmp.ge.f32.partialorder %v297, 0.0
      %vm330 = vcmp.ge.f32.partialorder %v298, 0.0
      %vm331 = vcmp.ge.f32.partialorder %v299, 0.0
      %vm332 = vcmp.ge.f32.partialorder %v300, 0.0
      %vm333 = vcmp.ge.f32.partialorder %v301, 0.0
      %vm334 = vcmp.ge.f32.partialorder %v302, 0.0
      %vm335 = vcmp.ge.f32.partialorder %v303, 0.0
      %vm336 = vcmp.ge.f32.partialorder %v304, 0.0
      %vm337 = vcmp.ge.f32.partialorder %v305, 0.0
      %vm338 = vcmp.ge.f32.partialorder %v306, 0.0
      %v339 = vmul.f32 %v275, 0.01
      %v340 = vmul.f32 %v276, 0.01
      %v341 = vmul.f32 %v277, 0.01
      %v342 = vmul.f32 %v278, 0.01
      %v343 = vmul.f32 %v279, 0.01
      %v344 = vmul.f32 %v280, 0.01
      %v345 = vmul.f32 %v281, 0.01
      %v346 = vmul.f32 %v282, 0.01
      %v347 = vmul.f32 %v283, 0.01
      %v348 = vmul.f32 %v284, 0.01
      %v349 = vmul.f32 %v285, 0.01
      %v350 = vmul.f32 %v286, 0.01
      %v351 = vmul.f32 %v287, 0.01
      %v352 = vmul.f32 %v288, 0.01
      %v353 = vmul.f32 %v289, 0.01
      %v354 = vmul.f32 %v290, 0.01
      %v355 = vmul.f32 %v291, 0.01
      %v356 = vmul.f32 %v292, 0.01
      %v357 = vmul.f32 %v293, 0.01
      %v358 = vmul.f32 %v294, 0.01
      %v359 = vmul.f32 %v295, 0.01
      %v360 = vmul.f32 %v296, 0.01
      %v361 = vmul.f32 %v297, 0.01
      %v362 = vmul.f32 %v298, 0.01
      %v363 = vmul.f32 %v299, 0.01
      %v364 = vmul.f32 %v300, 0.01
      %v365 = vmul.f32 %v301, 0.01
      %v366 = vmul.f32 %v302, 0.01
      %v367 = vmul.f32 %v303, 0.01
      %v368 = vmul.f32 %v304, 0.01
      %v369 = vmul.f32 %v305, 0.01
      %v370 = vmul.f32 %v306, 0.01
      %v371 = vsel %vm307, %v275, %v339
      %v372 = vsel %vm308, %v276, %v340
      %v373 = vsel %vm309, %v277, %v341
      %v374 = vsel %vm310, %v278, %v342
      %v375 = vsel %vm311, %v279, %v343
      %v376 = vsel %vm312, %v280, %v344
      %v377 = vsel %vm313, %v281, %v345
      %v378 = vsel %vm314, %v282, %v346
      %v379 = vsel %vm315, %v283, %v347
      %v380 = vsel %vm316, %v284, %v348
      %v381 = vsel %vm317, %v285, %v349
      %v382 = vsel %vm318, %v286, %v350
      %v383 = vsel %vm319, %v287, %v351
      %v384 = vsel %vm320, %v288, %v352
      %v385 = vsel %vm321, %v289, %v353
      %v386 = vsel %vm322, %v290, %v354
      %v387 = vsel %vm323, %v291, %v355
      %v388 = vsel %vm324, %v292, %v356
      %v389 = vsel %vm325, %v293, %v357
      %v390 = vsel %vm326, %v294, %v358
      %v391 = vsel %vm327, %v295, %v359
      %v392 = vsel %vm328, %v296, %v360
      %v393 = vsel %vm329, %v297, %v361
      %v394 = vsel %vm330, %v298, %v362
      %v395 = vsel %vm331, %v299, %v363
      %v396 = vsel %vm332, %v300, %v364
      %v397 = vsel %vm333, %v301, %v365
      %v398 = vsel %vm334, %v302, %v366
      %v399 = vsel %vm335, %v303, %v367
      %v400 = vsel %vm336, %v304, %v368
      %v401 = vsel %vm337, %v305, %v369
      %v402 = vsel %vm338, %v306, %v370
      %403 = vst [vmem:[%s170] sm:$0xff] %v371
      %404 = vst [vmem:[%s170 + $0x8] sm:$0xff] %v372
      %405 = vst [vmem:[%s170 + $0x10] sm:$0xff] %v373
      %406 = vst [vmem:[%s170 + $0x18] sm:$0xff] %v374
      %407 = vst [vmem:[%s170 + $0x20] sm:$0xff] %v375
      %408 = vst [vmem:[%s170 + $0x28] sm:$0xff] %v376
      %409 = vst [vmem:[%s170 + $0x30] sm:$0xff] %v377
      %410 = vst [vmem:[%s170 + $0x38] sm:$0xff] %v378
      %411 = vst [vmem:[%s170 + $0x40] sm:$0xff] %v379
      %412 = vst [vmem:[%s170 + $0x48] sm:$0xff] %v380
      %413 = vst [vmem:[%s170 + $0x50] sm:$0xff] %v381
      %414 = vst [vmem:[%s170 + $0x58] sm:$0xff] %v382
      %415 = vst [vmem:[%s170 + $0x60] sm:$0xff] %v383
      %416 = vst [vmem:[%s170 + $0x68] sm:$0xff] %v384
      %417 = vst [vmem:[%s170 + $0x70] sm:$0xff] %v385
      %418 = vst [vmem:[%s170 + $0x78] sm:$0xff] %v386
      %419 = vst [vmem:[%s170 + $0x80] sm:$0xff] %v387
      %420 = vst [vmem:[%s170 + $0x88] sm:$0xff] %v388
      %421 = vst [vmem:[%s170 + $0x90] sm:$0xff] %v389
      %422 = vst [vmem:[%s170 + $0x98] sm:$0xff] %v390
      %423 = vst [vmem:[%s170 + $0xa0] sm:$0xff] %v391
      %424 = vst [vmem:[%s170 + $0xa8] sm:$0xff] %v392
      %425 = vst [vmem:[%s170 + $0xb0] sm:$0xff] %v393
      %426 = vst [vmem:[%s170 + $0xb8] sm:$0xff] %v394
      %427 = vst [vmem:[%s170 + $0xc0] sm:$0xff] %v395
      %428 = vst [vmem:[%s170 + $0xc8] sm:$0xff] %v396
      %429 = vst [vmem:[%s170 + $0xd0] sm:$0xff] %v397
      %430 = vst [vmem:[%s170 + $0xd8] sm:$0xff] %v398
      %431 = vst [vmem:[%s170 + $0xe0] sm:$0xff] %v399
      %432 = vst [vmem:[%s170 + $0xe8] sm:$0xff] %v400
      %433 = vst [vmem:[%s170 + $0xf0] sm:$0xff] %v401
      %434 = vst [vmem:[%s170 + $0xf8] sm:$0xff] %v402
      %p435 = scmp.lt.s32.totalorder %s14, 1
      %s436 = scalar_select %p435, %s14, 1
      %s437 = smul.addr %s436, 32
      %s438 = smul.addr %s437, 8
      %s439 = scalar_lea.vmem %s3, %s438
      // Predicated region
      $region33: #{fg_function_forward.5} parent=31 // pred_check
        %p440 = pneg %p100
      $region34: #{fg_function_forward.5} parent=31 // pred_check_branch
        %442 = sbr.rel (%p440) target = $region36
      $region35: #{fg_function_forward.5} parent=31 // pred_region
        _
      $region36: #{fg_function_forward.5} parent=31 // pred_fallthru
        _
    $region32: #{fg_function_forward.5} parent=5 // pred_fallthru
      _
    %p443 = scmp.le.s32.totalorder 2, %s9
    // Predicated region
    $region37: #{fg_function_forward.5} parent=5 // pred_check
      %p444 = pneg %p443
    $region38: #{fg_function_forward.5} parent=5 // pred_check_branch
      %446 = sbr.rel (%p444) target = $region40
    $region39: #{fg_function_forward.5} parent=5 // pred_region
      %s447 = ssub.s32 %s9, 2
      // Predicated region
      $region41: #{fg_function_forward.5} parent=39 // pred_check
        %p448 = pneg %p106
      $region42: #{fg_function_forward.5} parent=39 // pred_check_branch
        %450 = sbr.rel (%p448) target = $region44
      $region43: #{fg_function_forward.5} parent=39 // pred_region
        %p451 = scmp.lt.s32.totalorder %s15, 1
        %s452 = scalar_select %p451, %s15, 1
        %s453 = smul.addr %s452, 32
        %s454 = smul.addr %s453, 8
        %s455 = scalar_lea.vmem %s3, %s454
      $region44: #{fg_function_forward.5} parent=39 // pred_fallthru
        _
    $region40: #{fg_function_forward.5} parent=5 // pred_fallthru
      _
  $region6: #{fg_function_forward.5} parent=0 // loop_footer
    %s13 = sadd.s32 1, %s9
  $region7: #{fg_function_forward.5} parent=0 // loop_footer_branch
    %8 = sbr.rel target = $region3
  $region8: #{fg_function_forward.5} parent=0 // loop_exit
    _

// kernel: fg_function_forward.3
$region0: #{fg_function_forward.3}
  #allocation0 [shape = 'u32[]', space=smem, size = 0x4, offset = 0x4, fixed_abs, tag = 'smem constant byte address 0x4 - core index']
  #allocation1 [shape = 'u32[72,128]{1,0:T(1,128)}', space=vmem, size = 0x9000, scoped, tag = 'internal scratch']
  #allocation2 [shape = 'bf16[256,1152]{1,0:T(8,128)(2,1)}', space=vmem, size = 0x90000, scoped, tag = 'scratch operand']
  %s0 = inlined_call_operand.vmem [shape: bf16[2,18,18,128], index: 0, kind: input, shape index: {}]
  %s1 = inlined_call_operand.vmem [shape: f32[1,128], index: 1, kind: input, shape index: {}]
  %s2 = inlined_call_operand.vmem [shape: f32[1,128], index: 2, kind: input, shape index: {}]
  %s3 = inlined_call_operand.vmem [shape: bf16[1152,128], index: 3, kind: input, shape index: {}]
  %s4 = inlined_call_operand.vmem [shape: bf16[2,256,128], index: 4, kind: output, shape index: {0}]
  %s5 = inlined_call_operand.vmem [shape: f32[2,2,128], index: 5, kind: output, shape index: {1}]
  %6 = xla_tuple %s4, %s5
  %s7 = sld [smem:[#allocation0]]
  $region57: #{fg_function_forward.3} parent=0
    _
  %s9 = ssub.s32 1, %s7
  %s10 = scalar_select 0, %s9, %s7
  loop: start=0, step=1, limit=4
  $region2: #{fg_function_forward.3} parent=0 // loop_pre_header
    _
  $region3: #{fg_function_forward.3} parent=0 // loop_header
    %s12 = sphi 0, %s16
    %p13 = scmp.ge.s32.totalorder %s12, 4
    %s22 = sphi 0, %s24
    %s25 = sphi 0, %s22
    %s26 = sphi 0, %s25
    %s42 = sphi 0, %s26
    %s46 = sphi 0, %s46
    %s48 = sphi 0, %s46
    %s49 = sphi 0, %s48
    %s63 = sphi 0, %s49
    %s67 = sphi 0, %s67
    %s69 = sphi 0, %s67
    %s70 = sphi 0, %s69
    %s84 = sphi 0, %s70
    %s88 = sphi 0, %s88
    %s90 = sphi 0, %s88
    %s91 = sphi 0, %s90
    %s105 = sphi 0, %s91
    %s111 = sphi 0, %s113
    %s114 = sphi 0, %s111
    %s115 = sphi 0, %s114
    %s131 = sphi 0, %s115
    %s137 = sphi 0, %s139
    %s140 = sphi 0, %s137
    %s141 = sphi 0, %s140
    %s157 = sphi 0, %s141
  $region4: #{fg_function_forward.3} parent=0 // loop_header_branch
    %15 = sbr.rel (%p13) target = $region8
  $region5: #{fg_function_forward.3} parent=0 // loop_body
    %s17 = ssub.s32 %s12, 1
    %s18 = ssub.s32 %s12, 2
    %s19 = sadd.s32 %s12, 1
    %s20 = ssub.s32 %s12, %s19
    %p21 = scmp.eq.s32.totalorder %s20, 0
    %s23 = sadd.s32 %s22, 1
    %s24 = scalar_select %p21, %s22, %s23
    %p27 = pneg %p21
    %p28 = scmp.eq.s32.totalorder %s12, 1
    %p29 = por %p27, %p28
    %p30 = scmp.ne.s32.totalorder %s22, %s25
    %p31 = scmp.eq.s32.totalorder %s12, 0
    %p32 = por %p30, %p31
    %p33 = scmp.ne.s32.totalorder %s22, %s25
    %p34 = scmp.eq.s32.totalorder %s17, 1
    %p35 = por %p33, %p34
    %p36 = scmp.ne.s32.totalorder %s25, %s26
    %p37 = scmp.eq.s32.totalorder %s17, 0
    %p38 = por %p36, %p37
    %p39 = scmp.ne.s32.totalorder %s25, %s26
    %p40 = scmp.eq.s32.totalorder %s18, 1
    %p41 = por %p39, %p40
    %p43 = scmp.ne.s32.totalorder %s26, %s42
    %p44 = scmp.eq.s32.totalorder %s18, 0
    %p45 = por %p43, %p44
    %s47 = sadd.s32 %s46, 1
    %p50 = scmp.eq.s32.totalorder %s12, 1
    %p51 = scmp.ne.s32.totalorder %s46, %s48
    %p52 = scmp.eq.s32.totalorder %s12, 0
    %p53 = por %p51, %p52
    %p54 = scmp.ne.s32.totalorder %s46, %s48
    %p55 = scmp.eq.s32.totalorder %s17, 1
    %p56 = por %p54, %p55
    %p57 = scmp.ne.s32.totalorder %s48, %s49
    %p58 = scmp.eq.s32.totalorder %s17, 0
    %p59 = por %p57, %p58
    %p60 = scmp.ne.s32.totalorder %s48, %s49
    %p61 = scmp.eq.s32.totalorder %s18, 1
    %p62 = por %p60, %p61
    %p64 = scmp.ne.s32.totalorder %s49, %s63
    %p65 = scmp.eq.s32.totalorder %s18, 0
    %p66 = por %p64, %p65
    %s68 = sadd.s32 %s67, 1
    %p71 = scmp.eq.s32.totalorder %s12, 1
    %p72 = scmp.ne.s32.totalorder %s67, %s69
    %p73 = scmp.eq.s32.totalorder %s12, 0
    %p74 = por %p72, %p73
    %p75 = scmp.ne.s32.totalorder %s67, %s69
    %p76 = scmp.eq.s32.totalorder %s17, 1
    %p77 = por %p75, %p76
    %p78 = scmp.ne.s32.totalorder %s69, %s70
    %p79 = scmp.eq.s32.totalorder %s17, 0
    %p80 = por %p78, %p79
    %p81 = scmp.ne.s32.totalorder %s69, %s70
    %p82 = scmp.eq.s32.totalorder %s18, 1
    %p83 = por %p81, %p82
    %p85 = scmp.ne.s32.totalorder %s70, %s84
    %p86 = scmp.eq.s32.totalorder %s18, 0
    %p87 = por %p85, %p86
    %s89 = sadd.s32 %s88, 1
    %p92 = scmp.eq.s32.totalorder %s12, 1
    %p93 = scmp.ne.s32.totalorder %s88, %s90
    %p94 = scmp.eq.s32.totalorder %s12, 0
    %p95 = por %p93, %p94
    %p96 = scmp.ne.s32.totalorder %s88, %s90
    %p97 = scmp.eq.s32.totalorder %s17, 1
    %p98 = por %p96, %p97
    %p99 = scmp.ne.s32.totalorder %s90, %s91
    %p100 = scmp.eq.s32.totalorder %s17, 0
    %p101 = por %p99, %p100
    %p102 = scmp.ne.s32.totalorder %s90, %s91
    %p103 = scmp.eq.s32.totalorder %s18, 1
    %p104 = por %p102, %p103
    %p106 = scmp.ne.s32.totalorder %s91, %s105
    %p107 = scmp.eq.s32.totalorder %s18, 0
    %p108 = por %p106, %p107
    %s109 = ssub.s32 %s12, %s19
    %p110 = scmp.eq.s32.totalorder %s109, 0
    %s112 = sadd.s32 %s111, 1
    %s113 = scalar_select %p110, %s111, %s112
    %p116 = pneg %p110
    %p117 = scmp.eq.s32.totalorder %s12, 1
    %p118 = por %p116, %p117
    %p119 = scmp.ne.s32.totalorder %s111, %s114
    %p120 = scmp.eq.s32.totalorder %s12, 0
    %p121 = por %p119, %p120
    %p122 = scmp.ne.s32.totalorder %s111, %s114
    %p123 = scmp.eq.s32.totalorder %s17, 1
    %p124 = por %p122, %p123
    %p125 = scmp.ne.s32.totalorder %s114, %s115
    %p126 = scmp.eq.s32.totalorder %s17, 0
    %p127 = por %p125, %p126
    %p128 = scmp.ne.s32.totalorder %s114, %s115
    %p129 = scmp.eq.s32.totalorder %s18, 1
    %p130 = por %p128, %p129
    %p132 = scmp.ne.s32.totalorder %s115, %s131
    %p133 = scmp.eq.s32.totalorder %s18, 0
    %p134 = por %p132, %p133
    %s135 = ssub.s32 %s12, %s19
    %p136 = scmp.eq.s32.totalorder %s135, 0
    %s138 = sadd.s32 %s137, 1
    %s139 = scalar_select %p136, %s137, %s138
    %p142 = pneg %p136
    %p143 = scmp.eq.s32.totalorder %s12, 1
    %p144 = por %p142, %p143
    %p145 = scmp.ne.s32.totalorder %s137, %s140
    %p146 = scmp.eq.s32.totalorder %s12, 0
    %p147 = por %p145, %p146
    %p148 = scmp.ne.s32.totalorder %s137, %s140
    %p149 = scmp.eq.s32.totalorder %s17, 1
    %p150 = por %p148, %p149
    %p151 = scmp.ne.s32.totalorder %s140, %s141
    %p152 = scmp.eq.s32.totalorder %s17, 0
    %p153 = por %p151, %p152
    %p154 = scmp.ne.s32.totalorder %s140, %s141
    %p155 = scmp.eq.s32.totalorder %s18, 1
    %p156 = por %p154, %p155
    %p158 = scmp.ne.s32.totalorder %s141, %s157
    %p159 = scmp.eq.s32.totalorder %s18, 0
    %p160 = por %p158, %p159
    %p161 = scmp.le.s32.totalorder 1, %s12
    %p162 = scmp.lt.s32.totalorder %s12, 3
    %p163 = pnand %p161, %p162
    %p164 = pneg %p163
    // Predicated region
    $region9: #{fg_function_forward.3} parent=5 // pred_check
      _
    $region10: #{fg_function_forward.3} parent=5 // pred_check_branch
      %166 = sbr.rel (%p163) target = $region12
    $region11: #{fg_function_forward.3} parent=5 // pred_region
      %s167 = ssub.s32 %s12, 1
      // Predicated region
      $region13: #{fg_function_forward.3} parent=11 // pred_check
        %p168 = pneg %p59
      $region14: #{fg_function_forward.3} parent=11 // pred_check_branch
        %170 = sbr.rel (%p168) target = $region16
      $region15: #{fg_function_forward.3} parent=11 // pred_region
        _
      $region16: #{fg_function_forward.3} parent=11 // pred_fallthru
        _
      // Predicated region
      $region17: #{fg_function_forward.3} parent=11 // pred_check
        %p171 = pneg %p80
      $region18: #{fg_function_forward.3} parent=11 // pred_check_branch
        %173 = sbr.rel (%p171) target = $region20
      $region19: #{fg_function_forward.3} parent=11 // pred_region
        _
      $region20: #{fg_function_forward.3} parent=11 // pred_fallthru
        _
      // Predicated region
      $region21: #{fg_function_forward.3} parent=11 // pred_check
        %p174 = pneg %p101
      $region22: #{fg_function_forward.3} parent=11 // pred_check_branch
        %176 = sbr.rel (%p174) target = $region24
      $region23: #{fg_function_forward.3} parent=11 // pred_region
        _
      $region24: #{fg_function_forward.3} parent=11 // pred_fallthru
        _
    $region12: #{fg_function_forward.3} parent=5 // pred_fallthru
      _
    %p177 = scmp.lt.s32.totalorder %s12, 2
    // Predicated region
    $region25: #{fg_function_forward.3} parent=5 // pred_check
      %p178 = pneg %p177
    $region26: #{fg_function_forward.3} parent=5 // pred_check_branch
      %180 = sbr.rel (%p178) target = $region28
    $region27: #{fg_function_forward.3} parent=5 // pred_region
      // Predicated region
      $region29: #{fg_function_forward.3} parent=27 // pred_check
        %p181 = pneg %p32
      $region30: #{fg_function_forward.3} parent=27 // pred_check_branch
        %183 = sbr.rel (%p181) target = $region32
      $region31: #{fg_function_forward.3} parent=27 // pred_region
        %p184 = scmp.lt.s32.totalorder %s12, 1
        %s185 = scalar_select %p184, %s12, 1
        %s186 = smul.addr %s185, 54
        %s187 = smul.addr %s186, 4
        %s188 = scalar_lea.vmem %s0, %s187
      $region32: #{fg_function_forward.3} parent=27 // pred_fallthru
        _
    $region28: #{fg_function_forward.3} parent=5 // pred_fallthru
      _
    %p189 = scmp.le.s32.totalorder 1, %s12
    %p190 = scmp.lt.s32.totalorder %s12, 3
    %p191 = pnand %p189, %p190
    %p192 = pneg %p191
    // Predicated region
    $region33: #{fg_function_forward.3} parent=5 // pred_check
      _
    $region34: #{fg_function_forward.3} parent=5 // pred_check_branch
      %194 = sbr.rel (%p191) target = $region36
    $region35: #{fg_function_forward.3} parent=5 // pred_region
      %s195 = ssub.s32 %s12, 1
      %p196 = scmp.lt.s32.totalorder %s17, 1
      %s197 = scalar_select %p196, %s17, 1
      %s198 = smul.addr %s197, 54
      %s199 = smul.addr %s198, 4
      %s200 = scalar_lea.vmem %s0, %s199
      %p201 = pneg %p38
      %p202 = pneg %p35
      %p203 = pneg %p59
      %p204 = pneg %p56
      %p205 = pneg %p80
      %p206 = pneg %p77
      %p207 = pneg %p101
      %p208 = pneg %p98
      %p209 = pneg %p127
      %p210 = pneg %p124
      %p211 = scmp.lt.s32.totalorder %s17, 1
      %s212 = scalar_select %p211, %s17, 1
      %s213 = smul.addr %s212, 32
      %s214 = smul.addr %s213, 4
      %s215 = scalar_lea.vmem %s4, %s214
      %p216 = pneg %p153
      %p217 = pneg %p150
      %p218 = scmp.lt.s32.totalorder %s17, 1
      %s219 = scalar_select %p218, %s17, 1
      %s220 = smul.addr %s219, 2
      %s221 = scalar_lea.vmem %s5, %s220
      %p222 = scmp.lt.s32.totalorder %s17, 1
      %s223 = scalar_select %p222, %s17, 1
      %s224 = smul.addr %s223, 54
      %s225 = smul.addr %s224, 4
      %s226 = scalar_lea.vmem %s0, %s225
      %p227 = scmp.lt.s32.totalorder %s17, 1
      %s228 = scalar_select %p227, %s17, 1
      %s229 = smul.addr %s228, 32
      %s230 = smul.addr %s229, 4
      %s231 = scalar_lea.vmem %s4, %s230
      %p232 = scmp.lt.s32.totalorder %s17, 1
      %s233 = scalar_select %p232, %s17, 1
      %s234 = smul.addr %s233, 2
      %s235 = scalar_lea.vmem %s5, %s234
      %v236 = vld [vmem:[%s226] sm:$0xf]
      %v237 = vld [vmem:[%s226 + $0x4] sm:$0xf]
      %v238 = vld [vmem:[%s226 + $0x8] sm:$0x1]
      %v239 = vld [vmem:[%s226 + $0xc] sm:$0xf]
      %v240 = vld [vmem:[%s226 + $0x10] sm:$0xf]
      %v241 = vld [vmem:[%s226 + $0x14] sm:$0x1]
      %v242 = vld [vmem:[%s226 + $0x18] sm:$0xf]
      %v243 = vld [vmem:[%s226 + $0x1c] sm:$0xf]
      %v244 = vld [vmem:[%s226 + $0x20] sm:$0x1]
      %v245 = vld [vmem:[%s226 + $0x24] sm:$0xf]
      %v246 = vld [vmem:[%s226 + $0x28] sm:$0xf]
      %v247 = vld [vmem:[%s226 + $0x2c] sm:$0x1]
      %v248 = vld [vmem:[%s226 + $0x30] sm:$0xf]
      %v249 = vld [vmem:[%s226 + $0x34] sm:$0xf]
      %v250 = vld [vmem:[%s226 + $0x38] sm:$0x1]
      %v251 = vld [vmem:[%s226 + $0x3c] sm:$0xf]
      %v252 = vld [vmem:[%s226 + $0x40] sm:$0xf]
      %v253 = vld [vmem:[%s226 + $0x44] sm:$0x1]
      %v254 = vld [vmem:[%s226 + $0x48] sm:$0xf]
      %v255 = vld [vmem:[%s226 + $0x4c] sm:$0xf]
      %v256 = vld [vmem:[%s226 + $0x50] sm:$0x1]
      %v257 = vld [vmem:[%s226 + $0x54] sm:$0xf]
      %v258 = vld [vmem:[%s226 + $0x58] sm:$0xf]
      %v259 = vld [vmem:[%s226 + $0x5c] sm:$0x1]
      %v260 = vld [vmem:[%s226 + $0x60] sm:$0xf]
      %v261 = vld [vmem:[%s226 + $0x64] sm:$0xf]
      %v262 = vld [vmem:[%s226 + $0x68] sm:$0x1]
      %v263 = vld [vmem:[%s226 + $0x6c] sm:$0xf]
      %v264 = vld [vmem:[%s226 + $0x70] sm:$0xf]
      %v265 = vld [vmem:[%s226 + $0x74] sm:$0x1]
      %v266 = vld [vmem:[%s226 + $0x78] sm:$0xf]
      %v267 = vld [vmem:[%s226 + $0x7c] sm:$0xf]
      %v268 = vld [vmem:[%s226 + $0x80] sm:$0x1]
      %v269 = vld [vmem:[%s226 + $0x84] sm:$0xf]
      %v270 = vld [vmem:[%s226 + $0x88] sm:$0xf]
      %v271 = vld [vmem:[%s226 + $0x8c] sm:$0x1]
      %v272 = vld [vmem:[%s226 + $0x90] sm:$0xf]
      %v273 = vld [vmem:[%s226 + $0x94] sm:$0xf]
      %v274 = vld [vmem:[%s226 + $0x98] sm:$0x1]
      %v275 = vld [vmem:[%s226 + $0x9c] sm:$0xf]
      %v276 = vld [vmem:[%s226 + $0xa0] sm:$0xf]
      %v277 = vld [vmem:[%s226 + $0xa4] sm:$0x1]
      %v278 = vld [vmem:[%s226 + $0xa8] sm:$0xf]
      %v279 = vld [vmem:[%s226 + $0xac] sm:$0xf]
      %v280 = vld [vmem:[%s226 + $0xb0] sm:$0x1]
      %v281 = vld [vmem:[%s226 + $0xb4] sm:$0xf]
      %v282 = vld [vmem:[%s226 + $0xb8] sm:$0xf]
      %v283 = vld [vmem:[%s226 + $0xbc] sm:$0x1]
      %v284 = vld [vmem:[%s226 + $0xc0] sm:$0xf]
      %v285 = vld [vmem:[%s226 + $0xc4] sm:$0xf]
      %v286 = vld [vmem:[%s226 + $0xc8] sm:$0x1]
      %v287 = vld [vmem:[%s226 + $0xcc] sm:$0xf]
      %v288 = vld [vmem:[%s226 + $0xd0] sm:$0xf]
      %v289 = vld [vmem:[%s226 + $0xd4] sm:$0x1]
      %290 = vst [vmem:[#allocation2] sm:$0xf] %v236
      %291 = vst [vmem:[#allocation2 + $0x24] sm:$0xf] %v237
      %292 = vst [vmem:[#allocation2 + $0x48] sm:$0xf] %v239
      %293 = vst [vmem:[#allocation2 + $0x6c] sm:$0xf] %v240
      %294 = vst [vmem:[#allocation2 + $0x90] sm:$0xf] %v242
      %295 = vst [vmem:[#allocation2 + $0xb4] sm:$0xf] %v243
      %296 = vst [vmem:[#allocation2 + $0xd8] sm:$0xf] %v245
      %297 = vst [vmem:[#allocation2 + $0xfc] sm:$0xf] %v246
      %298 = vst [vmem:[#allocation2 + $0x120] sm:$0xf] %v248
      %299 = vst [vmem:[#allocation2 + $0x144] sm:$0xf] %v249
      %300 = vst [vmem:[#allocation2 + $0x168] sm:$0xf] %v251
      %301 = vst [vmem:[#allocation2 + $0x18c] sm:$0xf] %v252
      %302 = vst [vmem:[#allocation2 + $0x1b0] sm:$0xf] %v254
      %303 = vst [vmem:[#allocation2 + $0x1d4] sm:$0xf] %v255
      %304 = vst [vmem:[#allocation2 + $0x1f8] sm:$0xf] %v257
      %305 = vst [vmem:[#allocation2 + $0x21c] sm:$0xf] %v258
      %306 = vst [vmem:[#allocation2 + $0x240] sm:$0xf] %v260
      %307 = vst [vmem:[#allocation2 + $0x264] sm:$0xf] %v261
      %308 = vst [vmem:[#allocation2 + $0x288] sm:$0xf] %v263
      %309 = vst [vmem:[#allocation2 + $0x2ac] sm:$0xf] %v264
      %310 = vst [vmem:[#allocation2 + $0x2d0] sm:$0xf] %v266
      %311 = vst [vmem:[#allocation2 + $0x2f4] sm:$0xf] %v267
      %312 = vst [vmem:[#allocation2 + $0x318] sm:$0xf] %v269
      %313 = vst [vmem:[#allocation2 + $0x33c] sm:$0xf] %v270
      %314 = vst [vmem:[#allocation2 + $0x360] sm:$0xf] %v272
      %315 = vst [vmem:[#allocation2 + $0x384] sm:$0xf] %v273
      %316 = vst [vmem:[#allocation2 + $0x3a8] sm:$0xf] %v275
      %317 = vst [vmem:[#allocation2 + $0x3cc] sm:$0xf] %v276
      %318 = vst [vmem:[#allocation2 + $0x3f0] sm:$0xf] %v278
      %319 = vst [vmem:[#allocation2 + $0x414] sm:$0xf] %v279
      %320 = vst [vmem:[#allocation2 + $0x438] sm:$0xf] %v281
      %321 = vst [vmem:[#allocation2 + $0x45c] sm:$0xf] %v282
      %vm322 = vsmask.f32 3328
      %vm323 = vsmask.f32 7440
      %vm324 = vmor %vm322, %vm323
      %v326 = vshrl.u32 %v236, 16
      %v328 = vrot.slane %v326, 4
      %v329 = vshll.u32 %v236, 16
      %v331 = vrot.slane %v329, 5
      %v332 = vor.u32 %v328, %v331
      %v333 = vrot.slane %v332, 4
      %v335 = vshll.u32 %v237, 16
      %v337 = vrot.slane %v335, 5
      %v338 = vsel %vm324, %v333, %v337
      %v339 = vshrl.u32 %v237, 16
      %v341 = vrot.slane %v339, 4
      %v342 = vor.u32 %v341, %v337
      %v343 = vrot.slane %v342, 4
      %v345 = vshll.u32 %v238, 16
      %v347 = vrot.slane %v345, 5
      %v348 = vsel %vm324, %v343, %v347
      %v350 = vshrl.u32 %v239, 16
      %v352 = vrot.slane %v350, 4
      %v353 = vshll.u32 %v239, 16
      %v355 = vrot.slane %v353, 5
      %v356 = vor.u32 %v352, %v355
      %v357 = vrot.slane %v356, 4
      %v359 = vshll.u32 %v240, 16
      %v361 = vrot.slane %v359, 5
      %v362 = vsel %vm324, %v357, %v361
      %v363 = vshrl.u32 %v240, 16
      %v365 = vrot.slane %v363, 4
      %v366 = vor.u32 %v365, %v361
      %v367 = vrot.slane %v366, 4
      %v369 = vshll.u32 %v241, 16
      %v371 = vrot.slane %v369, 5
      %v372 = vsel %vm324, %v367, %v371
      %v374 = vshrl.u32 %v242, 16
      %v376 = vrot.slane %v374, 4
      %v377 = vshll.u32 %v242, 16
      %v379 = vrot.slane %v377, 5
      %v380 = vor.u32 %v376, %v379
      %v381 = vrot.slane %v380, 4
      %v383 = vshll.u32 %v243, 16
      %v385 = vrot.slane %v383, 5
      %v386 = vsel %vm324, %v381, %v385
      %v387 = vshrl.u32 %v243, 16
      %v389 = vrot.slane %v387, 4
      %v390 = vor.u32 %v389, %v385
      %v391 = vrot.slane %v390, 4
      %v393 = vshll.u32 %v244, 16
      %v395 = vrot.slane %v393, 5
      %v396 = vsel %vm324, %v391, %v395
      %v398 = vshrl.u32 %v245, 16
      %v400 = vrot.slane %v398, 4
      %v401 = vshll.u32 %v245, 16
      %v403 = vrot.slane %v401, 5
      %v404 = vor.u32 %v400, %v403
      %v405 = vrot.slane %v404, 4
      %v407 = vshll.u32 %v246, 16
      %v409 = vrot.slane %v407, 5
      %v410 = vsel %vm324, %v405, %v409
      %v411 = vshrl.u32 %v246, 16
      %v413 = vrot.slane %v411, 4
      %v414 = vor.u32 %v413, %v409
      %v415 = vrot.slane %v414, 4
      %v417 = vshll.u32 %v247, 16
      %v419 = vrot.slane %v417, 5
      %v420 = vsel %vm324, %v415, %v419
      %v422 = vshrl.u32 %v248, 16
      %v424 = vrot.slane %v422, 4
      %v425 = vshll.u32 %v248, 16
      %v427 = vrot.slane %v425, 5
      %v428 = vor.u32 %v424, %v427
      %v429 = vrot.slane %v428, 4
      %v431 = vshll.u32 %v249, 16
      %v433 = vrot.slane %v431, 5
      %v434 = vsel %vm324, %v429, %v433
      %v435 = vshrl.u32 %v249, 16
      %v437 = vrot.slane %v435, 4
      %v438 = vor.u32 %v437, %v433
      %v439 = vrot.slane %v438, 4
      %v441 = vshll.u32 %v250, 16
      %v443 = vrot.slane %v441, 5
      %v444 = vsel %vm324, %v439, %v443
      %v446 = vshrl.u32 %v251, 16
      %v448 = vrot.slane %v446, 4
      %v449 = vshll.u32 %v251, 16
      %v451 = vrot.slane %v449, 5
      %v452 = vor.u32 %v448, %v451
      %v453 = vrot.slane %v452, 4
      %v455 = vshll.u32 %v252, 16
      %v457 = vrot.slane %v455, 5
      %v458 = vsel %vm324, %v453, %v457
      %v459 = vshrl.u32 %v252, 16
      %v461 = vrot.slane %v459, 4
      %v462 = vor.u32 %v461, %v457
      %v463 = vrot.slane %v462, 4
      %v465 = vshll.u32 %v253, 16
      %v467 = vrot.slane %v465, 5
      %v468 = vsel %vm324, %v463, %v467
      %v470 = vshrl.u32 %v254, 16
      %v472 = vrot.slane %v470, 4
      %v473 = vshll.u32 %v254, 16
      %v475 = vrot.slane %v473, 5
      %v476 = vor.u32 %v472, %v475
      %v477 = vrot.slane %v476, 4
      %v479 = vshll.u32 %v255, 16
      %v481 = vrot.slane %v479, 5
      %v482 = vsel %vm324, %v477, %v481
      %v483 = vshrl.u32 %v255, 16
      %v485 = vrot.slane %v483, 4
      %v486 = vor.u32 %v485, %v481
      %v487 = vrot.slane %v486, 4
      %v489 = vshll.u32 %v256, 16
      %v491 = vrot.slane %v489, 5
      %v492 = vsel %vm324, %v487, %v491
      %v494 = vshrl.u32 %v257, 16
      %v496 = vrot.slane %v494, 4
      %v497 = vshll.u32 %v257, 16
      %v499 = vrot.slane %v497, 5
      %v500 = vor.u32 %v496, %v499
      %v501 = vrot.slane %v500, 4
      %v503 = vshll.u32 %v258, 16
      %v505 = vrot.slane %v503, 5
      %v506 = vsel %vm324, %v501, %v505
      %v507 = vshrl.u32 %v258, 16
      %v509 = vrot.slane %v507, 4
      %v510 = vor.u32 %v509, %v505
      %v511 = vrot.slane %v510, 4
      %v513 = vshll.u32 %v259, 16
      %v515 = vrot.slane %v513, 5
      %v516 = vsel %vm324, %v511, %v515
      %v518 = vshrl.u32 %v260, 16
      %v520 = vrot.slane %v518, 4
      %v521 = vshll.u32 %v260, 16
      %v523 = vrot.slane %v521, 5
      %v524 = vor.u32 %v520, %v523
      %v525 = vrot.slane %v524, 4
      %v527 = vshll.u32 %v261, 16
      %v529 = vrot.slane %v527, 5
      %v530 = vsel %vm324, %v525, %v529
      %v531 = vshrl.u32 %v261, 16
      %v533 = vrot.slane %v531, 4
      %v534 = vor.u32 %v533, %v529
      %v535 = vrot.slane %v534, 4
      %v537 = vshll.u32 %v262, 16
      %v539 = vrot.slane %v537, 5
      %v540 = vsel %vm324, %v535, %v539
      %v542 = vshrl.u32 %v263, 16
      %v544 = vrot.slane %v542, 4
      %v545 = vshll.u32 %v263, 16
      %v547 = vrot.slane %v545, 5
      %v548 = vor.u32 %v544, %v547
      %v549 = vrot.slane %v548, 4
      %v551 = vshll.u32 %v264, 16
      %v553 = vrot.slane %v551, 5
      %v554 = vsel %vm324, %v549, %v553
      %v555 = vshrl.u32 %v264, 16
      %v557 = vrot.slane %v555, 4
      %v558 = vor.u32 %v557, %v553
      %v559 = vrot.slane %v558, 4
      %v561 = vshll.u32 %v265, 16
      %v563 = vrot.slane %v561, 5
      %v564 = vsel %vm324, %v559, %v563
      %v566 = vshrl.u32 %v266, 16
      %v568 = vrot.slane %v566, 4
      %v569 = vshll.u32 %v266, 16
      %v571 = vrot.slane %v569, 5
      %v572 = vor.u32 %v568, %v571
      %v573 = vrot.slane %v572, 4
      %v575 = vshll.u32 %v267, 16
      %v577 = vrot.slane %v575, 5
      %v578 = vsel %vm324, %v573, %v577
      %v579 = vshrl.u32 %v267, 16
      %v581 = vrot.slane %v579, 4
      %v582 = vor.u32 %v581, %v577
      %v583 = vrot.slane %v582, 4
      %v585 = vshll.u32 %v268, 16
      %v587 = vrot.slane %v585, 5
      %v588 = vsel %vm324, %v583, %v587
      %v590 = vshrl.u32 %v269, 16
      %v592 = vrot.slane %v590, 4
      %v593 = vshll.u32 %v269, 16
      %v595 = vrot.slane %v593, 5
      %v596 = vor.u32 %v592, %v595
      %v597 = vrot.slane %v596, 4
      %v599 = vshll.u32 %v270, 16
      %v601 = vrot.slane %v599, 5
      %v602 = vsel %vm324, %v597, %v601
      %v603 = vshrl.u32 %v270, 16
      %v605 = vrot.slane %v603, 4
      %v606 = vor.u32 %v605, %v601
      %v607 = vrot.slane %v606, 4
      %v609 = vshll.u32 %v271, 16
      %v611 = vrot.slane %v609, 5
      %v612 = vsel %vm324, %v607, %v611
      %v614 = vshrl.u32 %v272, 16
      %v616 = vrot.slane %v614, 4
      %v617 = vshll.u32 %v272, 16
      %v619 = vrot.slane %v617, 5
      %v620 = vor.u32 %v616, %v619
      %v621 = vrot.slane %v620, 4
      %v623 = vshll.u32 %v273, 16
      %v625 = vrot.slane %v623, 5
      %v626 = vsel %vm324, %v621, %v625
      %v627 = vshrl.u32 %v273, 16
      %v629 = vrot.slane %v627, 4
      %v630 = vor.u32 %v629, %v625
      %v631 = vrot.slane %v630, 4
      %v633 = vshll.u32 %v274, 16
      %v635 = vrot.slane %v633, 5
      %v636 = vsel %vm324, %v631, %v635
      %v638 = vshrl.u32 %v275, 16
      %v640 = vrot.slane %v638, 4
      %v641 = vshll.u32 %v275, 16
      %v643 = vrot.slane %v641, 5
      %v644 = vor.u32 %v640, %v643
      %v645 = vrot.slane %v644, 4
      %v647 = vshll.u32 %v276, 16
      %v649 = vrot.slane %v647, 5
      %v650 = vsel %vm324, %v645, %v649
      %v651 = vshrl.u32 %v276, 16
      %v653 = vrot.slane %v651, 4
      %v654 = vor.u32 %v653, %v649
      %v655 = vrot.slane %v654, 4
      %v657 = vshll.u32 %v277, 16
      %v659 = vrot.slane %v657, 5
      %v660 = vsel %vm324, %v655, %v659
      %v662 = vshrl.u32 %v278, 16
      %v664 = vrot.slane %v662, 4
      %v665 = vshll.u32 %v278, 16
      %v667 = vrot.slane %v665, 5
      %v668 = vor.u32 %v664, %v667
      %v669 = vrot.slane %v668, 4
      %v671 = vshll.u32 %v279, 16
      %v673 = vrot.slane %v671, 5
      %v674 = vsel %vm324, %v669, %v673
      %v675 = vshrl.u32 %v279, 16
      %v677 = vrot.slane %v675, 4
      %v678 = vor.u32 %v677, %v673
      %v679 = vrot.slane %v678, 4
      %v681 = vshll.u32 %v280, 16
      %v683 = vrot.slane %v681, 5
      %v684 = vsel %vm324, %v679, %v683
      %v686 = vshrl.u32 %v281, 16
      %v688 = vrot.slane %v686, 4
      %v689 = vshll.u32 %v281, 16
      %v691 = vrot.slane %v689, 5
      %v692 = vor.u32 %v688, %v691
      %v693 = vrot.slane %v692, 4
      %v695 = vshll.u32 %v282, 16
      %v697 = vrot.slane %v695, 5
      %v698 = vsel %vm324, %v693, %v697
      %v699 = vshrl.u32 %v282, 16
      %v701 = vrot.slane %v699, 4
      %v702 = vor.u32 %v701, %v697
      %v703 = vrot.slane %v702, 4
      %v705 = vshll.u32 %v283, 16
      %v707 = vrot.slane %v705, 5
      %v708 = vsel %vm324, %v703, %v707
      %741 = vst [vmem:[#allocation2 + $0x4] sm:$0xf] %v338
      %742 = vst [vmem:[#allocation2 + $0x28] sm:$0xf] %v348
      %743 = vst [vmem:[#allocation2 + $0x4c] sm:$0xf] %v362
      %744 = vst [vmem:[#allocation2 + $0x70] sm:$0xf] %v372
      %745 = vst [vmem:[#allocation2 + $0x94] sm:$0xf] %v386
      %746 = vst [vmem:[#allocation2 + $0xb8] sm:$0xf] %v396
      %747 = vst [vmem:[#allocation2 + $0xdc] sm:$0xf] %v410
      %748 = vst [vmem:[#allocation2 + $0x100] sm:$0xf] %v420
      %749 = vst [vmem:[#allocation2 + $0x124] sm:$0xf] %v434
      %750 = vst [vmem:[#allocation2 + $0x148] sm:$0xf] %v444
      %751 = vst [vmem:[#allocation2 + $0x16c] sm:$0xf] %v458
      %752 = vst [vmem:[#allocation2 + $0x190] sm:$0xf] %v468
      %753 = vst [vmem:[#allocation2 + $0x1b4] sm:$0xf] %v482
      %754 = vst [vmem:[#allocation2 + $0x1d8] sm:$0xf] %v492
      %755 = vst [vmem:[#allocation2 + $0x1fc] sm:$0xf] %v506
      %756 = vst [vmem:[#allocation2 + $0x220] sm:$0xf] %v516
      %757 = vst [vmem:[#allocation2 + $0x244] sm:$0xf] %v530
      %758 = vst [vmem:[#allocation2 + $0x268] sm:$0xf] %v540
      %759 = vst [vmem:[#allocation2 + $0x28c] sm:$0xf] %v554
      %760 = vst [vmem:[#allocation2 + $0x2b0] sm:$0xf] %v564
      %761 = vst [vmem:[#allocation2 + $0x2d4] sm:$0xf] %v578
      %762 = vst [vmem:[#allocation2 + $0x2f8] sm:$0xf] %v588
      %763 = vst [vmem:[#allocation2 + $0x31c] sm:$0xf] %v602
      %764 = vst [vmem:[#allocation2 + $0x340] sm:$0xf] %v612
      %765 = vst [vmem:[#allocation2 + $0x364] sm:$0xf] %v626
      %766 = vst [vmem:[#allocation2 + $0x388] sm:$0xf] %v636
      %767 = vst [vmem:[#allocation2 + $0x3ac] sm:$0xf] %v650
      %768 = vst [vmem:[#allocation2 + $0x3d0] sm:$0xf] %v660
      %769 = vst [vmem:[#allocation2 + $0x3f4] sm:$0xf] %v674
      %770 = vst [vmem:[#allocation2 + $0x418] sm:$0xf] %v684
      %771 = vst [vmem:[#allocation2 + $0x43c] sm:$0xf] %v698
      %772 = vst [vmem:[#allocation2 + $0x460] sm:$0xf] %v708
      %vm821 = vcmask 1042432
      %vm822 = vcmask 1046532
      %vm823 = vmor %vm821, %vm822
      %v824 = vrot.slane %v236, 5
      %v825 = vrot.slane %v824, 4
      %v826 = vrot.slane %v237, 5
      %v827 = vsel %vm823, %v825, %v826
      %v828 = vrot.slane %v826, 4
      %v829 = vrot.slane %v238, 5
      %v830 = vsel %vm823, %v828, %v829
      %v831 = vrot.slane %v239, 5
      %v832 = vrot.slane %v831, 4
      %v833 = vrot.slane %v240, 5
      %v834 = vsel %vm823, %v832, %v833
      %v835 = vrot.slane %v833, 4
      %v836 = vrot.slane %v241, 5
      %v837 = vsel %vm823, %v835, %v836
      %v838 = vrot.slane %v242, 5
      %v839 = vrot.slane %v838, 4
      %v840 = vrot.slane %v243, 5
      %v841 = vsel %vm823, %v839, %v840
      %v842 = vrot.slane %v840, 4
      %v843 = vrot.slane %v244, 5
      %v844 = vsel %vm823, %v842, %v843
      %v845 = vrot.slane %v245, 5
      %v846 = vrot.slane %v845, 4
      %v847 = vrot.slane %v246, 5
      %v848 = vsel %vm823, %v846, %v847
      %v849 = vrot.slane %v847, 4
      %v850 = vrot.slane %v247, 5
      %v851 = vsel %vm823, %v849, %v850
      %v852 = vrot.slane %v248, 5
      %v853 = vrot.slane %v852, 4
      %v854 = vrot.slane %v249, 5
      %v855 = vsel %vm823, %v853, %v854
      %v856 = vrot.slane %v854, 4
      %v857 = vrot.slane %v250, 5
      %v858 = vsel %vm823, %v856, %v857
      %v859 = vrot.slane %v251, 5
      %v860 = vrot.slane %v859, 4
      %v861 = vrot.slane %v252, 5
      %v862 = vsel %vm823, %v860, %v861
      %v863 = vrot.slane %v861, 4
      %v864 = vrot.slane %v253, 5
      %v865 = vsel %vm823, %v863, %v864
      %v866 = vrot.slane %v254, 5
      %v867 = vrot.slane %v866, 4
      %v868 = vrot.slane %v255, 5
      %v869 = vsel %vm823, %v867, %v868
      %v870 = vrot.slane %v868, 4
      %v871 = vrot.slane %v256, 5
      %v872 = vsel %vm823, %v870, %v871
      %v873 = vrot.slane %v257, 5
      %v874 = vrot.slane %v873, 4
      %v875 = vrot.slane %v258, 5
      %v876 = vsel %vm823, %v874, %v875
      %v877 = vrot.slane %v875, 4
      %v878 = vrot.slane %v259, 5
      %v879 = vsel %vm823, %v877, %v878
      %v880 = vrot.slane %v260, 5
      %v881 = vrot.slane %v880, 4
      %v882 = vrot.slane %v261, 5
      %v883 = vsel %vm823, %v881, %v882
      %v884 = vrot.slane %v882, 4
      %v885 = vrot.slane %v262, 5
      %v886 = vsel %vm823, %v884, %v885
      %v887 = vrot.slane %v263, 5
      %v888 = vrot.slane %v887, 4
      %v889 = vrot.slane %v264, 5
      %v890 = vsel %vm823, %v888, %v889
      %v891 = vrot.slane %v889, 4
      %v892 = vrot.slane %v265, 5
      %v893 = vsel %vm823, %v891, %v892
      %v894 = vrot.slane %v266, 5
      %v895 = vrot.slane %v894, 4
      %v896 = vrot.slane %v267, 5
      %v897 = vsel %vm823, %v895, %v896
      %v898 = vrot.slane %v896, 4
      %v899 = vrot.slane %v268, 5
      %v900 = vsel %vm823, %v898, %v899
      %v901 = vrot.slane %v269, 5
      %v902 = vrot.slane %v901, 4
      %v903 = vrot.slane %v270, 5
      %v904 = vsel %vm823, %v902, %v903
      %v905 = vrot.slane %v903, 4
      %v906 = vrot.slane %v271, 5
      %v907 = vsel %vm823, %v905, %v906
      %v908 = vrot.slane %v272, 5
      %v909 = vrot.slane %v908, 4
      %v910 = vrot.slane %v273, 5
      %v911 = vsel %vm823, %v909, %v910
      %v912 = vrot.slane %v910, 4
      %v913 = vrot.slane %v274, 5
      %v914 = vsel %vm823, %v912, %v913
      %v915 = vrot.slane %v275, 5
      %v916 = vrot.slane %v915, 4
      %v917 = vrot.slane %v276, 5
      %v918 = vsel %vm823, %v916, %v917
      %v919 = vrot.slane %v917, 4
      %v920 = vrot.slane %v277, 5
      %v921 = vsel %vm823, %v919, %v920
      %v922 = vrot.slane %v278, 5
      %v923 = vrot.slane %v922, 4
      %v924 = vrot.slane %v279, 5
      %v925 = vsel %vm823, %v923, %v924
      %v926 = vrot.slane %v924, 4
      %v927 = vrot.slane %v280, 5
      %v928 = vsel %vm823, %v926, %v927
      %v929 = vrot.slane %v281, 5
      %v930 = vrot.slane %v929, 4
      %v931 = vrot.slane %v282, 5
      %v932 = vsel %vm823, %v930, %v931
      %v933 = vrot.slane %v931, 4
      %v934 = vrot.slane %v283, 5
      %v935 = vsel %vm823, %v933, %v934
      %968 = vst [vmem:[#allocation2 + $0x8] sm:$0xf] %v827
      %969 = vst [vmem:[#allocation2 + $0x2c] sm:$0xf] %v830
      %970 = vst [vmem:[#allocation2 + $0x50] sm:$0xf] %v834
      %971 = vst [vmem:[#allocation2 + $0x74] sm:$0xf] %v837
      %972 = vst [vmem:[#allocation2 + $0x98] sm:$0xf] %v841
      %973 = vst [vmem:[#allocation2 + $0xbc] sm:$0xf] %v844
      %974 = vst [vmem:[#allocation2 + $0xe0] sm:$0xf] %v848
      %975 = vst [vmem:[#allocation2 + $0x104] sm:$0xf] %v851
      %976 = vst [vmem:[#allocation2 + $0x128] sm:$0xf] %v855
      %977 = vst [vmem:[#allocation2 + $0x14c] sm:$0xf] %v858
      %978 = vst [vmem:[#allocation2 + $0x170] sm:$0xf] %v862
      %979 = vst [vmem:[#allocation2 + $0x194] sm:$0xf] %v865
      %980 = vst [vmem:[#allocation2 + $0x1b8] sm:$0xf] %v869
      %981 = vst [vmem:[#allocation2 + $0x1dc] sm:$0xf] %v872
      %982 = vst [vmem:[#allocation2 + $0x200] sm:$0xf] %v876
      %983 = vst [vmem:[#allocation2 + $0x224] sm:$0xf] %v879
      %984 = vst [vmem:[#allocation2 + $0x248] sm:$0xf] %v883
      %985 = vst [vmem:[#allocation2 + $0x26c] sm:$0xf] %v886
      %986 = vst [vmem:[#allocation2 + $0x290] sm:$0xf] %v890
      %987 = vst [vmem:[#allocation2 + $0x2b4] sm:$0xf] %v893
      %988 = vst [vmem:[#allocation2 + $0x2d8] sm:$0xf] %v897
      %989 = vst [vmem:[#allocation2 + $0x2fc] sm:$0xf] %v900
      %990 = vst [vmem:[#allocation2 + $0x320] sm:$0xf] %v904
      %991 = vst [vmem:[#allocation2 + $0x344] sm:$0xf] %v907
      %992 = vst [vmem:[#allocation2 + $0x368] sm:$0xf] %v911
      %993 = vst [vmem:[#allocation2 + $0x38c] sm:$0xf] %v914
      %994 = vst [vmem:[#allocation2 + $0x3b0] sm:$0xf] %v918
      %995 = vst [vmem:[#allocation2 + $0x3d4] sm:$0xf] %v921
      %996 = vst [vmem:[#allocation2 + $0x3f8] sm:$0xf] %v925
      %997 = vst [vmem:[#allocation2 + $0x41c] sm:$0xf] %v928
      %998 = vst [vmem:[#allocation2 + $0x440] sm:$0xf] %v932
      %999 = vst [vmem:[#allocation2 + $0x464] sm:$0xf] %v935
      %1000 = vst [vmem:[#allocation2 + $0xc] sm:$0xf] %v239
      %1001 = vst [vmem:[#allocation2 + $0x30] sm:$0xf] %v240
      %1002 = vst [vmem:[#allocation2 + $0x54] sm:$0xf] %v242
      %1003 = vst [vmem:[#allocation2 + $0x78] sm:$0xf] %v243
      %1004 = vst [vmem:[#allocation2 + $0x9c] sm:$0xf] %v245
      %1005 = vst [vmem:[#allocation2 + $0xc0] sm:$0xf] %v246
      %1006 = vst [vmem:[#allocation2 + $0xe4] sm:$0xf] %v248
      %1007 = vst [vmem:[#allocation2 + $0x108] sm:$0xf] %v249
      %1008 = vst [vmem:[#allocation2 + $0x12c] sm:$0xf] %v251
      %1009 = vst [vmem:[#allocation2 + $0x150] sm:$0xf] %v252
      %1010 = vst [vmem:[#allocation2 + $0x174] sm:$0xf] %v254
      %1011 = vst [vmem:[#allocation2 + $0x198] sm:$0xf] %v255
      %1012 = vst [vmem:[#allocation2 + $0x1bc] sm:$0xf] %v257
      %1013 = vst [vmem:[#allocation2 + $0x1e0] sm:$0xf] %v258
      %1014 = vst [vmem:[#allocation2 + $0x204] sm:$0xf] %v260
      %1015 = vst [vmem:[#allocation2 + $0x228] sm:$0xf] %v261
      %1016 = vst [vmem:[#allocation2 + $0x24c] sm:$0xf] %v263
      %1017 = vst [vmem:[#allocation2 + $0x270] sm:$0xf] %v264
      %1018 = vst [vmem:[#allocation2 + $0x294] sm:$0xf] %v266
      %1019 = vst [vmem:[#allocation2 + $0x2b8] sm:$0xf] %v267
      %1020 = vst [vmem:[#allocation2 + $0x2dc] sm:$0xf] %v269
      %1021 = vst [vmem:[#allocation2 + $0x300] sm:$0xf] %v270
      %1022 = vst [vmem:[#allocation2 + $0x324] sm:$0xf] %v272
      %1023 = vst [vmem:[#allocation2 + $0x348] sm:$0xf] %v273
      %1024 = vst [vmem:[#allocation2 + $0x36c] sm:$0xf] %v275
      %1025 = vst [vmem:[#allocation2 + $0x390] sm:$0xf] %v276
      %1026 = vst [vmem:[#allocation2 + $0x3b4] sm:$0xf] %v278
      %1027 = vst [vmem:[#allocation2 + $0x3d8] sm:$0xf] %v279
      %1028 = vst [vmem:[#allocation2 + $0x3fc] sm:$0xf] %v281
      %1029 = vst [vmem:[#allocation2 + $0x420] sm:$0xf] %v282
      %1030 = vst [vmem:[#allocation2 + $0x444] sm:$0xf] %v284
      %1031 = vst [vmem:[#allocation2 + $0x468] sm:$0xf] %v285
      %v1033 = vshrl.u32 %v284, 16
      %v1035 = vrot.slane %v1033, 4
      %v1036 = vshll.u32 %v284, 16
      %v1038 = vrot.slane %v1036, 5
      %v1039 = vor.u32 %v1035, %v1038
      %v1040 = vrot.slane %v1039, 4
      %v1042 = vshll.u32 %v285, 16
      %v1044 = vrot.slane %v1042, 5
      %v1045 = vsel %vm324, %v1040, %v1044
      %v1046 = vshrl.u32 %v285, 16
      %v1048 = vrot.slane %v1046, 4
      %v1049 = vor.u32 %v1048, %v1044
      %v1050 = vrot.slane %v1049, 4
      %v1052 = vshll.u32 %v286, 16
      %v1054 = vrot.slane %v1052, 5
      %v1055 = vsel %vm324, %v1050, %v1054
      %1058 = vst [vmem:[#allocation2 + $0x10] sm:$0xf] %v362
      %1059 = vst [vmem:[#allocation2 + $0x34] sm:$0xf] %v372
      %1060 = vst [vmem:[#allocation2 + $0x58] sm:$0xf] %v386
      %1061 = vst [vmem:[#allocation2 + $0x7c] sm:$0xf] %v396
      %1062 = vst [vmem:[#allocation2 + $0xa0] sm:$0xf] %v410
      %1063 = vst [vmem:[#allocation2 + $0xc4] sm:$0xf] %v420
      %1064 = vst [vmem:[#allocation2 + $0xe8] sm:$0xf] %v434
      %1065 = vst [vmem:[#allocation2 + $0x10c] sm:$0xf] %v444
      %1066 = vst [vmem:[#allocation2 + $0x130] sm:$0xf] %v458
      %1067 = vst [vmem:[#allocation2 + $0x154] sm:$0xf] %v468
      %1068 = vst [vmem:[#allocation2 + $0x178] sm:$0xf] %v482
      %1069 = vst [vmem:[#allocation2 + $0x19c] sm:$0xf] %v492
      %1070 = vst [vmem:[#allocation2 + $0x1c0] sm:$0xf] %v506
      %1071 = vst [vmem:[#allocation2 + $0x1e4] sm:$0xf] %v516
      %1072 = vst [vmem:[#allocation2 + $0x208] sm:$0xf] %v530
      %1073 = vst [vmem:[#allocation2 + $0x22c] sm:$0xf] %v540
      %1074 = vst [vmem:[#allocation2 + $0x250] sm:$0xf] %v554
      %1075 = vst [vmem:[#allocation2 + $0x274] sm:$0xf] %v564
      %1076 = vst [vmem:[#allocation2 + $0x298] sm:$0xf] %v578
      %1077 = vst [vmem:[#allocation2 + $0x2bc] sm:$0xf] %v588
      %1078 = vst [vmem:[#allocation2 + $0x2e0] sm:$0xf] %v602
      %1079 = vst [vmem:[#allocation2 + $0x304] sm:$0xf] %v612
      %1080 = vst [vmem:[#allocation2 + $0x328] sm:$0xf] %v626
      %1081 = vst [vmem:[#allocation2 + $0x34c] sm:$0xf] %v636
      %1082 = vst [vmem:[#allocation2 + $0x370] sm:$0xf] %v650
      %1083 = vst [vmem:[#allocation2 + $0x394] sm:$0xf] %v660
      %1084 = vst [vmem:[#allocation2 + $0x3b8] sm:$0xf] %v674
      %1085 = vst [vmem:[#allocation2 + $0x3dc] sm:$0xf] %v684
      %1086 = vst [vmem:[#allocation2 + $0x400] sm:$0xf] %v698
      %1087 = vst [vmem:[#allocation2 + $0x424] sm:$0xf] %v708
      %1088 = vst [vmem:[#allocation2 + $0x448] sm:$0xf] %v1045
      %1089 = vst [vmem:[#allocation2 + $0x46c] sm:$0xf] %v1055
      %v1093 = vrot.slane %v284, 5
      %v1094 = vrot.slane %v1093, 4
      %v1095 = vrot.slane %v285, 5
      %v1096 = vsel %vm823, %v1094, %v1095
      %v1097 = vrot.slane %v1095, 4
      %v1098 = vrot.slane %v286, 5
      %v1099 = vsel %vm823, %v1097, %v1098
      %1102 = vst [vmem:[#allocation2 + $0x14] sm:$0xf] %v834
      %1103 = vst [vmem:[#allocation2 + $0x38] sm:$0xf] %v837
      %1104 = vst [vmem:[#allocation2 + $0x5c] sm:$0xf] %v841
      %1105 = vst [vmem:[#allocation2 + $0x80] sm:$0xf] %v844
      %1106 = vst [vmem:[#allocation2 + $0xa4] sm:$0xf] %v848
      %1107 = vst [vmem:[#allocation2 + $0xc8] sm:$0xf] %v851
      %1108 = vst [vmem:[#allocation2 + $0xec] sm:$0xf] %v855
      %1109 = vst [vmem:[#allocation2 + $0x110] sm:$0xf] %v858
      %1110 = vst [vmem:[#allocation2 + $0x134] sm:$0xf] %v862
      %1111 = vst [vmem:[#allocation2 + $0x158] sm:$0xf] %v865
      %1112 = vst [vmem:[#allocation2 + $0x17c] sm:$0xf] %v869
      %1113 = vst [vmem:[#allocation2 + $0x1a0] sm:$0xf] %v872
      %1114 = vst [vmem:[#allocation2 + $0x1c4] sm:$0xf] %v876
      %1115 = vst [vmem:[#allocation2 + $0x1e8] sm:$0xf] %v879
      %1116 = vst [vmem:[#allocation2 + $0x20c] sm:$0xf] %v883
      %1117 = vst [vmem:[#allocation2 + $0x230] sm:$0xf] %v886
      %1118 = vst [vmem:[#allocation2 + $0x254] sm:$0xf] %v890
      %1119 = vst [vmem:[#allocation2 + $0x278] sm:$0xf] %v893
      %1120 = vst [vmem:[#allocation2 + $0x29c] sm:$0xf] %v897
      %1121 = vst [vmem:[#allocation2 + $0x2c0] sm:$0xf] %v900
      %1122 = vst [vmem:[#allocation2 + $0x2e4] sm:$0xf] %v904
      %1123 = vst [vmem:[#allocation2 + $0x308] sm:$0xf] %v907
      %1124 = vst [vmem:[#allocation2 + $0x32c] sm:$0xf] %v911
      %1125 = vst [vmem:[#allocation2 + $0x350] sm:$0xf] %v914
      %1126 = vst [vmem:[#allocation2 + $0x374] sm:$0xf] %v918
      %1127 = vst [vmem:[#allocation2 + $0x398] sm:$0xf] %v921
      %1128 = vst [vmem:[#allocation2 + $0x3bc] sm:$0xf] %v925
      %1129 = vst [vmem:[#allocation2 + $0x3e0] sm:$0xf] %v928
      %1130 = vst [vmem:[#allocation2 + $0x404] sm:$0xf] %v932
      %1131 = vst [vmem:[#allocation2 + $0x428] sm:$0xf] %v935
      %1132 = vst [vmem:[#allocation2 + $0x44c] sm:$0xf] %v1096
      %1133 = vst [vmem:[#allocation2 + $0x470] sm:$0xf] %v1099
      %1134 = vst [vmem:[#allocation2 + $0x18] sm:$0xf] %v242
      %1135 = vst [vmem:[#allocation2 + $0x3c] sm:$0xf] %v243
      %1136 = vst [vmem:[#allocation2 + $0x60] sm:$0xf] %v245
      %1137 = vst [vmem:[#allocation2 + $0x84] sm:$0xf] %v246
      %1138 = vst [vmem:[#allocation2 + $0xa8] sm:$0xf] %v248
      %1139 = vst [vmem:[#allocation2 + $0xcc] sm:$0xf] %v249
      %1140 = vst [vmem:[#allocation2 + $0xf0] sm:$0xf] %v251
      %1141 = vst [vmem:[#allocation2 + $0x114] sm:$0xf] %v252
      %1142 = vst [vmem:[#allocation2 + $0x138] sm:$0xf] %v254
      %1143 = vst [vmem:[#allocation2 + $0x15c] sm:$0xf] %v255
      %1144 = vst [vmem:[#allocation2 + $0x180] sm:$0xf] %v257
      %1145 = vst [vmem:[#allocation2 + $0x1a4] sm:$0xf] %v258
      %1146 = vst [vmem:[#allocation2 + $0x1c8] sm:$0xf] %v260
      %1147 = vst [vmem:[#allocation2 + $0x1ec] sm:$0xf] %v261
      %1148 = vst [vmem:[#allocation2 + $0x210] sm:$0xf] %v263
      %1149 = vst [vmem:[#allocation2 + $0x234] sm:$0xf] %v264
      %1150 = vst [vmem:[#allocation2 + $0x258] sm:$0xf] %v266
      %1151 = vst [vmem:[#allocation2 + $0x27c] sm:$0xf] %v267
      %1152 = vst [vmem:[#allocation2 + $0x2a0] sm:$0xf] %v269
      %1153 = vst [vmem:[#allocation2 + $0x2c4] sm:$0xf] %v270
      %1154 = vst [vmem:[#allocation2 + $0x2e8] sm:$0xf] %v272
      %1155 = vst [vmem:[#allocation2 + $0x30c] sm:$0xf] %v273
      %1156 = vst [vmem:[#allocation2 + $0x330] sm:$0xf] %v275
      %1157 = vst [vmem:[#allocation2 + $0x354] sm:$0xf] %v276
      %1158 = vst [vmem:[#allocation2 + $0x378] sm:$0xf] %v278
      %1159 = vst [vmem:[#allocation2 + $0x39c] sm:$0xf] %v279
      %1160 = vst [vmem:[#allocation2 + $0x3c0] sm:$0xf] %v281
      %1161 = vst [vmem:[#allocation2 + $0x3e4] sm:$0xf] %v282
      %1162 = vst [vmem:[#allocation2 + $0x408] sm:$0xf] %v284
      %1163 = vst [vmem:[#allocation2 + $0x42c] sm:$0xf] %v285
      %1164 = vst [vmem:[#allocation2 + $0x450] sm:$0xf] %v287
      %1165 = vst [vmem:[#allocation2 + $0x474] sm:$0xf] %v288
      %v1167 = vshrl.u32 %v287, 16
      %v1169 = vrot.slane %v1167, 4
      %v1170 = vshll.u32 %v287, 16
      %v1172 = vrot.slane %v1170, 5
      %v1173 = vor.u32 %v1169, %v1172
      %v1174 = vrot.slane %v1173, 4
      %v1176 = vshll.u32 %v288, 16
      %v1178 = vrot.slane %v1176, 5
      %v1179 = vsel %vm324, %v1174, %v1178
      %v1180 = vshrl.u32 %v288, 16
      %v1182 = vrot.slane %v1180, 4
      %v1183 = vor.u32 %v1182, %v1178
      %v1184 = vrot.slane %v1183, 4
      %v1186 = vshll.u32 %v289, 16
      %v1188 = vrot.slane %v1186, 5
      %v1189 = vsel %vm324, %v1184, %v1188
      %1192 = vst [vmem:[#allocation2 + $0x1c] sm:$0xf] %v386
      %1193 = vst [vmem:[#allocation2 + $0x40] sm:$0xf] %v396
      %1194 = vst [vmem:[#allocation2 + $0x64] sm:$0xf] %v410
      %1195 = vst [vmem:[#allocation2 + $0x88] sm:$0xf] %v420
      %1196 = vst [vmem:[#allocation2 + $0xac] sm:$0xf] %v434
      %1197 = vst [vmem:[#allocation2 + $0xd0] sm:$0xf] %v444
      %1198 = vst [vmem:[#allocation2 + $0xf4] sm:$0xf] %v458
      %1199 = vst [vmem:[#allocation2 + $0x118] sm:$0xf] %v468
      %1200 = vst [vmem:[#allocation2 + $0x13c] sm:$0xf] %v482
      %1201 = vst [vmem:[#allocation2 + $0x160] sm:$0xf] %v492
      %1202 = vst [vmem:[#allocation2 + $0x184] sm:$0xf] %v506
      %1203 = vst [vmem:[#allocation2 + $0x1a8] sm:$0xf] %v516
      %1204 = vst [vmem:[#allocation2 + $0x1cc] sm:$0xf] %v530
      %1205 = vst [vmem:[#allocation2 + $0x1f0] sm:$0xf] %v540
      %1206 = vst [vmem:[#allocation2 + $0x214] sm:$0xf] %v554
      %1207 = vst [vmem:[#allocation2 + $0x238] sm:$0xf] %v564
      %1208 = vst [vmem:[#allocation2 + $0x25c] sm:$0xf] %v578
      %1209 = vst [vmem:[#allocation2 + $0x280] sm:$0xf] %v588
      %1210 = vst [vmem:[#allocation2 + $0x2a4] sm:$0xf] %v602
      %1211 = vst [vmem:[#allocation2 + $0x2c8] sm:$0xf] %v612
      %1212 = vst [vmem:[#allocation2 + $0x2ec] sm:$0xf] %v626
      %1213 = vst [vmem:[#allocation2 + $0x310] sm:$0xf] %v636
      %1214 = vst [vmem:[#allocation2 + $0x334] sm:$0xf] %v650
      %1215 = vst [vmem:[#allocation2 + $0x358] sm:$0xf] %v660
      %1216 = vst [vmem:[#allocation2 + $0x37c] sm:$0xf] %v674
      %1217 = vst [vmem:[#allocation2 + $0x3a0] sm:$0xf] %v684
      %1218 = vst [vmem:[#allocation2 + $0x3c4] sm:$0xf] %v698
      %1219 = vst [vmem:[#allocation2 + $0x3e8] sm:$0xf] %v708
      %1220 = vst [vmem:[#allocation2 + $0x40c] sm:$0xf] %v1045
      %1221 = vst [vmem:[#allocation2 + $0x430] sm:$0xf] %v1055
      %1222 = vst [vmem:[#allocation2 + $0x454] sm:$0xf] %v1179
      %1223 = vst [vmem:[#allocation2 + $0x478] sm:$0xf] %v1189
      %v1227 = vrot.slane %v287, 5
      %v1228 = vrot.slane %v1227, 4
      %v1229 = vrot.slane %v288, 5
      %v1230 = vsel %vm823, %v1228, %v1229
      %v1231 = vrot.slane %v1229, 4
      %v1232 = vrot.slane %v289, 5
      %v1233 = vsel %vm823, %v1231, %v1232
      %1236 = vst [vmem:[#allocation2 + $0x20] sm:$0xf] %v841
      %1237 = vst [vmem:[#allocation2 + $0x44] sm:$0xf] %v844
      %1238 = vst [vmem:[#allocation2 + $0x68] sm:$0xf] %v848
      %1239 = vst [vmem:[#allocation2 + $0x8c] sm:$0xf] %v851
      %1240 = vst [vmem:[#allocation2 + $0xb0] sm:$0xf] %v855
      %1241 = vst [vmem:[#allocation2 + $0xd4] sm:$0xf] %v858
      %1242 = vst [vmem:[#allocation2 + $0xf8] sm:$0xf] %v862
      %1243 = vst [vmem:[#allocation2 + $0x11c] sm:$0xf] %v865
      %1244 = vst [vmem:[#allocation2 + $0x140] sm:$0xf] %v869
      %1245 = vst [vmem:[#allocation2 + $0x164] sm:$0xf] %v872
      %1246 = vst [vmem:[#allocation2 + $0x188] sm:$0xf] %v876
      %1247 = vst [vmem:[#allocation2 + $0x1ac] sm:$0xf] %v879
      %1248 = vst [vmem:[#allocation2 + $0x1d0] sm:$0xf] %v883
      %1249 = vst [vmem:[#allocation2 + $0x1f4] sm:$0xf] %v886
      %1250 = vst [vmem:[#allocation2 + $0x218] sm:$0xf] %v890
      %1251 = vst [vmem:[#allocation2 + $0x23c] sm:$0xf] %v893
      %1252 = vst [vmem:[#allocation2 + $0x260] sm:$0xf] %v897
      %1253 = vst [vmem:[#allocation2 + $0x284] sm:$0xf] %v900
      %1254 = vst [vmem:[#allocation2 + $0x2a8] sm:$0xf] %v904
      %1255 = vst [vmem:[#allocation2 + $0x2cc] sm:$0xf] %v907
      %1256 = vst [vmem:[#allocation2 + $0x2f0] sm:$0xf] %v911
      %1257 = vst [vmem:[#allocation2 + $0x314] sm:$0xf] %v914
      %1258 = vst [vmem:[#allocation2 + $0x338] sm:$0xf] %v918
      %1259 = vst [vmem:[#allocation2 + $0x35c] sm:$0xf] %v921
      %1260 = vst [vmem:[#allocation2 + $0x380] sm:$0xf] %v925
      %1261 = vst [vmem:[#allocation2 + $0x3a4] sm:$0xf] %v928
      %1262 = vst [vmem:[#allocation2 + $0x3c8] sm:$0xf] %v932
      %1263 = vst [vmem:[#allocation2 + $0x3ec] sm:$0xf] %v935
      %1264 = vst [vmem:[#allocation2 + $0x410] sm:$0xf] %v1096
      %1265 = vst [vmem:[#allocation2 + $0x434] sm:$0xf] %v1099
      %1266 = vst [vmem:[#allocation2 + $0x458] sm:$0xf] %v1230
      %1267 = vst [vmem:[#allocation2 + $0x47c] sm:$0xf] %v1233
      %v1268 = vld [vmem:[#allocation2] sm:$0xff]
      %v1269 = vld [vmem:[#allocation2 + $0x8] sm:$0xff]
      %v1270 = vld [vmem:[#allocation2 + $0x10] sm:$0xff]
      %v1271 = vld [vmem:[#allocation2 + $0x18] sm:$0xff]
      %v1272 = vld [vmem:[#allocation2 + $0x20] sm:$0xf]
      %v1273 = vld [vmem:[#allocation2 + $0x24] sm:$0xff]
      %v1274 = vld [vmem:[#allocation2 + $0x2c] sm:$0xff]
      %v1275 = vld [vmem:[#allocation2 + $0x34] sm:$0xff]
      %v1276 = vld [vmem:[#allocation2 + $0x3c] sm:$0xff]
      %v1277 = vld [vmem:[#allocation2 + $0x44] sm:$0xf]
      %v1278 = vld [vmem:[#allocation2 + $0x48] sm:$0xff]
      %v1279 = vld [vmem:[#allocation2 + $0x50] sm:$0xff]
      %v1280 = vld [vmem:[#allocation2 + $0x58] sm:$0xff]
      %v1281 = vld [vmem:[#allocation2 + $0x60] sm:$0xff]
      %v1282 = vld [vmem:[#allocation2 + $0x68] sm:$0xf]
      %v1283 = vld [vmem:[#allocation2 + $0x6c] sm:$0xff]
      %v1284 = vld [vmem:[#allocation2 + $0x74] sm:$0xff]
      %v1285 = vld [vmem:[#allocation2 + $0x7c] sm:$0xff]
      %v1286 = vld [vmem:[#allocation2 + $0x84] sm:$0xff]
      %v1287 = vld [vmem:[#allocation2 + $0x8c] sm:$0xf]
      %v1288 = vld [vmem:[#allocation2 + $0x90] sm:$0xff]
      %v1289 = vld [vmem:[#allocation2 + $0x98] sm:$0xff]
      %v1290 = vld [vmem:[#allocation2 + $0xa0] sm:$0xff]
      %v1291 = vld [vmem:[#allocation2 + $0xa8] sm:$0xff]
      %v1292 = vld [vmem:[#allocation2 + $0xb0] sm:$0xf]
      %v1293 = vld [vmem:[#allocation2 + $0xb4] sm:$0xff]
      %v1294 = vld [vmem:[#allocation2 + $0xbc] sm:$0xff]
      %v1295 = vld [vmem:[#allocation2 + $0xc4] sm:$0xff]
      %v1296 = vld [vmem:[#allocation2 + $0xcc] sm:$0xff]
      %v1297 = vld [vmem:[#allocation2 + $0xd4] sm:$0xf]
      %v1298 = vld [vmem:[#allocation2 + $0xd8] sm:$0xff]
      %v1299 = vld [vmem:[#allocation2 + $0xe0] sm:$0xff]
      %v1300 = vld [vmem:[#allocation2 + $0xe8] sm:$0xff]
      %v1301 = vld [vmem:[#allocation2 + $0xf0] sm:$0xff]
      %v1302 = vld [vmem:[#allocation2 + $0xf8] sm:$0xf]
      %v1303 = vld [vmem:[#allocation2 + $0xfc] sm:$0xff]
      %v1304 = vld [vmem:[#allocation2 + $0x104] sm:$0xff]
      %v1305 = vld [vmem:[#allocation2 + $0x10c] sm:$0xff]
      %v1306 = vld [vmem:[#allocation2 + $0x114] sm:$0xff]
      %v1307 = vld [vmem:[#allocation2 + $0x11c] sm:$0xf]
      %v1308 = vld [vmem:[#allocation2 + $0x120] sm:$0xff]
      %v1309 = vld [vmem:[#allocation2 + $0x128] sm:$0xff]
      %v1310 = vld [vmem:[#allocation2 + $0x130] sm:$0xff]
      %v1311 = vld [vmem:[#allocation2 + $0x138] sm:$0xff]
      %v1312 = vld [vmem:[#allocation2 + $0x140] sm:$0xf]
      %v1313 = vld [vmem:[#allocation2 + $0x144] sm:$0xff]
      %v1314 = vld [vmem:[#allocation2 + $0x14c] sm:$0xff]
      %v1315 = vld [vmem:[#allocation2 + $0x154] sm:$0xff]
      %v1316 = vld [vmem:[#allocation2 + $0x15c] sm:$0xff]
      %v1317 = vld [vmem:[#allocation2 + $0x164] sm:$0xf]
      %v1318 = vld [vmem:[#allocation2 + $0x168] sm:$0xff]
      %v1319 = vld [vmem:[#allocation2 + $0x170] sm:$0xff]
      %v1320 = vld [vmem:[#allocation2 + $0x178] sm:$0xff]
      %v1321 = vld [vmem:[#allocation2 + $0x180] sm:$0xff]
      %v1322 = vld [vmem:[#allocation2 + $0x188] sm:$0xf]
      %v1323 = vld [vmem:[#allocation2 + $0x18c] sm:$0xff]
      %v1324 = vld [vmem:[#allocation2 + $0x194] sm:$0xff]
      %v1325 = vld [vmem:[#allocation2 + $0x19c] sm:$0xff]
      %v1326 = vld [vmem:[#allocation2 + $0x1a4] sm:$0xff]
      %v1327 = vld [vmem:[#allocation2 + $0x1ac] sm:$0xf]
      %v1328 = vld [vmem:[#allocation2 + $0x1b0] sm:$0xff]
      %v1329 = vld [vmem:[#allocation2 + $0x1b8] sm:$0xff]
      %v1330 = vld [vmem:[#allocation2 + $0x1c0] sm:$0xff]
      %v1331 = vld [vmem:[#allocation2 + $0x1c8] sm:$0xff]
      %v1332 = vld [vmem:[#allocation2 + $0x1d0] sm:$0xf]
      %v1333 = vld [vmem:[#allocation2 + $0x1d4] sm:$0xff]
      %v1334 = vld [vmem:[#allocation2 + $0x1dc] sm:$0xff]
      %v1335 = vld [vmem:[#allocation2 + $0x1e4] sm:$0xff]
      %v1336 = vld [vmem:[#allocation2 + $0x1ec] sm:$0xff]
      %v1337 = vld [vmem:[#allocation2 + $0x1f4] sm:$0xf]
      %v1338 = vld [vmem:[#allocation2 + $0x1f8] sm:$0xff]
      %v1339 = vld [vmem:[#allocation2 + $0x200] sm:$0xff]
      %v1340 = vld [vmem:[#allocation2 + $0x208] sm:$0xff]
      %v1341 = vld [vmem:[#allocation2 + $0x210] sm:$0xff]
      %v1342 = vld [vmem:[#allocation2 + $0x218] sm:$0xf]
      %v1343 = vld [vmem:[#allocation2 + $0x21c] sm:$0xff]
      %v1344 = vld [vmem:[#allocation2 + $0x224] sm:$0xff]
      %v1345 = vld [vmem:[#allocation2 + $0x22c] sm:$0xff]
      %v1346 = vld [vmem:[#allocation2 + $0x234] sm:$0xff]
      %v1347 = vld [vmem:[#allocation2 + $0x23c] sm:$0xf]
      %v1348 = vld [vmem:[#allocation2 + $0x240] sm:$0xff]
      %v1349 = vld [vmem:[#allocation2 + $0x248] sm:$0xff]
      %v1350 = vld [vmem:[#allocation2 + $0x250] sm:$0xff]
      %v1351 = vld [vmem:[#allocation2 + $0x258] sm:$0xff]
      %v1352 = vld [vmem:[#allocation2 + $0x260] sm:$0xf]
      %v1353 = vld [vmem:[#allocation2 + $0x264] sm:$0xff]
      %v1354 = vld [vmem:[#allocation2 + $0x26c] sm:$0xff]
      %v1355 = vld [vmem:[#allocation2 + $0x274] sm:$0xff]
      %v1356 = vld [vmem:[#allocation2 + $0x27c] sm:$0xff]
      %v1357 = vld [vmem:[#allocation2 + $0x284] sm:$0xf]
      %v1358 = vld [vmem:[#allocation2 + $0x288] sm:$0xff]
      %v1359 = vld [vmem:[#allocation2 + $0x290] sm:$0xff]
      %v1360 = vld [vmem:[#allocation2 + $0x298] sm:$0xff]
      %v1361 = vld [vmem:[#allocation2 + $0x2a0] sm:$0xff]
      %v1362 = vld [vmem:[#allocation2 + $0x2a8] sm:$0xf]
      %v1363 = vld [vmem:[#allocation2 + $0x2ac] sm:$0xff]
      %v1364 = vld [vmem:[#allocation2 + $0x2b4] sm:$0xff]
      %v1365 = vld [vmem:[#allocation2 + $0x2bc] sm:$0xff]
      %v1366 = vld [vmem:[#allocation2 + $0x2c4] sm:$0xff]
      %v1367 = vld [vmem:[#allocation2 + $0x2cc] sm:$0xf]
      %v1368 = vld [vmem:[#allocation2 + $0x2d0] sm:$0xff]
      %v1369 = vld [vmem:[#allocation2 + $0x2d8] sm:$0xff]
      %v1370 = vld [vmem:[#allocation2 + $0x2e0] sm:$0xff]
      %v1371 = vld [vmem:[#allocation2 + $0x2e8] sm:$0xff]
      %v1372 = vld [vmem:[#allocation2 + $0x2f0] sm:$0xf]
      %v1373 = vld [vmem:[#allocation2 + $0x2f4] sm:$0xff]
      %v1374 = vld [vmem:[#allocation2 + $0x2fc] sm:$0xff]
      %v1375 = vld [vmem:[#allocation2 + $0x304] sm:$0xff]
      %v1376 = vld [vmem:[#allocation2 + $0x30c] sm:$0xff]
      %v1377 = vld [vmem:[#allocation2 + $0x314] sm:$0xf]
      %v1378 = vld [vmem:[#allocation2 + $0x318] sm:$0xff]
      %v1379 = vld [vmem:[#allocation2 + $0x320] sm:$0xff]
      %v1380 = vld [vmem:[#allocation2 + $0x328] sm:$0xff]
      %v1381 = vld [vmem:[#allocation2 + $0x330] sm:$0xff]
      %v1382 = vld [vmem:[#allocation2 + $0x338] sm:$0xf]
      %v1383 = vld [vmem:[#allocation2 + $0x33c] sm:$0xff]
      %v1384 = vld [vmem:[#allocation2 + $0x344] sm:$0xff]
      %v1385 = vld [vmem:[#allocation2 + $0x34c] sm:$0xff]
      %v1386 = vld [vmem:[#allocation2 + $0x354] sm:$0xff]
      %v1387 = vld [vmem:[#allocation2 + $0x35c] sm:$0xf]
      %v1388 = vld [vmem:[#allocation2 + $0x360] sm:$0xff]
      %v1389 = vld [vmem:[#allocation2 + $0x368] sm:$0xff]
      %v1390 = vld [vmem:[#allocation2 + $0x370] sm:$0xff]
      %v1391 = vld [vmem:[#allocation2 + $0x378] sm:$0xff]
      %v1392 = vld [vmem:[#allocation2 + $0x380] sm:$0xf]
      %v1393 = vld [vmem:[#allocation2 + $0x384] sm:$0xff]
      %v1394 = vld [vmem:[#allocation2 + $0x38c] sm:$0xff]
      %v1395 = vld [vmem:[#allocation2 + $0x394] sm:$0xff]
      %v1396 = vld [vmem:[#allocation2 + $0x39c] sm:$0xff]
      %v1397 = vld [vmem:[#allocation2 + $0x3a4] sm:$0xf]
      %v1398 = vld [vmem:[#allocation2 + $0x3a8] sm:$0xff]
      %v1399 = vld [vmem:[#allocation2 + $0x3b0] sm:$0xff]
      %v1400 = vld [vmem:[#allocation2 + $0x3b8] sm:$0xff]
      %v1401 = vld [vmem:[#allocation2 + $0x3c0] sm:$0xff]
      %v1402 = vld [vmem:[#allocation2 + $0x3c8] sm:$0xf]
      %v1403 = vld [vmem:[#allocation2 + $0x3cc] sm:$0xff]
      %v1404 = vld [vmem:[#allocation2 + $0x3d4] sm:$0xff]
      %v1405 = vld [vmem:[#allocation2 + $0x3dc] sm:$0xff]
      %v1406 = vld [vmem:[#allocation2 + $0x3e4] sm:$0xff]
      %v1407 = vld [vmem:[#allocation2 + $0x3ec] sm:$0xf]
      %v1408 = vld [vmem:[#allocation2 + $0x3f0] sm:$0xff]
      %v1409 = vld [vmem:[#allocation2 + $0x3f8] sm:$0xff]
      %v1410 = vld [vmem:[#allocation2 + $0x400] sm:$0xff]
      %v1411 = vld [vmem:[#allocation2 + $0x408] sm:$0xff]
      %v1412 = vld [vmem:[#allocation2 + $0x410] sm:$0xf]
      %v1413 = vld [vmem:[#allocation2 + $0x414] sm:$0xff]
      %v1414 = vld [vmem:[#allocation2 + $0x41c] sm:$0xff]
      %v1415 = vld [vmem:[#allocation2 + $0x424] sm:$0xff]
      %v1416 = vld [vmem:[#allocation2 + $0x42c] sm:$0xff]
      %v1417 = vld [vmem:[#allocation2 + $0x434] sm:$0xf]
      %v1418 = vld [vmem:[#allocation2 + $0x438] sm:$0xff]
      %v1419 = vld [vmem:[#allocation2 + $0x440] sm:$0xff]
      %v1420 = vld [vmem:[#allocation2 + $0x448] sm:$0xff]
      %v1421 = vld [vmem:[#allocation2 + $0x450] sm:$0xff]
      %v1422 = vld [vmem:[#allocation2 + $0x458] sm:$0xf]
      %v1423 = vld [vmem:[#allocation2 + $0x45c] sm:$0xff]
      %v1424 = vld [vmem:[#allocation2 + $0x464] sm:$0xff]
      %v1425 = vld [vmem:[#allocation2 + $0x46c] sm:$0xff]
      %v1426 = vld [vmem:[#allocation2 + $0x474] sm:$0xff]
      %v1427 = vld [vmem:[#allocation2 + $0x47c] sm:$0xf]
      %v1428 = vld [vmem:[%s3] sm:$0xf]
      %v1429 = vld [vmem:[%s3 + $0x4] sm:$0xf]
      %v1430 = vld [vmem:[%s3 + $0x8] sm:$0xf]
      %v1431 = vld [vmem:[%s3 + $0xc] sm:$0xf]
      %v1432 = vld [vmem:[%s3 + $0x10] sm:$0xf]
      %v1433 = vld [vmem:[%s3 + $0x14] sm:$0xf]
      %v1434 = vld [vmem:[%s3 + $0x18] sm:$0xf]
      %v1435 = vld [vmem:[%s3 + $0x1c] sm:$0xf]
      %v1436 = vld [vmem:[%s3 + $0x20] sm:$0xf]
      %v1437 = vld [vmem:[%s3 + $0x24] sm:$0xf]
      %v1438 = vld [vmem:[%s3 + $0x28] sm:$0xf]
      %v1439 = vld [vmem:[%s3 + $0x2c] sm:$0xf]
      %v1440 = vld [vmem:[%s3 + $0x30] sm:$0xf]
      %v1441 = vld [vmem:[%s3 + $0x34] sm:$0xf]
      %v1442 = vld [vmem:[%s3 + $0x38] sm:$0xf]
      %v1443 = vld [vmem:[%s3 + $0x3c] sm:$0xf]
      %v1444 = vld [vmem:[%s3 + $0x40] sm:$0xf]
      %v1445 = vld [vmem:[%s3 + $0x44] sm:$0xf]
      %v1446 = vld [vmem:[%s3 + $0x48] sm:$0xf]
      %v1447 = vld [vmem:[%s3 + $0x4c] sm:$0xf]
      %v1448 = vld [vmem:[%s3 + $0x50] sm:$0xf]
      %v1449 = vld [vmem:[%s3 + $0x54] sm:$0xf]
      %v1450 = vld [vmem:[%s3 + $0x58] sm:$0xf]
      %v1451 = vld [vmem:[%s3 + $0x5c] sm:$0xf]
      %v1452 = vld [vmem:[%s3 + $0x60] sm:$0xf]
      %v1453 = vld [vmem:[%s3 + $0x64] sm:$0xf]
      %v1454 = vld [vmem:[%s3 + $0x68] sm:$0xf]
      %v1455 = vld [vmem:[%s3 + $0x6c] sm:$0xf]
      %v1456 = vld [vmem:[%s3 + $0x70] sm:$0xf]
      %v1457 = vld [vmem:[%s3 + $0x74] sm:$0xf]
      %v1458 = vld [vmem:[%s3 + $0x78] sm:$0xf]
      %v1459 = vld [vmem:[%s3 + $0x7c] sm:$0xf]
      %v1460 = vld [vmem:[%s3 + $0x80] sm:$0xf]
      %v1461 = vld [vmem:[%s3 + $0x84] sm:$0xf]
      %v1462 = vld [vmem:[%s3 + $0x88] sm:$0xf]
      %v1463 = vld [vmem:[%s3 + $0x8c] sm:$0xf]
      %v1464 = vld [vmem:[%s3 + $0x90] sm:$0xf]
      %v1465 = vld [vmem:[%s3 + $0x94] sm:$0xf]
      %v1466 = vld [vmem:[%s3 + $0x98] sm:$0xf]
      %v1467 = vld [vmem:[%s3 + $0x9c] sm:$0xf]
      %v1468 = vld [vmem:[%s3 + $0xa0] sm:$0xf]
      %v1469 = vld [vmem:[%s3 + $0xa4] sm:$0xf]
      %v1470 = vld [vmem:[%s3 + $0xa8] sm:$0xf]
      %v1471 = vld [vmem:[%s3 + $0xac] sm:$0xf]
      %v1472 = vld [vmem:[%s3 + $0xb0] sm:$0xf]
      %v1473 = vld [vmem:[%s3 + $0xb4] sm:$0xf]
      %v1474 = vld [vmem:[%s3 + $0xb8] sm:$0xf]
      %v1475 = vld [vmem:[%s3 + $0xbc] sm:$0xf]
      %v1476 = vld [vmem:[%s3 + $0xc0] sm:$0xf]
      %v1477 = vld [vmem:[%s3 + $0xc4] sm:$0xf]
      %v1478 = vld [vmem:[%s3 + $0xc8] sm:$0xf]
      %v1479 = vld [vmem:[%s3 + $0xcc] sm:$0xf]
      %v1480 = vld [vmem:[%s3 + $0xd0] sm:$0xf]
      %v1481 = vld [vmem:[%s3 + $0xd4] sm:$0xf]
      %v1482 = vld [vmem:[%s3 + $0xd8] sm:$0xf]
      %v1483 = vld [vmem:[%s3 + $0xdc] sm:$0xf]
      %v1484 = vld [vmem:[%s3 + $0xe0] sm:$0xf]
      %v1485 = vld [vmem:[%s3 + $0xe4] sm:$0xf]
      %v1486 = vld [vmem:[%s3 + $0xe8] sm:$0xf]
      %v1487 = vld [vmem:[%s3 + $0xec] sm:$0xf]
      %v1488 = vld [vmem:[%s3 + $0xf0] sm:$0xf]
      %v1489 = vld [vmem:[%s3 + $0xf4] sm:$0xf]
      %v1490 = vld [vmem:[%s3 + $0xf8] sm:$0xf]
      %v1491 = vld [vmem:[%s3 + $0xfc] sm:$0xf]
      %v1492 = vld [vmem:[%s3 + $0x100] sm:$0xf]
      %v1493 = vld [vmem:[%s3 + $0x104] sm:$0xf]
      %v1494 = vld [vmem:[%s3 + $0x108] sm:$0xf]
      %v1495 = vld [vmem:[%s3 + $0x10c] sm:$0xf]
      %v1496 = vld [vmem:[%s3 + $0x110] sm:$0xf]
      %v1497 = vld [vmem:[%s3 + $0x114] sm:$0xf]
      %v1498 = vld [vmem:[%s3 + $0x118] sm:$0xf]
      %v1499 = vld [vmem:[%s3 + $0x11c] sm:$0xf]
      %v1500 = vld [vmem:[%s3 + $0x120] sm:$0xf]
      %v1501 = vld [vmem:[%s3 + $0x124] sm:$0xf]
      %v1502 = vld [vmem:[%s3 + $0x128] sm:$0xf]
      %v1503 = vld [vmem:[%s3 + $0x12c] sm:$0xf]
      %v1504 = vld [vmem:[%s3 + $0x130] sm:$0xf]
      %v1505 = vld [vmem:[%s3 + $0x134] sm:$0xf]
      %v1506 = vld [vmem:[%s3 + $0x138] sm:$0xf]
      %v1507 = vld [vmem:[%s3 + $0x13c] sm:$0xf]
      %v1508 = vld [vmem:[%s3 + $0x140] sm:$0xf]
      %v1509 = vld [vmem:[%s3 + $0x144] sm:$0xf]
      %v1510 = vld [vmem:[%s3 + $0x148] sm:$0xf]
      %v1511 = vld [vmem:[%s3 + $0x14c] sm:$0xf]
      %v1512 = vld [vmem:[%s3 + $0x150] sm:$0xf]
      %v1513 = vld [vmem:[%s3 + $0x154] sm:$0xf]
      %v1514 = vld [vmem:[%s3 + $0x158] sm:$0xf]
      %v1515 = vld [vmem:[%s3 + $0x15c] sm:$0xf]
      %v1516 = vld [vmem:[%s3 + $0x160] sm:$0xf]
      %v1517 = vld [vmem:[%s3 + $0x164] sm:$0xf]
      %v1518 = vld [vmem:[%s3 + $0x168] sm:$0xf]
      %v1519 = vld [vmem:[%s3 + $0x16c] sm:$0xf]
      %v1520 = vld [vmem:[%s3 + $0x170] sm:$0xf]
      %v1521 = vld [vmem:[%s3 + $0x174] sm:$0xf]
      %v1522 = vld [vmem:[%s3 + $0x178] sm:$0xf]
      %v1523 = vld [vmem:[%s3 + $0x17c] sm:$0xf]
      %v1524 = vld [vmem:[%s3 + $0x180] sm:$0xf]
      %v1525 = vld [vmem:[%s3 + $0x184] sm:$0xf]
      %v1526 = vld [vmem:[%s3 + $0x188] sm:$0xf]
      %v1527 = vld [vmem:[%s3 + $0x18c] sm:$0xf]
      %v1528 = vld [vmem:[%s3 + $0x190] sm:$0xf]
      %v1529 = vld [vmem:[%s3 + $0x194] sm:$0xf]
      %v1530 = vld [vmem:[%s3 + $0x198] sm:$0xf]
      %v1531 = vld [vmem:[%s3 + $0x19c] sm:$0xf]
      %v1532 = vld [vmem:[%s3 + $0x1a0] sm:$0xf]
      %v1533 = vld [vmem:[%s3 + $0x1a4] sm:$0xf]
      %v1534 = vld [vmem:[%s3 + $0x1a8] sm:$0xf]
      %v1535 = vld [vmem:[%s3 + $0x1ac] sm:$0xf]
      %v1536 = vld [vmem:[%s3 + $0x1b0] sm:$0xf]
      %v1537 = vld [vmem:[%s3 + $0x1b4] sm:$0xf]
      %v1538 = vld [vmem:[%s3 + $0x1b8] sm:$0xf]
      %v1539 = vld [vmem:[%s3 + $0x1bc] sm:$0xf]
      %v1540 = vld [vmem:[%s3 + $0x1c0] sm:$0xf]
      %v1541 = vld [vmem:[%s3 + $0x1c4] sm:$0xf]
      %v1542 = vld [vmem:[%s3 + $0x1c8] sm:$0xf]
      %v1543 = vld [vmem:[%s3 + $0x1cc] sm:$0xf]
      %v1544 = vld [vmem:[%s3 + $0x1d0] sm:$0xf]
      %v1545 = vld [vmem:[%s3 + $0x1d4] sm:$0xf]
      %v1546 = vld [vmem:[%s3 + $0x1d8] sm:$0xf]
      %v1547 = vld [vmem:[%s3 + $0x1dc] sm:$0xf]
      %v1548 = vld [vmem:[%s3 + $0x1e0] sm:$0xf]
      %v1549 = vld [vmem:[%s3 + $0x1e4] sm:$0xf]
      %v1550 = vld [vmem:[%s3 + $0x1e8] sm:$0xf]
      %v1551 = vld [vmem:[%s3 + $0x1ec] sm:$0xf]
      %v1552 = vld [vmem:[%s3 + $0x1f0] sm:$0xf]
      %v1553 = vld [vmem:[%s3 + $0x1f4] sm:$0xf]
      %v1554 = vld [vmem:[%s3 + $0x1f8] sm:$0xf]
      %v1555 = vld [vmem:[%s3 + $0x1fc] sm:$0xf]
      %v1556 = vld [vmem:[%s3 + $0x200] sm:$0xf]
      %v1557 = vld [vmem:[%s3 + $0x204] sm:$0xf]
      %v1558 = vld [vmem:[%s3 + $0x208] sm:$0xf]
      %v1559 = vld [vmem:[%s3 + $0x20c] sm:$0xf]
      %v1560 = vld [vmem:[%s3 + $0x210] sm:$0xf]
      %v1561 = vld [vmem:[%s3 + $0x214] sm:$0xf]
      %v1562 = vld [vmem:[%s3 + $0x218] sm:$0xf]
      %v1563 = vld [vmem:[%s3 + $0x21c] sm:$0xf]
      %v1564 = vld [vmem:[%s3 + $0x220] sm:$0xf]
      %v1565 = vld [vmem:[%s3 + $0x224] sm:$0xf]
      %v1566 = vld [vmem:[%s3 + $0x228] sm:$0xf]
      %v1567 = vld [vmem:[%s3 + $0x22c] sm:$0xf]
      %v1568 = vld [vmem:[%s3 + $0x230] sm:$0xf]
      %v1569 = vld [vmem:[%s3 + $0x234] sm:$0xf]
      %v1570 = vld [vmem:[%s3 + $0x238] sm:$0xf]
      %v1571 = vld [vmem:[%s3 + $0x23c] sm:$0xf]
      %v1732 = vunpack.c.l.b16 %v1268
      %v1733 = vunpack.c.h.b16 %v1268
      %v1734 = vunpack.c.l.b16 %v1269
      %v1735 = vunpack.c.h.b16 %v1269
      %v1736 = vunpack.c.l.b16 %v1270
      %v1737 = vunpack.c.h.b16 %v1270
      %v1738 = vunpack.c.l.b16 %v1271
      %v1739 = vunpack.c.h.b16 %v1271
      %v1740 = vunpack.c.l.b16 %v1272
      %v1741 = vunpack.c.l.b16 %v1273
      %v1742 = vunpack.c.h.b16 %v1273
      %v1743 = vunpack.c.l.b16 %v1274
      %v1744 = vunpack.c.h.b16 %v1274
      %v1745 = vunpack.c.l.b16 %v1275
      %v1746 = vunpack.c.h.b16 %v1275
      %v1747 = vunpack.c.l.b16 %v1276
      %v1748 = vunpack.c.h.b16 %v1276
      %v1749 = vunpack.c.l.b16 %v1277
      %v1750 = vunpack.c.l.b16 %v1278
      %v1751 = vunpack.c.h.b16 %v1278
      %v1752 = vunpack.c.l.b16 %v1279
      %v1753 = vunpack.c.h.b16 %v1279
      %v1754 = vunpack.c.l.b16 %v1280
      %v1755 = vunpack.c.h.b16 %v1280
      %v1756 = vunpack.c.l.b16 %v1281
      %v1757 = vunpack.c.h.b16 %v1281
      %v1758 = vunpack.c.l.b16 %v1282
      %v1759 = vunpack.c.l.b16 %v1283
      %v1760 = vunpack.c.h.b16 %v1283
      %v1761 = vunpack.c.l.b16 %v1284
      %v1762 = vunpack.c.h.b16 %v1284
      %v1763 = vunpack.c.l.b16 %v1285
      %v1764 = vunpack.c.h.b16 %v1285
      %v1765 = vunpack.c.l.b16 %v1286
      %v1766 = vunpack.c.h.b16 %v1286
      %v1767 = vunpack.c.l.b16 %v1287
      %v1768 = vunpack.c.l.b16 %v1288
      %v1769 = vunpack.c.h.b16 %v1288
      %v1770 = vunpack.c.l.b16 %v1289
      %v1771 = vunpack.c.h.b16 %v1289
      %v1772 = vunpack.c.l.b16 %v1290
      %v1773 = vunpack.c.h.b16 %v1290
      %v1774 = vunpack.c.l.b16 %v1291
      %v1775 = vunpack.c.h.b16 %v1291
      %v1776 = vunpack.c.l.b16 %v1292
      %v1777 = vunpack.c.l.b16 %v1293
      %v1778 = vunpack.c.h.b16 %v1293
      %v1779 = vunpack.c.l.b16 %v1294
      %v1780 = vunpack.c.h.b16 %v1294
      %v1781 = vunpack.c.l.b16 %v1295
      %v1782 = vunpack.c.h.b16 %v1295
      %v1783 = vunpack.c.l.b16 %v1296
      %v1784 = vunpack.c.h.b16 %v1296
      %v1785 = vunpack.c.l.b16 %v1297
      %v1786 = vunpack.c.l.b16 %v1298
      %v1787 = vunpack.c.h.b16 %v1298
      %v1788 = vunpack.c.l.b16 %v1299
      %v1789 = vunpack.c.h.b16 %v1299
      %v1790 = vunpack.c.l.b16 %v1300
      %v1791 = vunpack.c.h.b16 %v1300
      %v1792 = vunpack.c.l.b16 %v1301
      %v1793 = vunpack.c.h.b16 %v1301
      %v1794 = vunpack.c.l.b16 %v1302
      %v1795 = vunpack.c.l.b16 %v1303
      %v1796 = vunpack.c.h.b16 %v1303
      %v1797 = vunpack.c.l.b16 %v1304
      %v1798 = vunpack.c.h.b16 %v1304
      %v1799 = vunpack.c.l.b16 %v1305
      %v1800 = vunpack.c.h.b16 %v1305
      %v1801 = vunpack.c.l.b16 %v1306
      %v1802 = vunpack.c.h.b16 %v1306
      %v1803 = vunpack.c.l.b16 %v1307
      %v1804 = vunpack.c.l.b16 %v1308
      %v1805 = vunpack.c.h.b16 %v1308
      %v1806 = vunpack.c.l.b16 %v1309
      %v1807 = vunpack.c.h.b16 %v1309
      %v1808 = vunpack.c.l.b16 %v1310
      %v1809 = vunpack.c.h.b16 %v1310
      %v1810 = vunpack.c.l.b16 %v1311
      %v1811 = vunpack.c.h.b16 %v1311
      %v1812 = vunpack.c.l.b16 %v1312
      %v1813 = vunpack.c.l.b16 %v1313
      %v1814 = vunpack.c.h.b16 %v1313
      %v1815 = vunpack.c.l.b16 %v1314
      %v1816 = vunpack.c.h.b16 %v1314
      %v1817 = vunpack.c.l.b16 %v1315
      %v1818 = vunpack.c.h.b16 %v1315
      %v1819 = vunpack.c.l.b16 %v1316
      %v1820 = vunpack.c.h.b16 %v1316
      %v1821 = vunpack.c.l.b16 %v1317
      %v1822 = vunpack.c.l.b16 %v1318
      %v1823 = vunpack.c.h.b16 %v1318
      %v1824 = vunpack.c.l.b16 %v1319
      %v1825 = vunpack.c.h.b16 %v1319
      %v1826 = vunpack.c.l.b16 %v1320
      %v1827 = vunpack.c.h.b16 %v1320
      %v1828 = vunpack.c.l.b16 %v1321
      %v1829 = vunpack.c.h.b16 %v1321
      %v1830 = vunpack.c.l.b16 %v1322
      %v1831 = vunpack.c.l.b16 %v1323
      %v1832 = vunpack.c.h.b16 %v1323
      %v1833 = vunpack.c.l.b16 %v1324
      %v1834 = vunpack.c.h.b16 %v1324
      %v1835 = vunpack.c.l.b16 %v1325
      %v1836 = vunpack.c.h.b16 %v1325
      %v1837 = vunpack.c.l.b16 %v1326
      %v1838 = vunpack.c.h.b16 %v1326
      %v1839 = vunpack.c.l.b16 %v1327
      %v1840 = vunpack.c.l.b16 %v1328
      %v1841 = vunpack.c.h.b16 %v1328
      %v1842 = vunpack.c.l.b16 %v1329
      %v1843 = vunpack.c.h.b16 %v1329
      %v1844 = vunpack.c.l.b16 %v1330
      %v1845 = vunpack.c.h.b16 %v1330
      %v1846 = vunpack.c.l.b16 %v1331
      %v1847 = vunpack.c.h.b16 %v1331
      %v1848 = vunpack.c.l.b16 %v1332
      %v1849 = vunpack.c.l.b16 %v1333
      %v1850 = vunpack.c.h.b16 %v1333
      %v1851 = vunpack.c.l.b16 %v1334
      %v1852 = vunpack.c.h.b16 %v1334
      %v1853 = vunpack.c.l.b16 %v1335
      %v1854 = vunpack.c.h.b16 %v1335
      %v1855 = vunpack.c.l.b16 %v1336
      %v1856 = vunpack.c.h.b16 %v1336
      %v1857 = vunpack.c.l.b16 %v1337
      %v1858 = vunpack.c.l.b16 %v1338
      %v1859 = vunpack.c.h.b16 %v1338
      %v1860 = vunpack.c.l.b16 %v1339
      %v1861 = vunpack.c.h.b16 %v1339
      %v1862 = vunpack.c.l.b16 %v1340
      %v1863 = vunpack.c.h.b16 %v1340
      %v1864 = vunpack.c.l.b16 %v1341
      %v1865 = vunpack.c.h.b16 %v1341
      %v1866 = vunpack.c.l.b16 %v1342
      %v1867 = vunpack.c.l.b16 %v1343
      %v1868 = vunpack.c.h.b16 %v1343
      %v1869 = vunpack.c.l.b16 %v1344
      %v1870 = vunpack.c.h.b16 %v1344
      %v1871 = vunpack.c.l.b16 %v1345
      %v1872 = vunpack.c.h.b16 %v1345
      %v1873 = vunpack.c.l.b16 %v1346
      %v1874 = vunpack.c.h.b16 %v1346
      %v1875 = vunpack.c.l.b16 %v1347
      %v1876 = vunpack.c.l.b16 %v1348
      %v1877 = vunpack.c.h.b16 %v1348
      %v1878 = vunpack.c.l.b16 %v1349
      %v1879 = vunpack.c.h.b16 %v1349
      %v1880 = vunpack.c.l.b16 %v1350
      %v1881 = vunpack.c.h.b16 %v1350
      %v1882 = vunpack.c.l.b16 %v1351
      %v1883 = vunpack.c.h.b16 %v1351
      %v1884 = vunpack.c.l.b16 %v1352
      %v1885 = vunpack.c.l.b16 %v1353
      %v1886 = vunpack.c.h.b16 %v1353
      %v1887 = vunpack.c.l.b16 %v1354
      %v1888 = vunpack.c.h.b16 %v1354
      %v1889 = vunpack.c.l.b16 %v1355
      %v1890 = vunpack.c.h.b16 %v1355
      %v1891 = vunpack.c.l.b16 %v1356
      %v1892 = vunpack.c.h.b16 %v1356
      %v1893 = vunpack.c.l.b16 %v1357
      %v1894 = vunpack.c.l.b16 %v1358
      %v1895 = vunpack.c.h.b16 %v1358
      %v1896 = vunpack.c.l.b16 %v1359
      %v1897 = vunpack.c.h.b16 %v1359
      %v1898 = vunpack.c.l.b16 %v1360
      %v1899 = vunpack.c.h.b16 %v1360
      %v1900 = vunpack.c.l.b16 %v1361
      %v1901 = vunpack.c.h.b16 %v1361
      %v1902 = vunpack.c.l.b16 %v1362
      %v1903 = vunpack.c.l.b16 %v1363
      %v1904 = vunpack.c.h.b16 %v1363
      %v1905 = vunpack.c.l.b16 %v1364
      %v1906 = vunpack.c.h.b16 %v1364
      %v1907 = vunpack.c.l.b16 %v1365
      %v1908 = vunpack.c.h.b16 %v1365
      %v1909 = vunpack.c.l.b16 %v1366
      %v1910 = vunpack.c.h.b16 %v1366
      %v1911 = vunpack.c.l.b16 %v1367
      %v1912 = vunpack.c.l.b16 %v1368
      %v1913 = vunpack.c.h.b16 %v1368
      %v1914 = vunpack.c.l.b16 %v1369
      %v1915 = vunpack.c.h.b16 %v1369
      %v1916 = vunpack.c.l.b16 %v1370
      %v1917 = vunpack.c.h.b16 %v1370
      %v1918 = vunpack.c.l.b16 %v1371
      %v1919 = vunpack.c.h.b16 %v1371
      %v1920 = vunpack.c.l.b16 %v1372
      %v1921 = vunpack.c.l.b16 %v1373
      %v1922 = vunpack.c.h.b16 %v1373
      %v1923 = vunpack.c.l.b16 %v1374
      %v1924 = vunpack.c.h.b16 %v1374
      %v1925 = vunpack.c.l.b16 %v1375
      %v1926 = vunpack.c.h.b16 %v1375
      %v1927 = vunpack.c.l.b16 %v1376
      %v1928 = vunpack.c.h.b16 %v1376
      %v1929 = vunpack.c.l.b16 %v1377
      %v1930 = vunpack.c.l.b16 %v1378
      %v1931 = vunpack.c.h.b16 %v1378
      %v1932 = vunpack.c.l.b16 %v1379
      %v1933 = vunpack.c.h.b16 %v1379
      %v1934 = vunpack.c.l.b16 %v1380
      %v1935 = vunpack.c.h.b16 %v1380
      %v1936 = vunpack.c.l.b16 %v1381
      %v1937 = vunpack.c.h.b16 %v1381
      %v1938 = vunpack.c.l.b16 %v1382
      %v1939 = vunpack.c.l.b16 %v1383
      %v1940 = vunpack.c.h.b16 %v1383
      %v1941 = vunpack.c.l.b16 %v1384
      %v1942 = vunpack.c.h.b16 %v1384
      %v1943 = vunpack.c.l.b16 %v1385
      %v1944 = vunpack.c.h.b16 %v1385
      %v1945 = vunpack.c.l.b16 %v1386
      %v1946 = vunpack.c.h.b16 %v1386
      %v1947 = vunpack.c.l.b16 %v1387
      %v1948 = vunpack.c.l.b16 %v1388
      %v1949 = vunpack.c.h.b16 %v1388
      %v1950 = vunpack.c.l.b16 %v1389
      %v1951 = vunpack.c.h.b16 %v1389
      %v1952 = vunpack.c.l.b16 %v1390
      %v1953 = vunpack.c.h.b16 %v1390
      %v1954 = vunpack.c.l.b16 %v1391
      %v1955 = vunpack.c.h.b16 %v1391
      %v1956 = vunpack.c.l.b16 %v1392
      %v1957 = vunpack.c.l.b16 %v1393
      %v1958 = vunpack.c.h.b16 %v1393
      %v1959 = vunpack.c.l.b16 %v1394
      %v1960 = vunpack.c.h.b16 %v1394
      %v1961 = vunpack.c.l.b16 %v1395
      %v1962 = vunpack.c.h.b16 %v1395
      %v1963 = vunpack.c.l.b16 %v1396
      %v1964 = vunpack.c.h.b16 %v1396
      %v1965 = vunpack.c.l.b16 %v1397
      %v1966 = vunpack.c.l.b16 %v1398
      %v1967 = vunpack.c.h.b16 %v1398
      %v1968 = vunpack.c.l.b16 %v1399
      %v1969 = vunpack.c.h.b16 %v1399
      %v1970 = vunpack.c.l.b16 %v1400
      %v1971 = vunpack.c.h.b16 %v1400
      %v1972 = vunpack.c.l.b16 %v1401
      %v1973 = vunpack.c.h.b16 %v1401
      %v1974 = vunpack.c.l.b16 %v1402
      %v1975 = vunpack.c.l.b16 %v1403
      %v1976 = vunpack.c.h.b16 %v1403
      %v1977 = vunpack.c.l.b16 %v1404
      %v1978 = vunpack.c.h.b16 %v1404
      %v1979 = vunpack.c.l.b16 %v1405
      %v1980 = vunpack.c.h.b16 %v1405
      %v1981 = vunpack.c.l.b16 %v1406
      %v1982 = vunpack.c.h.b16 %v1406
      %v1983 = vunpack.c.l.b16 %v1407
      %v1984 = vunpack.c.l.b16 %v1408
      %v1985 = vunpack.c.h.b16 %v1408
      %v1986 = vunpack.c.l.b16 %v1409
      %v1987 = vunpack.c.h.b16 %v1409
      %v1988 = vunpack.c.l.b16 %v1410
      %v1989 = vunpack.c.h.b16 %v1410
      %v1990 = vunpack.c.l.b16 %v1411
      %v1991 = vunpack.c.h.b16 %v1411
      %v1992 = vunpack.c.l.b16 %v1412
      %v1993 = vunpack.c.l.b16 %v1413
      %v1994 = vunpack.c.h.b16 %v1413
      %v1995 = vunpack.c.l.b16 %v1414
      %v1996 = vunpack.c.h.b16 %v1414
      %v1997 = vunpack.c.l.b16 %v1415
      %v1998 = vunpack.c.h.b16 %v1415
      %v1999 = vunpack.c.l.b16 %v1416
      %v2000 = vunpack.c.h.b16 %v1416
      %v2001 = vunpack.c.l.b16 %v1417
      %v2002 = vunpack.c.l.b16 %v1418
      %v2003 = vunpack.c.h.b16 %v1418
      %v2004 = vunpack.c.l.b16 %v1419
      %v2005 = vunpack.c.h.b16 %v1419
      %v2006 = vunpack.c.l.b16 %v1420
      %v2007 = vunpack.c.h.b16 %v1420
      %v2008 = vunpack.c.l.b16 %v1421
      %v2009 = vunpack.c.h.b16 %v1421
      %v2010 = vunpack.c.l.b16 %v1422
      %v2011 = vunpack.c.l.b16 %v1423
      %v2012 = vunpack.c.h.b16 %v1423
      %v2013 = vunpack.c.l.b16 %v1424
      %v2014 = vunpack.c.h.b16 %v1424
      %v2015 = vunpack.c.l.b16 %v1425
      %v2016 = vunpack.c.h.b16 %v1425
      %v2017 = vunpack.c.l.b16 %v1426
      %v2018 = vunpack.c.h.b16 %v1426
      %v2019 = vunpack.c.l.b16 %v1427
      %v2020 = vpack.c.b16 %v1741, %v1732
      %v2021 = vpack.c.b16 %v1742, %v1733
      %v2022 = vpack.c.b16 %v1743, %v1734
      %v2023 = vpack.c.b16 %v1744, %v1735
      %v2024 = vpack.c.b16 %v1745, %v1736
      %v2025 = vpack.c.b16 %v1746, %v1737
      %v2026 = vpack.c.b16 %v1747, %v1738
      %v2027 = vpack.c.b16 %v1748, %v1739
      %v2028 = vpack.c.b16 %v1749, %v1740
      %v2029 = vpack.c.b16 %v1759, %v1750
      %v2030 = vpack.c.b16 %v1760, %v1751
      %v2031 = vpack.c.b16 %v1761, %v1752
      %v2032 = vpack.c.b16 %v1762, %v1753
      %v2033 = vpack.c.b16 %v1763, %v1754
      %v2034 = vpack.c.b16 %v1764, %v1755
      %v2035 = vpack.c.b16 %v1765, %v1756
      %v2036 = vpack.c.b16 %v1766, %v1757
      %v2037 = vpack.c.b16 %v1767, %v1758
      %v2038 = vpack.c.b16 %v1777, %v1768
      %v2039 = vpack.c.b16 %v1778, %v1769
      %v2040 = vpack.c.b16 %v1779, %v1770
      %v2041 = vpack.c.b16 %v1780, %v1771
      %v2042 = vpack.c.b16 %v1781, %v1772
      %v2043 = vpack.c.b16 %v1782, %v1773
      %v2044 = vpack.c.b16 %v1783, %v1774
      %v2045 = vpack.c.b16 %v1784, %v1775
      %v2046 = vpack.c.b16 %v1785, %v1776
      %v2047 = vpack.c.b16 %v1795, %v1786
      %v2048 = vpack.c.b16 %v1796, %v1787
      %v2049 = vpack.c.b16 %v1797, %v1788
      %v2050 = vpack.c.b16 %v1798, %v1789
      %v2051 = vpack.c.b16 %v1799, %v1790
      %v2052 = vpack.c.b16 %v1800, %v1791
      %v2053 = vpack.c.b16 %v1801, %v1792
      %v2054 = vpack.c.b16 %v1802, %v1793
      %v2055 = vpack.c.b16 %v1803, %v1794
      %v2056 = vpack.c.b16 %v1813, %v1804
      %v2057 = vpack.c.b16 %v1814, %v1805
      %v2058 = vpack.c.b16 %v1815, %v1806
      %v2059 = vpack.c.b16 %v1816, %v1807
      %v2060 = vpack.c.b16 %v1817, %v1808
      %v2061 = vpack.c.b16 %v1818, %v1809
      %v2062 = vpack.c.b16 %v1819, %v1810
      %v2063 = vpack.c.b16 %v1820, %v1811
      %v2064 = vpack.c.b16 %v1821, %v1812
      %v2065 = vpack.c.b16 %v1831, %v1822
      %v2066 = vpack.c.b16 %v1832, %v1823
      %v2067 = vpack.c.b16 %v1833, %v1824
      %v2068 = vpack.c.b16 %v1834, %v1825
      %v2069 = vpack.c.b16 %v1835, %v1826
      %v2070 = vpack.c.b16 %v1836, %v1827
      %v2071 = vpack.c.b16 %v1837, %v1828
      %v2072 = vpack.c.b16 %v1838, %v1829
      %v2073 = vpack.c.b16 %v1839, %v1830
      %v2074 = vpack.c.b16 %v1849, %v1840
      %v2075 = vpack.c.b16 %v1850, %v1841
      %v2076 = vpack.c.b16 %v1851, %v1842
      %v2077 = vpack.c.b16 %v1852, %v1843
      %v2078 = vpack.c.b16 %v1853, %v1844
      %v2079 = vpack.c.b16 %v1854, %v1845
      %v2080 = vpack.c.b16 %v1855, %v1846
      %v2081 = vpack.c.b16 %v1856, %v1847
      %v2082 = vpack.c.b16 %v1857, %v1848
      %v2083 = vpack.c.b16 %v1867, %v1858
      %v2084 = vpack.c.b16 %v1868, %v1859
      %v2085 = vpack.c.b16 %v1869, %v1860
      %v2086 = vpack.c.b16 %v1870, %v1861
      %v2087 = vpack.c.b16 %v1871, %v1862
      %v2088 = vpack.c.b16 %v1872, %v1863
      %v2089 = vpack.c.b16 %v1873, %v1864
      %v2090 = vpack.c.b16 %v1874, %v1865
      %v2091 = vpack.c.b16 %v1875, %v1866
      %v2092 = vpack.c.b16 %v1885, %v1876
      %v2093 = vpack.c.b16 %v1886, %v1877
      %v2094 = vpack.c.b16 %v1887, %v1878
      %v2095 = vpack.c.b16 %v1888, %v1879
      %v2096 = vpack.c.b16 %v1889, %v1880
      %v2097 = vpack.c.b16 %v1890, %v1881
      %v2098 = vpack.c.b16 %v1891, %v1882
      %v2099 = vpack.c.b16 %v1892, %v1883
      %v2100 = vpack.c.b16 %v1893, %v1884
      %v2101 = vpack.c.b16 %v1903, %v1894
      %v2102 = vpack.c.b16 %v1904, %v1895
      %v2103 = vpack.c.b16 %v1905, %v1896
      %v2104 = vpack.c.b16 %v1906, %v1897
      %v2105 = vpack.c.b16 %v1907, %v1898
      %v2106 = vpack.c.b16 %v1908, %v1899
      %v2107 = vpack.c.b16 %v1909, %v1900
      %v2108 = vpack.c.b16 %v1910, %v1901
      %v2109 = vpack.c.b16 %v1911, %v1902
      %v2110 = vpack.c.b16 %v1921, %v1912
      %v2111 = vpack.c.b16 %v1922, %v1913
      %v2112 = vpack.c.b16 %v1923, %v1914
      %v2113 = vpack.c.b16 %v1924, %v1915
      %v2114 = vpack.c.b16 %v1925, %v1916
      %v2115 = vpack.c.b16 %v1926, %v1917
      %v2116 = vpack.c.b16 %v1927, %v1918
      %v2117 = vpack.c.b16 %v1928, %v1919
      %v2118 = vpack.c.b16 %v1929, %v1920
      %v2119 = vpack.c.b16 %v1939, %v1930
      %v2120 = vpack.c.b16 %v1940, %v1931
      %v2121 = vpack.c.b16 %v1941, %v1932
      %v2122 = vpack.c.b16 %v1942, %v1933
      %v2123 = vpack.c.b16 %v1943, %v1934
      %v2124 = vpack.c.b16 %v1944, %v1935
      %v2125 = vpack.c.b16 %v1945, %v1936
      %v2126 = vpack.c.b16 %v1946, %v1937
      %v2127 = vpack.c.b16 %v1947, %v1938
      %v2128 = vpack.c.b16 %v1957, %v1948
      %v2129 = vpack.c.b16 %v1958, %v1949
      %v2130 = vpack.c.b16 %v1959, %v1950
      %v2131 = vpack.c.b16 %v1960, %v1951
      %v2132 = vpack.c.b16 %v1961, %v1952
      %v2133 = vpack.c.b16 %v1962, %v1953
      %v2134 = vpack.c.b16 %v1963, %v1954
      %v2135 = vpack.c.b16 %v1964, %v1955
      %v2136 = vpack.c.b16 %v1965, %v1956
      %v2137 = vpack.c.b16 %v1975, %v1966
      %v2138 = vpack.c.b16 %v1976, %v1967
      %v2139 = vpack.c.b16 %v1977, %v1968
      %v2140 = vpack.c.b16 %v1978, %v1969
      %v2141 = vpack.c.b16 %v1979, %v1970
      %v2142 = vpack.c.b16 %v1980, %v1971
      %v2143 = vpack.c.b16 %v1981, %v1972
      %v2144 = vpack.c.b16 %v1982, %v1973
      %v2145 = vpack.c.b16 %v1983, %v1974
      %v2146 = vpack.c.b16 %v1993, %v1984
      %v2147 = vpack.c.b16 %v1994, %v1985
      %v2148 = vpack.c.b16 %v1995, %v1986
      %v2149 = vpack.c.b16 %v1996, %v1987
      %v2150 = vpack.c.b16 %v1997, %v1988
      %v2151 = vpack.c.b16 %v1998, %v1989
      %v2152 = vpack.c.b16 %v1999, %v1990
      %v2153 = vpack.c.b16 %v2000, %v1991
      %v2154 = vpack.c.b16 %v2001, %v1992
      %v2155 = vpack.c.b16 %v2011, %v2002
      %v2156 = vpack.c.b16 %v2012, %v2003
      %v2157 = vpack.c.b16 %v2013, %v2004
      %v2158 = vpack.c.b16 %v2014, %v2005
      %v2159 = vpack.c.b16 %v2015, %v2006
      %v2160 = vpack.c.b16 %v2016, %v2007
      %v2161 = vpack.c.b16 %v2017, %v2008
      %v2162 = vpack.c.b16 %v2018, %v2009
      %v2163 = vpack.c.b16 %v2019, %v2010
      %v2452 = vunpack.c.l.b16 %v1428
      %v2453 = vunpack.c.l.b16 %v1429
      %v2454 = vunpack.c.l.b16 %v1430
      %v2455 = vunpack.c.l.b16 %v1431
      %v2456 = vunpack.c.l.b16 %v1432
      %v2457 = vunpack.c.l.b16 %v1433
      %v2458 = vunpack.c.l.b16 %v1434
      %v2459 = vunpack.c.l.b16 %v1435
      %v2460 = vunpack.c.l.b16 %v1436
      %v2461 = vunpack.c.l.b16 %v1437
      %v2462 = vunpack.c.l.b16 %v1438
      %v2463 = vunpack.c.l.b16 %v1439
      %v2464 = vunpack.c.l.b16 %v1440
      %v2465 = vunpack.c.l.b16 %v1441
      %v2466 = vunpack.c.l.b16 %v1442
      %v2467 = vunpack.c.l.b16 %v1443
      %v2468 = vunpack.c.l.b16 %v1444
      %v2469 = vunpack.c.l.b16 %v1445
      %v2470 = vunpack.c.l.b16 %v1446
      %v2471 = vunpack.c.l.b16 %v1447
      %v2472 = vunpack.c.l.b16 %v1448
      %v2473 = vunpack.c.l.b16 %v1449
      %v2474 = vunpack.c.l.b16 %v1450
      %v2475 = vunpack.c.l.b16 %v1451
      %v2476 = vunpack.c.l.b16 %v1452
      %v2477 = vunpack.c.l.b16 %v1453
      %v2478 = vunpack.c.l.b16 %v1454
      %v2479 = vunpack.c.l.b16 %v1455
      %v2480 = vunpack.c.l.b16 %v1456
      %v2481 = vunpack.c.l.b16 %v1457
      %v2482 = vunpack.c.l.b16 %v1458
      %v2483 = vunpack.c.l.b16 %v1459
      %v2484 = vunpack.c.l.b16 %v1460
      %v2485 = vunpack.c.l.b16 %v1461
      %v2486 = vunpack.c.l.b16 %v1462
      %v2487 = vunpack.c.l.b16 %v1463
      %v2488 = vunpack.c.l.b16 %v1464
      %v2489 = vunpack.c.l.b16 %v1465
      %v2490 = vunpack.c.l.b16 %v1466
      %v2491 = vunpack.c.l.b16 %v1467
      %v2492 = vunpack.c.l.b16 %v1468
      %v2493 = vunpack.c.l.b16 %v1469
      %v2494 = vunpack.c.l.b16 %v1470
      %v2495 = vunpack.c.l.b16 %v1471
      %v2496 = vunpack.c.l.b16 %v1472
      %v2497 = vunpack.c.l.b16 %v1473
      %v2498 = vunpack.c.l.b16 %v1474
      %v2499 = vunpack.c.l.b16 %v1475
      %v2500 = vunpack.c.l.b16 %v1476
      %v2501 = vunpack.c.l.b16 %v1477
      %v2502 = vunpack.c.l.b16 %v1478
      %v2503 = vunpack.c.l.b16 %v1479
      %v2504 = vunpack.c.l.b16 %v1480
      %v2505 = vunpack.c.l.b16 %v1481
      %v2506 = vunpack.c.l.b16 %v1482
      %v2507 = vunpack.c.l.b16 %v1483
      %v2508 = vunpack.c.l.b16 %v1484
      %v2509 = vunpack.c.l.b16 %v1485
      %v2510 = vunpack.c.l.b16 %v1486
      %v2511 = vunpack.c.l.b16 %v1487
      %v2512 = vunpack.c.l.b16 %v1488
      %v2513 = vunpack.c.l.b16 %v1489
      %v2514 = vunpack.c.l.b16 %v1490
      %v2515 = vunpack.c.l.b16 %v1491
      %v2516 = vunpack.c.l.b16 %v1492
      %v2517 = vunpack.c.l.b16 %v1493
      %v2518 = vunpack.c.l.b16 %v1494
      %v2519 = vunpack.c.l.b16 %v1495
      %v2520 = vunpack.c.l.b16 %v1496
      %v2521 = vunpack.c.l.b16 %v1497
      %v2522 = vunpack.c.l.b16 %v1498
      %v2523 = vunpack.c.l.b16 %v1499
      %v2524 = vunpack.c.l.b16 %v1500
      %v2525 = vunpack.c.l.b16 %v1501
      %v2526 = vunpack.c.l.b16 %v1502
      %v2527 = vunpack.c.l.b16 %v1503
      %v2528 = vunpack.c.l.b16 %v1504
      %v2529 = vunpack.c.l.b16 %v1505
      %v2530 = vunpack.c.l.b16 %v1506
      %v2531 = vunpack.c.l.b16 %v1507
      %v2532 = vunpack.c.l.b16 %v1508
      %v2533 = vunpack.c.l.b16 %v1509
      %v2534 = vunpack.c.l.b16 %v1510
      %v2535 = vunpack.c.l.b16 %v1511
      %v2536 = vunpack.c.l.b16 %v1512
      %v2537 = vunpack.c.l.b16 %v1513
      %v2538 = vunpack.c.l.b16 %v1514
      %v2539 = vunpack.c.l.b16 %v1515
      %v2540 = vunpack.c.l.b16 %v1516
      %v2541 = vunpack.c.l.b16 %v1517
      %v2542 = vunpack.c.l.b16 %v1518
      %v2543 = vunpack.c.l.b16 %v1519
      %v2544 = vunpack.c.l.b16 %v1520
      %v2545 = vunpack.c.l.b16 %v1521
      %v2546 = vunpack.c.l.b16 %v1522
      %v2547 = vunpack.c.l.b16 %v1523
      %v2548 = vunpack.c.l.b16 %v1524
      %v2549 = vunpack.c.l.b16 %v1525
      %v2550 = vunpack.c.l.b16 %v1526
      %v2551 = vunpack.c.l.b16 %v1527
      %v2552 = vunpack.c.l.b16 %v1528
      %v2553 = vunpack.c.l.b16 %v1529
      %v2554 = vunpack.c.l.b16 %v1530
      %v2555 = vunpack.c.l.b16 %v1531
      %v2556 = vunpack.c.l.b16 %v1532
      %v2557 = vunpack.c.l.b16 %v1533
      %v2558 = vunpack.c.l.b16 %v1534
      %v2559 = vunpack.c.l.b16 %v1535
      %v2560 = vunpack.c.l.b16 %v1536
      %v2561 = vunpack.c.l.b16 %v1537
      %v2562 = vunpack.c.l.b16 %v1538
      %v2563 = vunpack.c.l.b16 %v1539
      %v2564 = vunpack.c.l.b16 %v1540
      %v2565 = vunpack.c.l.b16 %v1541
      %v2566 = vunpack.c.l.b16 %v1542
      %v2567 = vunpack.c.l.b16 %v1543
      %v2568 = vunpack.c.l.b16 %v1544
      %v2569 = vunpack.c.l.b16 %v1545
      %v2570 = vunpack.c.l.b16 %v1546
      %v2571 = vunpack.c.l.b16 %v1547
      %v2572 = vunpack.c.l.b16 %v1548
      %v2573 = vunpack.c.l.b16 %v1549
      %v2574 = vunpack.c.l.b16 %v1550
      %v2575 = vunpack.c.l.b16 %v1551
      %v2576 = vunpack.c.l.b16 %v1552
      %v2577 = vunpack.c.l.b16 %v1553
      %v2578 = vunpack.c.l.b16 %v1554
      %v2579 = vunpack.c.l.b16 %v1555
      %v2580 = vunpack.c.l.b16 %v1556
      %v2581 = vunpack.c.l.b16 %v1557
      %v2582 = vunpack.c.l.b16 %v1558
      %v2583 = vunpack.c.l.b16 %v1559
      %v2584 = vunpack.c.l.b16 %v1560
      %v2585 = vunpack.c.l.b16 %v1561
      %v2586 = vunpack.c.l.b16 %v1562
      %v2587 = vunpack.c.l.b16 %v1563
      %v2588 = vunpack.c.l.b16 %v1564
      %v2589 = vunpack.c.l.b16 %v1565
      %v2590 = vunpack.c.l.b16 %v1566
      %v2591 = vunpack.c.l.b16 %v1567
      %v2592 = vunpack.c.l.b16 %v1568
      %v2593 = vunpack.c.l.b16 %v1569
      %v2594 = vunpack.c.l.b16 %v1570
      %v2595 = vunpack.c.l.b16 %v1571
      %v2596 = vpack.c.b16 %v2453, %v2452
      %v2597 = vpack.c.b16 %v2455, %v2454
      %v2598 = vpack.c.b16 %v2457, %v2456
      %v2599 = vpack.c.b16 %v2459, %v2458
      %v2600 = vpack.c.b16 %v2461, %v2460
      %v2601 = vpack.c.b16 %v2463, %v2462
      %v2602 = vpack.c.b16 %v2465, %v2464
      %v2603 = vpack.c.b16 %v2467, %v2466
      %v2604 = vpack.c.b16 %v2469, %v2468
      %v2605 = vpack.c.b16 %v2471, %v2470
      %v2606 = vpack.c.b16 %v2473, %v2472
      %v2607 = vpack.c.b16 %v2475, %v2474
      %v2608 = vpack.c.b16 %v2477, %v2476
      %v2609 = vpack.c.b16 %v2479, %v2478
      %v2610 = vpack.c.b16 %v2481, %v2480
      %v2611 = vpack.c.b16 %v2483, %v2482
      %v2612 = vpack.c.b16 %v2485, %v2484
      %v2613 = vpack.c.b16 %v2487, %v2486
      %v2614 = vpack.c.b16 %v2489, %v2488
      %v2615 = vpack.c.b16 %v2491, %v2490
      %v2616 = vpack.c.b16 %v2493, %v2492
      %v2617 = vpack.c.b16 %v2495, %v2494
      %v2618 = vpack.c.b16 %v2497, %v2496
      %v2619 = vpack.c.b16 %v2499, %v2498
      %v2620 = vpack.c.b16 %v2501, %v2500
      %v2621 = vpack.c.b16 %v2503, %v2502
      %v2622 = vpack.c.b16 %v2505, %v2504
      %v2623 = vpack.c.b16 %v2507, %v2506
      %v2624 = vpack.c.b16 %v2509, %v2508
      %v2625 = vpack.c.b16 %v2511, %v2510
      %v2626 = vpack.c.b16 %v2513, %v2512
      %v2627 = vpack.c.b16 %v2515, %v2514
      %v2628 = vpack.c.b16 %v2517, %v2516
      %v2629 = vpack.c.b16 %v2519, %v2518
      %v2630 = vpack.c.b16 %v2521, %v2520
      %v2631 = vpack.c.b16 %v2523, %v2522
      %v2632 = vpack.c.b16 %v2525, %v2524
      %v2633 = vpack.c.b16 %v2527, %v2526
      %v2634 = vpack.c.b16 %v2529, %v2528
      %v2635 = vpack.c.b16 %v2531, %v2530
      %v2636 = vpack.c.b16 %v2533, %v2532
      %v2637 = vpack.c.b16 %v2535, %v2534
      %v2638 = vpack.c.b16 %v2537, %v2536
      %v2639 = vpack.c.b16 %v2539, %v2538
      %v2640 = vpack.c.b16 %v2541, %v2540
      %v2641 = vpack.c.b16 %v2543, %v2542
      %v2642 = vpack.c.b16 %v2545, %v2544
      %v2643 = vpack.c.b16 %v2547, %v2546
      %v2644 = vpack.c.b16 %v2549, %v2548
      %v2645 = vpack.c.b16 %v2551, %v2550
      %v2646 = vpack.c.b16 %v2553, %v2552
      %v2647 = vpack.c.b16 %v2555, %v2554
      %v2648 = vpack.c.b16 %v2557, %v2556
      %v2649 = vpack.c.b16 %v2559, %v2558
      %v2650 = vpack.c.b16 %v2561, %v2560
      %v2651 = vpack.c.b16 %v2563, %v2562
      %v2652 = vpack.c.b16 %v2565, %v2564
      %v2653 = vpack.c.b16 %v2567, %v2566
      %v2654 = vpack.c.b16 %v2569, %v2568
      %v2655 = vpack.c.b16 %v2571, %v2570
      %v2656 = vpack.c.b16 %v2573, %v2572
      %v2657 = vpack.c.b16 %v2575, %v2574
      %v2658 = vpack.c.b16 %v2577, %v2576
      %v2659 = vpack.c.b16 %v2579, %v2578
      %v2660 = vpack.c.b16 %v2581, %v2580
      %v2661 = vpack.c.b16 %v2583, %v2582
      %v2662 = vpack.c.b16 %v2585, %v2584
      %v2663 = vpack.c.b16 %v2587, %v2586
      %v2664 = vpack.c.b16 %v2589, %v2588
      %v2665 = vpack.c.b16 %v2591, %v2590
      %v2666 = vpack.c.b16 %v2593, %v2592
      %v2667 = vpack.c.b16 %v2595, %v2594
      %2740 = vmatpush.bf16.msra.mxu0 %v2603
      %2741 = vmatpush.bf16.msra.mxu0 %v2602
      %2742 = vmatpush.bf16.msra.mxu0 %v2601
      %2743 = vmatpush.bf16.msra.mxu0 %v2600
      %2744 = vmatpush.bf16.msra.mxu0 %v2599
      %2745 = vmatpush.bf16.msra.mxu0 %v2598
      %2746 = vmatpush.bf16.msra.mxu0 %v2597
      %2747 = vmatpush.bf16.msra.mxu0 %v2596
      %2748 = vmatmul.bf16.gmra.mxu0 %v2020
      %v2749 = vpop.f32.mrf.mxu0
      %v2750 = vadd.f32 0.0, %v2749
      %v2751 = vpop.f32.mrf.mxu0
      %v2752 = vadd.f32 0.0, %v2751
      %2753 = vmatmul.bf16.gmra.mxu0 %v2029
      %v2754 = vpop.f32.mrf.mxu0
      %v2755 = vadd.f32 0.0, %v2754
      %v2756 = vpop.f32.mrf.mxu0
      %v2757 = vadd.f32 0.0, %v2756
      %2758 = vmatmul.bf16.gmra.mxu0 %v2038
      %v2759 = vpop.f32.mrf.mxu0
      %v2760 = vadd.f32 0.0, %v2759
      %v2761 = vpop.f32.mrf.mxu0
      %v2762 = vadd.f32 0.0, %v2761
      %2763 = vmatmul.bf16.gmra.mxu0 %v2047
      %v2764 = vpop.f32.mrf.mxu0
      %v2765 = vadd.f32 0.0, %v2764
      %v2766 = vpop.f32.mrf.mxu0
      %v2767 = vadd.f32 0.0, %v2766
      %2768 = vmatmul.bf16.gmra.mxu0 %v2056
      %v2769 = vpop.f32.mrf.mxu0
      %v2770 = vadd.f32 0.0, %v2769
      %v2771 = vpop.f32.mrf.mxu0
      %v2772 = vadd.f32 0.0, %v2771
      %2773 = vmatmul.bf16.gmra.mxu0 %v2065
      %v2774 = vpop.f32.mrf.mxu0
      %v2775 = vadd.f32 0.0, %v2774
      %v2776 = vpop.f32.mrf.mxu0
      %v2777 = vadd.f32 0.0, %v2776
      %2778 = vmatmul.bf16.gmra.mxu0 %v2074
      %v2779 = vpop.f32.mrf.mxu0
      %v2780 = vadd.f32 0.0, %v2779
      %v2781 = vpop.f32.mrf.mxu0
      %v2782 = vadd.f32 0.0, %v2781
      %2783 = vmatmul.bf16.gmra.mxu0 %v2083
      %v2784 = vpop.f32.mrf.mxu0
      %v2785 = vadd.f32 0.0, %v2784
      %v2786 = vpop.f32.mrf.mxu0
      %v2787 = vadd.f32 0.0, %v2786
      %2788 = vmatmul.bf16.gmra.mxu0 %v2092
      %v2789 = vpop.f32.mrf.mxu0
      %v2790 = vadd.f32 0.0, %v2789
      %v2791 = vpop.f32.mrf.mxu0
      %v2792 = vadd.f32 0.0, %v2791
      %2793 = vmatmul.bf16.gmra.mxu0 %v2101
      %v2794 = vpop.f32.mrf.mxu0
      %v2795 = vadd.f32 0.0, %v2794
      %v2796 = vpop.f32.mrf.mxu0
      %v2797 = vadd.f32 0.0, %v2796
      %2798 = vmatmul.bf16.gmra.mxu0 %v2110
      %v2799 = vpop.f32.mrf.mxu0
      %v2800 = vadd.f32 0.0, %v2799
      %v2801 = vpop.f32.mrf.mxu0
      %v2802 = vadd.f32 0.0, %v2801
      %2803 = vmatmul.bf16.gmra.mxu0 %v2119
      %v2804 = vpop.f32.mrf.mxu0
      %v2805 = vadd.f32 0.0, %v2804
      %v2806 = vpop.f32.mrf.mxu0
      %v2807 = vadd.f32 0.0, %v2806
      %2808 = vmatmul.bf16.gmra.mxu0 %v2128
      %v2809 = vpop.f32.mrf.mxu0
      %v2810 = vadd.f32 0.0, %v2809
      %v2811 = vpop.f32.mrf.mxu0
      %v2812 = vadd.f32 0.0, %v2811
      %2813 = vmatmul.bf16.gmra.mxu0 %v2137
      %v2814 = vpop.f32.mrf.mxu0
      %v2815 = vadd.f32 0.0, %v2814
      %v2816 = vpop.f32.mrf.mxu0
      %v2817 = vadd.f32 0.0, %v2816
      %2818 = vmatmul.bf16.gmra.mxu0 %v2146
      %v2819 = vpop.f32.mrf.mxu0
      %v2820 = vadd.f32 0.0, %v2819
      %v2821 = vpop.f32.mrf.mxu0
      %v2822 = vadd.f32 0.0, %v2821
      %2823 = vmatmul.bf16.gmra.mxu0 %v2155
      %v2824 = vpop.f32.mrf.mxu0
      %v2825 = vadd.f32 0.0, %v2824
      %v2826 = vpop.f32.mrf.mxu0
      %v2827 = vadd.f32 0.0, %v2826
      %2828 = vdwg.mxu0
      %2829 = vmatpush.bf16.msra.mxu0 %v2611
      %2830 = vmatpush.bf16.msra.mxu0 %v2610
      %2831 = vmatpush.bf16.msra.mxu0 %v2609
      %2832 = vmatpush.bf16.msra.mxu0 %v2608
      %2833 = vmatpush.bf16.msra.mxu0 %v2607
      %2834 = vmatpush.bf16.msra.mxu0 %v2606
      %2835 = vmatpush.bf16.msra.mxu0 %v2605
      %2836 = vmatpush.bf16.msra.mxu0 %v2604
      %2837 = vmatmul.bf16.gmra.mxu0 %v2021
      %v2838 = vpop.f32.mrf.mxu0
      %v2839 = vadd.f32 %v2750, %v2838
      %v2840 = vpop.f32.mrf.mxu0
      %v2841 = vadd.f32 %v2752, %v2840
      %2842 = vmatmul.bf16.gmra.mxu0 %v2030
      %v2843 = vpop.f32.mrf.mxu0
      %v2844 = vadd.f32 %v2755, %v2843
      %v2845 = vpop.f32.mrf.mxu0
      %v2846 = vadd.f32 %v2757, %v2845
      %2847 = vmatmul.bf16.gmra.mxu0 %v2039
      %v2848 = vpop.f32.mrf.mxu0
      %v2849 = vadd.f32 %v2760, %v2848
      %v2850 = vpop.f32.mrf.mxu0
      %v2851 = vadd.f32 %v2762, %v2850
      %2852 = vmatmul.bf16.gmra.mxu0 %v2048
      %v2853 = vpop.f32.mrf.mxu0
      %v2854 = vadd.f32 %v2765, %v2853
      %v2855 = vpop.f32.mrf.mxu0
      %v2856 = vadd.f32 %v2767, %v2855
      %2857 = vmatmul.bf16.gmra.mxu0 %v2057
      %v2858 = vpop.f32.mrf.mxu0
      %v2859 = vadd.f32 %v2770, %v2858
      %v2860 = vpop.f32.mrf.mxu0
      %v2861 = vadd.f32 %v2772, %v2860
      %2862 = vmatmul.bf16.gmra.mxu0 %v2066
      %v2863 = vpop.f32.mrf.mxu0
      %v2864 = vadd.f32 %v2775, %v2863
      %v2865 = vpop.f32.mrf.mxu0
      %v2866 = vadd.f32 %v2777, %v2865
      %2867 = vmatmul.bf16.gmra.mxu0 %v2075
      %v2868 = vpop.f32.mrf.mxu0
      %v2869 = vadd.f32 %v2780, %v2868
      %v2870 = vpop.f32.mrf.mxu0
      %v2871 = vadd.f32 %v2782, %v2870
      %2872 = vmatmul.bf16.gmra.mxu0 %v2084
      %v2873 = vpop.f32.mrf.mxu0
      %v2874 = vadd.f32 %v2785, %v2873
      %v2875 = vpop.f32.mrf.mxu0
      %v2876 = vadd.f32 %v2787, %v2875
      %2877 = vmatmul.bf16.gmra.mxu0 %v2093
      %v2878 = vpop.f32.mrf.mxu0
      %v2879 = vadd.f32 %v2790, %v2878
      %v2880 = vpop.f32.mrf.mxu0
      %v2881 = vadd.f32 %v2792, %v2880
      %2882 = vmatmul.bf16.gmra.mxu0 %v2102
      %v2883 = vpop.f32.mrf.mxu0
      %v2884 = vadd.f32 %v2795, %v2883
      %v2885 = vpop.f32.mrf.mxu0
      %v2886 = vadd.f32 %v2797, %v2885
      %2887 = vmatmul.bf16.gmra.mxu0 %v2111
      %v2888 = vpop.f32.mrf.mxu0
      %v2889 = vadd.f32 %v2800, %v2888
      %v2890 = vpop.f32.mrf.mxu0
      %v2891 = vadd.f32 %v2802, %v2890
      %2892 = vmatmul.bf16.gmra.mxu0 %v2120
      %v2893 = vpop.f32.mrf.mxu0
      %v2894 = vadd.f32 %v2805, %v2893
      %v2895 = vpop.f32.mrf.mxu0
      %v2896 = vadd.f32 %v2807, %v2895
      %2897 = vmatmul.bf16.gmra.mxu0 %v2129
      %v2898 = vpop.f32.mrf.mxu0
      %v2899 = vadd.f32 %v2810, %v2898
      %v2900 = vpop.f32.mrf.mxu0
      %v2901 = vadd.f32 %v2812, %v2900
      %2902 = vmatmul.bf16.gmra.mxu0 %v2138
      %v2903 = vpop.f32.mrf.mxu0
      %v2904 = vadd.f32 %v2815, %v2903
      %v2905 = vpop.f32.mrf.mxu0
      %v2906 = vadd.f32 %v2817, %v2905
      %2907 = vmatmul.bf16.gmra.mxu0 %v2147
      %v2908 = vpop.f32.mrf.mxu0
      %v2909 = vadd.f32 %v2820, %v2908
      %v2910 = vpop.f32.mrf.mxu0
      %v2911 = vadd.f32 %v2822, %v2910
      %2912 = vmatmul.bf16.gmra.mxu0 %v2156
      %v2913 = vpop.f32.mrf.mxu0
      %v2914 = vadd.f32 %v2825, %v2913
      %v2915 = vpop.f32.mrf.mxu0
      %v2916 = vadd.f32 %v2827, %v2915
      %2917 = vdwg.mxu0
      %2918 = vmatpush.bf16.msra.mxu0 %v2619
      %2919 = vmatpush.bf16.msra.mxu0 %v2618
      %2920 = vmatpush.bf16.msra.mxu0 %v2617
      %2921 = vmatpush.bf16.msra.mxu0 %v2616
      %2922 = vmatpush.bf16.msra.mxu0 %v2615
      %2923 = vmatpush.bf16.msra.mxu0 %v2614
      %2924 = vmatpush.bf16.msra.mxu0 %v2613
      %2925 = vmatpush.bf16.msra.mxu0 %v2612
      %2926 = vmatmul.bf16.gmra.mxu0 %v2022
      %v2927 = vpop.f32.mrf.mxu0
      %v2928 = vadd.f32 %v2839, %v2927
      %v2929 = vpop.f32.mrf.mxu0
      %v2930 = vadd.f32 %v2841, %v2929
      %2931 = vmatmul.bf16.gmra.mxu0 %v2031
      %v2932 = vpop.f32.mrf.mxu0
      %v2933 = vadd.f32 %v2844, %v2932
      %v2934 = vpop.f32.mrf.mxu0
      %v2935 = vadd.f32 %v2846, %v2934
      %2936 = vmatmul.bf16.gmra.mxu0 %v2040
      %v2937 = vpop.f32.mrf.mxu0
      %v2938 = vadd.f32 %v2849, %v2937
      %v2939 = vpop.f32.mrf.mxu0
      %v2940 = vadd.f32 %v2851, %v2939
      %2941 = vmatmul.bf16.gmra.mxu0 %v2049
      %v2942 = vpop.f32.mrf.mxu0
      %v2943 = vadd.f32 %v2854, %v2942
      %v2944 = vpop.f32.mrf.mxu0
      %v2945 = vadd.f32 %v2856, %v2944
      %2946 = vmatmul.bf16.gmra.mxu0 %v2058
      %v2947 = vpop.f32.mrf.mxu0
      %v2948 = vadd.f32 %v2859, %v2947
      %v2949 = vpop.f32.mrf.mxu0
      %v2950 = vadd.f32 %v2861, %v2949
      %2951 = vmatmul.bf16.gmra.mxu0 %v2067
      %v2952 = vpop.f32.mrf.mxu0
      %v2953 = vadd.f32 %v2864, %v2952
      %v2954 = vpop.f32.mrf.mxu0
      %v2955 = vadd.f32 %v2866, %v2954
      %2956 = vmatmul.bf16.gmra.mxu0 %v2076
      %v2957 = vpop.f32.mrf.mxu0
      %v2958 = vadd.f32 %v2869, %v2957
      %v2959 = vpop.f32.mrf.mxu0
      %v2960 = vadd.f32 %v2871, %v2959
      %2961 = vmatmul.bf16.gmra.mxu0 %v2085
      %v2962 = vpop.f32.mrf.mxu0
      %v2963 = vadd.f32 %v2874, %v2962
      %v2964 = vpop.f32.mrf.mxu0
      %v2965 = vadd.f32 %v2876, %v2964
      %2966 = vmatmul.bf16.gmra.mxu0 %v2094
      %v2967 = vpop.f32.mrf.mxu0
      %v2968 = vadd.f32 %v2879, %v2967
      %v2969 = vpop.f32.mrf.mxu0
      %v2970 = vadd.f32 %v2881, %v2969
      %2971 = vmatmul.bf16.gmra.mxu0 %v2103
      %v2972 = vpop.f32.mrf.mxu0
      %v2973 = vadd.f32 %v2884, %v2972
      %v2974 = vpop.f32.mrf.mxu0
      %v2975 = vadd.f32 %v2886, %v2974
      %2976 = vmatmul.bf16.gmra.mxu0 %v2112
      %v2977 = vpop.f32.mrf.mxu0
      %v2978 = vadd.f32 %v2889, %v2977
      %v2979 = vpop.f32.mrf.mxu0
      %v2980 = vadd.f32 %v2891, %v2979
      %2981 = vmatmul.bf16.gmra.mxu0 %v2121
      %v2982 = vpop.f32.mrf.mxu0
      %v2983 = vadd.f32 %v2894, %v2982
      %v2984 = vpop.f32.mrf.mxu0
      %v2985 = vadd.f32 %v2896, %v2984
      %2986 = vmatmul.bf16.gmra.mxu0 %v2130
      %v2987 = vpop.f32.mrf.mxu0
      %v2988 = vadd.f32 %v2899, %v2987
      %v2989 = vpop.f32.mrf.mxu0
      %v2990 = vadd.f32 %v2901, %v2989
      %2991 = vmatmul.bf16.gmra.mxu0 %v2139
      %v2992 = vpop.f32.mrf.mxu0
      %v2993 = vadd.f32 %v2904, %v2992
      %v2994 = vpop.f32.mrf.mxu0
      %v2995 = vadd.f32 %v2906, %v2994
      %2996 = vmatmul.bf16.gmra.mxu0 %v2148
      %v2997 = vpop.f32.mrf.mxu0
      %v2998 = vadd.f32 %v2909, %v2997
      %v2999 = vpop.f32.mrf.mxu0
      %v3000 = vadd.f32 %v2911, %v2999
      %3001 = vmatmul.bf16.gmra.mxu0 %v2157
      %v3002 = vpop.f32.mrf.mxu0
      %v3003 = vadd.f32 %v2914, %v3002
      %v3004 = vpop.f32.mrf.mxu0
      %v3005 = vadd.f32 %v2916, %v3004
      %3006 = vdwg.mxu0
      %3007 = vmatpush.bf16.msra.mxu0 %v2627
      %3008 = vmatpush.bf16.msra.mxu0 %v2626
      %3009 = vmatpush.bf16.msra.mxu0 %v2625
      %3010 = vmatpush.bf16.msra.mxu0 %v2624
      %3011 = vmatpush.bf16.msra.mxu0 %v2623
      %3012 = vmatpush.bf16.msra.mxu0 %v2622
      %3013 = vmatpush.bf16.msra.mxu0 %v2621
      %3014 = vmatpush.bf16.msra.mxu0 %v2620
      %3015 = vmatmul.bf16.gmra.mxu0 %v2023
      %v3016 = vpop.f32.mrf.mxu0
      %v3017 = vadd.f32 %v2928, %v3016
      %v3018 = vpop.f32.mrf.mxu0
      %v3019 = vadd.f32 %v2930, %v3018
      %3020 = vmatmul.bf16.gmra.mxu0 %v2032
      %v3021 = vpop.f32.mrf.mxu0
      %v3022 = vadd.f32 %v2933, %v3021
      %v3023 = vpop.f32.mrf.mxu0
      %v3024 = vadd.f32 %v2935, %v3023
      %3025 = vmatmul.bf16.gmra.mxu0 %v2041
      %v3026 = vpop.f32.mrf.mxu0
      %v3027 = vadd.f32 %v2938, %v3026
      %v3028 = vpop.f32.mrf.mxu0
      %v3029 = vadd.f32 %v2940, %v3028
      %3030 = vmatmul.bf16.gmra.mxu0 %v2050
      %v3031 = vpop.f32.mrf.mxu0
      %v3032 = vadd.f32 %v2943, %v3031
      %v3033 = vpop.f32.mrf.mxu0
      %v3034 = vadd.f32 %v2945, %v3033
      %3035 = vmatmul.bf16.gmra.mxu0 %v2059
      %v3036 = vpop.f32.mrf.mxu0
      %v3037 = vadd.f32 %v2948, %v3036
      %v3038 = vpop.f32.mrf.mxu0
      %v3039 = vadd.f32 %v2950, %v3038
      %3040 = vmatmul.bf16.gmra.mxu0 %v2068
      %v3041 = vpop.f32.mrf.mxu0
      %v3042 = vadd.f32 %v2953, %v3041
      %v3043 = vpop.f32.mrf.mxu0
      %v3044 = vadd.f32 %v2955, %v3043
      %3045 = vmatmul.bf16.gmra.mxu0 %v2077
      %v3046 = vpop.f32.mrf.mxu0
      %v3047 = vadd.f32 %v2958, %v3046
      %v3048 = vpop.f32.mrf.mxu0
      %v3049 = vadd.f32 %v2960, %v3048
      %3050 = vmatmul.bf16.gmra.mxu0 %v2086
      %v3051 = vpop.f32.mrf.mxu0
      %v3052 = vadd.f32 %v2963, %v3051
      %v3053 = vpop.f32.mrf.mxu0
      %v3054 = vadd.f32 %v2965, %v3053
      %3055 = vmatmul.bf16.gmra.mxu0 %v2095
      %v3056 = vpop.f32.mrf.mxu0
      %v3057 = vadd.f32 %v2968, %v3056
      %v3058 = vpop.f32.mrf.mxu0
      %v3059 = vadd.f32 %v2970, %v3058
      %3060 = vmatmul.bf16.gmra.mxu0 %v2104
      %v3061 = vpop.f32.mrf.mxu0
      %v3062 = vadd.f32 %v2973, %v3061
      %v3063 = vpop.f32.mrf.mxu0
      %v3064 = vadd.f32 %v2975, %v3063
      %3065 = vmatmul.bf16.gmra.mxu0 %v2113
      %v3066 = vpop.f32.mrf.mxu0
      %v3067 = vadd.f32 %v2978, %v3066
      %v3068 = vpop.f32.mrf.mxu0
      %v3069 = vadd.f32 %v2980, %v3068
      %3070 = vmatmul.bf16.gmra.mxu0 %v2122
      %v3071 = vpop.f32.mrf.mxu0
      %v3072 = vadd.f32 %v2983, %v3071
      %v3073 = vpop.f32.mrf.mxu0
      %v3074 = vadd.f32 %v2985, %v3073
      %3075 = vmatmul.bf16.gmra.mxu0 %v2131
      %v3076 = vpop.f32.mrf.mxu0
      %v3077 = vadd.f32 %v2988, %v3076
      %v3078 = vpop.f32.mrf.mxu0
      %v3079 = vadd.f32 %v2990, %v3078
      %3080 = vmatmul.bf16.gmra.mxu0 %v2140
      %v3081 = vpop.f32.mrf.mxu0
      %v3082 = vadd.f32 %v2993, %v3081
      %v3083 = vpop.f32.mrf.mxu0
      %v3084 = vadd.f32 %v2995, %v3083
      %3085 = vmatmul.bf16.gmra.mxu0 %v2149
      %v3086 = vpop.f32.mrf.mxu0
      %v3087 = vadd.f32 %v2998, %v3086
      %v3088 = vpop.f32.mrf.mxu0
      %v3089 = vadd.f32 %v3000, %v3088
      %3090 = vmatmul.bf16.gmra.mxu0 %v2158
      %v3091 = vpop.f32.mrf.mxu0
      %v3092 = vadd.f32 %v3003, %v3091
      %v3093 = vpop.f32.mrf.mxu0
      %v3094 = vadd.f32 %v3005, %v3093
      %3095 = vdwg.mxu0
      %3096 = vmatpush.bf16.msra.mxu0 %v2635
      %3097 = vmatpush.bf16.msra.mxu0 %v2634
      %3098 = vmatpush.bf16.msra.mxu0 %v2633
      %3099 = vmatpush.bf16.msra.mxu0 %v2632
      %3100 = vmatpush.bf16.msra.mxu0 %v2631
      %3101 = vmatpush.bf16.msra.mxu0 %v2630
      %3102 = vmatpush.bf16.msra.mxu0 %v2629
      %3103 = vmatpush.bf16.msra.mxu0 %v2628
      %3104 = vmatmul.bf16.gmra.mxu0 %v2024
      %v3105 = vpop.f32.mrf.mxu0
      %v3106 = vadd.f32 %v3017, %v3105
      %v3107 = vpop.f32.mrf.mxu0
      %v3108 = vadd.f32 %v3019, %v3107
      %3109 = vmatmul.bf16.gmra.mxu0 %v2033
      %v3110 = vpop.f32.mrf.mxu0
      %v3111 = vadd.f32 %v3022, %v3110
      %v3112 = vpop.f32.mrf.mxu0
      %v3113 = vadd.f32 %v3024, %v3112
      %3114 = vmatmul.bf16.gmra.mxu0 %v2042
      %v3115 = vpop.f32.mrf.mxu0
      %v3116 = vadd.f32 %v3027, %v3115
      %v3117 = vpop.f32.mrf.mxu0
      %v3118 = vadd.f32 %v3029, %v3117
      %3119 = vmatmul.bf16.gmra.mxu0 %v2051
      %v3120 = vpop.f32.mrf.mxu0
      %v3121 = vadd.f32 %v3032, %v3120
      %v3122 = vpop.f32.mrf.mxu0
      %v3123 = vadd.f32 %v3034, %v3122
      %3124 = vmatmul.bf16.gmra.mxu0 %v2060
      %v3125 = vpop.f32.mrf.mxu0
      %v3126 = vadd.f32 %v3037, %v3125
      %v3127 = vpop.f32.mrf.mxu0
      %v3128 = vadd.f32 %v3039, %v3127
      %3129 = vmatmul.bf16.gmra.mxu0 %v2069
      %v3130 = vpop.f32.mrf.mxu0
      %v3131 = vadd.f32 %v3042, %v3130
      %v3132 = vpop.f32.mrf.mxu0
      %v3133 = vadd.f32 %v3044, %v3132
      %3134 = vmatmul.bf16.gmra.mxu0 %v2078
      %v3135 = vpop.f32.mrf.mxu0
      %v3136 = vadd.f32 %v3047, %v3135
      %v3137 = vpop.f32.mrf.mxu0
      %v3138 = vadd.f32 %v3049, %v3137
      %3139 = vmatmul.bf16.gmra.mxu0 %v2087
      %v3140 = vpop.f32.mrf.mxu0
      %v3141 = vadd.f32 %v3052, %v3140
      %v3142 = vpop.f32.mrf.mxu0
      %v3143 = vadd.f32 %v3054, %v3142
      %3144 = vmatmul.bf16.gmra.mxu0 %v2096
      %v3145 = vpop.f32.mrf.mxu0
      %v3146 = vadd.f32 %v3057, %v3145
      %v3147 = vpop.f32.mrf.mxu0
      %v3148 = vadd.f32 %v3059, %v3147
      %3149 = vmatmul.bf16.gmra.mxu0 %v2105
      %v3150 = vpop.f32.mrf.mxu0
      %v3151 = vadd.f32 %v3062, %v3150
      %v3152 = vpop.f32.mrf.mxu0
      %v3153 = vadd.f32 %v3064, %v3152
      %3154 = vmatmul.bf16.gmra.mxu0 %v2114
      %v3155 = vpop.f32.mrf.mxu0
      %v3156 = vadd.f32 %v3067, %v3155
      %v3157 = vpop.f32.mrf.mxu0
      %v3158 = vadd.f32 %v3069, %v3157
      %3159 = vmatmul.bf16.gmra.mxu0 %v2123
      %v3160 = vpop.f32.mrf.mxu0
      %v3161 = vadd.f32 %v3072, %v3160
      %v3162 = vpop.f32.mrf.mxu0
      %v3163 = vadd.f32 %v3074, %v3162
      %3164 = vmatmul.bf16.gmra.mxu0 %v2132
      %v3165 = vpop.f32.mrf.mxu0
      %v3166 = vadd.f32 %v3077, %v3165
      %v3167 = vpop.f32.mrf.mxu0
      %v3168 = vadd.f32 %v3079, %v3167
      %3169 = vmatmul.bf16.gmra.mxu0 %v2141
      %v3170 = vpop.f32.mrf.mxu0
      %v3171 = vadd.f32 %v3082, %v3170
      %v3172 = vpop.f32.mrf.mxu0
      %v3173 = vadd.f32 %v3084, %v3172
      %3174 = vmatmul.bf16.gmra.mxu0 %v2150
      %v3175 = vpop.f32.mrf.mxu0
      %v3176 = vadd.f32 %v3087, %v3175
      %v3177 = vpop.f32.mrf.mxu0
      %v3178 = vadd.f32 %v3089, %v3177
      %3179 = vmatmul.bf16.gmra.mxu0 %v2159
      %v3180 = vpop.f32.mrf.mxu0
      %v3181 = vadd.f32 %v3092, %v3180
      %v3182 = vpop.f32.mrf.mxu0
      %v3183 = vadd.f32 %v3094, %v3182
      %3184 = vdwg.mxu0
      %3185 = vmatpush.bf16.msra.mxu0 %v2643
      %3186 = vmatpush.bf16.msra.mxu0 %v2642
      %3187 = vmatpush.bf16.msra.mxu0 %v2641
      %3188 = vmatpush.bf16.msra.mxu0 %v2640
      %3189 = vmatpush.bf16.msra.mxu0 %v2639
      %3190 = vmatpush.bf16.msra.mxu0 %v2638
      %3191 = vmatpush.bf16.msra.mxu0 %v2637
      %3192 = vmatpush.bf16.msra.mxu0 %v2636
      %3193 = vmatmul.bf16.gmra.mxu0 %v2025
      %v3194 = vpop.f32.mrf.mxu0
      %v3195 = vadd.f32 %v3106, %v3194
      %v3196 = vpop.f32.mrf.mxu0
      %v3197 = vadd.f32 %v3108, %v3196
      %3198 = vmatmul.bf16.gmra.mxu0 %v2034
      %v3199 = vpop.f32.mrf.mxu0
      %v3200 = vadd.f32 %v3111, %v3199
      %v3201 = vpop.f32.mrf.mxu0
      %v3202 = vadd.f32 %v3113, %v3201
      %3203 = vmatmul.bf16.gmra.mxu0 %v2043
      %v3204 = vpop.f32.mrf.mxu0
      %v3205 = vadd.f32 %v3116, %v3204
      %v3206 = vpop.f32.mrf.mxu0
      %v3207 = vadd.f32 %v3118, %v3206
      %3208 = vmatmul.bf16.gmra.mxu0 %v2052
      %v3209 = vpop.f32.mrf.mxu0
      %v3210 = vadd.f32 %v3121, %v3209
      %v3211 = vpop.f32.mrf.mxu0
      %v3212 = vadd.f32 %v3123, %v3211
      %3213 = vmatmul.bf16.gmra.mxu0 %v2061
      %v3214 = vpop.f32.mrf.mxu0
      %v3215 = vadd.f32 %v3126, %v3214
      %v3216 = vpop.f32.mrf.mxu0
      %v3217 = vadd.f32 %v3128, %v3216
      %3218 = vmatmul.bf16.gmra.mxu0 %v2070
      %v3219 = vpop.f32.mrf.mxu0
      %v3220 = vadd.f32 %v3131, %v3219
      %v3221 = vpop.f32.mrf.mxu0
      %v3222 = vadd.f32 %v3133, %v3221
      %3223 = vmatmul.bf16.gmra.mxu0 %v2079
      %v3224 = vpop.f32.mrf.mxu0
      %v3225 = vadd.f32 %v3136, %v3224
      %v3226 = vpop.f32.mrf.mxu0
      %v3227 = vadd.f32 %v3138, %v3226
      %3228 = vmatmul.bf16.gmra.mxu0 %v2088
      %v3229 = vpop.f32.mrf.mxu0
      %v3230 = vadd.f32 %v3141, %v3229
      %v3231 = vpop.f32.mrf.mxu0
      %v3232 = vadd.f32 %v3143, %v3231
      %3233 = vmatmul.bf16.gmra.mxu0 %v2097
      %v3234 = vpop.f32.mrf.mxu0
      %v3235 = vadd.f32 %v3146, %v3234
      %v3236 = vpop.f32.mrf.mxu0
      %v3237 = vadd.f32 %v3148, %v3236
      %3238 = vmatmul.bf16.gmra.mxu0 %v2106
      %v3239 = vpop.f32.mrf.mxu0
      %v3240 = vadd.f32 %v3151, %v3239
      %v3241 = vpop.f32.mrf.mxu0
      %v3242 = vadd.f32 %v3153, %v3241
      %3243 = vmatmul.bf16.gmra.mxu0 %v2115
      %v3244 = vpop.f32.mrf.mxu0
      %v3245 = vadd.f32 %v3156, %v3244
      %v3246 = vpop.f32.mrf.mxu0
      %v3247 = vadd.f32 %v3158, %v3246
      %3248 = vmatmul.bf16.gmra.mxu0 %v2124
      %v3249 = vpop.f32.mrf.mxu0
      %v3250 = vadd.f32 %v3161, %v3249
      %v3251 = vpop.f32.mrf.mxu0
      %v3252 = vadd.f32 %v3163, %v3251
      %3253 = vmatmul.bf16.gmra.mxu0 %v2133
      %v3254 = vpop.f32.mrf.mxu0
      %v3255 = vadd.f32 %v3166, %v3254
      %v3256 = vpop.f32.mrf.mxu0
      %v3257 = vadd.f32 %v3168, %v3256
      %3258 = vmatmul.bf16.gmra.mxu0 %v2142
      %v3259 = vpop.f32.mrf.mxu0
      %v3260 = vadd.f32 %v3171, %v3259
      %v3261 = vpop.f32.mrf.mxu0
      %v3262 = vadd.f32 %v3173, %v3261
      %3263 = vmatmul.bf16.gmra.mxu0 %v2151
      %v3264 = vpop.f32.mrf.mxu0
      %v3265 = vadd.f32 %v3176, %v3264
      %v3266 = vpop.f32.mrf.mxu0
      %v3267 = vadd.f32 %v3178, %v3266
      %3268 = vmatmul.bf16.gmra.mxu0 %v2160
      %v3269 = vpop.f32.mrf.mxu0
      %v3270 = vadd.f32 %v3181, %v3269
      %v3271 = vpop.f32.mrf.mxu0
      %v3272 = vadd.f32 %v3183, %v3271
      %3273 = vdwg.mxu0
      %3274 = vmatpush.bf16.msra.mxu0 %v2651
      %3275 = vmatpush.bf16.msra.mxu0 %v2650
      %3276 = vmatpush.bf16.msra.mxu0 %v2649
      %3277 = vmatpush.bf16.msra.mxu0 %v2648
      %3278 = vmatpush.bf16.msra.mxu0 %v2647
      %3279 = vmatpush.bf16.msra.mxu0 %v2646
      %3280 = vmatpush.bf16.msra.mxu0 %v2645
      %3281 = vmatpush.bf16.msra.mxu0 %v2644
      %3282 = vmatmul.bf16.gmra.mxu0 %v2026
      %v3283 = vpop.f32.mrf.mxu0
      %v3284 = vadd.f32 %v3195, %v3283
      %v3285 = vpop.f32.mrf.mxu0
      %v3286 = vadd.f32 %v3197, %v3285
      %3287 = vmatmul.bf16.gmra.mxu0 %v2035
      %v3288 = vpop.f32.mrf.mxu0
      %v3289 = vadd.f32 %v3200, %v3288
      %v3290 = vpop.f32.mrf.mxu0
      %v3291 = vadd.f32 %v3202, %v3290
      %3292 = vmatmul.bf16.gmra.mxu0 %v2044
      %v3293 = vpop.f32.mrf.mxu0
      %v3294 = vadd.f32 %v3205, %v3293
      %v3295 = vpop.f32.mrf.mxu0
      %v3296 = vadd.f32 %v3207, %v3295
      %3297 = vmatmul.bf16.gmra.mxu0 %v2053
      %v3298 = vpop.f32.mrf.mxu0
      %v3299 = vadd.f32 %v3210, %v3298
      %v3300 = vpop.f32.mrf.mxu0
      %v3301 = vadd.f32 %v3212, %v3300
      %3302 = vmatmul.bf16.gmra.mxu0 %v2062
      %v3303 = vpop.f32.mrf.mxu0
      %v3304 = vadd.f32 %v3215, %v3303
      %v3305 = vpop.f32.mrf.mxu0
      %v3306 = vadd.f32 %v3217, %v3305
      %3307 = vmatmul.bf16.gmra.mxu0 %v2071
      %v3308 = vpop.f32.mrf.mxu0
      %v3309 = vadd.f32 %v3220, %v3308
      %v3310 = vpop.f32.mrf.mxu0
      %v3311 = vadd.f32 %v3222, %v3310
      %3312 = vmatmul.bf16.gmra.mxu0 %v2080
      %v3313 = vpop.f32.mrf.mxu0
      %v3314 = vadd.f32 %v3225, %v3313
      %v3315 = vpop.f32.mrf.mxu0
      %v3316 = vadd.f32 %v3227, %v3315
      %3317 = vmatmul.bf16.gmra.mxu0 %v2089
      %v3318 = vpop.f32.mrf.mxu0
      %v3319 = vadd.f32 %v3230, %v3318
      %v3320 = vpop.f32.mrf.mxu0
      %v3321 = vadd.f32 %v3232, %v3320
      %3322 = vmatmul.bf16.gmra.mxu0 %v2098
      %v3323 = vpop.f32.mrf.mxu0
      %v3324 = vadd.f32 %v3235, %v3323
      %v3325 = vpop.f32.mrf.mxu0
      %v3326 = vadd.f32 %v3237, %v3325
      %3327 = vmatmul.bf16.gmra.mxu0 %v2107
      %v3328 = vpop.f32.mrf.mxu0
      %v3329 = vadd.f32 %v3240, %v3328
      %v3330 = vpop.f32.mrf.mxu0
      %v3331 = vadd.f32 %v3242, %v3330
      %3332 = vmatmul.bf16.gmra.mxu0 %v2116
      %v3333 = vpop.f32.mrf.mxu0
      %v3334 = vadd.f32 %v3245, %v3333
      %v3335 = vpop.f32.mrf.mxu0
      %v3336 = vadd.f32 %v3247, %v3335
      %3337 = vmatmul.bf16.gmra.mxu0 %v2125
      %v3338 = vpop.f32.mrf.mxu0
      %v3339 = vadd.f32 %v3250, %v3338
      %v3340 = vpop.f32.mrf.mxu0
      %v3341 = vadd.f32 %v3252, %v3340
      %3342 = vmatmul.bf16.gmra.mxu0 %v2134
      %v3343 = vpop.f32.mrf.mxu0
      %v3344 = vadd.f32 %v3255, %v3343
      %v3345 = vpop.f32.mrf.mxu0
      %v3346 = vadd.f32 %v3257, %v3345
      %3347 = vmatmul.bf16.gmra.mxu0 %v2143
      %v3348 = vpop.f32.mrf.mxu0
      %v3349 = vadd.f32 %v3260, %v3348
      %v3350 = vpop.f32.mrf.mxu0
      %v3351 = vadd.f32 %v3262, %v3350
      %3352 = vmatmul.bf16.gmra.mxu0 %v2152
      %v3353 = vpop.f32.mrf.mxu0
      %v3354 = vadd.f32 %v3265, %v3353
      %v3355 = vpop.f32.mrf.mxu0
      %v3356 = vadd.f32 %v3267, %v3355
      %3357 = vmatmul.bf16.gmra.mxu0 %v2161
      %v3358 = vpop.f32.mrf.mxu0
      %v3359 = vadd.f32 %v3270, %v3358
      %v3360 = vpop.f32.mrf.mxu0
      %v3361 = vadd.f32 %v3272, %v3360
      %3362 = vdwg.mxu0
      %3363 = vmatpush.bf16.msra.mxu0 %v2659
      %3364 = vmatpush.bf16.msra.mxu0 %v2658
      %3365 = vmatpush.bf16.msra.mxu0 %v2657
      %3366 = vmatpush.bf16.msra.mxu0 %v2656
      %3367 = vmatpush.bf16.msra.mxu0 %v2655
      %3368 = vmatpush.bf16.msra.mxu0 %v2654
      %3369 = vmatpush.bf16.msra.mxu0 %v2653
      %3370 = vmatpush.bf16.msra.mxu0 %v2652
      %3371 = vmatmul.bf16.gmra.mxu0 %v2027
      %v3372 = vpop.f32.mrf.mxu0
      %v3373 = vadd.f32 %v3284, %v3372
      %v3374 = vpop.f32.mrf.mxu0
      %v3375 = vadd.f32 %v3286, %v3374
      %3376 = vmatmul.bf16.gmra.mxu0 %v2036
      %v3377 = vpop.f32.mrf.mxu0
      %v3378 = vadd.f32 %v3289, %v3377
      %v3379 = vpop.f32.mrf.mxu0
      %v3380 = vadd.f32 %v3291, %v3379
      %3381 = vmatmul.bf16.gmra.mxu0 %v2045
      %v3382 = vpop.f32.mrf.mxu0
      %v3383 = vadd.f32 %v3294, %v3382
      %v3384 = vpop.f32.mrf.mxu0
      %v3385 = vadd.f32 %v3296, %v3384
      %3386 = vmatmul.bf16.gmra.mxu0 %v2054
      %v3387 = vpop.f32.mrf.mxu0
      %v3388 = vadd.f32 %v3299, %v3387
      %v3389 = vpop.f32.mrf.mxu0
      %v3390 = vadd.f32 %v3301, %v3389
      %3391 = vmatmul.bf16.gmra.mxu0 %v2063
      %v3392 = vpop.f32.mrf.mxu0
      %v3393 = vadd.f32 %v3304, %v3392
      %v3394 = vpop.f32.mrf.mxu0
      %v3395 = vadd.f32 %v3306, %v3394
      %3396 = vmatmul.bf16.gmra.mxu0 %v2072
      %v3397 = vpop.f32.mrf.mxu0
      %v3398 = vadd.f32 %v3309, %v3397
      %v3399 = vpop.f32.mrf.mxu0
      %v3400 = vadd.f32 %v3311, %v3399
      %3401 = vmatmul.bf16.gmra.mxu0 %v2081
      %v3402 = vpop.f32.mrf.mxu0
      %v3403 = vadd.f32 %v3314, %v3402
      %v3404 = vpop.f32.mrf.mxu0
      %v3405 = vadd.f32 %v3316, %v3404
      %3406 = vmatmul.bf16.gmra.mxu0 %v2090
      %v3407 = vpop.f32.mrf.mxu0
      %v3408 = vadd.f32 %v3319, %v3407
      %v3409 = vpop.f32.mrf.mxu0
      %v3410 = vadd.f32 %v3321, %v3409
      %3411 = vmatmul.bf16.gmra.mxu0 %v2099
      %v3412 = vpop.f32.mrf.mxu0
      %v3413 = vadd.f32 %v3324, %v3412
      %v3414 = vpop.f32.mrf.mxu0
      %v3415 = vadd.f32 %v3326, %v3414
      %3416 = vmatmul.bf16.gmra.mxu0 %v2108
      %v3417 = vpop.f32.mrf.mxu0
      %v3418 = vadd.f32 %v3329, %v3417
      %v3419 = vpop.f32.mrf.mxu0
      %v3420 = vadd.f32 %v3331, %v3419
      %3421 = vmatmul.bf16.gmra.mxu0 %v2117
      %v3422 = vpop.f32.mrf.mxu0
      %v3423 = vadd.f32 %v3334, %v3422
      %v3424 = vpop.f32.mrf.mxu0
      %v3425 = vadd.f32 %v3336, %v3424
      %3426 = vmatmul.bf16.gmra.mxu0 %v2126
      %v3427 = vpop.f32.mrf.mxu0
      %v3428 = vadd.f32 %v3339, %v3427
      %v3429 = vpop.f32.mrf.mxu0
      %v3430 = vadd.f32 %v3341, %v3429
      %3431 = vmatmul.bf16.gmra.mxu0 %v2135
      %v3432 = vpop.f32.mrf.mxu0
      %v3433 = vadd.f32 %v3344, %v3432
      %v3434 = vpop.f32.mrf.mxu0
      %v3435 = vadd.f32 %v3346, %v3434
      %3436 = vmatmul.bf16.gmra.mxu0 %v2144
      %v3437 = vpop.f32.mrf.mxu0
      %v3438 = vadd.f32 %v3349, %v3437
      %v3439 = vpop.f32.mrf.mxu0
      %v3440 = vadd.f32 %v3351, %v3439
      %3441 = vmatmul.bf16.gmra.mxu0 %v2153
      %v3442 = vpop.f32.mrf.mxu0
      %v3443 = vadd.f32 %v3354, %v3442
      %v3444 = vpop.f32.mrf.mxu0
      %v3445 = vadd.f32 %v3356, %v3444
      %3446 = vmatmul.bf16.gmra.mxu0 %v2162
      %v3447 = vpop.f32.mrf.mxu0
      %v3448 = vadd.f32 %v3359, %v3447
      %v3449 = vpop.f32.mrf.mxu0
      %v3450 = vadd.f32 %v3361, %v3449
      %3451 = vdwg.mxu0
      %3452 = vmatpush.bf16.msra.mxu0 %v2667
      %3453 = vmatpush.bf16.msra.mxu0 %v2666
      %3454 = vmatpush.bf16.msra.mxu0 %v2665
      %3455 = vmatpush.bf16.msra.mxu0 %v2664
      %3456 = vmatpush.bf16.msra.mxu0 %v2663
      %3457 = vmatpush.bf16.msra.mxu0 %v2662
      %3458 = vmatpush.bf16.msra.mxu0 %v2661
      %3459 = vmatpush.bf16.msra.mxu0 %v2660
      %3460 = vmatmul.bf16.gmra.mxu0 %v2028
      %v3461 = vpop.f32.mrf.mxu0
      %v3462 = vadd.f32 %v3373, %v3461
      %v3463 = vpop.f32.mrf.mxu0
      %v3464 = vadd.f32 %v3375, %v3463
      %3465 = vmatmul.bf16.gmra.mxu0 %v2037
      %v3466 = vpop.f32.mrf.mxu0
      %v3467 = vadd.f32 %v3378, %v3466
      %v3468 = vpop.f32.mrf.mxu0
      %v3469 = vadd.f32 %v3380, %v3468
      %3470 = vmatmul.bf16.gmra.mxu0 %v2046
      %v3471 = vpop.f32.mrf.mxu0
      %v3472 = vadd.f32 %v3383, %v3471
      %v3473 = vpop.f32.mrf.mxu0
      %v3474 = vadd.f32 %v3385, %v3473
      %3475 = vmatmul.bf16.gmra.mxu0 %v2055
      %v3476 = vpop.f32.mrf.mxu0
      %v3477 = vadd.f32 %v3388, %v3476
      %v3478 = vpop.f32.mrf.mxu0
      %v3479 = vadd.f32 %v3390, %v3478
      %3480 = vmatmul.bf16.gmra.mxu0 %v2064
      %v3481 = vpop.f32.mrf.mxu0
      %v3482 = vadd.f32 %v3393, %v3481
      %v3483 = vpop.f32.mrf.mxu0
      %v3484 = vadd.f32 %v3395, %v3483
      %3485 = vmatmul.bf16.gmra.mxu0 %v2073
      %v3486 = vpop.f32.mrf.mxu0
      %v3487 = vadd.f32 %v3398, %v3486
      %v3488 = vpop.f32.mrf.mxu0
      %v3489 = vadd.f32 %v3400, %v3488
      %3490 = vmatmul.bf16.gmra.mxu0 %v2082
      %v3491 = vpop.f32.mrf.mxu0
      %v3492 = vadd.f32 %v3403, %v3491
      %v3493 = vpop.f32.mrf.mxu0
      %v3494 = vadd.f32 %v3405, %v3493
      %3495 = vmatmul.bf16.gmra.mxu0 %v2091
      %v3496 = vpop.f32.mrf.mxu0
      %v3497 = vadd.f32 %v3408, %v3496
      %v3498 = vpop.f32.mrf.mxu0
      %v3499 = vadd.f32 %v3410, %v3498
      %3500 = vmatmul.bf16.gmra.mxu0 %v2100
      %v3501 = vpop.f32.mrf.mxu0
      %v3502 = vadd.f32 %v3413, %v3501
      %v3503 = vpop.f32.mrf.mxu0
      %v3504 = vadd.f32 %v3415, %v3503
      %3505 = vmatmul.bf16.gmra.mxu0 %v2109
      %v3506 = vpop.f32.mrf.mxu0
      %v3507 = vadd.f32 %v3418, %v3506
      %v3508 = vpop.f32.mrf.mxu0
      %v3509 = vadd.f32 %v3420, %v3508
      %3510 = vmatmul.bf16.gmra.mxu0 %v2118
      %v3511 = vpop.f32.mrf.mxu0
      %v3512 = vadd.f32 %v3423, %v3511
      %v3513 = vpop.f32.mrf.mxu0
      %v3514 = vadd.f32 %v3425, %v3513
      %3515 = vmatmul.bf16.gmra.mxu0 %v2127
      %v3516 = vpop.f32.mrf.mxu0
      %v3517 = vadd.f32 %v3428, %v3516
      %v3518 = vpop.f32.mrf.mxu0
      %v3519 = vadd.f32 %v3430, %v3518
      %3520 = vmatmul.bf16.gmra.mxu0 %v2136
      %v3521 = vpop.f32.mrf.mxu0
      %v3522 = vadd.f32 %v3433, %v3521
      %v3523 = vpop.f32.mrf.mxu0
      %v3524 = vadd.f32 %v3435, %v3523
      %3525 = vmatmul.bf16.gmra.mxu0 %v2145
      %v3526 = vpop.f32.mrf.mxu0
      %v3527 = vadd.f32 %v3438, %v3526
      %v3528 = vpop.f32.mrf.mxu0
      %v3529 = vadd.f32 %v3440, %v3528
      %3530 = vmatmul.bf16.gmra.mxu0 %v2154
      %v3531 = vpop.f32.mrf.mxu0
      %v3532 = vadd.f32 %v3443, %v3531
      %v3533 = vpop.f32.mrf.mxu0
      %v3534 = vadd.f32 %v3445, %v3533
      %3535 = vmatmul.bf16.gmra.mxu0 %v2163
      %v3536 = vpop.f32.mrf.mxu0
      %v3537 = vadd.f32 %v3448, %v3536
      %v3538 = vpop.f32.mrf.mxu0
      %v3539 = vadd.f32 %v3450, %v3538
      %3540 = vdwg.mxu0
      %v3541 = vpack.c.bf16 %v3462, %v3462
      %v3542 = vpack.c.bf16 %v3464, %v3464
      %v3543 = vpack.c.bf16 %v3467, %v3467
      %v3544 = vpack.c.bf16 %v3469, %v3469
      %v3545 = vpack.c.bf16 %v3472, %v3472
      %v3546 = vpack.c.bf16 %v3474, %v3474
      %v3547 = vpack.c.bf16 %v3477, %v3477
      %v3548 = vpack.c.bf16 %v3479, %v3479
      %v3549 = vpack.c.bf16 %v3482, %v3482
      %v3550 = vpack.c.bf16 %v3484, %v3484
      %v3551 = vpack.c.bf16 %v3487, %v3487
      %v3552 = vpack.c.bf16 %v3489, %v3489
      %v3553 = vpack.c.bf16 %v3492, %v3492
      %v3554 = vpack.c.bf16 %v3494, %v3494
      %v3555 = vpack.c.bf16 %v3497, %v3497
      %v3556 = vpack.c.bf16 %v3499, %v3499
      %v3557 = vpack.c.bf16 %v3502, %v3502
      %v3558 = vpack.c.bf16 %v3504, %v3504
      %v3559 = vpack.c.bf16 %v3507, %v3507
      %v3560 = vpack.c.bf16 %v3509, %v3509
      %v3561 = vpack.c.bf16 %v3512, %v3512
      %v3562 = vpack.c.bf16 %v3514, %v3514
      %v3563 = vpack.c.bf16 %v3517, %v3517
      %v3564 = vpack.c.bf16 %v3519, %v3519
      %v3565 = vpack.c.bf16 %v3522, %v3522
      %v3566 = vpack.c.bf16 %v3524, %v3524
      %v3567 = vpack.c.bf16 %v3527, %v3527
      %v3568 = vpack.c.bf16 %v3529, %v3529
      %v3569 = vpack.c.bf16 %v3532, %v3532
      %v3570 = vpack.c.bf16 %v3534, %v3534
      %v3571 = vpack.c.bf16 %v3537, %v3537
      %v3572 = vpack.c.bf16 %v3539, %v3539
      %3573 = vst [vmem:[%s231] sm:$0xf] %v3541
      %3574 = vst [vmem:[%s231 + $0x4] sm:$0xf] %v3542
      %3575 = vst [vmem:[%s231 + $0x8] sm:$0xf] %v3543
      %3576 = vst [vmem:[%s231 + $0xc] sm:$0xf] %v3544
      %3577 = vst [vmem:[%s231 + $0x10] sm:$0xf] %v3545
      %3578 = vst [vmem:[%s231 + $0x14] sm:$0xf] %v3546
      %3579 = vst [vmem:[%s231 + $0x18] sm:$0xf] %v3547
      %3580 = vst [vmem:[%s231 + $0x1c] sm:$0xf] %v3548
      %3581 = vst [vmem:[%s231 + $0x20] sm:$0xf] %v3549
      %3582 = vst [vmem:[%s231 + $0x24] sm:$0xf] %v3550
      %3583 = vst [vmem:[%s231 + $0x28] sm:$0xf] %v3551
      %3584 = vst [vmem:[%s231 + $0x2c] sm:$0xf] %v3552
      %3585 = vst [vmem:[%s231 + $0x30] sm:$0xf] %v3553
      %3586 = vst [vmem:[%s231 + $0x34] sm:$0xf] %v3554
      %3587 = vst [vmem:[%s231 + $0x38] sm:$0xf] %v3555
      %3588 = vst [vmem:[%s231 + $0x3c] sm:$0xf] %v3556
      %3589 = vst [vmem:[%s231 + $0x40] sm:$0xf] %v3557
      %3590 = vst [vmem:[%s231 + $0x44] sm:$0xf] %v3558
      %3591 = vst [vmem:[%s231 + $0x48] sm:$0xf] %v3559
      %3592 = vst [vmem:[%s231 + $0x4c] sm:$0xf] %v3560
      %3593 = vst [vmem:[%s231 + $0x50] sm:$0xf] %v3561
      %3594 = vst [vmem:[%s231 + $0x54] sm:$0xf] %v3562
      %3595 = vst [vmem:[%s231 + $0x58] sm:$0xf] %v3563
      %3596 = vst [vmem:[%s231 + $0x5c] sm:$0xf] %v3564
      %3597 = vst [vmem:[%s231 + $0x60] sm:$0xf] %v3565
      %3598 = vst [vmem:[%s231 + $0x64] sm:$0xf] %v3566
      %3599 = vst [vmem:[%s231 + $0x68] sm:$0xf] %v3567
      %3600 = vst [vmem:[%s231 + $0x6c] sm:$0xf] %v3568
      %3601 = vst [vmem:[%s231 + $0x70] sm:$0xf] %v3569
      %3602 = vst [vmem:[%s231 + $0x74] sm:$0xf] %v3570
      %3603 = vst [vmem:[%s231 + $0x78] sm:$0xf] %v3571
      %3604 = vst [vmem:[%s231 + $0x7c] sm:$0xf] %v3572
      %v3605 = vadd.f32 %v3462, %v3464
      %v3606 = vadd.f32 %v3605, %v3467
      %v3607 = vadd.f32 %v3606, %v3469
      %v3608 = vadd.f32 %v3607, %v3472
      %v3609 = vadd.f32 %v3608, %v3474
      %v3610 = vadd.f32 %v3609, %v3477
      %v3611 = vadd.f32 %v3610, %v3479
      %v3612 = vadd.f32 %v3611, %v3482
      %v3613 = vadd.f32 %v3612, %v3484
      %v3614 = vadd.f32 %v3613, %v3487
      %v3615 = vadd.f32 %v3614, %v3489
      %v3616 = vadd.f32 %v3615, %v3492
      %v3617 = vadd.f32 %v3616, %v3494
      %v3618 = vadd.f32 %v3617, %v3497
      %v3619 = vadd.f32 %v3618, %v3499
      %v3620 = vadd.f32 %v3619, %v3502
      %v3621 = vadd.f32 %v3620, %v3504
      %v3622 = vadd.f32 %v3621, %v3507
      %v3623 = vadd.f32 %v3622, %v3509
      %v3624 = vadd.f32 %v3623, %v3512
      %v3625 = vadd.f32 %v3624, %v3514
      %v3626 = vadd.f32 %v3625, %v3517
      %v3627 = vadd.f32 %v3626, %v3519
      %v3628 = vadd.f32 %v3627, %v3522
      %v3629 = vadd.f32 %v3628, %v3524
      %v3630 = vadd.f32 %v3629, %v3527
      %v3631 = vadd.f32 %v3630, %v3529
      %v3632 = vadd.f32 %v3631, %v3532
      %v3633 = vadd.f32 %v3632, %v3534
      %v3634 = vadd.f32 %v3633, %v3537
      %v3635 = vadd.f32 %v3634, %v3539
      %v3636 = vrot.slane %v3635, 4
      %v3637 = vadd.f32 %v3635, %v3636
      %v3638 = vrot.slane %v3637, 2
      %v3639 = vadd.f32 %v3637, %v3638
      %v3640 = vrot.slane %v3639, 1
      %v3641 = vadd.f32 %v3639, %v3640
      %v3642 = vmul.f32 %v3462, %v3462
      %v3643 = vmul.f32 %v3464, %v3464
      %v3644 = vmul.f32 %v3467, %v3467
      %v3645 = vmul.f32 %v3469, %v3469
      %v3646 = vmul.f32 %v3472, %v3472
      %v3647 = vmul.f32 %v3474, %v3474
      %v3648 = vmul.f32 %v3477, %v3477
      %v3649 = vmul.f32 %v3479, %v3479
      %v3650 = vmul.f32 %v3482, %v3482
      %v3651 = vmul.f32 %v3484, %v3484
      %v3652 = vmul.f32 %v3487, %v3487
      %v3653 = vmul.f32 %v3489, %v3489
      %v3654 = vmul.f32 %v3492, %v3492
      %v3655 = vmul.f32 %v3494, %v3494
      %v3656 = vmul.f32 %v3497, %v3497
      %v3657 = vmul.f32 %v3499, %v3499
      %v3658 = vmul.f32 %v3502, %v3502
      %v3659 = vmul.f32 %v3504, %v3504
      %v3660 = vmul.f32 %v3507, %v3507
      %v3661 = vmul.f32 %v3509, %v3509
      %v3662 = vmul.f32 %v3512, %v3512
      %v3663 = vmul.f32 %v3514, %v3514
      %v3664 = vmul.f32 %v3517, %v3517
      %v3665 = vmul.f32 %v3519, %v3519
      %v3666 = vmul.f32 %v3522, %v3522
      %v3667 = vmul.f32 %v3524, %v3524
      %v3668 = vmul.f32 %v3527, %v3527
      %v3669 = vmul.f32 %v3529, %v3529
      %v3670 = vmul.f32 %v3532, %v3532
      %v3671 = vmul.f32 %v3534, %v3534
      %v3672 = vmul.f32 %v3537, %v3537
      %v3673 = vmul.f32 %v3539, %v3539
      %v3674 = vadd.f32 %v3642, %v3643
      %v3675 = vadd.f32 %v3674, %v3644
      %v3676 = vadd.f32 %v3675, %v3645
      %v3677 = vadd.f32 %v3676, %v3646
      %v3678 = vadd.f32 %v3677, %v3647
      %v3679 = vadd.f32 %v3678, %v3648
      %v3680 = vadd.f32 %v3679, %v3649
      %v3681 = vadd.f32 %v3680, %v3650
      %v3682 = vadd.f32 %v3681, %v3651
      %v3683 = vadd.f32 %v3682, %v3652
      %v3684 = vadd.f32 %v3683, %v3653
      %v3685 = vadd.f32 %v3684, %v3654
      %v3686 = vadd.f32 %v3685, %v3655
      %v3687 = vadd.f32 %v3686, %v3656
      %v3688 = vadd.f32 %v3687, %v3657
      %v3689 = vadd.f32 %v3688, %v3658
      %v3690 = vadd.f32 %v3689, %v3659
      %v3691 = vadd.f32 %v3690, %v3660
      %v3692 = vadd.f32 %v3691, %v3661
      %v3693 = vadd.f32 %v3692, %v3662
      %v3694 = vadd.f32 %v3693, %v3663
      %v3695 = vadd.f32 %v3694, %v3664
      %v3696 = vadd.f32 %v3695, %v3665
      %v3697 = vadd.f32 %v3696, %v3666
      %v3698 = vadd.f32 %v3697, %v3667
      %v3699 = vadd.f32 %v3698, %v3668
      %v3700 = vadd.f32 %v3699, %v3669
      %v3701 = vadd.f32 %v3700, %v3670
      %v3702 = vadd.f32 %v3701, %v3671
      %v3703 = vadd.f32 %v3702, %v3672
      %v3704 = vadd.f32 %v3703, %v3673
      %v3705 = vrot.slane %v3704, 4
      %v3706 = vadd.f32 %v3704, %v3705
      %v3707 = vrot.slane %v3706, 2
      %v3708 = vadd.f32 %v3706, %v3707
      %v3709 = vrot.slane %v3708, 1
      %v3710 = vadd.f32 %v3708, %v3709
      %vm3711 = vcmask 1040384
      %v3712 = vsel %vm3711, %v3641, %v3710
      %3713 = vst [vmem:[%s235] sm:$0x3] %v3712
      %p3714 = scmp.lt.s32.totalorder %s17, 1
      %s3715 = scalar_select %p3714, %s17, 1
      %s3716 = smul.addr %s3715, 32
      %s3717 = smul.addr %s3716, 4
      %s3718 = scalar_lea.vmem %s4, %s3717
      %p3719 = scmp.lt.s32.totalorder %s17, 1
      %s3720 = scalar_select %p3719, %s17, 1
      %s3721 = smul.addr %s3720, 2
      %s3722 = scalar_lea.vmem %s5, %s3721
      // Predicated region
      $region37: #{fg_function_forward.3} parent=35 // pred_check
        %p3723 = pneg %p124
      $region38: #{fg_function_forward.3} parent=35 // pred_check_branch
        %3725 = sbr.rel (%p3723) target = $region40
      $region39: #{fg_function_forward.3} parent=35 // pred_region
        _
      $region40: #{fg_function_forward.3} parent=35 // pred_fallthru
        _
      // Predicated region
      $region41: #{fg_function_forward.3} parent=35 // pred_check
        %p3726 = pneg %p150
      $region42: #{fg_function_forward.3} parent=35 // pred_check_branch
        %3728 = sbr.rel (%p3726) target = $region44
      $region43: #{fg_function_forward.3} parent=35 // pred_region
        _
      $region44: #{fg_function_forward.3} parent=35 // pred_fallthru
        _
    $region36: #{fg_function_forward.3} parent=5 // pred_fallthru
      _
    %p3729 = scmp.le.s32.totalorder 2, %s12
    // Predicated region
    $region45: #{fg_function_forward.3} parent=5 // pred_check
      %p3730 = pneg %p3729
    $region46: #{fg_function_forward.3} parent=5 // pred_check_branch
      %3732 = sbr.rel (%p3730) target = $region48
    $region47: #{fg_function_forward.3} parent=5 // pred_region
      %s3733 = ssub.s32 %s12, 2
      // Predicated region
      $region49: #{fg_function_forward.3} parent=47 // pred_check
        %p3734 = pneg %p130
      $region50: #{fg_function_forward.3} parent=47 // pred_check_branch
        %3736 = sbr.rel (%p3734) target = $region52
      $region51: #{fg_function_forward.3} parent=47 // pred_region
        %p3737 = scmp.lt.s32.totalorder %s18, 1
        %s3738 = scalar_select %p3737, %s18, 1
        %s3739 = smul.addr %s3738, 32
        %s3740 = smul.addr %s3739, 4
        %s3741 = scalar_lea.vmem %s4, %s3740
      $region52: #{fg_function_forward.3} parent=47 // pred_fallthru
        _
      // Predicated region
      $region53: #{fg_function_forward.3} parent=47 // pred_check
        %p3742 = pneg %p156
      $region54: #{fg_function_forward.3} parent=47 // pred_check_branch
        %3744 = sbr.rel (%p3742) target = $region56
      $region55: #{fg_function_forward.3} parent=47 // pred_region
        %p3745 = scmp.lt.s32.totalorder %s18, 1
        %s3746 = scalar_select %p3745, %s18, 1
        %s3747 = smul.addr %s3746, 2
        %s3748 = scalar_lea.vmem %s5, %s3747
      $region56: #{fg_function_forward.3} parent=47 // pred_fallthru
        _
    $region48: #{fg_function_forward.3} parent=5 // pred_fallthru
      _
  $region6: #{fg_function_forward.3} parent=0 // loop_footer
    %s16 = sadd.s32 1, %s12
  $region7: #{fg_function_forward.3} parent=0 // loop_footer_branch
    %11 = sbr.rel target = $region3
  $region8: #{fg_function_forward.3} parent=0 // loop_exit
    _

// kernel: fg_function_forward.4
$region0: #{fg_function_forward.4}
  #allocation0 [shape = 'u32[]', space=smem, size = 0x4, offset = 0x4, fixed_abs, tag = 'smem constant byte address 0x4 - core index']
  #allocation1 [shape = 'u32[72,128]{1,0:T(1,128)}', space=vmem, size = 0x9000, scoped, tag = 'internal scratch']
  #allocation2 [shape = 'bf16[256,1152]{1,0:T(8,128)(2,1)}', space=vmem, size = 0x90000, scoped, tag = 'scratch operand']
  %s0 = inlined_call_operand.vmem [shape: bf16[2,18,18,128], index: 0, kind: input, shape index: {}]
  %s1 = inlined_call_operand.vmem [shape: f32[1,128], index: 1, kind: input, shape index: {}]
  %s2 = inlined_call_operand.vmem [shape: f32[1,128], index: 2, kind: input, shape index: {}]
  %s3 = inlined_call_operand.vmem [shape: bf16[1152,128], index: 3, kind: input, shape index: {}]
  %s4 = inlined_call_operand.vmem [shape: bf16[2,256,128], index: 4, kind: output, shape index: {0}]
  %s5 = inlined_call_operand.vmem [shape: f32[2,2,128], index: 5, kind: output, shape index: {1}]
  %6 = xla_tuple %s4, %s5
  %s7 = sld [smem:[#allocation0]]
  $region57: #{fg_function_forward.4} parent=0
    _
  %s9 = ssub.s32 1, %s7
  %s10 = scalar_select 0, %s9, %s7
  loop: start=0, step=1, limit=4
  $region2: #{fg_function_forward.4} parent=0 // loop_pre_header
    _
  $region3: #{fg_function_forward.4} parent=0 // loop_header
    %s12 = sphi 0, %s16
    %p13 = scmp.ge.s32.totalorder %s12, 4
    %s22 = sphi 0, %s24
    %s25 = sphi 0, %s22
    %s26 = sphi 0, %s25
    %s42 = sphi 0, %s26
    %s46 = sphi 0, %s46
    %s48 = sphi 0, %s46
    %s49 = sphi 0, %s48
    %s63 = sphi 0, %s49
    %s67 = sphi 0, %s67
    %s69 = sphi 0, %s67
    %s70 = sphi 0, %s69
    %s84 = sphi 0, %s70
    %s88 = sphi 0, %s88
    %s90 = sphi 0, %s88
    %s91 = sphi 0, %s90
    %s105 = sphi 0, %s91
    %s111 = sphi 0, %s113
    %s114 = sphi 0, %s111
    %s115 = sphi 0, %s114
    %s131 = sphi 0, %s115
    %s137 = sphi 0, %s139
    %s140 = sphi 0, %s137
    %s141 = sphi 0, %s140
    %s157 = sphi 0, %s141
  $region4: #{fg_function_forward.4} parent=0 // loop_header_branch
    %15 = sbr.rel (%p13) target = $region8
  $region5: #{fg_function_forward.4} parent=0 // loop_body
    %s17 = ssub.s32 %s12, 1
    %s18 = ssub.s32 %s12, 2
    %s19 = sadd.s32 %s12, 1
    %s20 = ssub.s32 %s12, %s19
    %p21 = scmp.eq.s32.totalorder %s20, 0
    %s23 = sadd.s32 %s22, 1
    %s24 = scalar_select %p21, %s22, %s23
    %p27 = pneg %p21
    %p28 = scmp.eq.s32.totalorder %s12, 1
    %p29 = por %p27, %p28
    %p30 = scmp.ne.s32.totalorder %s22, %s25
    %p31 = scmp.eq.s32.totalorder %s12, 0
    %p32 = por %p30, %p31
    %p33 = scmp.ne.s32.totalorder %s22, %s25
    %p34 = scmp.eq.s32.totalorder %s17, 1
    %p35 = por %p33, %p34
    %p36 = scmp.ne.s32.totalorder %s25, %s26
    %p37 = scmp.eq.s32.totalorder %s17, 0
    %p38 = por %p36, %p37
    %p39 = scmp.ne.s32.totalorder %s25, %s26
    %p40 = scmp.eq.s32.totalorder %s18, 1
    %p41 = por %p39, %p40
    %p43 = scmp.ne.s32.totalorder %s26, %s42
    %p44 = scmp.eq.s32.totalorder %s18, 0
    %p45 = por %p43, %p44
    %s47 = sadd.s32 %s46, 1
    %p50 = scmp.eq.s32.totalorder %s12, 1
    %p51 = scmp.ne.s32.totalorder %s46, %s48
    %p52 = scmp.eq.s32.totalorder %s12, 0
    %p53 = por %p51, %p52
    %p54 = scmp.ne.s32.totalorder %s46, %s48
    %p55 = scmp.eq.s32.totalorder %s17, 1
    %p56 = por %p54, %p55
    %p57 = scmp.ne.s32.totalorder %s48, %s49
    %p58 = scmp.eq.s32.totalorder %s17, 0
    %p59 = por %p57, %p58
    %p60 = scmp.ne.s32.totalorder %s48, %s49
    %p61 = scmp.eq.s32.totalorder %s18, 1
    %p62 = por %p60, %p61
    %p64 = scmp.ne.s32.totalorder %s49, %s63
    %p65 = scmp.eq.s32.totalorder %s18, 0
    %p66 = por %p64, %p65
    %s68 = sadd.s32 %s67, 1
    %p71 = scmp.eq.s32.totalorder %s12, 1
    %p72 = scmp.ne.s32.totalorder %s67, %s69
    %p73 = scmp.eq.s32.totalorder %s12, 0
    %p74 = por %p72, %p73
    %p75 = scmp.ne.s32.totalorder %s67, %s69
    %p76 = scmp.eq.s32.totalorder %s17, 1
    %p77 = por %p75, %p76
    %p78 = scmp.ne.s32.totalorder %s69, %s70
    %p79 = scmp.eq.s32.totalorder %s17, 0
    %p80 = por %p78, %p79
    %p81 = scmp.ne.s32.totalorder %s69, %s70
    %p82 = scmp.eq.s32.totalorder %s18, 1
    %p83 = por %p81, %p82
    %p85 = scmp.ne.s32.totalorder %s70, %s84
    %p86 = scmp.eq.s32.totalorder %s18, 0
    %p87 = por %p85, %p86
    %s89 = sadd.s32 %s88, 1
    %p92 = scmp.eq.s32.totalorder %s12, 1
    %p93 = scmp.ne.s32.totalorder %s88, %s90
    %p94 = scmp.eq.s32.totalorder %s12, 0
    %p95 = por %p93, %p94
    %p96 = scmp.ne.s32.totalorder %s88, %s90
    %p97 = scmp.eq.s32.totalorder %s17, 1
    %p98 = por %p96, %p97
    %p99 = scmp.ne.s32.totalorder %s90, %s91
    %p100 = scmp.eq.s32.totalorder %s17, 0
    %p101 = por %p99, %p100
    %p102 = scmp.ne.s32.totalorder %s90, %s91
    %p103 = scmp.eq.s32.totalorder %s18, 1
    %p104 = por %p102, %p103
    %p106 = scmp.ne.s32.totalorder %s91, %s105
    %p107 = scmp.eq.s32.totalorder %s18, 0
    %p108 = por %p106, %p107
    %s109 = ssub.s32 %s12, %s19
    %p110 = scmp.eq.s32.totalorder %s109, 0
    %s112 = sadd.s32 %s111, 1
    %s113 = scalar_select %p110, %s111, %s112
    %p116 = pneg %p110
    %p117 = scmp.eq.s32.totalorder %s12, 1
    %p118 = por %p116, %p117
    %p119 = scmp.ne.s32.totalorder %s111, %s114
    %p120 = scmp.eq.s32.totalorder %s12, 0
    %p121 = por %p119, %p120
    %p122 = scmp.ne.s32.totalorder %s111, %s114
    %p123 = scmp.eq.s32.totalorder %s17, 1
    %p124 = por %p122, %p123
    %p125 = scmp.ne.s32.totalorder %s114, %s115
    %p126 = scmp.eq.s32.totalorder %s17, 0
    %p127 = por %p125, %p126
    %p128 = scmp.ne.s32.totalorder %s114, %s115
    %p129 = scmp.eq.s32.totalorder %s18, 1
    %p130 = por %p128, %p129
    %p132 = scmp.ne.s32.totalorder %s115, %s131
    %p133 = scmp.eq.s32.totalorder %s18, 0
    %p134 = por %p132, %p133
    %s135 = ssub.s32 %s12, %s19
    %p136 = scmp.eq.s32.totalorder %s135, 0
    %s138 = sadd.s32 %s137, 1
    %s139 = scalar_select %p136, %s137, %s138
    %p142 = pneg %p136
    %p143 = scmp.eq.s32.totalorder %s12, 1
    %p144 = por %p142, %p143
    %p145 = scmp.ne.s32.totalorder %s137, %s140
    %p146 = scmp.eq.s32.totalorder %s12, 0
    %p147 = por %p145, %p146
    %p148 = scmp.ne.s32.totalorder %s137, %s140
    %p149 = scmp.eq.s32.totalorder %s17, 1
    %p150 = por %p148, %p149
    %p151 = scmp.ne.s32.totalorder %s140, %s141
    %p152 = scmp.eq.s32.totalorder %s17, 0
    %p153 = por %p151, %p152
    %p154 = scmp.ne.s32.totalorder %s140, %s141
    %p155 = scmp.eq.s32.totalorder %s18, 1
    %p156 = por %p154, %p155
    %p158 = scmp.ne.s32.totalorder %s141, %s157
    %p159 = scmp.eq.s32.totalorder %s18, 0
    %p160 = por %p158, %p159
    %p161 = scmp.le.s32.totalorder 1, %s12
    %p162 = scmp.lt.s32.totalorder %s12, 3
    %p163 = pnand %p161, %p162
    %p164 = pneg %p163
    // Predicated region
    $region9: #{fg_function_forward.4} parent=5 // pred_check
      _
    $region10: #{fg_function_forward.4} parent=5 // pred_check_branch
      %166 = sbr.rel (%p163) target = $region12
    $region11: #{fg_function_forward.4} parent=5 // pred_region
      %s167 = ssub.s32 %s12, 1
      // Predicated region
      $region13: #{fg_function_forward.4} parent=11 // pred_check
        %p168 = pneg %p59
      $region14: #{fg_function_forward.4} parent=11 // pred_check_branch
        %170 = sbr.rel (%p168) target = $region16
      $region15: #{fg_function_forward.4} parent=11 // pred_region
        _
      $region16: #{fg_function_forward.4} parent=11 // pred_fallthru
        _
      // Predicated region
      $region17: #{fg_function_forward.4} parent=11 // pred_check
        %p171 = pneg %p80
      $region18: #{fg_function_forward.4} parent=11 // pred_check_branch
        %173 = sbr.rel (%p171) target = $region20
      $region19: #{fg_function_forward.4} parent=11 // pred_region
        _
      $region20: #{fg_function_forward.4} parent=11 // pred_fallthru
        _
      // Predicated region
      $region21: #{fg_function_forward.4} parent=11 // pred_check
        %p174 = pneg %p101
      $region22: #{fg_function_forward.4} parent=11 // pred_check_branch
        %176 = sbr.rel (%p174) target = $region24
      $region23: #{fg_function_forward.4} parent=11 // pred_region
        _
      $region24: #{fg_function_forward.4} parent=11 // pred_fallthru
        _
    $region12: #{fg_function_forward.4} parent=5 // pred_fallthru
      _
    %p177 = scmp.lt.s32.totalorder %s12, 2
    // Predicated region
    $region25: #{fg_function_forward.4} parent=5 // pred_check
      %p178 = pneg %p177
    $region26: #{fg_function_forward.4} parent=5 // pred_check_branch
      %180 = sbr.rel (%p178) target = $region28
    $region27: #{fg_function_forward.4} parent=5 // pred_region
      // Predicated region
      $region29: #{fg_function_forward.4} parent=27 // pred_check
        %p181 = pneg %p32
      $region30: #{fg_function_forward.4} parent=27 // pred_check_branch
        %183 = sbr.rel (%p181) target = $region32
      $region31: #{fg_function_forward.4} parent=27 // pred_region
        %p184 = scmp.lt.s32.totalorder %s12, 1
        %s185 = scalar_select %p184, %s12, 1
        %s186 = smul.addr %s185, 54
        %s187 = smul.addr %s186, 4
        %s188 = scalar_lea.vmem %s0, %s187
      $region32: #{fg_function_forward.4} parent=27 // pred_fallthru
        _
    $region28: #{fg_function_forward.4} parent=5 // pred_fallthru
      _
    %p189 = scmp.le.s32.totalorder 1, %s12
    %p190 = scmp.lt.s32.totalorder %s12, 3
    %p191 = pnand %p189, %p190
    %p192 = pneg %p191
    // Predicated region
    $region33: #{fg_function_forward.4} parent=5 // pred_check
      _
    $region34: #{fg_function_forward.4} parent=5 // pred_check_branch
      %194 = sbr.rel (%p191) target = $region36
    $region35: #{fg_function_forward.4} parent=5 // pred_region
      %s195 = ssub.s32 %s12, 1
      %p196 = scmp.lt.s32.totalorder %s17, 1
      %s197 = scalar_select %p196, %s17, 1
      %s198 = smul.addr %s197, 54
      %s199 = smul.addr %s198, 4
      %s200 = scalar_lea.vmem %s0, %s199
      %p201 = pneg %p38
      %p202 = pneg %p35
      %p203 = pneg %p59
      %p204 = pneg %p56
      %p205 = pneg %p80
      %p206 = pneg %p77
      %p207 = pneg %p101
      %p208 = pneg %p98
      %p209 = pneg %p127
      %p210 = pneg %p124
      %p211 = scmp.lt.s32.totalorder %s17, 1
      %s212 = scalar_select %p211, %s17, 1
      %s213 = smul.addr %s212, 32
      %s214 = smul.addr %s213, 4
      %s215 = scalar_lea.vmem %s4, %s214
      %p216 = pneg %p153
      %p217 = pneg %p150
      %p218 = scmp.lt.s32.totalorder %s17, 1
      %s219 = scalar_select %p218, %s17, 1
      %s220 = smul.addr %s219, 2
      %s221 = scalar_lea.vmem %s5, %s220
      %p222 = scmp.lt.s32.totalorder %s17, 1
      %s223 = scalar_select %p222, %s17, 1
      %s224 = smul.addr %s223, 54
      %s225 = smul.addr %s224, 4
      %s226 = scalar_lea.vmem %s0, %s225
      %p227 = scmp.lt.s32.totalorder %s17, 1
      %s228 = scalar_select %p227, %s17, 1
      %s229 = smul.addr %s228, 32
      %s230 = smul.addr %s229, 4
      %s231 = scalar_lea.vmem %s4, %s230
      %p232 = scmp.lt.s32.totalorder %s17, 1
      %s233 = scalar_select %p232, %s17, 1
      %s234 = smul.addr %s233, 2
      %s235 = scalar_lea.vmem %s5, %s234
      %v236 = vld [vmem:[%s226] sm:$0xf]
      %v237 = vld [vmem:[%s226 + $0x4] sm:$0xf]
      %v238 = vld [vmem:[%s226 + $0x8] sm:$0x1]
      %v239 = vld [vmem:[%s226 + $0xc] sm:$0xf]
      %v240 = vld [vmem:[%s226 + $0x10] sm:$0xf]
      %v241 = vld [vmem:[%s226 + $0x14] sm:$0x1]
      %v242 = vld [vmem:[%s226 + $0x18] sm:$0xf]
      %v243 = vld [vmem:[%s226 + $0x1c] sm:$0xf]
      %v244 = vld [vmem:[%s226 + $0x20] sm:$0x1]
      %v245 = vld [vmem:[%s226 + $0x24] sm:$0xf]
      %v246 = vld [vmem:[%s226 + $0x28] sm:$0xf]
      %v247 = vld [vmem:[%s226 + $0x2c] sm:$0x1]
      %v248 = vld [vmem:[%s226 + $0x30] sm:$0xf]
      %v249 = vld [vmem:[%s226 + $0x34] sm:$0xf]
      %v250 = vld [vmem:[%s226 + $0x38] sm:$0x1]
      %v251 = vld [vmem:[%s226 + $0x3c] sm:$0xf]
      %v252 = vld [vmem:[%s226 + $0x40] sm:$0xf]
      %v253 = vld [vmem:[%s226 + $0x44] sm:$0x1]
      %v254 = vld [vmem:[%s226 + $0x48] sm:$0xf]
      %v255 = vld [vmem:[%s226 + $0x4c] sm:$0xf]
      %v256 = vld [vmem:[%s226 + $0x50] sm:$0x1]
      %v257 = vld [vmem:[%s226 + $0x54] sm:$0xf]
      %v258 = vld [vmem:[%s226 + $0x58] sm:$0xf]
      %v259 = vld [vmem:[%s226 + $0x5c] sm:$0x1]
      %v260 = vld [vmem:[%s226 + $0x60] sm:$0xf]
      %v261 = vld [vmem:[%s226 + $0x64] sm:$0xf]
      %v262 = vld [vmem:[%s226 + $0x68] sm:$0x1]
      %v263 = vld [vmem:[%s226 + $0x6c] sm:$0xf]
      %v264 = vld [vmem:[%s226 + $0x70] sm:$0xf]
      %v265 = vld [vmem:[%s226 + $0x74] sm:$0x1]
      %v266 = vld [vmem:[%s226 + $0x78] sm:$0xf]
      %v267 = vld [vmem:[%s226 + $0x7c] sm:$0xf]
      %v268 = vld [vmem:[%s226 + $0x80] sm:$0x1]
      %v269 = vld [vmem:[%s226 + $0x84] sm:$0xf]
      %v270 = vld [vmem:[%s226 + $0x88] sm:$0xf]
      %v271 = vld [vmem:[%s226 + $0x8c] sm:$0x1]
      %v272 = vld [vmem:[%s226 + $0x90] sm:$0xf]
      %v273 = vld [vmem:[%s226 + $0x94] sm:$0xf]
      %v274 = vld [vmem:[%s226 + $0x98] sm:$0x1]
      %v275 = vld [vmem:[%s226 + $0x9c] sm:$0xf]
      %v276 = vld [vmem:[%s226 + $0xa0] sm:$0xf]
      %v277 = vld [vmem:[%s226 + $0xa4] sm:$0x1]
      %v278 = vld [vmem:[%s226 + $0xa8] sm:$0xf]
      %v279 = vld [vmem:[%s226 + $0xac] sm:$0xf]
      %v280 = vld [vmem:[%s226 + $0xb0] sm:$0x1]
      %v281 = vld [vmem:[%s226 + $0xb4] sm:$0xf]
      %v282 = vld [vmem:[%s226 + $0xb8] sm:$0xf]
      %v283 = vld [vmem:[%s226 + $0xbc] sm:$0x1]
      %v284 = vld [vmem:[%s226 + $0xc0] sm:$0xf]
      %v285 = vld [vmem:[%s226 + $0xc4] sm:$0xf]
      %v286 = vld [vmem:[%s226 + $0xc8] sm:$0x1]
      %v287 = vld [vmem:[%s226 + $0xcc] sm:$0xf]
      %v288 = vld [vmem:[%s226 + $0xd0] sm:$0xf]
      %v289 = vld [vmem:[%s226 + $0xd4] sm:$0x1]
      %v290 = vunpack.c.l.bf16 %v236
      %v291 = vunpack.c.l.bf16 %v237
      %v292 = vunpack.c.l.bf16 %v238
      %v293 = vunpack.c.l.bf16 %v239
      %v294 = vunpack.c.l.bf16 %v240
      %v295 = vunpack.c.l.bf16 %v241
      %v296 = vunpack.c.l.bf16 %v242
      %v297 = vunpack.c.l.bf16 %v243
      %v298 = vunpack.c.l.bf16 %v244
      %v299 = vunpack.c.l.bf16 %v245
      %v300 = vunpack.c.l.bf16 %v246
      %v301 = vunpack.c.l.bf16 %v247
      %v302 = vunpack.c.l.bf16 %v248
      %v303 = vunpack.c.l.bf16 %v249
      %v304 = vunpack.c.l.bf16 %v250
      %v305 = vunpack.c.l.bf16 %v251
      %v306 = vunpack.c.l.bf16 %v252
      %v307 = vunpack.c.l.bf16 %v253
      %v308 = vunpack.c.l.bf16 %v254
      %v309 = vunpack.c.l.bf16 %v255
      %v310 = vunpack.c.l.bf16 %v256
      %v311 = vunpack.c.l.bf16 %v257
      %v312 = vunpack.c.l.bf16 %v258
      %v313 = vunpack.c.l.bf16 %v259
      %v314 = vunpack.c.l.bf16 %v260
      %v315 = vunpack.c.l.bf16 %v261
      %v316 = vunpack.c.l.bf16 %v262
      %v317 = vunpack.c.l.bf16 %v263
      %v318 = vunpack.c.l.bf16 %v264
      %v319 = vunpack.c.l.bf16 %v265
      %v320 = vunpack.c.l.bf16 %v266
      %v321 = vunpack.c.l.bf16 %v267
      %v322 = vunpack.c.l.bf16 %v268
      %v323 = vunpack.c.l.bf16 %v269
      %v324 = vunpack.c.l.bf16 %v270
      %v325 = vunpack.c.l.bf16 %v271
      %v326 = vunpack.c.l.bf16 %v272
      %v327 = vunpack.c.l.bf16 %v273
      %v328 = vunpack.c.l.bf16 %v274
      %v329 = vunpack.c.l.bf16 %v275
      %v330 = vunpack.c.l.bf16 %v276
      %v331 = vunpack.c.l.bf16 %v277
      %v332 = vunpack.c.l.bf16 %v278
      %v333 = vunpack.c.l.bf16 %v279
      %v334 = vunpack.c.l.bf16 %v280
      %v335 = vunpack.c.l.bf16 %v281
      %v336 = vunpack.c.l.bf16 %v282
      %v337 = vunpack.c.l.bf16 %v283
      %v338 = vunpack.c.l.bf16 %v284
      %v339 = vunpack.c.l.bf16 %v285
      %v340 = vunpack.c.l.bf16 %v286
      %v341 = vunpack.c.l.bf16 %v287
      %v342 = vunpack.c.l.bf16 %v288
      %v343 = vunpack.c.l.bf16 %v289
      %v344 = vld [vmem:[%s1] sm:$0x1]
      %v346 = vperm.slane %v344, 0
      %v348 = vmul.f32 %v290, %v346
      %v349 = vmul.f32 %v291, %v346
      %v350 = vmul.f32 %v292, %v346
      %v351 = vmul.f32 %v293, %v346
      %v352 = vmul.f32 %v294, %v346
      %v353 = vmul.f32 %v295, %v346
      %v354 = vmul.f32 %v296, %v346
      %v355 = vmul.f32 %v297, %v346
      %v356 = vmul.f32 %v298, %v346
      %v357 = vmul.f32 %v299, %v346
      %v358 = vmul.f32 %v300, %v346
      %v359 = vmul.f32 %v301, %v346
      %v360 = vmul.f32 %v302, %v346
      %v361 = vmul.f32 %v303, %v346
      %v362 = vmul.f32 %v304, %v346
      %v363 = vmul.f32 %v305, %v346
      %v364 = vmul.f32 %v306, %v346
      %v365 = vmul.f32 %v307, %v346
      %v366 = vmul.f32 %v308, %v346
      %v367 = vmul.f32 %v309, %v346
      %v368 = vmul.f32 %v310, %v346
      %v369 = vmul.f32 %v311, %v346
      %v370 = vmul.f32 %v312, %v346
      %v371 = vmul.f32 %v313, %v346
      %v372 = vmul.f32 %v314, %v346
      %v373 = vmul.f32 %v315, %v346
      %v374 = vmul.f32 %v316, %v346
      %v375 = vmul.f32 %v317, %v346
      %v376 = vmul.f32 %v318, %v346
      %v377 = vmul.f32 %v319, %v346
      %v378 = vmul.f32 %v320, %v346
      %v379 = vmul.f32 %v321, %v346
      %v380 = vmul.f32 %v322, %v346
      %v381 = vmul.f32 %v323, %v346
      %v382 = vmul.f32 %v324, %v346
      %v383 = vmul.f32 %v325, %v346
      %v384 = vmul.f32 %v326, %v346
      %v385 = vmul.f32 %v327, %v346
      %v386 = vmul.f32 %v328, %v346
      %v387 = vmul.f32 %v329, %v346
      %v388 = vmul.f32 %v330, %v346
      %v389 = vmul.f32 %v331, %v346
      %v390 = vmul.f32 %v332, %v346
      %v391 = vmul.f32 %v333, %v346
      %v392 = vmul.f32 %v334, %v346
      %v393 = vmul.f32 %v335, %v346
      %v394 = vmul.f32 %v336, %v346
      %v395 = vmul.f32 %v337, %v346
      %v396 = vmul.f32 %v338, %v346
      %v397 = vmul.f32 %v339, %v346
      %v398 = vmul.f32 %v340, %v346
      %v399 = vmul.f32 %v341, %v346
      %v400 = vmul.f32 %v342, %v346
      %v401 = vmul.f32 %v343, %v346
      %v402 = vld [vmem:[%s2] sm:$0x1]
      %v404 = vperm.slane %v402, 0
      %v406 = vadd.f32 %v348, %v404
      %v407 = vadd.f32 %v349, %v404
      %v408 = vadd.f32 %v350, %v404
      %v409 = vadd.f32 %v351, %v404
      %v410 = vadd.f32 %v352, %v404
      %v411 = vadd.f32 %v353, %v404
      %v412 = vadd.f32 %v354, %v404
      %v413 = vadd.f32 %v355, %v404
      %v414 = vadd.f32 %v356, %v404
      %v415 = vadd.f32 %v357, %v404
      %v416 = vadd.f32 %v358, %v404
      %v417 = vadd.f32 %v359, %v404
      %v418 = vadd.f32 %v360, %v404
      %v419 = vadd.f32 %v361, %v404
      %v420 = vadd.f32 %v362, %v404
      %v421 = vadd.f32 %v363, %v404
      %v422 = vadd.f32 %v364, %v404
      %v423 = vadd.f32 %v365, %v404
      %v424 = vadd.f32 %v366, %v404
      %v425 = vadd.f32 %v367, %v404
      %v426 = vadd.f32 %v368, %v404
      %v427 = vadd.f32 %v369, %v404
      %v428 = vadd.f32 %v370, %v404
      %v429 = vadd.f32 %v371, %v404
      %v430 = vadd.f32 %v372, %v404
      %v431 = vadd.f32 %v373, %v404
      %v432 = vadd.f32 %v374, %v404
      %v433 = vadd.f32 %v375, %v404
      %v434 = vadd.f32 %v376, %v404
      %v435 = vadd.f32 %v377, %v404
      %v436 = vadd.f32 %v378, %v404
      %v437 = vadd.f32 %v379, %v404
      %v438 = vadd.f32 %v380, %v404
      %v439 = vadd.f32 %v381, %v404
      %v440 = vadd.f32 %v382, %v404
      %v441 = vadd.f32 %v383, %v404
      %v442 = vadd.f32 %v384, %v404
      %v443 = vadd.f32 %v385, %v404
      %v444 = vadd.f32 %v386, %v404
      %v445 = vadd.f32 %v387, %v404
      %v446 = vadd.f32 %v388, %v404
      %v447 = vadd.f32 %v389, %v404
      %v448 = vadd.f32 %v390, %v404
      %v449 = vadd.f32 %v391, %v404
      %v450 = vadd.f32 %v392, %v404
      %v451 = vadd.f32 %v393, %v404
      %v452 = vadd.f32 %v394, %v404
      %v453 = vadd.f32 %v395, %v404
      %v454 = vadd.f32 %v396, %v404
      %v455 = vadd.f32 %v397, %v404
      %v456 = vadd.f32 %v398, %v404
      %v457 = vadd.f32 %v399, %v404
      %v458 = vadd.f32 %v400, %v404
      %v459 = vadd.f32 %v401, %v404
      %vm460 = vcmp.ge.f32.partialorder %v406, 0.0
      %vm461 = vcmp.ge.f32.partialorder %v407, 0.0
      %vm462 = vcmp.ge.f32.partialorder %v408, 0.0
      %vm463 = vcmp.ge.f32.partialorder %v409, 0.0
      %vm464 = vcmp.ge.f32.partialorder %v410, 0.0
      %vm465 = vcmp.ge.f32.partialorder %v411, 0.0
      %vm466 = vcmp.ge.f32.partialorder %v412, 0.0
      %vm467 = vcmp.ge.f32.partialorder %v413, 0.0
      %vm468 = vcmp.ge.f32.partialorder %v414, 0.0
      %vm469 = vcmp.ge.f32.partialorder %v415, 0.0
      %vm470 = vcmp.ge.f32.partialorder %v416, 0.0
      %vm471 = vcmp.ge.f32.partialorder %v417, 0.0
      %vm472 = vcmp.ge.f32.partialorder %v418, 0.0
      %vm473 = vcmp.ge.f32.partialorder %v419, 0.0
      %vm474 = vcmp.ge.f32.partialorder %v420, 0.0
      %vm475 = vcmp.ge.f32.partialorder %v421, 0.0
      %vm476 = vcmp.ge.f32.partialorder %v422, 0.0
      %vm477 = vcmp.ge.f32.partialorder %v423, 0.0
      %vm478 = vcmp.ge.f32.partialorder %v424, 0.0
      %vm479 = vcmp.ge.f32.partialorder %v425, 0.0
      %vm480 = vcmp.ge.f32.partialorder %v426, 0.0
      %vm481 = vcmp.ge.f32.partialorder %v427, 0.0
      %vm482 = vcmp.ge.f32.partialorder %v428, 0.0
      %vm483 = vcmp.ge.f32.partialorder %v429, 0.0
      %vm484 = vcmp.ge.f32.partialorder %v430, 0.0
      %vm485 = vcmp.ge.f32.partialorder %v431, 0.0
      %vm486 = vcmp.ge.f32.partialorder %v432, 0.0
      %vm487 = vcmp.ge.f32.partialorder %v433, 0.0
      %vm488 = vcmp.ge.f32.partialorder %v434, 0.0
      %vm489 = vcmp.ge.f32.partialorder %v435, 0.0
      %vm490 = vcmp.ge.f32.partialorder %v436, 0.0
      %vm491 = vcmp.ge.f32.partialorder %v437, 0.0
      %vm492 = vcmp.ge.f32.partialorder %v438, 0.0
      %vm493 = vcmp.ge.f32.partialorder %v439, 0.0
      %vm494 = vcmp.ge.f32.partialorder %v440, 0.0
      %vm495 = vcmp.ge.f32.partialorder %v441, 0.0
      %vm496 = vcmp.ge.f32.partialorder %v442, 0.0
      %vm497 = vcmp.ge.f32.partialorder %v443, 0.0
      %vm498 = vcmp.ge.f32.partialorder %v444, 0.0
      %vm499 = vcmp.ge.f32.partialorder %v445, 0.0
      %vm500 = vcmp.ge.f32.partialorder %v446, 0.0
      %vm501 = vcmp.ge.f32.partialorder %v447, 0.0
      %vm502 = vcmp.ge.f32.partialorder %v448, 0.0
      %vm503 = vcmp.ge.f32.partialorder %v449, 0.0
      %vm504 = vcmp.ge.f32.partialorder %v450, 0.0
      %vm505 = vcmp.ge.f32.partialorder %v451, 0.0
      %vm506 = vcmp.ge.f32.partialorder %v452, 0.0
      %vm507 = vcmp.ge.f32.partialorder %v453, 0.0
      %vm508 = vcmp.ge.f32.partialorder %v454, 0.0
      %vm509 = vcmp.ge.f32.partialorder %v455, 0.0
      %vm510 = vcmp.ge.f32.partialorder %v456, 0.0
      %vm511 = vcmp.ge.f32.partialorder %v457, 0.0
      %vm512 = vcmp.ge.f32.partialorder %v458, 0.0
      %vm513 = vcmp.ge.f32.partialorder %v459, 0.0
      %v514 = vmul.f32 %v406, 0.01
      %v515 = vmul.f32 %v407, 0.01
      %v516 = vmul.f32 %v408, 0.01
      %v517 = vmul.f32 %v409, 0.01
      %v518 = vmul.f32 %v410, 0.01
      %v519 = vmul.f32 %v411, 0.01
      %v520 = vmul.f32 %v412, 0.01
      %v521 = vmul.f32 %v413, 0.01
      %v522 = vmul.f32 %v414, 0.01
      %v523 = vmul.f32 %v415, 0.01
      %v524 = vmul.f32 %v416, 0.01
      %v525 = vmul.f32 %v417, 0.01
      %v526 = vmul.f32 %v418, 0.01
      %v527 = vmul.f32 %v419, 0.01
      %v528 = vmul.f32 %v420, 0.01
      %v529 = vmul.f32 %v421, 0.01
      %v530 = vmul.f32 %v422, 0.01
      %v531 = vmul.f32 %v423, 0.01
      %v532 = vmul.f32 %v424, 0.01
      %v533 = vmul.f32 %v425, 0.01
      %v534 = vmul.f32 %v426, 0.01
      %v535 = vmul.f32 %v427, 0.01
      %v536 = vmul.f32 %v428, 0.01
      %v537 = vmul.f32 %v429, 0.01
      %v538 = vmul.f32 %v430, 0.01
      %v539 = vmul.f32 %v431, 0.01
      %v540 = vmul.f32 %v432, 0.01
      %v541 = vmul.f32 %v433, 0.01
      %v542 = vmul.f32 %v434, 0.01
      %v543 = vmul.f32 %v435, 0.01
      %v544 = vmul.f32 %v436, 0.01
      %v545 = vmul.f32 %v437, 0.01
      %v546 = vmul.f32 %v438, 0.01
      %v547 = vmul.f32 %v439, 0.01
      %v548 = vmul.f32 %v440, 0.01
      %v549 = vmul.f32 %v441, 0.01
      %v550 = vmul.f32 %v442, 0.01
      %v551 = vmul.f32 %v443, 0.01
      %v552 = vmul.f32 %v444, 0.01
      %v553 = vmul.f32 %v445, 0.01
      %v554 = vmul.f32 %v446, 0.01
      %v555 = vmul.f32 %v447, 0.01
      %v556 = vmul.f32 %v448, 0.01
      %v557 = vmul.f32 %v449, 0.01
      %v558 = vmul.f32 %v450, 0.01
      %v559 = vmul.f32 %v451, 0.01
      %v560 = vmul.f32 %v452, 0.01
      %v561 = vmul.f32 %v453, 0.01
      %v562 = vmul.f32 %v454, 0.01
      %v563 = vmul.f32 %v455, 0.01
      %v564 = vmul.f32 %v456, 0.01
      %v565 = vmul.f32 %v457, 0.01
      %v566 = vmul.f32 %v458, 0.01
      %v567 = vmul.f32 %v459, 0.01
      %v568 = vsel %vm460, %v406, %v514
      %v569 = vsel %vm461, %v407, %v515
      %v570 = vsel %vm462, %v408, %v516
      %v571 = vsel %vm463, %v409, %v517
      %v572 = vsel %vm464, %v410, %v518
      %v573 = vsel %vm465, %v411, %v519
      %v574 = vsel %vm466, %v412, %v520
      %v575 = vsel %vm467, %v413, %v521
      %v576 = vsel %vm468, %v414, %v522
      %v577 = vsel %vm469, %v415, %v523
      %v578 = vsel %vm470, %v416, %v524
      %v579 = vsel %vm471, %v417, %v525
      %v580 = vsel %vm472, %v418, %v526
      %v581 = vsel %vm473, %v419, %v527
      %v582 = vsel %vm474, %v420, %v528
      %v583 = vsel %vm475, %v421, %v529
      %v584 = vsel %vm476, %v422, %v530
      %v585 = vsel %vm477, %v423, %v531
      %v586 = vsel %vm478, %v424, %v532
      %v587 = vsel %vm479, %v425, %v533
      %v588 = vsel %vm480, %v426, %v534
      %v589 = vsel %vm481, %v427, %v535
      %v590 = vsel %vm482, %v428, %v536
      %v591 = vsel %vm483, %v429, %v537
      %v592 = vsel %vm484, %v430, %v538
      %v593 = vsel %vm485, %v431, %v539
      %v594 = vsel %vm486, %v432, %v540
      %v595 = vsel %vm487, %v433, %v541
      %v596 = vsel %vm488, %v434, %v542
      %v597 = vsel %vm489, %v435, %v543
      %v598 = vsel %vm490, %v436, %v544
      %v599 = vsel %vm491, %v437, %v545
      %v600 = vsel %vm492, %v438, %v546
      %v601 = vsel %vm493, %v439, %v547
      %v602 = vsel %vm494, %v440, %v548
      %v603 = vsel %vm495, %v441, %v549
      %v604 = vsel %vm496, %v442, %v550
      %v605 = vsel %vm497, %v443, %v551
      %v606 = vsel %vm498, %v444, %v552
      %v607 = vsel %vm499, %v445, %v553
      %v608 = vsel %vm500, %v446, %v554
      %v609 = vsel %vm501, %v447, %v555
      %v610 = vsel %vm502, %v448, %v556
      %v611 = vsel %vm503, %v449, %v557
      %v612 = vsel %vm504, %v450, %v558
      %v613 = vsel %vm505, %v451, %v559
      %v614 = vsel %vm506, %v452, %v560
      %v615 = vsel %vm507, %v453, %v561
      %v616 = vsel %vm508, %v454, %v562
      %v617 = vsel %vm509, %v455, %v563
      %v618 = vsel %vm510, %v456, %v564
      %v619 = vsel %vm511, %v457, %v565
      %v620 = vsel %vm512, %v458, %v566
      %v621 = vsel %vm513, %v459, %v567
      %v622 = vlaneseq
      %v623 = vshrl.u32 %v622, 7
      %v624 = vadd.s32 %v623, 8
      %v625 = vadd.s32 %v623, 16
      %vm626 = vcmp.ge.s32.totalorder %v623, 1
      %vm627 = vcmp.ge.s32.totalorder %v624, 1
      %vm628 = vcmp.ge.s32.totalorder %v625, 1
      %vm629 = vmand 0, %vm626
      %vm630 = vmand 0, %vm627
      %vm631 = vmand 0, %vm628
      %vm632 = vmand 1, %vm626
      %vm633 = vmand 1, %vm627
      %vm634 = vmand 1, %vm628
      %vm635 = vcmp.le.s32.totalorder %v623, 16
      %vm636 = vcmp.le.s32.totalorder %v624, 16
      %vm637 = vcmp.le.s32.totalorder %v625, 16
      %vm638 = vmand %vm629, %vm635
      %vm639 = vmand %vm630, %vm636
      %vm640 = vmand %vm631, %vm637
      %vm641 = vmand %vm632, %vm635
      %vm642 = vmand %vm633, %vm636
      %vm643 = vmand %vm634, %vm637
      %v644 = vsel %vm638, 1, 0
      %v645 = vsel %vm639, 1, 0
      %v646 = vsel %vm640, 1, 0
      %v647 = vsel %vm641, 1, 0
      %v648 = vsel %vm642, 1, 0
      %v649 = vsel %vm643, 1, 0
      %vm650 = vcmp.eq.s32.totalorder %v644, 1
      %vm651 = vcmp.eq.s32.totalorder %v645, 1
      %vm652 = vcmp.eq.s32.totalorder %v646, 1
      %vm653 = vcmp.eq.s32.totalorder %v647, 1
      %vm654 = vcmp.eq.s32.totalorder %v648, 1
      %vm655 = vcmp.eq.s32.totalorder %v649, 1
      %v656 = vsel %vm650, %v568, 0.0
      %v657 = vsel %vm651, %v569, 0.0
      %v658 = vsel %vm652, %v570, 0.0
      %v659 = vsel %vm653, %v571, 0.0
      %v660 = vsel %vm654, %v572, 0.0
      %v661 = vsel %vm655, %v573, 0.0
      %v662 = vsel %vm653, %v574, 0.0
      %v663 = vsel %vm654, %v575, 0.0
      %v664 = vsel %vm655, %v576, 0.0
      %v665 = vsel %vm653, %v577, 0.0
      %v666 = vsel %vm654, %v578, 0.0
      %v667 = vsel %vm655, %v579, 0.0
      %v668 = vsel %vm653, %v580, 0.0
      %v669 = vsel %vm654, %v581, 0.0
      %v670 = vsel %vm655, %v582, 0.0
      %v671 = vsel %vm653, %v583, 0.0
      %v672 = vsel %vm654, %v584, 0.0
      %v673 = vsel %vm655, %v585, 0.0
      %v674 = vsel %vm653, %v586, 0.0
      %v675 = vsel %vm654, %v587, 0.0
      %v676 = vsel %vm655, %v588, 0.0
      %v677 = vsel %vm653, %v589, 0.0
      %v678 = vsel %vm654, %v590, 0.0
      %v679 = vsel %vm655, %v591, 0.0
      %v680 = vsel %vm653, %v592, 0.0
      %v681 = vsel %vm654, %v593, 0.0
      %v682 = vsel %vm655, %v594, 0.0
      %v683 = vsel %vm653, %v595, 0.0
      %v684 = vsel %vm654, %v596, 0.0
      %v685 = vsel %vm655, %v597, 0.0
      %v686 = vsel %vm653, %v598, 0.0
      %v687 = vsel %vm654, %v599, 0.0
      %v688 = vsel %vm655, %v600, 0.0
      %v689 = vsel %vm653, %v601, 0.0
      %v690 = vsel %vm654, %v602, 0.0
      %v691 = vsel %vm655, %v603, 0.0
      %v692 = vsel %vm653, %v604, 0.0
      %v693 = vsel %vm654, %v605, 0.0
      %v694 = vsel %vm655, %v606, 0.0
      %v695 = vsel %vm653, %v607, 0.0
      %v696 = vsel %vm654, %v608, 0.0
      %v697 = vsel %vm655, %v609, 0.0
      %v698 = vsel %vm653, %v610, 0.0
      %v699 = vsel %vm654, %v611, 0.0
      %v700 = vsel %vm655, %v612, 0.0
      %v701 = vsel %vm653, %v613, 0.0
      %v702 = vsel %vm654, %v614, 0.0
      %v703 = vsel %vm655, %v615, 0.0
      %v704 = vsel %vm653, %v616, 0.0
      %v705 = vsel %vm654, %v617, 0.0
      %v706 = vsel %vm655, %v618, 0.0
      %v707 = vsel %vm650, %v619, 0.0
      %v708 = vsel %vm651, %v620, 0.0
      %v709 = vsel %vm652, %v621, 0.0
      %v710 = vpack.c.bf16 %v656, %v656
      %v711 = vpack.c.bf16 %v657, %v657
      %v712 = vpack.c.bf16 %v658, %v658
      %v713 = vpack.c.bf16 %v659, %v659
      %v714 = vpack.c.bf16 %v660, %v660
      %v715 = vpack.c.bf16 %v661, %v661
      %v716 = vpack.c.bf16 %v662, %v662
      %v717 = vpack.c.bf16 %v663, %v663
      %v718 = vpack.c.bf16 %v664, %v664
      %v719 = vpack.c.bf16 %v665, %v665
      %v720 = vpack.c.bf16 %v666, %v666
      %v721 = vpack.c.bf16 %v667, %v667
      %v722 = vpack.c.bf16 %v668, %v668
      %v723 = vpack.c.bf16 %v669, %v669
      %v724 = vpack.c.bf16 %v670, %v670
      %v725 = vpack.c.bf16 %v671, %v671
      %v726 = vpack.c.bf16 %v672, %v672
      %v727 = vpack.c.bf16 %v673, %v673
      %v728 = vpack.c.bf16 %v674, %v674
      %v729 = vpack.c.bf16 %v675, %v675
      %v730 = vpack.c.bf16 %v676, %v676
      %v731 = vpack.c.bf16 %v677, %v677
      %v732 = vpack.c.bf16 %v678, %v678
      %v733 = vpack.c.bf16 %v679, %v679
      %v734 = vpack.c.bf16 %v680, %v680
      %v735 = vpack.c.bf16 %v681, %v681
      %v736 = vpack.c.bf16 %v682, %v682
      %v737 = vpack.c.bf16 %v683, %v683
      %v738 = vpack.c.bf16 %v684, %v684
      %v739 = vpack.c.bf16 %v685, %v685
      %v740 = vpack.c.bf16 %v686, %v686
      %v741 = vpack.c.bf16 %v687, %v687
      %v742 = vpack.c.bf16 %v688, %v688
      %v743 = vpack.c.bf16 %v689, %v689
      %v744 = vpack.c.bf16 %v690, %v690
      %v745 = vpack.c.bf16 %v691, %v691
      %v746 = vpack.c.bf16 %v692, %v692
      %v747 = vpack.c.bf16 %v693, %v693
      %v748 = vpack.c.bf16 %v694, %v694
      %v749 = vpack.c.bf16 %v695, %v695
      %v750 = vpack.c.bf16 %v696, %v696
      %v751 = vpack.c.bf16 %v697, %v697
      %v752 = vpack.c.bf16 %v698, %v698
      %v753 = vpack.c.bf16 %v699, %v699
      %v754 = vpack.c.bf16 %v700, %v700
      %v755 = vpack.c.bf16 %v701, %v701
      %v756 = vpack.c.bf16 %v702, %v702
      %v757 = vpack.c.bf16 %v703, %v703
      %v758 = vpack.c.bf16 %v704, %v704
      %v759 = vpack.c.bf16 %v705, %v705
      %v760 = vpack.c.bf16 %v706, %v706
      %v761 = vpack.c.bf16 %v707, %v707
      %v762 = vpack.c.bf16 %v708, %v708
      %v763 = vpack.c.bf16 %v709, %v709
      %764 = vst [vmem:[#allocation2] sm:$0xf] %v710
      %765 = vst [vmem:[#allocation2 + $0x24] sm:$0xf] %v711
      %766 = vst [vmem:[#allocation2 + $0x48] sm:$0xf] %v713
      %767 = vst [vmem:[#allocation2 + $0x6c] sm:$0xf] %v714
      %768 = vst [vmem:[#allocation2 + $0x90] sm:$0xf] %v716
      %769 = vst [vmem:[#allocation2 + $0xb4] sm:$0xf] %v717
      %770 = vst [vmem:[#allocation2 + $0xd8] sm:$0xf] %v719
      %771 = vst [vmem:[#allocation2 + $0xfc] sm:$0xf] %v720
      %772 = vst [vmem:[#allocation2 + $0x120] sm:$0xf] %v722
      %773 = vst [vmem:[#allocation2 + $0x144] sm:$0xf] %v723
      %774 = vst [vmem:[#allocation2 + $0x168] sm:$0xf] %v725
      %775 = vst [vmem:[#allocation2 + $0x18c] sm:$0xf] %v726
      %776 = vst [vmem:[#allocation2 + $0x1b0] sm:$0xf] %v728
      %777 = vst [vmem:[#allocation2 + $0x1d4] sm:$0xf] %v729
      %778 = vst [vmem:[#allocation2 + $0x1f8] sm:$0xf] %v731
      %779 = vst [vmem:[#allocation2 + $0x21c] sm:$0xf] %v732
      %780 = vst [vmem:[#allocation2 + $0x240] sm:$0xf] %v734
      %781 = vst [vmem:[#allocation2 + $0x264] sm:$0xf] %v735
      %782 = vst [vmem:[#allocation2 + $0x288] sm:$0xf] %v737
      %783 = vst [vmem:[#allocation2 + $0x2ac] sm:$0xf] %v738
      %784 = vst [vmem:[#allocation2 + $0x2d0] sm:$0xf] %v740
      %785 = vst [vmem:[#allocation2 + $0x2f4] sm:$0xf] %v741
      %786 = vst [vmem:[#allocation2 + $0x318] sm:$0xf] %v743
      %787 = vst [vmem:[#allocation2 + $0x33c] sm:$0xf] %v744
      %788 = vst [vmem:[#allocation2 + $0x360] sm:$0xf] %v746
      %789 = vst [vmem:[#allocation2 + $0x384] sm:$0xf] %v747
      %790 = vst [vmem:[#allocation2 + $0x3a8] sm:$0xf] %v749
      %791 = vst [vmem:[#allocation2 + $0x3cc] sm:$0xf] %v750
      %792 = vst [vmem:[#allocation2 + $0x3f0] sm:$0xf] %v752
      %793 = vst [vmem:[#allocation2 + $0x414] sm:$0xf] %v753
      %794 = vst [vmem:[#allocation2 + $0x438] sm:$0xf] %v755
      %795 = vst [vmem:[#allocation2 + $0x45c] sm:$0xf] %v756
      %vm796 = vsmask.f32 3328
      %vm797 = vsmask.f32 7440
      %vm798 = vmor %vm796, %vm797
      %v800 = vshrl.u32 %v710, 16
      %v802 = vrot.slane %v800, 4
      %v803 = vshll.u32 %v710, 16
      %v805 = vrot.slane %v803, 5
      %v806 = vor.u32 %v802, %v805
      %v807 = vrot.slane %v806, 4
      %v809 = vshll.u32 %v711, 16
      %v811 = vrot.slane %v809, 5
      %v812 = vsel %vm798, %v807, %v811
      %v813 = vshrl.u32 %v711, 16
      %v815 = vrot.slane %v813, 4
      %v816 = vor.u32 %v815, %v811
      %v817 = vrot.slane %v816, 4
      %v819 = vshll.u32 %v712, 16
      %v821 = vrot.slane %v819, 5
      %v822 = vsel %vm798, %v817, %v821
      %v824 = vshrl.u32 %v713, 16
      %v826 = vrot.slane %v824, 4
      %v827 = vshll.u32 %v713, 16
      %v829 = vrot.slane %v827, 5
      %v830 = vor.u32 %v826, %v829
      %v831 = vrot.slane %v830, 4
      %v833 = vshll.u32 %v714, 16
      %v835 = vrot.slane %v833, 5
      %v836 = vsel %vm798, %v831, %v835
      %v837 = vshrl.u32 %v714, 16
      %v839 = vrot.slane %v837, 4
      %v840 = vor.u32 %v839, %v835
      %v841 = vrot.slane %v840, 4
      %v843 = vshll.u32 %v715, 16
      %v845 = vrot.slane %v843, 5
      %v846 = vsel %vm798, %v841, %v845
      %v848 = vshrl.u32 %v716, 16
      %v850 = vrot.slane %v848, 4
      %v851 = vshll.u32 %v716, 16
      %v853 = vrot.slane %v851, 5
      %v854 = vor.u32 %v850, %v853
      %v855 = vrot.slane %v854, 4
      %v857 = vshll.u32 %v717, 16
      %v859 = vrot.slane %v857, 5
      %v860 = vsel %vm798, %v855, %v859
      %v861 = vshrl.u32 %v717, 16
      %v863 = vrot.slane %v861, 4
      %v864 = vor.u32 %v863, %v859
      %v865 = vrot.slane %v864, 4
      %v867 = vshll.u32 %v718, 16
      %v869 = vrot.slane %v867, 5
      %v870 = vsel %vm798, %v865, %v869
      %v872 = vshrl.u32 %v719, 16
      %v874 = vrot.slane %v872, 4
      %v875 = vshll.u32 %v719, 16
      %v877 = vrot.slane %v875, 5
      %v878 = vor.u32 %v874, %v877
      %v879 = vrot.slane %v878, 4
      %v881 = vshll.u32 %v720, 16
      %v883 = vrot.slane %v881, 5
      %v884 = vsel %vm798, %v879, %v883
      %v885 = vshrl.u32 %v720, 16
      %v887 = vrot.slane %v885, 4
      %v888 = vor.u32 %v887, %v883
      %v889 = vrot.slane %v888, 4
      %v891 = vshll.u32 %v721, 16
      %v893 = vrot.slane %v891, 5
      %v894 = vsel %vm798, %v889, %v893
      %v896 = vshrl.u32 %v722, 16
      %v898 = vrot.slane %v896, 4
      %v899 = vshll.u32 %v722, 16
      %v901 = vrot.slane %v899, 5
      %v902 = vor.u32 %v898, %v901
      %v903 = vrot.slane %v902, 4
      %v905 = vshll.u32 %v723, 16
      %v907 = vrot.slane %v905, 5
      %v908 = vsel %vm798, %v903, %v907
      %v909 = vshrl.u32 %v723, 16
      %v911 = vrot.slane %v909, 4
      %v912 = vor.u32 %v911, %v907
      %v913 = vrot.slane %v912, 4
      %v915 = vshll.u32 %v724, 16
      %v917 = vrot.slane %v915, 5
      %v918 = vsel %vm798, %v913, %v917
      %v920 = vshrl.u32 %v725, 16
      %v922 = vrot.slane %v920, 4
      %v923 = vshll.u32 %v725, 16
      %v925 = vrot.slane %v923, 5
      %v926 = vor.u32 %v922, %v925
      %v927 = vrot.slane %v926, 4
      %v929 = vshll.u32 %v726, 16
      %v931 = vrot.slane %v929, 5
      %v932 = vsel %vm798, %v927, %v931
      %v933 = vshrl.u32 %v726, 16
      %v935 = vrot.slane %v933, 4
      %v936 = vor.u32 %v935, %v931
      %v937 = vrot.slane %v936, 4
      %v939 = vshll.u32 %v727, 16
      %v941 = vrot.slane %v939, 5
      %v942 = vsel %vm798, %v937, %v941
      %v944 = vshrl.u32 %v728, 16
      %v946 = vrot.slane %v944, 4
      %v947 = vshll.u32 %v728, 16
      %v949 = vrot.slane %v947, 5
      %v950 = vor.u32 %v946, %v949
      %v951 = vrot.slane %v950, 4
      %v953 = vshll.u32 %v729, 16
      %v955 = vrot.slane %v953, 5
      %v956 = vsel %vm798, %v951, %v955
      %v957 = vshrl.u32 %v729, 16
      %v959 = vrot.slane %v957, 4
      %v960 = vor.u32 %v959, %v955
      %v961 = vrot.slane %v960, 4
      %v963 = vshll.u32 %v730, 16
      %v965 = vrot.slane %v963, 5
      %v966 = vsel %vm798, %v961, %v965
      %v968 = vshrl.u32 %v731, 16
      %v970 = vrot.slane %v968, 4
      %v971 = vshll.u32 %v731, 16
      %v973 = vrot.slane %v971, 5
      %v974 = vor.u32 %v970, %v973
      %v975 = vrot.slane %v974, 4
      %v977 = vshll.u32 %v732, 16
      %v979 = vrot.slane %v977, 5
      %v980 = vsel %vm798, %v975, %v979
      %v981 = vshrl.u32 %v732, 16
      %v983 = vrot.slane %v981, 4
      %v984 = vor.u32 %v983, %v979
      %v985 = vrot.slane %v984, 4
      %v987 = vshll.u32 %v733, 16
      %v989 = vrot.slane %v987, 5
      %v990 = vsel %vm798, %v985, %v989
      %v992 = vshrl.u32 %v734, 16
      %v994 = vrot.slane %v992, 4
      %v995 = vshll.u32 %v734, 16
      %v997 = vrot.slane %v995, 5
      %v998 = vor.u32 %v994, %v997
      %v999 = vrot.slane %v998, 4
      %v1001 = vshll.u32 %v735, 16
      %v1003 = vrot.slane %v1001, 5
      %v1004 = vsel %vm798, %v999, %v1003
      %v1005 = vshrl.u32 %v735, 16
      %v1007 = vrot.slane %v1005, 4
      %v1008 = vor.u32 %v1007, %v1003
      %v1009 = vrot.slane %v1008, 4
      %v1011 = vshll.u32 %v736, 16
      %v1013 = vrot.slane %v1011, 5
      %v1014 = vsel %vm798, %v1009, %v1013
      %v1016 = vshrl.u32 %v737, 16
      %v1018 = vrot.slane %v1016, 4
      %v1019 = vshll.u32 %v737, 16
      %v1021 = vrot.slane %v1019, 5
      %v1022 = vor.u32 %v1018, %v1021
      %v1023 = vrot.slane %v1022, 4
      %v1025 = vshll.u32 %v738, 16
      %v1027 = vrot.slane %v1025, 5
      %v1028 = vsel %vm798, %v1023, %v1027
      %v1029 = vshrl.u32 %v738, 16
      %v1031 = vrot.slane %v1029, 4
      %v1032 = vor.u32 %v1031, %v1027
      %v1033 = vrot.slane %v1032, 4
      %v1035 = vshll.u32 %v739, 16
      %v1037 = vrot.slane %v1035, 5
      %v1038 = vsel %vm798, %v1033, %v1037
      %v1040 = vshrl.u32 %v740, 16
      %v1042 = vrot.slane %v1040, 4
      %v1043 = vshll.u32 %v740, 16
      %v1045 = vrot.slane %v1043, 5
      %v1046 = vor.u32 %v1042, %v1045
      %v1047 = vrot.slane %v1046, 4
      %v1049 = vshll.u32 %v741, 16
      %v1051 = vrot.slane %v1049, 5
      %v1052 = vsel %vm798, %v1047, %v1051
      %v1053 = vshrl.u32 %v741, 16
      %v1055 = vrot.slane %v1053, 4
      %v1056 = vor.u32 %v1055, %v1051
      %v1057 = vrot.slane %v1056, 4
      %v1059 = vshll.u32 %v742, 16
      %v1061 = vrot.slane %v1059, 5
      %v1062 = vsel %vm798, %v1057, %v1061
      %v1064 = vshrl.u32 %v743, 16
      %v1066 = vrot.slane %v1064, 4
      %v1067 = vshll.u32 %v743, 16
      %v1069 = vrot.slane %v1067, 5
      %v1070 = vor.u32 %v1066, %v1069
      %v1071 = vrot.slane %v1070, 4
      %v1073 = vshll.u32 %v744, 16
      %v1075 = vrot.slane %v1073, 5
      %v1076 = vsel %vm798, %v1071, %v1075
      %v1077 = vshrl.u32 %v744, 16
      %v1079 = vrot.slane %v1077, 4
      %v1080 = vor.u32 %v1079, %v1075
      %v1081 = vrot.slane %v1080, 4
      %v1083 = vshll.u32 %v745, 16
      %v1085 = vrot.slane %v1083, 5
      %v1086 = vsel %vm798, %v1081, %v1085
      %v1088 = vshrl.u32 %v746, 16
      %v1090 = vrot.slane %v1088, 4
      %v1091 = vshll.u32 %v746, 16
      %v1093 = vrot.slane %v1091, 5
      %v1094 = vor.u32 %v1090, %v1093
      %v1095 = vrot.slane %v1094, 4
      %v1097 = vshll.u32 %v747, 16
      %v1099 = vrot.slane %v1097, 5
      %v1100 = vsel %vm798, %v1095, %v1099
      %v1101 = vshrl.u32 %v747, 16
      %v1103 = vrot.slane %v1101, 4
      %v1104 = vor.u32 %v1103, %v1099
      %v1105 = vrot.slane %v1104, 4
      %v1107 = vshll.u32 %v748, 16
      %v1109 = vrot.slane %v1107, 5
      %v1110 = vsel %vm798, %v1105, %v1109
      %v1112 = vshrl.u32 %v749, 16
      %v1114 = vrot.slane %v1112, 4
      %v1115 = vshll.u32 %v749, 16
      %v1117 = vrot.slane %v1115, 5
      %v1118 = vor.u32 %v1114, %v1117
      %v1119 = vrot.slane %v1118, 4
      %v1121 = vshll.u32 %v750, 16
      %v1123 = vrot.slane %v1121, 5
      %v1124 = vsel %vm798, %v1119, %v1123
      %v1125 = vshrl.u32 %v750, 16
      %v1127 = vrot.slane %v1125, 4
      %v1128 = vor.u32 %v1127, %v1123
      %v1129 = vrot.slane %v1128, 4
      %v1131 = vshll.u32 %v751, 16
      %v1133 = vrot.slane %v1131, 5
      %v1134 = vsel %vm798, %v1129, %v1133
      %v1136 = vshrl.u32 %v752, 16
      %v1138 = vrot.slane %v1136, 4
      %v1139 = vshll.u32 %v752, 16
      %v1141 = vrot.slane %v1139, 5
      %v1142 = vor.u32 %v1138, %v1141
      %v1143 = vrot.slane %v1142, 4
      %v1145 = vshll.u32 %v753, 16
      %v1147 = vrot.slane %v1145, 5
      %v1148 = vsel %vm798, %v1143, %v1147
      %v1149 = vshrl.u32 %v753, 16
      %v1151 = vrot.slane %v1149, 4
      %v1152 = vor.u32 %v1151, %v1147
      %v1153 = vrot.slane %v1152, 4
      %v1155 = vshll.u32 %v754, 16
      %v1157 = vrot.slane %v1155, 5
      %v1158 = vsel %vm798, %v1153, %v1157
      %v1160 = vshrl.u32 %v755, 16
      %v1162 = vrot.slane %v1160, 4
      %v1163 = vshll.u32 %v755, 16
      %v1165 = vrot.slane %v1163, 5
      %v1166 = vor.u32 %v1162, %v1165
      %v1167 = vrot.slane %v1166, 4
      %v1169 = vshll.u32 %v756, 16
      %v1171 = vrot.slane %v1169, 5
      %v1172 = vsel %vm798, %v1167, %v1171
      %v1173 = vshrl.u32 %v756, 16
      %v1175 = vrot.slane %v1173, 4
      %v1176 = vor.u32 %v1175, %v1171
      %v1177 = vrot.slane %v1176, 4
      %v1179 = vshll.u32 %v757, 16
      %v1181 = vrot.slane %v1179, 5
      %v1182 = vsel %vm798, %v1177, %v1181
      %1215 = vst [vmem:[#allocation2 + $0x4] sm:$0xf] %v812
      %1216 = vst [vmem:[#allocation2 + $0x28] sm:$0xf] %v822
      %1217 = vst [vmem:[#allocation2 + $0x4c] sm:$0xf] %v836
      %1218 = vst [vmem:[#allocation2 + $0x70] sm:$0xf] %v846
      %1219 = vst [vmem:[#allocation2 + $0x94] sm:$0xf] %v860
      %1220 = vst [vmem:[#allocation2 + $0xb8] sm:$0xf] %v870
      %1221 = vst [vmem:[#allocation2 + $0xdc] sm:$0xf] %v884
      %1222 = vst [vmem:[#allocation2 + $0x100] sm:$0xf] %v894
      %1223 = vst [vmem:[#allocation2 + $0x124] sm:$0xf] %v908
      %1224 = vst [vmem:[#allocation2 + $0x148] sm:$0xf] %v918
      %1225 = vst [vmem:[#allocation2 + $0x16c] sm:$0xf] %v932
      %1226 = vst [vmem:[#allocation2 + $0x190] sm:$0xf] %v942
      %1227 = vst [vmem:[#allocation2 + $0x1b4] sm:$0xf] %v956
      %1228 = vst [vmem:[#allocation2 + $0x1d8] sm:$0xf] %v966
      %1229 = vst [vmem:[#allocation2 + $0x1fc] sm:$0xf] %v980
      %1230 = vst [vmem:[#allocation2 + $0x220] sm:$0xf] %v990
      %1231 = vst [vmem:[#allocation2 + $0x244] sm:$0xf] %v1004
      %1232 = vst [vmem:[#allocation2 + $0x268] sm:$0xf] %v1014
      %1233 = vst [vmem:[#allocation2 + $0x28c] sm:$0xf] %v1028
      %1234 = vst [vmem:[#allocation2 + $0x2b0] sm:$0xf] %v1038
      %1235 = vst [vmem:[#allocation2 + $0x2d4] sm:$0xf] %v1052
      %1236 = vst [vmem:[#allocation2 + $0x2f8] sm:$0xf] %v1062
      %1237 = vst [vmem:[#allocation2 + $0x31c] sm:$0xf] %v1076
      %1238 = vst [vmem:[#allocation2 + $0x340] sm:$0xf] %v1086
      %1239 = vst [vmem:[#allocation2 + $0x364] sm:$0xf] %v1100
      %1240 = vst [vmem:[#allocation2 + $0x388] sm:$0xf] %v1110
      %1241 = vst [vmem:[#allocation2 + $0x3ac] sm:$0xf] %v1124
      %1242 = vst [vmem:[#allocation2 + $0x3d0] sm:$0xf] %v1134
      %1243 = vst [vmem:[#allocation2 + $0x3f4] sm:$0xf] %v1148
      %1244 = vst [vmem:[#allocation2 + $0x418] sm:$0xf] %v1158
      %1245 = vst [vmem:[#allocation2 + $0x43c] sm:$0xf] %v1172
      %1246 = vst [vmem:[#allocation2 + $0x460] sm:$0xf] %v1182
      %vm1295 = vcmask 1042432
      %vm1296 = vcmask 1046532
      %vm1297 = vmor %vm1295, %vm1296
      %v1298 = vrot.slane %v710, 5
      %v1299 = vrot.slane %v1298, 4
      %v1300 = vrot.slane %v711, 5
      %v1301 = vsel %vm1297, %v1299, %v1300
      %v1302 = vrot.slane %v1300, 4
      %v1303 = vrot.slane %v712, 5
      %v1304 = vsel %vm1297, %v1302, %v1303
      %v1305 = vrot.slane %v713, 5
      %v1306 = vrot.slane %v1305, 4
      %v1307 = vrot.slane %v714, 5
      %v1308 = vsel %vm1297, %v1306, %v1307
      %v1309 = vrot.slane %v1307, 4
      %v1310 = vrot.slane %v715, 5
      %v1311 = vsel %vm1297, %v1309, %v1310
      %v1312 = vrot.slane %v716, 5
      %v1313 = vrot.slane %v1312, 4
      %v1314 = vrot.slane %v717, 5
      %v1315 = vsel %vm1297, %v1313, %v1314
      %v1316 = vrot.slane %v1314, 4
      %v1317 = vrot.slane %v718, 5
      %v1318 = vsel %vm1297, %v1316, %v1317
      %v1319 = vrot.slane %v719, 5
      %v1320 = vrot.slane %v1319, 4
      %v1321 = vrot.slane %v720, 5
      %v1322 = vsel %vm1297, %v1320, %v1321
      %v1323 = vrot.slane %v1321, 4
      %v1324 = vrot.slane %v721, 5
      %v1325 = vsel %vm1297, %v1323, %v1324
      %v1326 = vrot.slane %v722, 5
      %v1327 = vrot.slane %v1326, 4
      %v1328 = vrot.slane %v723, 5
      %v1329 = vsel %vm1297, %v1327, %v1328
      %v1330 = vrot.slane %v1328, 4
      %v1331 = vrot.slane %v724, 5
      %v1332 = vsel %vm1297, %v1330, %v1331
      %v1333 = vrot.slane %v725, 5
      %v1334 = vrot.slane %v1333, 4
      %v1335 = vrot.slane %v726, 5
      %v1336 = vsel %vm1297, %v1334, %v1335
      %v1337 = vrot.slane %v1335, 4
      %v1338 = vrot.slane %v727, 5
      %v1339 = vsel %vm1297, %v1337, %v1338
      %v1340 = vrot.slane %v728, 5
      %v1341 = vrot.slane %v1340, 4
      %v1342 = vrot.slane %v729, 5
      %v1343 = vsel %vm1297, %v1341, %v1342
      %v1344 = vrot.slane %v1342, 4
      %v1345 = vrot.slane %v730, 5
      %v1346 = vsel %vm1297, %v1344, %v1345
      %v1347 = vrot.slane %v731, 5
      %v1348 = vrot.slane %v1347, 4
      %v1349 = vrot.slane %v732, 5
      %v1350 = vsel %vm1297, %v1348, %v1349
      %v1351 = vrot.slane %v1349, 4
      %v1352 = vrot.slane %v733, 5
      %v1353 = vsel %vm1297, %v1351, %v1352
      %v1354 = vrot.slane %v734, 5
      %v1355 = vrot.slane %v1354, 4
      %v1356 = vrot.slane %v735, 5
      %v1357 = vsel %vm1297, %v1355, %v1356
      %v1358 = vrot.slane %v1356, 4
      %v1359 = vrot.slane %v736, 5
      %v1360 = vsel %vm1297, %v1358, %v1359
      %v1361 = vrot.slane %v737, 5
      %v1362 = vrot.slane %v1361, 4
      %v1363 = vrot.slane %v738, 5
      %v1364 = vsel %vm1297, %v1362, %v1363
      %v1365 = vrot.slane %v1363, 4
      %v1366 = vrot.slane %v739, 5
      %v1367 = vsel %vm1297, %v1365, %v1366
      %v1368 = vrot.slane %v740, 5
      %v1369 = vrot.slane %v1368, 4
      %v1370 = vrot.slane %v741, 5
      %v1371 = vsel %vm1297, %v1369, %v1370
      %v1372 = vrot.slane %v1370, 4
      %v1373 = vrot.slane %v742, 5
      %v1374 = vsel %vm1297, %v1372, %v1373
      %v1375 = vrot.slane %v743, 5
      %v1376 = vrot.slane %v1375, 4
      %v1377 = vrot.slane %v744, 5
      %v1378 = vsel %vm1297, %v1376, %v1377
      %v1379 = vrot.slane %v1377, 4
      %v1380 = vrot.slane %v745, 5
      %v1381 = vsel %vm1297, %v1379, %v1380
      %v1382 = vrot.slane %v746, 5
      %v1383 = vrot.slane %v1382, 4
      %v1384 = vrot.slane %v747, 5
      %v1385 = vsel %vm1297, %v1383, %v1384
      %v1386 = vrot.slane %v1384, 4
      %v1387 = vrot.slane %v748, 5
      %v1388 = vsel %vm1297, %v1386, %v1387
      %v1389 = vrot.slane %v749, 5
      %v1390 = vrot.slane %v1389, 4
      %v1391 = vrot.slane %v750, 5
      %v1392 = vsel %vm1297, %v1390, %v1391
      %v1393 = vrot.slane %v1391, 4
      %v1394 = vrot.slane %v751, 5
      %v1395 = vsel %vm1297, %v1393, %v1394
      %v1396 = vrot.slane %v752, 5
      %v1397 = vrot.slane %v1396, 4
      %v1398 = vrot.slane %v753, 5
      %v1399 = vsel %vm1297, %v1397, %v1398
      %v1400 = vrot.slane %v1398, 4
      %v1401 = vrot.slane %v754, 5
      %v1402 = vsel %vm1297, %v1400, %v1401
      %v1403 = vrot.slane %v755, 5
      %v1404 = vrot.slane %v1403, 4
      %v1405 = vrot.slane %v756, 5
      %v1406 = vsel %vm1297, %v1404, %v1405
      %v1407 = vrot.slane %v1405, 4
      %v1408 = vrot.slane %v757, 5
      %v1409 = vsel %vm1297, %v1407, %v1408
      %1442 = vst [vmem:[#allocation2 + $0x8] sm:$0xf] %v1301
      %1443 = vst [vmem:[#allocation2 + $0x2c] sm:$0xf] %v1304
      %1444 = vst [vmem:[#allocation2 + $0x50] sm:$0xf] %v1308
      %1445 = vst [vmem:[#allocation2 + $0x74] sm:$0xf] %v1311
      %1446 = vst [vmem:[#allocation2 + $0x98] sm:$0xf] %v1315
      %1447 = vst [vmem:[#allocation2 + $0xbc] sm:$0xf] %v1318
      %1448 = vst [vmem:[#allocation2 + $0xe0] sm:$0xf] %v1322
      %1449 = vst [vmem:[#allocation2 + $0x104] sm:$0xf] %v1325
      %1450 = vst [vmem:[#allocation2 + $0x128] sm:$0xf] %v1329
      %1451 = vst [vmem:[#allocation2 + $0x14c] sm:$0xf] %v1332
      %1452 = vst [vmem:[#allocation2 + $0x170] sm:$0xf] %v1336
      %1453 = vst [vmem:[#allocation2 + $0x194] sm:$0xf] %v1339
      %1454 = vst [vmem:[#allocation2 + $0x1b8] sm:$0xf] %v1343
      %1455 = vst [vmem:[#allocation2 + $0x1dc] sm:$0xf] %v1346
      %1456 = vst [vmem:[#allocation2 + $0x200] sm:$0xf] %v1350
      %1457 = vst [vmem:[#allocation2 + $0x224] sm:$0xf] %v1353
      %1458 = vst [vmem:[#allocation2 + $0x248] sm:$0xf] %v1357
      %1459 = vst [vmem:[#allocation2 + $0x26c] sm:$0xf] %v1360
      %1460 = vst [vmem:[#allocation2 + $0x290] sm:$0xf] %v1364
      %1461 = vst [vmem:[#allocation2 + $0x2b4] sm:$0xf] %v1367
      %1462 = vst [vmem:[#allocation2 + $0x2d8] sm:$0xf] %v1371
      %1463 = vst [vmem:[#allocation2 + $0x2fc] sm:$0xf] %v1374
      %1464 = vst [vmem:[#allocation2 + $0x320] sm:$0xf] %v1378
      %1465 = vst [vmem:[#allocation2 + $0x344] sm:$0xf] %v1381
      %1466 = vst [vmem:[#allocation2 + $0x368] sm:$0xf] %v1385
      %1467 = vst [vmem:[#allocation2 + $0x38c] sm:$0xf] %v1388
      %1468 = vst [vmem:[#allocation2 + $0x3b0] sm:$0xf] %v1392
      %1469 = vst [vmem:[#allocation2 + $0x3d4] sm:$0xf] %v1395
      %1470 = vst [vmem:[#allocation2 + $0x3f8] sm:$0xf] %v1399
      %1471 = vst [vmem:[#allocation2 + $0x41c] sm:$0xf] %v1402
      %1472 = vst [vmem:[#allocation2 + $0x440] sm:$0xf] %v1406
      %1473 = vst [vmem:[#allocation2 + $0x464] sm:$0xf] %v1409
      %1474 = vst [vmem:[#allocation2 + $0xc] sm:$0xf] %v713
      %1475 = vst [vmem:[#allocation2 + $0x30] sm:$0xf] %v714
      %1476 = vst [vmem:[#allocation2 + $0x54] sm:$0xf] %v716
      %1477 = vst [vmem:[#allocation2 + $0x78] sm:$0xf] %v717
      %1478 = vst [vmem:[#allocation2 + $0x9c] sm:$0xf] %v719
      %1479 = vst [vmem:[#allocation2 + $0xc0] sm:$0xf] %v720
      %1480 = vst [vmem:[#allocation2 + $0xe4] sm:$0xf] %v722
      %1481 = vst [vmem:[#allocation2 + $0x108] sm:$0xf] %v723
      %1482 = vst [vmem:[#allocation2 + $0x12c] sm:$0xf] %v725
      %1483 = vst [vmem:[#allocation2 + $0x150] sm:$0xf] %v726
      %1484 = vst [vmem:[#allocation2 + $0x174] sm:$0xf] %v728
      %1485 = vst [vmem:[#allocation2 + $0x198] sm:$0xf] %v729
      %1486 = vst [vmem:[#allocation2 + $0x1bc] sm:$0xf] %v731
      %1487 = vst [vmem:[#allocation2 + $0x1e0] sm:$0xf] %v732
      %1488 = vst [vmem:[#allocation2 + $0x204] sm:$0xf] %v734
      %1489 = vst [vmem:[#allocation2 + $0x228] sm:$0xf] %v735
      %1490 = vst [vmem:[#allocation2 + $0x24c] sm:$0xf] %v737
      %1491 = vst [vmem:[#allocation2 + $0x270] sm:$0xf] %v738
      %1492 = vst [vmem:[#allocation2 + $0x294] sm:$0xf] %v740
      %1493 = vst [vmem:[#allocation2 + $0x2b8] sm:$0xf] %v741
      %1494 = vst [vmem:[#allocation2 + $0x2dc] sm:$0xf] %v743
      %1495 = vst [vmem:[#allocation2 + $0x300] sm:$0xf] %v744
      %1496 = vst [vmem:[#allocation2 + $0x324] sm:$0xf] %v746
      %1497 = vst [vmem:[#allocation2 + $0x348] sm:$0xf] %v747
      %1498 = vst [vmem:[#allocation2 + $0x36c] sm:$0xf] %v749
      %1499 = vst [vmem:[#allocation2 + $0x390] sm:$0xf] %v750
      %1500 = vst [vmem:[#allocation2 + $0x3b4] sm:$0xf] %v752
      %1501 = vst [vmem:[#allocation2 + $0x3d8] sm:$0xf] %v753
      %1502 = vst [vmem:[#allocation2 + $0x3fc] sm:$0xf] %v755
      %1503 = vst [vmem:[#allocation2 + $0x420] sm:$0xf] %v756
      %1504 = vst [vmem:[#allocation2 + $0x444] sm:$0xf] %v758
      %1505 = vst [vmem:[#allocation2 + $0x468] sm:$0xf] %v759
      %v1507 = vshrl.u32 %v758, 16
      %v1509 = vrot.slane %v1507, 4
      %v1510 = vshll.u32 %v758, 16
      %v1512 = vrot.slane %v1510, 5
      %v1513 = vor.u32 %v1509, %v1512
      %v1514 = vrot.slane %v1513, 4
      %v1516 = vshll.u32 %v759, 16
      %v1518 = vrot.slane %v1516, 5
      %v1519 = vsel %vm798, %v1514, %v1518
      %v1520 = vshrl.u32 %v759, 16
      %v1522 = vrot.slane %v1520, 4
      %v1523 = vor.u32 %v1522, %v1518
      %v1524 = vrot.slane %v1523, 4
      %v1526 = vshll.u32 %v760, 16
      %v1528 = vrot.slane %v1526, 5
      %v1529 = vsel %vm798, %v1524, %v1528
      %1532 = vst [vmem:[#allocation2 + $0x10] sm:$0xf] %v836
      %1533 = vst [vmem:[#allocation2 + $0x34] sm:$0xf] %v846
      %1534 = vst [vmem:[#allocation2 + $0x58] sm:$0xf] %v860
      %1535 = vst [vmem:[#allocation2 + $0x7c] sm:$0xf] %v870
      %1536 = vst [vmem:[#allocation2 + $0xa0] sm:$0xf] %v884
      %1537 = vst [vmem:[#allocation2 + $0xc4] sm:$0xf] %v894
      %1538 = vst [vmem:[#allocation2 + $0xe8] sm:$0xf] %v908
      %1539 = vst [vmem:[#allocation2 + $0x10c] sm:$0xf] %v918
      %1540 = vst [vmem:[#allocation2 + $0x130] sm:$0xf] %v932
      %1541 = vst [vmem:[#allocation2 + $0x154] sm:$0xf] %v942
      %1542 = vst [vmem:[#allocation2 + $0x178] sm:$0xf] %v956
      %1543 = vst [vmem:[#allocation2 + $0x19c] sm:$0xf] %v966
      %1544 = vst [vmem:[#allocation2 + $0x1c0] sm:$0xf] %v980
      %1545 = vst [vmem:[#allocation2 + $0x1e4] sm:$0xf] %v990
      %1546 = vst [vmem:[#allocation2 + $0x208] sm:$0xf] %v1004
      %1547 = vst [vmem:[#allocation2 + $0x22c] sm:$0xf] %v1014
      %1548 = vst [vmem:[#allocation2 + $0x250] sm:$0xf] %v1028
      %1549 = vst [vmem:[#allocation2 + $0x274] sm:$0xf] %v1038
      %1550 = vst [vmem:[#allocation2 + $0x298] sm:$0xf] %v1052
      %1551 = vst [vmem:[#allocation2 + $0x2bc] sm:$0xf] %v1062
      %1552 = vst [vmem:[#allocation2 + $0x2e0] sm:$0xf] %v1076
      %1553 = vst [vmem:[#allocation2 + $0x304] sm:$0xf] %v1086
      %1554 = vst [vmem:[#allocation2 + $0x328] sm:$0xf] %v1100
      %1555 = vst [vmem:[#allocation2 + $0x34c] sm:$0xf] %v1110
      %1556 = vst [vmem:[#allocation2 + $0x370] sm:$0xf] %v1124
      %1557 = vst [vmem:[#allocation2 + $0x394] sm:$0xf] %v1134
      %1558 = vst [vmem:[#allocation2 + $0x3b8] sm:$0xf] %v1148
      %1559 = vst [vmem:[#allocation2 + $0x3dc] sm:$0xf] %v1158
      %1560 = vst [vmem:[#allocation2 + $0x400] sm:$0xf] %v1172
      %1561 = vst [vmem:[#allocation2 + $0x424] sm:$0xf] %v1182
      %1562 = vst [vmem:[#allocation2 + $0x448] sm:$0xf] %v1519
      %1563 = vst [vmem:[#allocation2 + $0x46c] sm:$0xf] %v1529
      %v1567 = vrot.slane %v758, 5
      %v1568 = vrot.slane %v1567, 4
      %v1569 = vrot.slane %v759, 5
      %v1570 = vsel %vm1297, %v1568, %v1569
      %v1571 = vrot.slane %v1569, 4
      %v1572 = vrot.slane %v760, 5
      %v1573 = vsel %vm1297, %v1571, %v1572
      %1576 = vst [vmem:[#allocation2 + $0x14] sm:$0xf] %v1308
      %1577 = vst [vmem:[#allocation2 + $0x38] sm:$0xf] %v1311
      %1578 = vst [vmem:[#allocation2 + $0x5c] sm:$0xf] %v1315
      %1579 = vst [vmem:[#allocation2 + $0x80] sm:$0xf] %v1318
      %1580 = vst [vmem:[#allocation2 + $0xa4] sm:$0xf] %v1322
      %1581 = vst [vmem:[#allocation2 + $0xc8] sm:$0xf] %v1325
      %1582 = vst [vmem:[#allocation2 + $0xec] sm:$0xf] %v1329
      %1583 = vst [vmem:[#allocation2 + $0x110] sm:$0xf] %v1332
      %1584 = vst [vmem:[#allocation2 + $0x134] sm:$0xf] %v1336
      %1585 = vst [vmem:[#allocation2 + $0x158] sm:$0xf] %v1339
      %1586 = vst [vmem:[#allocation2 + $0x17c] sm:$0xf] %v1343
      %1587 = vst [vmem:[#allocation2 + $0x1a0] sm:$0xf] %v1346
      %1588 = vst [vmem:[#allocation2 + $0x1c4] sm:$0xf] %v1350
      %1589 = vst [vmem:[#allocation2 + $0x1e8] sm:$0xf] %v1353
      %1590 = vst [vmem:[#allocation2 + $0x20c] sm:$0xf] %v1357
      %1591 = vst [vmem:[#allocation2 + $0x230] sm:$0xf] %v1360
      %1592 = vst [vmem:[#allocation2 + $0x254] sm:$0xf] %v1364
      %1593 = vst [vmem:[#allocation2 + $0x278] sm:$0xf] %v1367
      %1594 = vst [vmem:[#allocation2 + $0x29c] sm:$0xf] %v1371
      %1595 = vst [vmem:[#allocation2 + $0x2c0] sm:$0xf] %v1374
      %1596 = vst [vmem:[#allocation2 + $0x2e4] sm:$0xf] %v1378
      %1597 = vst [vmem:[#allocation2 + $0x308] sm:$0xf] %v1381
      %1598 = vst [vmem:[#allocation2 + $0x32c] sm:$0xf] %v1385
      %1599 = vst [vmem:[#allocation2 + $0x350] sm:$0xf] %v1388
      %1600 = vst [vmem:[#allocation2 + $0x374] sm:$0xf] %v1392
      %1601 = vst [vmem:[#allocation2 + $0x398] sm:$0xf] %v1395
      %1602 = vst [vmem:[#allocation2 + $0x3bc] sm:$0xf] %v1399
      %1603 = vst [vmem:[#allocation2 + $0x3e0] sm:$0xf] %v1402
      %1604 = vst [vmem:[#allocation2 + $0x404] sm:$0xf] %v1406
      %1605 = vst [vmem:[#allocation2 + $0x428] sm:$0xf] %v1409
      %1606 = vst [vmem:[#allocation2 + $0x44c] sm:$0xf] %v1570
      %1607 = vst [vmem:[#allocation2 + $0x470] sm:$0xf] %v1573
      %1608 = vst [vmem:[#allocation2 + $0x18] sm:$0xf] %v716
      %1609 = vst [vmem:[#allocation2 + $0x3c] sm:$0xf] %v717
      %1610 = vst [vmem:[#allocation2 + $0x60] sm:$0xf] %v719
      %1611 = vst [vmem:[#allocation2 + $0x84] sm:$0xf] %v720
      %1612 = vst [vmem:[#allocation2 + $0xa8] sm:$0xf] %v722
      %1613 = vst [vmem:[#allocation2 + $0xcc] sm:$0xf] %v723
      %1614 = vst [vmem:[#allocation2 + $0xf0] sm:$0xf] %v725
      %1615 = vst [vmem:[#allocation2 + $0x114] sm:$0xf] %v726
      %1616 = vst [vmem:[#allocation2 + $0x138] sm:$0xf] %v728
      %1617 = vst [vmem:[#allocation2 + $0x15c] sm:$0xf] %v729
      %1618 = vst [vmem:[#allocation2 + $0x180] sm:$0xf] %v731
      %1619 = vst [vmem:[#allocation2 + $0x1a4] sm:$0xf] %v732
      %1620 = vst [vmem:[#allocation2 + $0x1c8] sm:$0xf] %v734
      %1621 = vst [vmem:[#allocation2 + $0x1ec] sm:$0xf] %v735
      %1622 = vst [vmem:[#allocation2 + $0x210] sm:$0xf] %v737
      %1623 = vst [vmem:[#allocation2 + $0x234] sm:$0xf] %v738
      %1624 = vst [vmem:[#allocation2 + $0x258] sm:$0xf] %v740
      %1625 = vst [vmem:[#allocation2 + $0x27c] sm:$0xf] %v741
      %1626 = vst [vmem:[#allocation2 + $0x2a0] sm:$0xf] %v743
      %1627 = vst [vmem:[#allocation2 + $0x2c4] sm:$0xf] %v744
      %1628 = vst [vmem:[#allocation2 + $0x2e8] sm:$0xf] %v746
      %1629 = vst [vmem:[#allocation2 + $0x30c] sm:$0xf] %v747
      %1630 = vst [vmem:[#allocation2 + $0x330] sm:$0xf] %v749
      %1631 = vst [vmem:[#allocation2 + $0x354] sm:$0xf] %v750
      %1632 = vst [vmem:[#allocation2 + $0x378] sm:$0xf] %v752
      %1633 = vst [vmem:[#allocation2 + $0x39c] sm:$0xf] %v753
      %1634 = vst [vmem:[#allocation2 + $0x3c0] sm:$0xf] %v755
      %1635 = vst [vmem:[#allocation2 + $0x3e4] sm:$0xf] %v756
      %1636 = vst [vmem:[#allocation2 + $0x408] sm:$0xf] %v758
      %1637 = vst [vmem:[#allocation2 + $0x42c] sm:$0xf] %v759
      %1638 = vst [vmem:[#allocation2 + $0x450] sm:$0xf] %v761
      %1639 = vst [vmem:[#allocation2 + $0x474] sm:$0xf] %v762
      %v1641 = vshrl.u32 %v761, 16
      %v1643 = vrot.slane %v1641, 4
      %v1644 = vshll.u32 %v761, 16
      %v1646 = vrot.slane %v1644, 5
      %v1647 = vor.u32 %v1643, %v1646
      %v1648 = vrot.slane %v1647, 4
      %v1650 = vshll.u32 %v762, 16
      %v1652 = vrot.slane %v1650, 5
      %v1653 = vsel %vm798, %v1648, %v1652
      %v1654 = vshrl.u32 %v762, 16
      %v1656 = vrot.slane %v1654, 4
      %v1657 = vor.u32 %v1656, %v1652
      %v1658 = vrot.slane %v1657, 4
      %v1660 = vshll.u32 %v763, 16
      %v1662 = vrot.slane %v1660, 5
      %v1663 = vsel %vm798, %v1658, %v1662
      %1666 = vst [vmem:[#allocation2 + $0x1c] sm:$0xf] %v860
      %1667 = vst [vmem:[#allocation2 + $0x40] sm:$0xf] %v870
      %1668 = vst [vmem:[#allocation2 + $0x64] sm:$0xf] %v884
      %1669 = vst [vmem:[#allocation2 + $0x88] sm:$0xf] %v894
      %1670 = vst [vmem:[#allocation2 + $0xac] sm:$0xf] %v908
      %1671 = vst [vmem:[#allocation2 + $0xd0] sm:$0xf] %v918
      %1672 = vst [vmem:[#allocation2 + $0xf4] sm:$0xf] %v932
      %1673 = vst [vmem:[#allocation2 + $0x118] sm:$0xf] %v942
      %1674 = vst [vmem:[#allocation2 + $0x13c] sm:$0xf] %v956
      %1675 = vst [vmem:[#allocation2 + $0x160] sm:$0xf] %v966
      %1676 = vst [vmem:[#allocation2 + $0x184] sm:$0xf] %v980
      %1677 = vst [vmem:[#allocation2 + $0x1a8] sm:$0xf] %v990
      %1678 = vst [vmem:[#allocation2 + $0x1cc] sm:$0xf] %v1004
      %1679 = vst [vmem:[#allocation2 + $0x1f0] sm:$0xf] %v1014
      %1680 = vst [vmem:[#allocation2 + $0x214] sm:$0xf] %v1028
      %1681 = vst [vmem:[#allocation2 + $0x238] sm:$0xf] %v1038
      %1682 = vst [vmem:[#allocation2 + $0x25c] sm:$0xf] %v1052
      %1683 = vst [vmem:[#allocation2 + $0x280] sm:$0xf] %v1062
      %1684 = vst [vmem:[#allocation2 + $0x2a4] sm:$0xf] %v1076
      %1685 = vst [vmem:[#allocation2 + $0x2c8] sm:$0xf] %v1086
      %1686 = vst [vmem:[#allocation2 + $0x2ec] sm:$0xf] %v1100
      %1687 = vst [vmem:[#allocation2 + $0x310] sm:$0xf] %v1110
      %1688 = vst [vmem:[#allocation2 + $0x334] sm:$0xf] %v1124
      %1689 = vst [vmem:[#allocation2 + $0x358] sm:$0xf] %v1134
      %1690 = vst [vmem:[#allocation2 + $0x37c] sm:$0xf] %v1148
      %1691 = vst [vmem:[#allocation2 + $0x3a0] sm:$0xf] %v1158
      %1692 = vst [vmem:[#allocation2 + $0x3c4] sm:$0xf] %v1172
      %1693 = vst [vmem:[#allocation2 + $0x3e8] sm:$0xf] %v1182
      %1694 = vst [vmem:[#allocation2 + $0x40c] sm:$0xf] %v1519
      %1695 = vst [vmem:[#allocation2 + $0x430] sm:$0xf] %v1529
      %1696 = vst [vmem:[#allocation2 + $0x454] sm:$0xf] %v1653
      %1697 = vst [vmem:[#allocation2 + $0x478] sm:$0xf] %v1663
      %v1701 = vrot.slane %v761, 5
      %v1702 = vrot.slane %v1701, 4
      %v1703 = vrot.slane %v762, 5
      %v1704 = vsel %vm1297, %v1702, %v1703
      %v1705 = vrot.slane %v1703, 4
      %v1706 = vrot.slane %v763, 5
      %v1707 = vsel %vm1297, %v1705, %v1706
      %1710 = vst [vmem:[#allocation2 + $0x20] sm:$0xf] %v1315
      %1711 = vst [vmem:[#allocation2 + $0x44] sm:$0xf] %v1318
      %1712 = vst [vmem:[#allocation2 + $0x68] sm:$0xf] %v1322
      %1713 = vst [vmem:[#allocation2 + $0x8c] sm:$0xf] %v1325
      %1714 = vst [vmem:[#allocation2 + $0xb0] sm:$0xf] %v1329
      %1715 = vst [vmem:[#allocation2 + $0xd4] sm:$0xf] %v1332
      %1716 = vst [vmem:[#allocation2 + $0xf8] sm:$0xf] %v1336
      %1717 = vst [vmem:[#allocation2 + $0x11c] sm:$0xf] %v1339
      %1718 = vst [vmem:[#allocation2 + $0x140] sm:$0xf] %v1343
      %1719 = vst [vmem:[#allocation2 + $0x164] sm:$0xf] %v1346
      %1720 = vst [vmem:[#allocation2 + $0x188] sm:$0xf] %v1350
      %1721 = vst [vmem:[#allocation2 + $0x1ac] sm:$0xf] %v1353
      %1722 = vst [vmem:[#allocation2 + $0x1d0] sm:$0xf] %v1357
      %1723 = vst [vmem:[#allocation2 + $0x1f4] sm:$0xf] %v1360
      %1724 = vst [vmem:[#allocation2 + $0x218] sm:$0xf] %v1364
      %1725 = vst [vmem:[#allocation2 + $0x23c] sm:$0xf] %v1367
      %1726 = vst [vmem:[#allocation2 + $0x260] sm:$0xf] %v1371
      %1727 = vst [vmem:[#allocation2 + $0x284] sm:$0xf] %v1374
      %1728 = vst [vmem:[#allocation2 + $0x2a8] sm:$0xf] %v1378
      %1729 = vst [vmem:[#allocation2 + $0x2cc] sm:$0xf] %v1381
      %1730 = vst [vmem:[#allocation2 + $0x2f0] sm:$0xf] %v1385
      %1731 = vst [vmem:[#allocation2 + $0x314] sm:$0xf] %v1388
      %1732 = vst [vmem:[#allocation2 + $0x338] sm:$0xf] %v1392
      %1733 = vst [vmem:[#allocation2 + $0x35c] sm:$0xf] %v1395
      %1734 = vst [vmem:[#allocation2 + $0x380] sm:$0xf] %v1399
      %1735 = vst [vmem:[#allocation2 + $0x3a4] sm:$0xf] %v1402
      %1736 = vst [vmem:[#allocation2 + $0x3c8] sm:$0xf] %v1406
      %1737 = vst [vmem:[#allocation2 + $0x3ec] sm:$0xf] %v1409
      %1738 = vst [vmem:[#allocation2 + $0x410] sm:$0xf] %v1570
      %1739 = vst [vmem:[#allocation2 + $0x434] sm:$0xf] %v1573
      %1740 = vst [vmem:[#allocation2 + $0x458] sm:$0xf] %v1704
      %1741 = vst [vmem:[#allocation2 + $0x47c] sm:$0xf] %v1707
      %v1742 = vld [vmem:[#allocation2] sm:$0xff]
      %v1743 = vld [vmem:[#allocation2 + $0x8] sm:$0xff]
      %v1744 = vld [vmem:[#allocation2 + $0x10] sm:$0xff]
      %v1745 = vld [vmem:[#allocation2 + $0x18] sm:$0xff]
      %v1746 = vld [vmem:[#allocation2 + $0x20] sm:$0xf]
      %v1747 = vld [vmem:[#allocation2 + $0x24] sm:$0xff]
      %v1748 = vld [vmem:[#allocation2 + $0x2c] sm:$0xff]
      %v1749 = vld [vmem:[#allocation2 + $0x34] sm:$0xff]
      %v1750 = vld [vmem:[#allocation2 + $0x3c] sm:$0xff]
      %v1751 = vld [vmem:[#allocation2 + $0x44] sm:$0xf]
      %v1752 = vld [vmem:[#allocation2 + $0x48] sm:$0xff]
      %v1753 = vld [vmem:[#allocation2 + $0x50] sm:$0xff]
      %v1754 = vld [vmem:[#allocation2 + $0x58] sm:$0xff]
      %v1755 = vld [vmem:[#allocation2 + $0x60] sm:$0xff]
      %v1756 = vld [vmem:[#allocation2 + $0x68] sm:$0xf]
      %v1757 = vld [vmem:[#allocation2 + $0x6c] sm:$0xff]
      %v1758 = vld [vmem:[#allocation2 + $0x74] sm:$0xff]
      %v1759 = vld [vmem:[#allocation2 + $0x7c] sm:$0xff]
      %v1760 = vld [vmem:[#allocation2 + $0x84] sm:$0xff]
      %v1761 = vld [vmem:[#allocation2 + $0x8c] sm:$0xf]
      %v1762 = vld [vmem:[#allocation2 + $0x90] sm:$0xff]
      %v1763 = vld [vmem:[#allocation2 + $0x98] sm:$0xff]
      %v1764 = vld [vmem:[#allocation2 + $0xa0] sm:$0xff]
      %v1765 = vld [vmem:[#allocation2 + $0xa8] sm:$0xff]
      %v1766 = vld [vmem:[#allocation2 + $0xb0] sm:$0xf]
      %v1767 = vld [vmem:[#allocation2 + $0xb4] sm:$0xff]
      %v1768 = vld [vmem:[#allocation2 + $0xbc] sm:$0xff]
      %v1769 = vld [vmem:[#allocation2 + $0xc4] sm:$0xff]
      %v1770 = vld [vmem:[#allocation2 + $0xcc] sm:$0xff]
      %v1771 = vld [vmem:[#allocation2 + $0xd4] sm:$0xf]
      %v1772 = vld [vmem:[#allocation2 + $0xd8] sm:$0xff]
      %v1773 = vld [vmem:[#allocation2 + $0xe0] sm:$0xff]
      %v1774 = vld [vmem:[#allocation2 + $0xe8] sm:$0xff]
      %v1775 = vld [vmem:[#allocation2 + $0xf0] sm:$0xff]
      %v1776 = vld [vmem:[#allocation2 + $0xf8] sm:$0xf]
      %v1777 = vld [vmem:[#allocation2 + $0xfc] sm:$0xff]
      %v1778 = vld [vmem:[#allocation2 + $0x104] sm:$0xff]
      %v1779 = vld [vmem:[#allocation2 + $0x10c] sm:$0xff]
      %v1780 = vld [vmem:[#allocation2 + $0x114] sm:$0xff]
      %v1781 = vld [vmem:[#allocation2 + $0x11c] sm:$0xf]
      %v1782 = vld [vmem:[#allocation2 + $0x120] sm:$0xff]
      %v1783 = vld [vmem:[#allocation2 + $0x128] sm:$0xff]
      %v1784 = vld [vmem:[#allocation2 + $0x130] sm:$0xff]
      %v1785 = vld [vmem:[#allocation2 + $0x138] sm:$0xff]
      %v1786 = vld [vmem:[#allocation2 + $0x140] sm:$0xf]
      %v1787 = vld [vmem:[#allocation2 + $0x144] sm:$0xff]
      %v1788 = vld [vmem:[#allocation2 + $0x14c] sm:$0xff]
      %v1789 = vld [vmem:[#allocation2 + $0x154] sm:$0xff]
      %v1790 = vld [vmem:[#allocation2 + $0x15c] sm:$0xff]
      %v1791 = vld [vmem:[#allocation2 + $0x164] sm:$0xf]
      %v1792 = vld [vmem:[#allocation2 + $0x168] sm:$0xff]
      %v1793 = vld [vmem:[#allocation2 + $0x170] sm:$0xff]
      %v1794 = vld [vmem:[#allocation2 + $0x178] sm:$0xff]
      %v1795 = vld [vmem:[#allocation2 + $0x180] sm:$0xff]
      %v1796 = vld [vmem:[#allocation2 + $0x188] sm:$0xf]
      %v1797 = vld [vmem:[#allocation2 + $0x18c] sm:$0xff]
      %v1798 = vld [vmem:[#allocation2 + $0x194] sm:$0xff]
      %v1799 = vld [vmem:[#allocation2 + $0x19c] sm:$0xff]
      %v1800 = vld [vmem:[#allocation2 + $0x1a4] sm:$0xff]
      %v1801 = vld [vmem:[#allocation2 + $0x1ac] sm:$0xf]
      %v1802 = vld [vmem:[#allocation2 + $0x1b0] sm:$0xff]
      %v1803 = vld [vmem:[#allocation2 + $0x1b8] sm:$0xff]
      %v1804 = vld [vmem:[#allocation2 + $0x1c0] sm:$0xff]
      %v1805 = vld [vmem:[#allocation2 + $0x1c8] sm:$0xff]
      %v1806 = vld [vmem:[#allocation2 + $0x1d0] sm:$0xf]
      %v1807 = vld [vmem:[#allocation2 + $0x1d4] sm:$0xff]
      %v1808 = vld [vmem:[#allocation2 + $0x1dc] sm:$0xff]
      %v1809 = vld [vmem:[#allocation2 + $0x1e4] sm:$0xff]
      %v1810 = vld [vmem:[#allocation2 + $0x1ec] sm:$0xff]
      %v1811 = vld [vmem:[#allocation2 + $0x1f4] sm:$0xf]
      %v1812 = vld [vmem:[#allocation2 + $0x1f8] sm:$0xff]
      %v1813 = vld [vmem:[#allocation2 + $0x200] sm:$0xff]
      %v1814 = vld [vmem:[#allocation2 + $0x208] sm:$0xff]
      %v1815 = vld [vmem:[#allocation2 + $0x210] sm:$0xff]
      %v1816 = vld [vmem:[#allocation2 + $0x218] sm:$0xf]
      %v1817 = vld [vmem:[#allocation2 + $0x21c] sm:$0xff]
      %v1818 = vld [vmem:[#allocation2 + $0x224] sm:$0xff]
      %v1819 = vld [vmem:[#allocation2 + $0x22c] sm:$0xff]
      %v1820 = vld [vmem:[#allocation2 + $0x234] sm:$0xff]
      %v1821 = vld [vmem:[#allocation2 + $0x23c] sm:$0xf]
      %v1822 = vld [vmem:[#allocation2 + $0x240] sm:$0xff]
      %v1823 = vld [vmem:[#allocation2 + $0x248] sm:$0xff]
      %v1824 = vld [vmem:[#allocation2 + $0x250] sm:$0xff]
      %v1825 = vld [vmem:[#allocation2 + $0x258] sm:$0xff]
      %v1826 = vld [vmem:[#allocation2 + $0x260] sm:$0xf]
      %v1827 = vld [vmem:[#allocation2 + $0x264] sm:$0xff]
      %v1828 = vld [vmem:[#allocation2 + $0x26c] sm:$0xff]
      %v1829 = vld [vmem:[#allocation2 + $0x274] sm:$0xff]
      %v1830 = vld [vmem:[#allocation2 + $0x27c] sm:$0xff]
      %v1831 = vld [vmem:[#allocation2 + $0x284] sm:$0xf]
      %v1832 = vld [vmem:[#allocation2 + $0x288] sm:$0xff]
      %v1833 = vld [vmem:[#allocation2 + $0x290] sm:$0xff]
      %v1834 = vld [vmem:[#allocation2 + $0x298] sm:$0xff]
      %v1835 = vld [vmem:[#allocation2 + $0x2a0] sm:$0xff]
      %v1836 = vld [vmem:[#allocation2 + $0x2a8] sm:$0xf]
      %v1837 = vld [vmem:[#allocation2 + $0x2ac] sm:$0xff]
      %v1838 = vld [vmem:[#allocation2 + $0x2b4] sm:$0xff]
      %v1839 = vld [vmem:[#allocation2 + $0x2bc] sm:$0xff]
      %v1840 = vld [vmem:[#allocation2 + $0x2c4] sm:$0xff]
      %v1841 = vld [vmem:[#allocation2 + $0x2cc] sm:$0xf]
      %v1842 = vld [vmem:[#allocation2 + $0x2d0] sm:$0xff]
      %v1843 = vld [vmem:[#allocation2 + $0x2d8] sm:$0xff]
      %v1844 = vld [vmem:[#allocation2 + $0x2e0] sm:$0xff]
      %v1845 = vld [vmem:[#allocation2 + $0x2e8] sm:$0xff]
      %v1846 = vld [vmem:[#allocation2 + $0x2f0] sm:$0xf]
      %v1847 = vld [vmem:[#allocation2 + $0x2f4] sm:$0xff]
      %v1848 = vld [vmem:[#allocation2 + $0x2fc] sm:$0xff]
      %v1849 = vld [vmem:[#allocation2 + $0x304] sm:$0xff]
      %v1850 = vld [vmem:[#allocation2 + $0x30c] sm:$0xff]
      %v1851 = vld [vmem:[#allocation2 + $0x314] sm:$0xf]
      %v1852 = vld [vmem:[#allocation2 + $0x318] sm:$0xff]
      %v1853 = vld [vmem:[#allocation2 + $0x320] sm:$0xff]
      %v1854 = vld [vmem:[#allocation2 + $0x328] sm:$0xff]
      %v1855 = vld [vmem:[#allocation2 + $0x330] sm:$0xff]
      %v1856 = vld [vmem:[#allocation2 + $0x338] sm:$0xf]
      %v1857 = vld [vmem:[#allocation2 + $0x33c] sm:$0xff]
      %v1858 = vld [vmem:[#allocation2 + $0x344] sm:$0xff]
      %v1859 = vld [vmem:[#allocation2 + $0x34c] sm:$0xff]
      %v1860 = vld [vmem:[#allocation2 + $0x354] sm:$0xff]
      %v1861 = vld [vmem:[#allocation2 + $0x35c] sm:$0xf]
      %v1862 = vld [vmem:[#allocation2 + $0x360] sm:$0xff]
      %v1863 = vld [vmem:[#allocation2 + $0x368] sm:$0xff]
      %v1864 = vld [vmem:[#allocation2 + $0x370] sm:$0xff]
      %v1865 = vld [vmem:[#allocation2 + $0x378] sm:$0xff]
      %v1866 = vld [vmem:[#allocation2 + $0x380] sm:$0xf]
      %v1867 = vld [vmem:[#allocation2 + $0x384] sm:$0xff]
      %v1868 = vld [vmem:[#allocation2 + $0x38c] sm:$0xff]
      %v1869 = vld [vmem:[#allocation2 + $0x394] sm:$0xff]
      %v1870 = vld [vmem:[#allocation2 + $0x39c] sm:$0xff]
      %v1871 = vld [vmem:[#allocation2 + $0x3a4] sm:$0xf]
      %v1872 = vld [vmem:[#allocation2 + $0x3a8] sm:$0xff]
      %v1873 = vld [vmem:[#allocation2 + $0x3b0] sm:$0xff]
      %v1874 = vld [vmem:[#allocation2 + $0x3b8] sm:$0xff]
      %v1875 = vld [vmem:[#allocation2 + $0x3c0] sm:$0xff]
      %v1876 = vld [vmem:[#allocation2 + $0x3c8] sm:$0xf]
      %v1877 = vld [vmem:[#allocation2 + $0x3cc] sm:$0xff]
      %v1878 = vld [vmem:[#allocation2 + $0x3d4] sm:$0xff]
      %v1879 = vld [vmem:[#allocation2 + $0x3dc] sm:$0xff]
      %v1880 = vld [vmem:[#allocation2 + $0x3e4] sm:$0xff]
      %v1881 = vld [vmem:[#allocation2 + $0x3ec] sm:$0xf]
      %v1882 = vld [vmem:[#allocation2 + $0x3f0] sm:$0xff]
      %v1883 = vld [vmem:[#allocation2 + $0x3f8] sm:$0xff]
      %v1884 = vld [vmem:[#allocation2 + $0x400] sm:$0xff]
      %v1885 = vld [vmem:[#allocation2 + $0x408] sm:$0xff]
      %v1886 = vld [vmem:[#allocation2 + $0x410] sm:$0xf]
      %v1887 = vld [vmem:[#allocation2 + $0x414] sm:$0xff]
      %v1888 = vld [vmem:[#allocation2 + $0x41c] sm:$0xff]
      %v1889 = vld [vmem:[#allocation2 + $0x424] sm:$0xff]
      %v1890 = vld [vmem:[#allocation2 + $0x42c] sm:$0xff]
      %v1891 = vld [vmem:[#allocation2 + $0x434] sm:$0xf]
      %v1892 = vld [vmem:[#allocation2 + $0x438] sm:$0xff]
      %v1893 = vld [vmem:[#allocation2 + $0x440] sm:$0xff]
      %v1894 = vld [vmem:[#allocation2 + $0x448] sm:$0xff]
      %v1895 = vld [vmem:[#allocation2 + $0x450] sm:$0xff]
      %v1896 = vld [vmem:[#allocation2 + $0x458] sm:$0xf]
      %v1897 = vld [vmem:[#allocation2 + $0x45c] sm:$0xff]
      %v1898 = vld [vmem:[#allocation2 + $0x464] sm:$0xff]
      %v1899 = vld [vmem:[#allocation2 + $0x46c] sm:$0xff]
      %v1900 = vld [vmem:[#allocation2 + $0x474] sm:$0xff]
      %v1901 = vld [vmem:[#allocation2 + $0x47c] sm:$0xf]
      %v1902 = vld [vmem:[%s3] sm:$0xf]
      %v1903 = vld [vmem:[%s3 + $0x4] sm:$0xf]
      %v1904 = vld [vmem:[%s3 + $0x8] sm:$0xf]
      %v1905 = vld [vmem:[%s3 + $0xc] sm:$0xf]
      %v1906 = vld [vmem:[%s3 + $0x10] sm:$0xf]
      %v1907 = vld [vmem:[%s3 + $0x14] sm:$0xf]
      %v1908 = vld [vmem:[%s3 + $0x18] sm:$0xf]
      %v1909 = vld [vmem:[%s3 + $0x1c] sm:$0xf]
      %v1910 = vld [vmem:[%s3 + $0x20] sm:$0xf]
      %v1911 = vld [vmem:[%s3 + $0x24] sm:$0xf]
      %v1912 = vld [vmem:[%s3 + $0x28] sm:$0xf]
      %v1913 = vld [vmem:[%s3 + $0x2c] sm:$0xf]
      %v1914 = vld [vmem:[%s3 + $0x30] sm:$0xf]
      %v1915 = vld [vmem:[%s3 + $0x34] sm:$0xf]
      %v1916 = vld [vmem:[%s3 + $0x38] sm:$0xf]
      %v1917 = vld [vmem:[%s3 + $0x3c] sm:$0xf]
      %v1918 = vld [vmem:[%s3 + $0x40] sm:$0xf]
      %v1919 = vld [vmem:[%s3 + $0x44] sm:$0xf]
      %v1920 = vld [vmem:[%s3 + $0x48] sm:$0xf]
      %v1921 = vld [vmem:[%s3 + $0x4c] sm:$0xf]
      %v1922 = vld [vmem:[%s3 + $0x50] sm:$0xf]
      %v1923 = vld [vmem:[%s3 + $0x54] sm:$0xf]
      %v1924 = vld [vmem:[%s3 + $0x58] sm:$0xf]
      %v1925 = vld [vmem:[%s3 + $0x5c] sm:$0xf]
      %v1926 = vld [vmem:[%s3 + $0x60] sm:$0xf]
      %v1927 = vld [vmem:[%s3 + $0x64] sm:$0xf]
      %v1928 = vld [vmem:[%s3 + $0x68] sm:$0xf]
      %v1929 = vld [vmem:[%s3 + $0x6c] sm:$0xf]
      %v1930 = vld [vmem:[%s3 + $0x70] sm:$0xf]
      %v1931 = vld [vmem:[%s3 + $0x74] sm:$0xf]
      %v1932 = vld [vmem:[%s3 + $0x78] sm:$0xf]
      %v1933 = vld [vmem:[%s3 + $0x7c] sm:$0xf]
      %v1934 = vld [vmem:[%s3 + $0x80] sm:$0xf]
      %v1935 = vld [vmem:[%s3 + $0x84] sm:$0xf]
      %v1936 = vld [vmem:[%s3 + $0x88] sm:$0xf]
      %v1937 = vld [vmem:[%s3 + $0x8c] sm:$0xf]
      %v1938 = vld [vmem:[%s3 + $0x90] sm:$0xf]
      %v1939 = vld [vmem:[%s3 + $0x94] sm:$0xf]
      %v1940 = vld [vmem:[%s3 + $0x98] sm:$0xf]
      %v1941 = vld [vmem:[%s3 + $0x9c] sm:$0xf]
      %v1942 = vld [vmem:[%s3 + $0xa0] sm:$0xf]
      %v1943 = vld [vmem:[%s3 + $0xa4] sm:$0xf]
      %v1944 = vld [vmem:[%s3 + $0xa8] sm:$0xf]
      %v1945 = vld [vmem:[%s3 + $0xac] sm:$0xf]
      %v1946 = vld [vmem:[%s3 + $0xb0] sm:$0xf]
      %v1947 = vld [vmem:[%s3 + $0xb4] sm:$0xf]
      %v1948 = vld [vmem:[%s3 + $0xb8] sm:$0xf]
      %v1949 = vld [vmem:[%s3 + $0xbc] sm:$0xf]
      %v1950 = vld [vmem:[%s3 + $0xc0] sm:$0xf]
      %v1951 = vld [vmem:[%s3 + $0xc4] sm:$0xf]
      %v1952 = vld [vmem:[%s3 + $0xc8] sm:$0xf]
      %v1953 = vld [vmem:[%s3 + $0xcc] sm:$0xf]
      %v1954 = vld [vmem:[%s3 + $0xd0] sm:$0xf]
      %v1955 = vld [vmem:[%s3 + $0xd4] sm:$0xf]
      %v1956 = vld [vmem:[%s3 + $0xd8] sm:$0xf]
      %v1957 = vld [vmem:[%s3 + $0xdc] sm:$0xf]
      %v1958 = vld [vmem:[%s3 + $0xe0] sm:$0xf]
      %v1959 = vld [vmem:[%s3 + $0xe4] sm:$0xf]
      %v1960 = vld [vmem:[%s3 + $0xe8] sm:$0xf]
      %v1961 = vld [vmem:[%s3 + $0xec] sm:$0xf]
      %v1962 = vld [vmem:[%s3 + $0xf0] sm:$0xf]
      %v1963 = vld [vmem:[%s3 + $0xf4] sm:$0xf]
      %v1964 = vld [vmem:[%s3 + $0xf8] sm:$0xf]
      %v1965 = vld [vmem:[%s3 + $0xfc] sm:$0xf]
      %v1966 = vld [vmem:[%s3 + $0x100] sm:$0xf]
      %v1967 = vld [vmem:[%s3 + $0x104] sm:$0xf]
      %v1968 = vld [vmem:[%s3 + $0x108] sm:$0xf]
      %v1969 = vld [vmem:[%s3 + $0x10c] sm:$0xf]
      %v1970 = vld [vmem:[%s3 + $0x110] sm:$0xf]
      %v1971 = vld [vmem:[%s3 + $0x114] sm:$0xf]
      %v1972 = vld [vmem:[%s3 + $0x118] sm:$0xf]
      %v1973 = vld [vmem:[%s3 + $0x11c] sm:$0xf]
      %v1974 = vld [vmem:[%s3 + $0x120] sm:$0xf]
      %v1975 = vld [vmem:[%s3 + $0x124] sm:$0xf]
      %v1976 = vld [vmem:[%s3 + $0x128] sm:$0xf]
      %v1977 = vld [vmem:[%s3 + $0x12c] sm:$0xf]
      %v1978 = vld [vmem:[%s3 + $0x130] sm:$0xf]
      %v1979 = vld [vmem:[%s3 + $0x134] sm:$0xf]
      %v1980 = vld [vmem:[%s3 + $0x138] sm:$0xf]
      %v1981 = vld [vmem:[%s3 + $0x13c] sm:$0xf]
      %v1982 = vld [vmem:[%s3 + $0x140] sm:$0xf]
      %v1983 = vld [vmem:[%s3 + $0x144] sm:$0xf]
      %v1984 = vld [vmem:[%s3 + $0x148] sm:$0xf]
      %v1985 = vld [vmem:[%s3 + $0x14c] sm:$0xf]
      %v1986 = vld [vmem:[%s3 + $0x150] sm:$0xf]
      %v1987 = vld [vmem:[%s3 + $0x154] sm:$0xf]
      %v1988 = vld [vmem:[%s3 + $0x158] sm:$0xf]
      %v1989 = vld [vmem:[%s3 + $0x15c] sm:$0xf]
      %v1990 = vld [vmem:[%s3 + $0x160] sm:$0xf]
      %v1991 = vld [vmem:[%s3 + $0x164] sm:$0xf]
      %v1992 = vld [vmem:[%s3 + $0x168] sm:$0xf]
      %v1993 = vld [vmem:[%s3 + $0x16c] sm:$0xf]
      %v1994 = vld [vmem:[%s3 + $0x170] sm:$0xf]
      %v1995 = vld [vmem:[%s3 + $0x174] sm:$0xf]
      %v1996 = vld [vmem:[%s3 + $0x178] sm:$0xf]
      %v1997 = vld [vmem:[%s3 + $0x17c] sm:$0xf]
      %v1998 = vld [vmem:[%s3 + $0x180] sm:$0xf]
      %v1999 = vld [vmem:[%s3 + $0x184] sm:$0xf]
      %v2000 = vld [vmem:[%s3 + $0x188] sm:$0xf]
      %v2001 = vld [vmem:[%s3 + $0x18c] sm:$0xf]
      %v2002 = vld [vmem:[%s3 + $0x190] sm:$0xf]
      %v2003 = vld [vmem:[%s3 + $0x194] sm:$0xf]
      %v2004 = vld [vmem:[%s3 + $0x198] sm:$0xf]
      %v2005 = vld [vmem:[%s3 + $0x19c] sm:$0xf]
      %v2006 = vld [vmem:[%s3 + $0x1a0] sm:$0xf]
      %v2007 = vld [vmem:[%s3 + $0x1a4] sm:$0xf]
      %v2008 = vld [vmem:[%s3 + $0x1a8] sm:$0xf]
      %v2009 = vld [vmem:[%s3 + $0x1ac] sm:$0xf]
      %v2010 = vld [vmem:[%s3 + $0x1b0] sm:$0xf]
      %v2011 = vld [vmem:[%s3 + $0x1b4] sm:$0xf]
      %v2012 = vld [vmem:[%s3 + $0x1b8] sm:$0xf]
      %v2013 = vld [vmem:[%s3 + $0x1bc] sm:$0xf]
      %v2014 = vld [vmem:[%s3 + $0x1c0] sm:$0xf]
      %v2015 = vld [vmem:[%s3 + $0x1c4] sm:$0xf]
      %v2016 = vld [vmem:[%s3 + $0x1c8] sm:$0xf]
      %v2017 = vld [vmem:[%s3 + $0x1cc] sm:$0xf]
      %v2018 = vld [vmem:[%s3 + $0x1d0] sm:$0xf]
      %v2019 = vld [vmem:[%s3 + $0x1d4] sm:$0xf]
      %v2020 = vld [vmem:[%s3 + $0x1d8] sm:$0xf]
      %v2021 = vld [vmem:[%s3 + $0x1dc] sm:$0xf]
      %v2022 = vld [vmem:[%s3 + $0x1e0] sm:$0xf]
      %v2023 = vld [vmem:[%s3 + $0x1e4] sm:$0xf]
      %v2024 = vld [vmem:[%s3 + $0x1e8] sm:$0xf]
      %v2025 = vld [vmem:[%s3 + $0x1ec] sm:$0xf]
      %v2026 = vld [vmem:[%s3 + $0x1f0] sm:$0xf]
      %v2027 = vld [vmem:[%s3 + $0x1f4] sm:$0xf]
      %v2028 = vld [vmem:[%s3 + $0x1f8] sm:$0xf]
      %v2029 = vld [vmem:[%s3 + $0x1fc] sm:$0xf]
      %v2030 = vld [vmem:[%s3 + $0x200] sm:$0xf]
      %v2031 = vld [vmem:[%s3 + $0x204] sm:$0xf]
      %v2032 = vld [vmem:[%s3 + $0x208] sm:$0xf]
      %v2033 = vld [vmem:[%s3 + $0x20c] sm:$0xf]
      %v2034 = vld [vmem:[%s3 + $0x210] sm:$0xf]
      %v2035 = vld [vmem:[%s3 + $0x214] sm:$0xf]
      %v2036 = vld [vmem:[%s3 + $0x218] sm:$0xf]
      %v2037 = vld [vmem:[%s3 + $0x21c] sm:$0xf]
      %v2038 = vld [vmem:[%s3 + $0x220] sm:$0xf]
      %v2039 = vld [vmem:[%s3 + $0x224] sm:$0xf]
      %v2040 = vld [vmem:[%s3 + $0x228] sm:$0xf]
      %v2041 = vld [vmem:[%s3 + $0x22c] sm:$0xf]
      %v2042 = vld [vmem:[%s3 + $0x230] sm:$0xf]
      %v2043 = vld [vmem:[%s3 + $0x234] sm:$0xf]
      %v2044 = vld [vmem:[%s3 + $0x238] sm:$0xf]
      %v2045 = vld [vmem:[%s3 + $0x23c] sm:$0xf]
      %v2206 = vunpack.c.l.b16 %v1742
      %v2207 = vunpack.c.h.b16 %v1742
      %v2208 = vunpack.c.l.b16 %v1743
      %v2209 = vunpack.c.h.b16 %v1743
      %v2210 = vunpack.c.l.b16 %v1744
      %v2211 = vunpack.c.h.b16 %v1744
      %v2212 = vunpack.c.l.b16 %v1745
      %v2213 = vunpack.c.h.b16 %v1745
      %v2214 = vunpack.c.l.b16 %v1746
      %v2215 = vunpack.c.l.b16 %v1747
      %v2216 = vunpack.c.h.b16 %v1747
      %v2217 = vunpack.c.l.b16 %v1748
      %v2218 = vunpack.c.h.b16 %v1748
      %v2219 = vunpack.c.l.b16 %v1749
      %v2220 = vunpack.c.h.b16 %v1749
      %v2221 = vunpack.c.l.b16 %v1750
      %v2222 = vunpack.c.h.b16 %v1750
      %v2223 = vunpack.c.l.b16 %v1751
      %v2224 = vunpack.c.l.b16 %v1752
      %v2225 = vunpack.c.h.b16 %v1752
      %v2226 = vunpack.c.l.b16 %v1753
      %v2227 = vunpack.c.h.b16 %v1753
      %v2228 = vunpack.c.l.b16 %v1754
      %v2229 = vunpack.c.h.b16 %v1754
      %v2230 = vunpack.c.l.b16 %v1755
      %v2231 = vunpack.c.h.b16 %v1755
      %v2232 = vunpack.c.l.b16 %v1756
      %v2233 = vunpack.c.l.b16 %v1757
      %v2234 = vunpack.c.h.b16 %v1757
      %v2235 = vunpack.c.l.b16 %v1758
      %v2236 = vunpack.c.h.b16 %v1758
      %v2237 = vunpack.c.l.b16 %v1759
      %v2238 = vunpack.c.h.b16 %v1759
      %v2239 = vunpack.c.l.b16 %v1760
      %v2240 = vunpack.c.h.b16 %v1760
      %v2241 = vunpack.c.l.b16 %v1761
      %v2242 = vunpack.c.l.b16 %v1762
      %v2243 = vunpack.c.h.b16 %v1762
      %v2244 = vunpack.c.l.b16 %v1763
      %v2245 = vunpack.c.h.b16 %v1763
      %v2246 = vunpack.c.l.b16 %v1764
      %v2247 = vunpack.c.h.b16 %v1764
      %v2248 = vunpack.c.l.b16 %v1765
      %v2249 = vunpack.c.h.b16 %v1765
      %v2250 = vunpack.c.l.b16 %v1766
      %v2251 = vunpack.c.l.b16 %v1767
      %v2252 = vunpack.c.h.b16 %v1767
      %v2253 = vunpack.c.l.b16 %v1768
      %v2254 = vunpack.c.h.b16 %v1768
      %v2255 = vunpack.c.l.b16 %v1769
      %v2256 = vunpack.c.h.b16 %v1769
      %v2257 = vunpack.c.l.b16 %v1770
      %v2258 = vunpack.c.h.b16 %v1770
      %v2259 = vunpack.c.l.b16 %v1771
      %v2260 = vunpack.c.l.b16 %v1772
      %v2261 = vunpack.c.h.b16 %v1772
      %v2262 = vunpack.c.l.b16 %v1773
      %v2263 = vunpack.c.h.b16 %v1773
      %v2264 = vunpack.c.l.b16 %v1774
      %v2265 = vunpack.c.h.b16 %v1774
      %v2266 = vunpack.c.l.b16 %v1775
      %v2267 = vunpack.c.h.b16 %v1775
      %v2268 = vunpack.c.l.b16 %v1776
      %v2269 = vunpack.c.l.b16 %v1777
      %v2270 = vunpack.c.h.b16 %v1777
      %v2271 = vunpack.c.l.b16 %v1778
      %v2272 = vunpack.c.h.b16 %v1778
      %v2273 = vunpack.c.l.b16 %v1779
      %v2274 = vunpack.c.h.b16 %v1779
      %v2275 = vunpack.c.l.b16 %v1780
      %v2276 = vunpack.c.h.b16 %v1780
      %v2277 = vunpack.c.l.b16 %v1781
      %v2278 = vunpack.c.l.b16 %v1782
      %v2279 = vunpack.c.h.b16 %v1782
      %v2280 = vunpack.c.l.b16 %v1783
      %v2281 = vunpack.c.h.b16 %v1783
      %v2282 = vunpack.c.l.b16 %v1784
      %v2283 = vunpack.c.h.b16 %v1784
      %v2284 = vunpack.c.l.b16 %v1785
      %v2285 = vunpack.c.h.b16 %v1785
      %v2286 = vunpack.c.l.b16 %v1786
      %v2287 = vunpack.c.l.b16 %v1787
      %v2288 = vunpack.c.h.b16 %v1787
      %v2289 = vunpack.c.l.b16 %v1788
      %v2290 = vunpack.c.h.b16 %v1788
      %v2291 = vunpack.c.l.b16 %v1789
      %v2292 = vunpack.c.h.b16 %v1789
      %v2293 = vunpack.c.l.b16 %v1790
      %v2294 = vunpack.c.h.b16 %v1790
      %v2295 = vunpack.c.l.b16 %v1791
      %v2296 = vunpack.c.l.b16 %v1792
      %v2297 = vunpack.c.h.b16 %v1792
      %v2298 = vunpack.c.l.b16 %v1793
      %v2299 = vunpack.c.h.b16 %v1793
      %v2300 = vunpack.c.l.b16 %v1794
      %v2301 = vunpack.c.h.b16 %v1794
      %v2302 = vunpack.c.l.b16 %v1795
      %v2303 = vunpack.c.h.b16 %v1795
      %v2304 = vunpack.c.l.b16 %v1796
      %v2305 = vunpack.c.l.b16 %v1797
      %v2306 = vunpack.c.h.b16 %v1797
      %v2307 = vunpack.c.l.b16 %v1798
      %v2308 = vunpack.c.h.b16 %v1798
      %v2309 = vunpack.c.l.b16 %v1799
      %v2310 = vunpack.c.h.b16 %v1799
      %v2311 = vunpack.c.l.b16 %v1800
      %v2312 = vunpack.c.h.b16 %v1800
      %v2313 = vunpack.c.l.b16 %v1801
      %v2314 = vunpack.c.l.b16 %v1802
      %v2315 = vunpack.c.h.b16 %v1802
      %v2316 = vunpack.c.l.b16 %v1803
      %v2317 = vunpack.c.h.b16 %v1803
      %v2318 = vunpack.c.l.b16 %v1804
      %v2319 = vunpack.c.h.b16 %v1804
      %v2320 = vunpack.c.l.b16 %v1805
      %v2321 = vunpack.c.h.b16 %v1805
      %v2322 = vunpack.c.l.b16 %v1806
      %v2323 = vunpack.c.l.b16 %v1807
      %v2324 = vunpack.c.h.b16 %v1807
      %v2325 = vunpack.c.l.b16 %v1808
      %v2326 = vunpack.c.h.b16 %v1808
      %v2327 = vunpack.c.l.b16 %v1809
      %v2328 = vunpack.c.h.b16 %v1809
      %v2329 = vunpack.c.l.b16 %v1810
      %v2330 = vunpack.c.h.b16 %v1810
      %v2331 = vunpack.c.l.b16 %v1811
      %v2332 = vunpack.c.l.b16 %v1812
      %v2333 = vunpack.c.h.b16 %v1812
      %v2334 = vunpack.c.l.b16 %v1813
      %v2335 = vunpack.c.h.b16 %v1813
      %v2336 = vunpack.c.l.b16 %v1814
      %v2337 = vunpack.c.h.b16 %v1814
      %v2338 = vunpack.c.l.b16 %v1815
      %v2339 = vunpack.c.h.b16 %v1815
      %v2340 = vunpack.c.l.b16 %v1816
      %v2341 = vunpack.c.l.b16 %v1817
      %v2342 = vunpack.c.h.b16 %v1817
      %v2343 = vunpack.c.l.b16 %v1818
      %v2344 = vunpack.c.h.b16 %v1818
      %v2345 = vunpack.c.l.b16 %v1819
      %v2346 = vunpack.c.h.b16 %v1819
      %v2347 = vunpack.c.l.b16 %v1820
      %v2348 = vunpack.c.h.b16 %v1820
      %v2349 = vunpack.c.l.b16 %v1821
      %v2350 = vunpack.c.l.b16 %v1822
      %v2351 = vunpack.c.h.b16 %v1822
      %v2352 = vunpack.c.l.b16 %v1823
      %v2353 = vunpack.c.h.b16 %v1823
      %v2354 = vunpack.c.l.b16 %v1824
      %v2355 = vunpack.c.h.b16 %v1824
      %v2356 = vunpack.c.l.b16 %v1825
      %v2357 = vunpack.c.h.b16 %v1825
      %v2358 = vunpack.c.l.b16 %v1826
      %v2359 = vunpack.c.l.b16 %v1827
      %v2360 = vunpack.c.h.b16 %v1827
      %v2361 = vunpack.c.l.b16 %v1828
      %v2362 = vunpack.c.h.b16 %v1828
      %v2363 = vunpack.c.l.b16 %v1829
      %v2364 = vunpack.c.h.b16 %v1829
      %v2365 = vunpack.c.l.b16 %v1830
      %v2366 = vunpack.c.h.b16 %v1830
      %v2367 = vunpack.c.l.b16 %v1831
      %v2368 = vunpack.c.l.b16 %v1832
      %v2369 = vunpack.c.h.b16 %v1832
      %v2370 = vunpack.c.l.b16 %v1833
      %v2371 = vunpack.c.h.b16 %v1833
      %v2372 = vunpack.c.l.b16 %v1834
      %v2373 = vunpack.c.h.b16 %v1834
      %v2374 = vunpack.c.l.b16 %v1835
      %v2375 = vunpack.c.h.b16 %v1835
      %v2376 = vunpack.c.l.b16 %v1836
      %v2377 = vunpack.c.l.b16 %v1837
      %v2378 = vunpack.c.h.b16 %v1837
      %v2379 = vunpack.c.l.b16 %v1838
      %v2380 = vunpack.c.h.b16 %v1838
      %v2381 = vunpack.c.l.b16 %v1839
      %v2382 = vunpack.c.h.b16 %v1839
      %v2383 = vunpack.c.l.b16 %v1840
      %v2384 = vunpack.c.h.b16 %v1840
      %v2385 = vunpack.c.l.b16 %v1841
      %v2386 = vunpack.c.l.b16 %v1842
      %v2387 = vunpack.c.h.b16 %v1842
      %v2388 = vunpack.c.l.b16 %v1843
      %v2389 = vunpack.c.h.b16 %v1843
      %v2390 = vunpack.c.l.b16 %v1844
      %v2391 = vunpack.c.h.b16 %v1844
      %v2392 = vunpack.c.l.b16 %v1845
      %v2393 = vunpack.c.h.b16 %v1845
      %v2394 = vunpack.c.l.b16 %v1846
      %v2395 = vunpack.c.l.b16 %v1847
      %v2396 = vunpack.c.h.b16 %v1847
      %v2397 = vunpack.c.l.b16 %v1848
      %v2398 = vunpack.c.h.b16 %v1848
      %v2399 = vunpack.c.l.b16 %v1849
      %v2400 = vunpack.c.h.b16 %v1849
      %v2401 = vunpack.c.l.b16 %v1850
      %v2402 = vunpack.c.h.b16 %v1850
      %v2403 = vunpack.c.l.b16 %v1851
      %v2404 = vunpack.c.l.b16 %v1852
      %v2405 = vunpack.c.h.b16 %v1852
      %v2406 = vunpack.c.l.b16 %v1853
      %v2407 = vunpack.c.h.b16 %v1853
      %v2408 = vunpack.c.l.b16 %v1854
      %v2409 = vunpack.c.h.b16 %v1854
      %v2410 = vunpack.c.l.b16 %v1855
      %v2411 = vunpack.c.h.b16 %v1855
      %v2412 = vunpack.c.l.b16 %v1856
      %v2413 = vunpack.c.l.b16 %v1857
      %v2414 = vunpack.c.h.b16 %v1857
      %v2415 = vunpack.c.l.b16 %v1858
      %v2416 = vunpack.c.h.b16 %v1858
      %v2417 = vunpack.c.l.b16 %v1859
      %v2418 = vunpack.c.h.b16 %v1859
      %v2419 = vunpack.c.l.b16 %v1860
      %v2420 = vunpack.c.h.b16 %v1860
      %v2421 = vunpack.c.l.b16 %v1861
      %v2422 = vunpack.c.l.b16 %v1862
      %v2423 = vunpack.c.h.b16 %v1862
      %v2424 = vunpack.c.l.b16 %v1863
      %v2425 = vunpack.c.h.b16 %v1863
      %v2426 = vunpack.c.l.b16 %v1864
      %v2427 = vunpack.c.h.b16 %v1864
      %v2428 = vunpack.c.l.b16 %v1865
      %v2429 = vunpack.c.h.b16 %v1865
      %v2430 = vunpack.c.l.b16 %v1866
      %v2431 = vunpack.c.l.b16 %v1867
      %v2432 = vunpack.c.h.b16 %v1867
      %v2433 = vunpack.c.l.b16 %v1868
      %v2434 = vunpack.c.h.b16 %v1868
      %v2435 = vunpack.c.l.b16 %v1869
      %v2436 = vunpack.c.h.b16 %v1869
      %v2437 = vunpack.c.l.b16 %v1870
      %v2438 = vunpack.c.h.b16 %v1870
      %v2439 = vunpack.c.l.b16 %v1871
      %v2440 = vunpack.c.l.b16 %v1872
      %v2441 = vunpack.c.h.b16 %v1872
      %v2442 = vunpack.c.l.b16 %v1873
      %v2443 = vunpack.c.h.b16 %v1873
      %v2444 = vunpack.c.l.b16 %v1874
      %v2445 = vunpack.c.h.b16 %v1874
      %v2446 = vunpack.c.l.b16 %v1875
      %v2447 = vunpack.c.h.b16 %v1875
      %v2448 = vunpack.c.l.b16 %v1876
      %v2449 = vunpack.c.l.b16 %v1877
      %v2450 = vunpack.c.h.b16 %v1877
      %v2451 = vunpack.c.l.b16 %v1878
      %v2452 = vunpack.c.h.b16 %v1878
      %v2453 = vunpack.c.l.b16 %v1879
      %v2454 = vunpack.c.h.b16 %v1879
      %v2455 = vunpack.c.l.b16 %v1880
      %v2456 = vunpack.c.h.b16 %v1880
      %v2457 = vunpack.c.l.b16 %v1881
      %v2458 = vunpack.c.l.b16 %v1882
      %v2459 = vunpack.c.h.b16 %v1882
      %v2460 = vunpack.c.l.b16 %v1883
      %v2461 = vunpack.c.h.b16 %v1883
      %v2462 = vunpack.c.l.b16 %v1884
      %v2463 = vunpack.c.h.b16 %v1884
      %v2464 = vunpack.c.l.b16 %v1885
      %v2465 = vunpack.c.h.b16 %v1885
      %v2466 = vunpack.c.l.b16 %v1886
      %v2467 = vunpack.c.l.b16 %v1887
      %v2468 = vunpack.c.h.b16 %v1887
      %v2469 = vunpack.c.l.b16 %v1888
      %v2470 = vunpack.c.h.b16 %v1888
      %v2471 = vunpack.c.l.b16 %v1889
      %v2472 = vunpack.c.h.b16 %v1889
      %v2473 = vunpack.c.l.b16 %v1890
      %v2474 = vunpack.c.h.b16 %v1890
      %v2475 = vunpack.c.l.b16 %v1891
      %v2476 = vunpack.c.l.b16 %v1892
      %v2477 = vunpack.c.h.b16 %v1892
      %v2478 = vunpack.c.l.b16 %v1893
      %v2479 = vunpack.c.h.b16 %v1893
      %v2480 = vunpack.c.l.b16 %v1894
      %v2481 = vunpack.c.h.b16 %v1894
      %v2482 = vunpack.c.l.b16 %v1895
      %v2483 = vunpack.c.h.b16 %v1895
      %v2484 = vunpack.c.l.b16 %v1896
      %v2485 = vunpack.c.l.b16 %v1897
      %v2486 = vunpack.c.h.b16 %v1897
      %v2487 = vunpack.c.l.b16 %v1898
      %v2488 = vunpack.c.h.b16 %v1898
      %v2489 = vunpack.c.l.b16 %v1899
      %v2490 = vunpack.c.h.b16 %v1899
      %v2491 = vunpack.c.l.b16 %v1900
      %v2492 = vunpack.c.h.b16 %v1900
      %v2493 = vunpack.c.l.b16 %v1901
      %v2494 = vpack.c.b16 %v2215, %v2206
      %v2495 = vpack.c.b16 %v2216, %v2207
      %v2496 = vpack.c.b16 %v2217, %v2208
      %v2497 = vpack.c.b16 %v2218, %v2209
      %v2498 = vpack.c.b16 %v2219, %v2210
      %v2499 = vpack.c.b16 %v2220, %v2211
      %v2500 = vpack.c.b16 %v2221, %v2212
      %v2501 = vpack.c.b16 %v2222, %v2213
      %v2502 = vpack.c.b16 %v2223, %v2214
      %v2503 = vpack.c.b16 %v2233, %v2224
      %v2504 = vpack.c.b16 %v2234, %v2225
      %v2505 = vpack.c.b16 %v2235, %v2226
      %v2506 = vpack.c.b16 %v2236, %v2227
      %v2507 = vpack.c.b16 %v2237, %v2228
      %v2508 = vpack.c.b16 %v2238, %v2229
      %v2509 = vpack.c.b16 %v2239, %v2230
      %v2510 = vpack.c.b16 %v2240, %v2231
      %v2511 = vpack.c.b16 %v2241, %v2232
      %v2512 = vpack.c.b16 %v2251, %v2242
      %v2513 = vpack.c.b16 %v2252, %v2243
      %v2514 = vpack.c.b16 %v2253, %v2244
      %v2515 = vpack.c.b16 %v2254, %v2245
      %v2516 = vpack.c.b16 %v2255, %v2246
      %v2517 = vpack.c.b16 %v2256, %v2247
      %v2518 = vpack.c.b16 %v2257, %v2248
      %v2519 = vpack.c.b16 %v2258, %v2249
      %v2520 = vpack.c.b16 %v2259, %v2250
      %v2521 = vpack.c.b16 %v2269, %v2260
      %v2522 = vpack.c.b16 %v2270, %v2261
      %v2523 = vpack.c.b16 %v2271, %v2262
      %v2524 = vpack.c.b16 %v2272, %v2263
      %v2525 = vpack.c.b16 %v2273, %v2264
      %v2526 = vpack.c.b16 %v2274, %v2265
      %v2527 = vpack.c.b16 %v2275, %v2266
      %v2528 = vpack.c.b16 %v2276, %v2267
      %v2529 = vpack.c.b16 %v2277, %v2268
      %v2530 = vpack.c.b16 %v2287, %v2278
      %v2531 = vpack.c.b16 %v2288, %v2279
      %v2532 = vpack.c.b16 %v2289, %v2280
      %v2533 = vpack.c.b16 %v2290, %v2281
      %v2534 = vpack.c.b16 %v2291, %v2282
      %v2535 = vpack.c.b16 %v2292, %v2283
      %v2536 = vpack.c.b16 %v2293, %v2284
      %v2537 = vpack.c.b16 %v2294, %v2285
      %v2538 = vpack.c.b16 %v2295, %v2286
      %v2539 = vpack.c.b16 %v2305, %v2296
      %v2540 = vpack.c.b16 %v2306, %v2297
      %v2541 = vpack.c.b16 %v2307, %v2298
      %v2542 = vpack.c.b16 %v2308, %v2299
      %v2543 = vpack.c.b16 %v2309, %v2300
      %v2544 = vpack.c.b16 %v2310, %v2301
      %v2545 = vpack.c.b16 %v2311, %v2302
      %v2546 = vpack.c.b16 %v2312, %v2303
      %v2547 = vpack.c.b16 %v2313, %v2304
      %v2548 = vpack.c.b16 %v2323, %v2314
      %v2549 = vpack.c.b16 %v2324, %v2315
      %v2550 = vpack.c.b16 %v2325, %v2316
      %v2551 = vpack.c.b16 %v2326, %v2317
      %v2552 = vpack.c.b16 %v2327, %v2318
      %v2553 = vpack.c.b16 %v2328, %v2319
      %v2554 = vpack.c.b16 %v2329, %v2320
      %v2555 = vpack.c.b16 %v2330, %v2321
      %v2556 = vpack.c.b16 %v2331, %v2322
      %v2557 = vpack.c.b16 %v2341, %v2332
      %v2558 = vpack.c.b16 %v2342, %v2333
      %v2559 = vpack.c.b16 %v2343, %v2334
      %v2560 = vpack.c.b16 %v2344, %v2335
      %v2561 = vpack.c.b16 %v2345, %v2336
      %v2562 = vpack.c.b16 %v2346, %v2337
      %v2563 = vpack.c.b16 %v2347, %v2338
      %v2564 = vpack.c.b16 %v2348, %v2339
      %v2565 = vpack.c.b16 %v2349, %v2340
      %v2566 = vpack.c.b16 %v2359, %v2350
      %v2567 = vpack.c.b16 %v2360, %v2351
      %v2568 = vpack.c.b16 %v2361, %v2352
      %v2569 = vpack.c.b16 %v2362, %v2353
      %v2570 = vpack.c.b16 %v2363, %v2354
      %v2571 = vpack.c.b16 %v2364, %v2355
      %v2572 = vpack.c.b16 %v2365, %v2356
      %v2573 = vpack.c.b16 %v2366, %v2357
      %v2574 = vpack.c.b16 %v2367, %v2358
      %v2575 = vpack.c.b16 %v2377, %v2368
      %v2576 = vpack.c.b16 %v2378, %v2369
      %v2577 = vpack.c.b16 %v2379, %v2370
      %v2578 = vpack.c.b16 %v2380, %v2371
      %v2579 = vpack.c.b16 %v2381, %v2372
      %v2580 = vpack.c.b16 %v2382, %v2373
      %v2581 = vpack.c.b16 %v2383, %v2374
      %v2582 = vpack.c.b16 %v2384, %v2375
      %v2583 = vpack.c.b16 %v2385, %v2376
      %v2584 = vpack.c.b16 %v2395, %v2386
      %v2585 = vpack.c.b16 %v2396, %v2387
      %v2586 = vpack.c.b16 %v2397, %v2388
      %v2587 = vpack.c.b16 %v2398, %v2389
      %v2588 = vpack.c.b16 %v2399, %v2390
      %v2589 = vpack.c.b16 %v2400, %v2391
      %v2590 = vpack.c.b16 %v2401, %v2392
      %v2591 = vpack.c.b16 %v2402, %v2393
      %v2592 = vpack.c.b16 %v2403, %v2394
      %v2593 = vpack.c.b16 %v2413, %v2404
      %v2594 = vpack.c.b16 %v2414, %v2405
      %v2595 = vpack.c.b16 %v2415, %v2406
      %v2596 = vpack.c.b16 %v2416, %v2407
      %v2597 = vpack.c.b16 %v2417, %v2408
      %v2598 = vpack.c.b16 %v2418, %v2409
      %v2599 = vpack.c.b16 %v2419, %v2410
      %v2600 = vpack.c.b16 %v2420, %v2411
      %v2601 = vpack.c.b16 %v2421, %v2412
      %v2602 = vpack.c.b16 %v2431, %v2422
      %v2603 = vpack.c.b16 %v2432, %v2423
      %v2604 = vpack.c.b16 %v2433, %v2424
      %v2605 = vpack.c.b16 %v2434, %v2425
      %v2606 = vpack.c.b16 %v2435, %v2426
      %v2607 = vpack.c.b16 %v2436, %v2427
      %v2608 = vpack.c.b16 %v2437, %v2428
      %v2609 = vpack.c.b16 %v2438, %v2429
      %v2610 = vpack.c.b16 %v2439, %v2430
      %v2611 = vpack.c.b16 %v2449, %v2440
      %v2612 = vpack.c.b16 %v2450, %v2441
      %v2613 = vpack.c.b16 %v2451, %v2442
      %v2614 = vpack.c.b16 %v2452, %v2443
      %v2615 = vpack.c.b16 %v2453, %v2444
      %v2616 = vpack.c.b16 %v2454, %v2445
      %v2617 = vpack.c.b16 %v2455, %v2446
      %v2618 = vpack.c.b16 %v2456, %v2447
      %v2619 = vpack.c.b16 %v2457, %v2448
      %v2620 = vpack.c.b16 %v2467, %v2458
      %v2621 = vpack.c.b16 %v2468, %v2459
      %v2622 = vpack.c.b16 %v2469, %v2460
      %v2623 = vpack.c.b16 %v2470, %v2461
      %v2624 = vpack.c.b16 %v2471, %v2462
      %v2625 = vpack.c.b16 %v2472, %v2463
      %v2626 = vpack.c.b16 %v2473, %v2464
      %v2627 = vpack.c.b16 %v2474, %v2465
      %v2628 = vpack.c.b16 %v2475, %v2466
      %v2629 = vpack.c.b16 %v2485, %v2476
      %v2630 = vpack.c.b16 %v2486, %v2477
      %v2631 = vpack.c.b16 %v2487, %v2478
      %v2632 = vpack.c.b16 %v2488, %v2479
      %v2633 = vpack.c.b16 %v2489, %v2480
      %v2634 = vpack.c.b16 %v2490, %v2481
      %v2635 = vpack.c.b16 %v2491, %v2482
      %v2636 = vpack.c.b16 %v2492, %v2483
      %v2637 = vpack.c.b16 %v2493, %v2484
      %v2926 = vunpack.c.l.b16 %v1902
      %v2927 = vunpack.c.l.b16 %v1903
      %v2928 = vunpack.c.l.b16 %v1904
      %v2929 = vunpack.c.l.b16 %v1905
      %v2930 = vunpack.c.l.b16 %v1906
      %v2931 = vunpack.c.l.b16 %v1907
      %v2932 = vunpack.c.l.b16 %v1908
      %v2933 = vunpack.c.l.b16 %v1909
      %v2934 = vunpack.c.l.b16 %v1910
      %v2935 = vunpack.c.l.b16 %v1911
      %v2936 = vunpack.c.l.b16 %v1912
      %v2937 = vunpack.c.l.b16 %v1913
      %v2938 = vunpack.c.l.b16 %v1914
      %v2939 = vunpack.c.l.b16 %v1915
      %v2940 = vunpack.c.l.b16 %v1916
      %v2941 = vunpack.c.l.b16 %v1917
      %v2942 = vunpack.c.l.b16 %v1918
      %v2943 = vunpack.c.l.b16 %v1919
      %v2944 = vunpack.c.l.b16 %v1920
      %v2945 = vunpack.c.l.b16 %v1921
      %v2946 = vunpack.c.l.b16 %v1922
      %v2947 = vunpack.c.l.b16 %v1923
      %v2948 = vunpack.c.l.b16 %v1924
      %v2949 = vunpack.c.l.b16 %v1925
      %v2950 = vunpack.c.l.b16 %v1926
      %v2951 = vunpack.c.l.b16 %v1927
      %v2952 = vunpack.c.l.b16 %v1928
      %v2953 = vunpack.c.l.b16 %v1929
      %v2954 = vunpack.c.l.b16 %v1930
      %v2955 = vunpack.c.l.b16 %v1931
      %v2956 = vunpack.c.l.b16 %v1932
      %v2957 = vunpack.c.l.b16 %v1933
      %v2958 = vunpack.c.l.b16 %v1934
      %v2959 = vunpack.c.l.b16 %v1935
      %v2960 = vunpack.c.l.b16 %v1936
      %v2961 = vunpack.c.l.b16 %v1937
      %v2962 = vunpack.c.l.b16 %v1938
      %v2963 = vunpack.c.l.b16 %v1939
      %v2964 = vunpack.c.l.b16 %v1940
      %v2965 = vunpack.c.l.b16 %v1941
      %v2966 = vunpack.c.l.b16 %v1942
      %v2967 = vunpack.c.l.b16 %v1943
      %v2968 = vunpack.c.l.b16 %v1944
      %v2969 = vunpack.c.l.b16 %v1945
      %v2970 = vunpack.c.l.b16 %v1946
      %v2971 = vunpack.c.l.b16 %v1947
      %v2972 = vunpack.c.l.b16 %v1948
      %v2973 = vunpack.c.l.b16 %v1949
      %v2974 = vunpack.c.l.b16 %v1950
      %v2975 = vunpack.c.l.b16 %v1951
      %v2976 = vunpack.c.l.b16 %v1952
      %v2977 = vunpack.c.l.b16 %v1953
      %v2978 = vunpack.c.l.b16 %v1954
      %v2979 = vunpack.c.l.b16 %v1955
      %v2980 = vunpack.c.l.b16 %v1956
      %v2981 = vunpack.c.l.b16 %v1957
      %v2982 = vunpack.c.l.b16 %v1958
      %v2983 = vunpack.c.l.b16 %v1959
      %v2984 = vunpack.c.l.b16 %v1960
      %v2985 = vunpack.c.l.b16 %v1961
      %v2986 = vunpack.c.l.b16 %v1962
      %v2987 = vunpack.c.l.b16 %v1963
      %v2988 = vunpack.c.l.b16 %v1964
      %v2989 = vunpack.c.l.b16 %v1965
      %v2990 = vunpack.c.l.b16 %v1966
      %v2991 = vunpack.c.l.b16 %v1967
      %v2992 = vunpack.c.l.b16 %v1968
      %v2993 = vunpack.c.l.b16 %v1969
      %v2994 = vunpack.c.l.b16 %v1970
      %v2995 = vunpack.c.l.b16 %v1971
      %v2996 = vunpack.c.l.b16 %v1972
      %v2997 = vunpack.c.l.b16 %v1973
      %v2998 = vunpack.c.l.b16 %v1974
      %v2999 = vunpack.c.l.b16 %v1975
      %v3000 = vunpack.c.l.b16 %v1976
      %v3001 = vunpack.c.l.b16 %v1977
      %v3002 = vunpack.c.l.b16 %v1978
      %v3003 = vunpack.c.l.b16 %v1979
      %v3004 = vunpack.c.l.b16 %v1980
      %v3005 = vunpack.c.l.b16 %v1981
      %v3006 = vunpack.c.l.b16 %v1982
      %v3007 = vunpack.c.l.b16 %v1983
      %v3008 = vunpack.c.l.b16 %v1984
      %v3009 = vunpack.c.l.b16 %v1985
      %v3010 = vunpack.c.l.b16 %v1986
      %v3011 = vunpack.c.l.b16 %v1987
      %v3012 = vunpack.c.l.b16 %v1988
      %v3013 = vunpack.c.l.b16 %v1989
      %v3014 = vunpack.c.l.b16 %v1990
      %v3015 = vunpack.c.l.b16 %v1991
      %v3016 = vunpack.c.l.b16 %v1992
      %v3017 = vunpack.c.l.b16 %v1993
      %v3018 = vunpack.c.l.b16 %v1994
      %v3019 = vunpack.c.l.b16 %v1995
      %v3020 = vunpack.c.l.b16 %v1996
      %v3021 = vunpack.c.l.b16 %v1997
      %v3022 = vunpack.c.l.b16 %v1998
      %v3023 = vunpack.c.l.b16 %v1999
      %v3024 = vunpack.c.l.b16 %v2000
      %v3025 = vunpack.c.l.b16 %v2001
      %v3026 = vunpack.c.l.b16 %v2002
      %v3027 = vunpack.c.l.b16 %v2003
      %v3028 = vunpack.c.l.b16 %v2004
      %v3029 = vunpack.c.l.b16 %v2005
      %v3030 = vunpack.c.l.b16 %v2006
      %v3031 = vunpack.c.l.b16 %v2007
      %v3032 = vunpack.c.l.b16 %v2008
      %v3033 = vunpack.c.l.b16 %v2009
      %v3034 = vunpack.c.l.b16 %v2010
      %v3035 = vunpack.c.l.b16 %v2011
      %v3036 = vunpack.c.l.b16 %v2012
      %v3037 = vunpack.c.l.b16 %v2013
      %v3038 = vunpack.c.l.b16 %v2014
      %v3039 = vunpack.c.l.b16 %v2015
      %v3040 = vunpack.c.l.b16 %v2016
      %v3041 = vunpack.c.l.b16 %v2017
      %v3042 = vunpack.c.l.b16 %v2018
      %v3043 = vunpack.c.l.b16 %v2019
      %v3044 = vunpack.c.l.b16 %v2020
      %v3045 = vunpack.c.l.b16 %v2021
      %v3046 = vunpack.c.l.b16 %v2022
      %v3047 = vunpack.c.l.b16 %v2023
      %v3048 = vunpack.c.l.b16 %v2024
      %v3049 = vunpack.c.l.b16 %v2025
      %v3050 = vunpack.c.l.b16 %v2026
      %v3051 = vunpack.c.l.b16 %v2027
      %v3052 = vunpack.c.l.b16 %v2028
      %v3053 = vunpack.c.l.b16 %v2029
      %v3054 = vunpack.c.l.b16 %v2030
      %v3055 = vunpack.c.l.b16 %v2031
      %v3056 = vunpack.c.l.b16 %v2032
      %v3057 = vunpack.c.l.b16 %v2033
      %v3058 = vunpack.c.l.b16 %v2034
      %v3059 = vunpack.c.l.b16 %v2035
      %v3060 = vunpack.c.l.b16 %v2036
      %v3061 = vunpack.c.l.b16 %v2037
      %v3062 = vunpack.c.l.b16 %v2038
      %v3063 = vunpack.c.l.b16 %v2039
      %v3064 = vunpack.c.l.b16 %v2040
      %v3065 = vunpack.c.l.b16 %v2041
      %v3066 = vunpack.c.l.b16 %v2042
      %v3067 = vunpack.c.l.b16 %v2043
      %v3068 = vunpack.c.l.b16 %v2044
      %v3069 = vunpack.c.l.b16 %v2045
      %v3070 = vpack.c.b16 %v2927, %v2926
      %v3071 = vpack.c.b16 %v2929, %v2928
      %v3072 = vpack.c.b16 %v2931, %v2930
      %v3073 = vpack.c.b16 %v2933, %v2932
      %v3074 = vpack.c.b16 %v2935, %v2934
      %v3075 = vpack.c.b16 %v2937, %v2936
      %v3076 = vpack.c.b16 %v2939, %v2938
      %v3077 = vpack.c.b16 %v2941, %v2940
      %v3078 = vpack.c.b16 %v2943, %v2942
      %v3079 = vpack.c.b16 %v2945, %v2944
      %v3080 = vpack.c.b16 %v2947, %v2946
      %v3081 = vpack.c.b16 %v2949, %v2948
      %v3082 = vpack.c.b16 %v2951, %v2950
      %v3083 = vpack.c.b16 %v2953, %v2952
      %v3084 = vpack.c.b16 %v2955, %v2954
      %v3085 = vpack.c.b16 %v2957, %v2956
      %v3086 = vpack.c.b16 %v2959, %v2958
      %v3087 = vpack.c.b16 %v2961, %v2960
      %v3088 = vpack.c.b16 %v2963, %v2962
      %v3089 = vpack.c.b16 %v2965, %v2964
      %v3090 = vpack.c.b16 %v2967, %v2966
      %v3091 = vpack.c.b16 %v2969, %v2968
      %v3092 = vpack.c.b16 %v2971, %v2970
      %v3093 = vpack.c.b16 %v2973, %v2972
      %v3094 = vpack.c.b16 %v2975, %v2974
      %v3095 = vpack.c.b16 %v2977, %v2976
      %v3096 = vpack.c.b16 %v2979, %v2978
      %v3097 = vpack.c.b16 %v2981, %v2980
      %v3098 = vpack.c.b16 %v2983, %v2982
      %v3099 = vpack.c.b16 %v2985, %v2984
      %v3100 = vpack.c.b16 %v2987, %v2986
      %v3101 = vpack.c.b16 %v2989, %v2988
      %v3102 = vpack.c.b16 %v2991, %v2990
      %v3103 = vpack.c.b16 %v2993, %v2992
      %v3104 = vpack.c.b16 %v2995, %v2994
      %v3105 = vpack.c.b16 %v2997, %v2996
      %v3106 = vpack.c.b16 %v2999, %v2998
      %v3107 = vpack.c.b16 %v3001, %v3000
      %v3108 = vpack.c.b16 %v3003, %v3002
      %v3109 = vpack.c.b16 %v3005, %v3004
      %v3110 = vpack.c.b16 %v3007, %v3006
      %v3111 = vpack.c.b16 %v3009, %v3008
      %v3112 = vpack.c.b16 %v3011, %v3010
      %v3113 = vpack.c.b16 %v3013, %v3012
      %v3114 = vpack.c.b16 %v3015, %v3014
      %v3115 = vpack.c.b16 %v3017, %v3016
      %v3116 = vpack.c.b16 %v3019, %v3018
      %v3117 = vpack.c.b16 %v3021, %v3020
      %v3118 = vpack.c.b16 %v3023, %v3022
      %v3119 = vpack.c.b16 %v3025, %v3024
      %v3120 = vpack.c.b16 %v3027, %v3026
      %v3121 = vpack.c.b16 %v3029, %v3028
      %v3122 = vpack.c.b16 %v3031, %v3030
      %v3123 = vpack.c.b16 %v3033, %v3032
      %v3124 = vpack.c.b16 %v3035, %v3034
      %v3125 = vpack.c.b16 %v3037, %v3036
      %v3126 = vpack.c.b16 %v3039, %v3038
      %v3127 = vpack.c.b16 %v3041, %v3040
      %v3128 = vpack.c.b16 %v3043, %v3042
      %v3129 = vpack.c.b16 %v3045, %v3044
      %v3130 = vpack.c.b16 %v3047, %v3046
      %v3131 = vpack.c.b16 %v3049, %v3048
      %v3132 = vpack.c.b16 %v3051, %v3050
      %v3133 = vpack.c.b16 %v3053, %v3052
      %v3134 = vpack.c.b16 %v3055, %v3054
      %v3135 = vpack.c.b16 %v3057, %v3056
      %v3136 = vpack.c.b16 %v3059, %v3058
      %v3137 = vpack.c.b16 %v3061, %v3060
      %v3138 = vpack.c.b16 %v3063, %v3062
      %v3139 = vpack.c.b16 %v3065, %v3064
      %v3140 = vpack.c.b16 %v3067, %v3066
      %v3141 = vpack.c.b16 %v3069, %v3068
      %3214 = vmatpush.bf16.msra.mxu0 %v3077
      %3215 = vmatpush.bf16.msra.mxu0 %v3076
      %3216 = vmatpush.bf16.msra.mxu0 %v3075
      %3217 = vmatpush.bf16.msra.mxu0 %v3074
      %3218 = vmatpush.bf16.msra.mxu0 %v3073
      %3219 = vmatpush.bf16.msra.mxu0 %v3072
      %3220 = vmatpush.bf16.msra.mxu0 %v3071
      %3221 = vmatpush.bf16.msra.mxu0 %v3070
      %3222 = vmatmul.bf16.gmra.mxu0 %v2494
      %v3223 = vpop.f32.mrf.mxu0
      %v3224 = vadd.f32 0.0, %v3223
      %v3225 = vpop.f32.mrf.mxu0
      %v3226 = vadd.f32 0.0, %v3225
      %3227 = vmatmul.bf16.gmra.mxu0 %v2503
      %v3228 = vpop.f32.mrf.mxu0
      %v3229 = vadd.f32 0.0, %v3228
      %v3230 = vpop.f32.mrf.mxu0
      %v3231 = vadd.f32 0.0, %v3230
      %3232 = vmatmul.bf16.gmra.mxu0 %v2512
      %v3233 = vpop.f32.mrf.mxu0
      %v3234 = vadd.f32 0.0, %v3233
      %v3235 = vpop.f32.mrf.mxu0
      %v3236 = vadd.f32 0.0, %v3235
      %3237 = vmatmul.bf16.gmra.mxu0 %v2521
      %v3238 = vpop.f32.mrf.mxu0
      %v3239 = vadd.f32 0.0, %v3238
      %v3240 = vpop.f32.mrf.mxu0
      %v3241 = vadd.f32 0.0, %v3240
      %3242 = vmatmul.bf16.gmra.mxu0 %v2530
      %v3243 = vpop.f32.mrf.mxu0
      %v3244 = vadd.f32 0.0, %v3243
      %v3245 = vpop.f32.mrf.mxu0
      %v3246 = vadd.f32 0.0, %v3245
      %3247 = vmatmul.bf16.gmra.mxu0 %v2539
      %v3248 = vpop.f32.mrf.mxu0
      %v3249 = vadd.f32 0.0, %v3248
      %v3250 = vpop.f32.mrf.mxu0
      %v3251 = vadd.f32 0.0, %v3250
      %3252 = vmatmul.bf16.gmra.mxu0 %v2548
      %v3253 = vpop.f32.mrf.mxu0
      %v3254 = vadd.f32 0.0, %v3253
      %v3255 = vpop.f32.mrf.mxu0
      %v3256 = vadd.f32 0.0, %v3255
      %3257 = vmatmul.bf16.gmra.mxu0 %v2557
      %v3258 = vpop.f32.mrf.mxu0
      %v3259 = vadd.f32 0.0, %v3258
      %v3260 = vpop.f32.mrf.mxu0
      %v3261 = vadd.f32 0.0, %v3260
      %3262 = vmatmul.bf16.gmra.mxu0 %v2566
      %v3263 = vpop.f32.mrf.mxu0
      %v3264 = vadd.f32 0.0, %v3263
      %v3265 = vpop.f32.mrf.mxu0
      %v3266 = vadd.f32 0.0, %v3265
      %3267 = vmatmul.bf16.gmra.mxu0 %v2575
      %v3268 = vpop.f32.mrf.mxu0
      %v3269 = vadd.f32 0.0, %v3268
      %v3270 = vpop.f32.mrf.mxu0
      %v3271 = vadd.f32 0.0, %v3270
      %3272 = vmatmul.bf16.gmra.mxu0 %v2584
      %v3273 = vpop.f32.mrf.mxu0
      %v3274 = vadd.f32 0.0, %v3273
      %v3275 = vpop.f32.mrf.mxu0
      %v3276 = vadd.f32 0.0, %v3275
      %3277 = vmatmul.bf16.gmra.mxu0 %v2593
      %v3278 = vpop.f32.mrf.mxu0
      %v3279 = vadd.f32 0.0, %v3278
      %v3280 = vpop.f32.mrf.mxu0
      %v3281 = vadd.f32 0.0, %v3280
      %3282 = vmatmul.bf16.gmra.mxu0 %v2602
      %v3283 = vpop.f32.mrf.mxu0
      %v3284 = vadd.f32 0.0, %v3283
      %v3285 = vpop.f32.mrf.mxu0
      %v3286 = vadd.f32 0.0, %v3285
      %3287 = vmatmul.bf16.gmra.mxu0 %v2611
      %v3288 = vpop.f32.mrf.mxu0
      %v3289 = vadd.f32 0.0, %v3288
      %v3290 = vpop.f32.mrf.mxu0
      %v3291 = vadd.f32 0.0, %v3290
      %3292 = vmatmul.bf16.gmra.mxu0 %v2620
      %v3293 = vpop.f32.mrf.mxu0
      %v3294 = vadd.f32 0.0, %v3293
      %v3295 = vpop.f32.mrf.mxu0
      %v3296 = vadd.f32 0.0, %v3295
      %3297 = vmatmul.bf16.gmra.mxu0 %v2629
      %v3298 = vpop.f32.mrf.mxu0
      %v3299 = vadd.f32 0.0, %v3298
      %v3300 = vpop.f32.mrf.mxu0
      %v3301 = vadd.f32 0.0, %v3300
      %3302 = vdwg.mxu0
      %3303 = vmatpush.bf16.msra.mxu0 %v3085
      %3304 = vmatpush.bf16.msra.mxu0 %v3084
      %3305 = vmatpush.bf16.msra.mxu0 %v3083
      %3306 = vmatpush.bf16.msra.mxu0 %v3082
      %3307 = vmatpush.bf16.msra.mxu0 %v3081
      %3308 = vmatpush.bf16.msra.mxu0 %v3080
      %3309 = vmatpush.bf16.msra.mxu0 %v3079
      %3310 = vmatpush.bf16.msra.mxu0 %v3078
      %3311 = vmatmul.bf16.gmra.mxu0 %v2495
      %v3312 = vpop.f32.mrf.mxu0
      %v3313 = vadd.f32 %v3224, %v3312
      %v3314 = vpop.f32.mrf.mxu0
      %v3315 = vadd.f32 %v3226, %v3314
      %3316 = vmatmul.bf16.gmra.mxu0 %v2504
      %v3317 = vpop.f32.mrf.mxu0
      %v3318 = vadd.f32 %v3229, %v3317
      %v3319 = vpop.f32.mrf.mxu0
      %v3320 = vadd.f32 %v3231, %v3319
      %3321 = vmatmul.bf16.gmra.mxu0 %v2513
      %v3322 = vpop.f32.mrf.mxu0
      %v3323 = vadd.f32 %v3234, %v3322
      %v3324 = vpop.f32.mrf.mxu0
      %v3325 = vadd.f32 %v3236, %v3324
      %3326 = vmatmul.bf16.gmra.mxu0 %v2522
      %v3327 = vpop.f32.mrf.mxu0
      %v3328 = vadd.f32 %v3239, %v3327
      %v3329 = vpop.f32.mrf.mxu0
      %v3330 = vadd.f32 %v3241, %v3329
      %3331 = vmatmul.bf16.gmra.mxu0 %v2531
      %v3332 = vpop.f32.mrf.mxu0
      %v3333 = vadd.f32 %v3244, %v3332
      %v3334 = vpop.f32.mrf.mxu0
      %v3335 = vadd.f32 %v3246, %v3334
      %3336 = vmatmul.bf16.gmra.mxu0 %v2540
      %v3337 = vpop.f32.mrf.mxu0
      %v3338 = vadd.f32 %v3249, %v3337
      %v3339 = vpop.f32.mrf.mxu0
      %v3340 = vadd.f32 %v3251, %v3339
      %3341 = vmatmul.bf16.gmra.mxu0 %v2549
      %v3342 = vpop.f32.mrf.mxu0
      %v3343 = vadd.f32 %v3254, %v3342
      %v3344 = vpop.f32.mrf.mxu0
      %v3345 = vadd.f32 %v3256, %v3344
      %3346 = vmatmul.bf16.gmra.mxu0 %v2558
      %v3347 = vpop.f32.mrf.mxu0
      %v3348 = vadd.f32 %v3259, %v3347
      %v3349 = vpop.f32.mrf.mxu0
      %v3350 = vadd.f32 %v3261, %v3349
      %3351 = vmatmul.bf16.gmra.mxu0 %v2567
      %v3352 = vpop.f32.mrf.mxu0
      %v3353 = vadd.f32 %v3264, %v3352
      %v3354 = vpop.f32.mrf.mxu0
      %v3355 = vadd.f32 %v3266, %v3354
      %3356 = vmatmul.bf16.gmra.mxu0 %v2576
      %v3357 = vpop.f32.mrf.mxu0
      %v3358 = vadd.f32 %v3269, %v3357
      %v3359 = vpop.f32.mrf.mxu0
      %v3360 = vadd.f32 %v3271, %v3359
      %3361 = vmatmul.bf16.gmra.mxu0 %v2585
      %v3362 = vpop.f32.mrf.mxu0
      %v3363 = vadd.f32 %v3274, %v3362
      %v3364 = vpop.f32.mrf.mxu0
      %v3365 = vadd.f32 %v3276, %v3364
      %3366 = vmatmul.bf16.gmra.mxu0 %v2594
      %v3367 = vpop.f32.mrf.mxu0
      %v3368 = vadd.f32 %v3279, %v3367
      %v3369 = vpop.f32.mrf.mxu0
      %v3370 = vadd.f32 %v3281, %v3369
      %3371 = vmatmul.bf16.gmra.mxu0 %v2603
      %v3372 = vpop.f32.mrf.mxu0
      %v3373 = vadd.f32 %v3284, %v3372
      %v3374 = vpop.f32.mrf.mxu0
      %v3375 = vadd.f32 %v3286, %v3374
      %3376 = vmatmul.bf16.gmra.mxu0 %v2612
      %v3377 = vpop.f32.mrf.mxu0
      %v3378 = vadd.f32 %v3289, %v3377
      %v3379 = vpop.f32.mrf.mxu0
      %v3380 = vadd.f32 %v3291, %v3379
      %3381 = vmatmul.bf16.gmra.mxu0 %v2621
      %v3382 = vpop.f32.mrf.mxu0
      %v3383 = vadd.f32 %v3294, %v3382
      %v3384 = vpop.f32.mrf.mxu0
      %v3385 = vadd.f32 %v3296, %v3384
      %3386 = vmatmul.bf16.gmra.mxu0 %v2630
      %v3387 = vpop.f32.mrf.mxu0
      %v3388 = vadd.f32 %v3299, %v3387
      %v3389 = vpop.f32.mrf.mxu0
      %v3390 = vadd.f32 %v3301, %v3389
      %3391 = vdwg.mxu0
      %3392 = vmatpush.bf16.msra.mxu0 %v3093
      %3393 = vmatpush.bf16.msra.mxu0 %v3092
      %3394 = vmatpush.bf16.msra.mxu0 %v3091
      %3395 = vmatpush.bf16.msra.mxu0 %v3090
      %3396 = vmatpush.bf16.msra.mxu0 %v3089
      %3397 = vmatpush.bf16.msra.mxu0 %v3088
      %3398 = vmatpush.bf16.msra.mxu0 %v3087
      %3399 = vmatpush.bf16.msra.mxu0 %v3086
      %3400 = vmatmul.bf16.gmra.mxu0 %v2496
      %v3401 = vpop.f32.mrf.mxu0
      %v3402 = vadd.f32 %v3313, %v3401
      %v3403 = vpop.f32.mrf.mxu0
      %v3404 = vadd.f32 %v3315, %v3403
      %3405 = vmatmul.bf16.gmra.mxu0 %v2505
      %v3406 = vpop.f32.mrf.mxu0
      %v3407 = vadd.f32 %v3318, %v3406
      %v3408 = vpop.f32.mrf.mxu0
      %v3409 = vadd.f32 %v3320, %v3408
      %3410 = vmatmul.bf16.gmra.mxu0 %v2514
      %v3411 = vpop.f32.mrf.mxu0
      %v3412 = vadd.f32 %v3323, %v3411
      %v3413 = vpop.f32.mrf.mxu0
      %v3414 = vadd.f32 %v3325, %v3413
      %3415 = vmatmul.bf16.gmra.mxu0 %v2523
      %v3416 = vpop.f32.mrf.mxu0
      %v3417 = vadd.f32 %v3328, %v3416
      %v3418 = vpop.f32.mrf.mxu0
      %v3419 = vadd.f32 %v3330, %v3418
      %3420 = vmatmul.bf16.gmra.mxu0 %v2532
      %v3421 = vpop.f32.mrf.mxu0
      %v3422 = vadd.f32 %v3333, %v3421
      %v3423 = vpop.f32.mrf.mxu0
      %v3424 = vadd.f32 %v3335, %v3423
      %3425 = vmatmul.bf16.gmra.mxu0 %v2541
      %v3426 = vpop.f32.mrf.mxu0
      %v3427 = vadd.f32 %v3338, %v3426
      %v3428 = vpop.f32.mrf.mxu0
      %v3429 = vadd.f32 %v3340, %v3428
      %3430 = vmatmul.bf16.gmra.mxu0 %v2550
      %v3431 = vpop.f32.mrf.mxu0
      %v3432 = vadd.f32 %v3343, %v3431
      %v3433 = vpop.f32.mrf.mxu0
      %v3434 = vadd.f32 %v3345, %v3433
      %3435 = vmatmul.bf16.gmra.mxu0 %v2559
      %v3436 = vpop.f32.mrf.mxu0
      %v3437 = vadd.f32 %v3348, %v3436
      %v3438 = vpop.f32.mrf.mxu0
      %v3439 = vadd.f32 %v3350, %v3438
      %3440 = vmatmul.bf16.gmra.mxu0 %v2568
      %v3441 = vpop.f32.mrf.mxu0
      %v3442 = vadd.f32 %v3353, %v3441
      %v3443 = vpop.f32.mrf.mxu0
      %v3444 = vadd.f32 %v3355, %v3443
      %3445 = vmatmul.bf16.gmra.mxu0 %v2577
      %v3446 = vpop.f32.mrf.mxu0
      %v3447 = vadd.f32 %v3358, %v3446
      %v3448 = vpop.f32.mrf.mxu0
      %v3449 = vadd.f32 %v3360, %v3448
      %3450 = vmatmul.bf16.gmra.mxu0 %v2586
      %v3451 = vpop.f32.mrf.mxu0
      %v3452 = vadd.f32 %v3363, %v3451
      %v3453 = vpop.f32.mrf.mxu0
      %v3454 = vadd.f32 %v3365, %v3453
      %3455 = vmatmul.bf16.gmra.mxu0 %v2595
      %v3456 = vpop.f32.mrf.mxu0
      %v3457 = vadd.f32 %v3368, %v3456
      %v3458 = vpop.f32.mrf.mxu0
      %v3459 = vadd.f32 %v3370, %v3458
      %3460 = vmatmul.bf16.gmra.mxu0 %v2604
      %v3461 = vpop.f32.mrf.mxu0
      %v3462 = vadd.f32 %v3373, %v3461
      %v3463 = vpop.f32.mrf.mxu0
      %v3464 = vadd.f32 %v3375, %v3463
      %3465 = vmatmul.bf16.gmra.mxu0 %v2613
      %v3466 = vpop.f32.mrf.mxu0
      %v3467 = vadd.f32 %v3378, %v3466
      %v3468 = vpop.f32.mrf.mxu0
      %v3469 = vadd.f32 %v3380, %v3468
      %3470 = vmatmul.bf16.gmra.mxu0 %v2622
      %v3471 = vpop.f32.mrf.mxu0
      %v3472 = vadd.f32 %v3383, %v3471
      %v3473 = vpop.f32.mrf.mxu0
      %v3474 = vadd.f32 %v3385, %v3473
      %3475 = vmatmul.bf16.gmra.mxu0 %v2631
      %v3476 = vpop.f32.mrf.mxu0
      %v3477 = vadd.f32 %v3388, %v3476
      %v3478 = vpop.f32.mrf.mxu0
      %v3479 = vadd.f32 %v3390, %v3478
      %3480 = vdwg.mxu0
      %3481 = vmatpush.bf16.msra.mxu0 %v3101
      %3482 = vmatpush.bf16.msra.mxu0 %v3100
      %3483 = vmatpush.bf16.msra.mxu0 %v3099
      %3484 = vmatpush.bf16.msra.mxu0 %v3098
      %3485 = vmatpush.bf16.msra.mxu0 %v3097
      %3486 = vmatpush.bf16.msra.mxu0 %v3096
      %3487 = vmatpush.bf16.msra.mxu0 %v3095
      %3488 = vmatpush.bf16.msra.mxu0 %v3094
      %3489 = vmatmul.bf16.gmra.mxu0 %v2497
      %v3490 = vpop.f32.mrf.mxu0
      %v3491 = vadd.f32 %v3402, %v3490
      %v3492 = vpop.f32.mrf.mxu0
      %v3493 = vadd.f32 %v3404, %v3492
      %3494 = vmatmul.bf16.gmra.mxu0 %v2506
      %v3495 = vpop.f32.mrf.mxu0
      %v3496 = vadd.f32 %v3407, %v3495
      %v3497 = vpop.f32.mrf.mxu0
      %v3498 = vadd.f32 %v3409, %v3497
      %3499 = vmatmul.bf16.gmra.mxu0 %v2515
      %v3500 = vpop.f32.mrf.mxu0
      %v3501 = vadd.f32 %v3412, %v3500
      %v3502 = vpop.f32.mrf.mxu0
      %v3503 = vadd.f32 %v3414, %v3502
      %3504 = vmatmul.bf16.gmra.mxu0 %v2524
      %v3505 = vpop.f32.mrf.mxu0
      %v3506 = vadd.f32 %v3417, %v3505
      %v3507 = vpop.f32.mrf.mxu0
      %v3508 = vadd.f32 %v3419, %v3507
      %3509 = vmatmul.bf16.gmra.mxu0 %v2533
      %v3510 = vpop.f32.mrf.mxu0
      %v3511 = vadd.f32 %v3422, %v3510
      %v3512 = vpop.f32.mrf.mxu0
      %v3513 = vadd.f32 %v3424, %v3512
      %3514 = vmatmul.bf16.gmra.mxu0 %v2542
      %v3515 = vpop.f32.mrf.mxu0
      %v3516 = vadd.f32 %v3427, %v3515
      %v3517 = vpop.f32.mrf.mxu0
      %v3518 = vadd.f32 %v3429, %v3517
      %3519 = vmatmul.bf16.gmra.mxu0 %v2551
      %v3520 = vpop.f32.mrf.mxu0
      %v3521 = vadd.f32 %v3432, %v3520
      %v3522 = vpop.f32.mrf.mxu0
      %v3523 = vadd.f32 %v3434, %v3522
      %3524 = vmatmul.bf16.gmra.mxu0 %v2560
      %v3525 = vpop.f32.mrf.mxu0
      %v3526 = vadd.f32 %v3437, %v3525
      %v3527 = vpop.f32.mrf.mxu0
      %v3528 = vadd.f32 %v3439, %v3527
      %3529 = vmatmul.bf16.gmra.mxu0 %v2569
      %v3530 = vpop.f32.mrf.mxu0
      %v3531 = vadd.f32 %v3442, %v3530
      %v3532 = vpop.f32.mrf.mxu0
      %v3533 = vadd.f32 %v3444, %v3532
      %3534 = vmatmul.bf16.gmra.mxu0 %v2578
      %v3535 = vpop.f32.mrf.mxu0
      %v3536 = vadd.f32 %v3447, %v3535
      %v3537 = vpop.f32.mrf.mxu0
      %v3538 = vadd.f32 %v3449, %v3537
      %3539 = vmatmul.bf16.gmra.mxu0 %v2587
      %v3540 = vpop.f32.mrf.mxu0
      %v3541 = vadd.f32 %v3452, %v3540
      %v3542 = vpop.f32.mrf.mxu0
      %v3543 = vadd.f32 %v3454, %v3542
      %3544 = vmatmul.bf16.gmra.mxu0 %v2596
      %v3545 = vpop.f32.mrf.mxu0
      %v3546 = vadd.f32 %v3457, %v3545
      %v3547 = vpop.f32.mrf.mxu0
      %v3548 = vadd.f32 %v3459, %v3547
      %3549 = vmatmul.bf16.gmra.mxu0 %v2605
      %v3550 = vpop.f32.mrf.mxu0
      %v3551 = vadd.f32 %v3462, %v3550
      %v3552 = vpop.f32.mrf.mxu0
      %v3553 = vadd.f32 %v3464, %v3552
      %3554 = vmatmul.bf16.gmra.mxu0 %v2614
      %v3555 = vpop.f32.mrf.mxu0
      %v3556 = vadd.f32 %v3467, %v3555
      %v3557 = vpop.f32.mrf.mxu0
      %v3558 = vadd.f32 %v3469, %v3557
      %3559 = vmatmul.bf16.gmra.mxu0 %v2623
      %v3560 = vpop.f32.mrf.mxu0
      %v3561 = vadd.f32 %v3472, %v3560
      %v3562 = vpop.f32.mrf.mxu0
      %v3563 = vadd.f32 %v3474, %v3562
      %3564 = vmatmul.bf16.gmra.mxu0 %v2632
      %v3565 = vpop.f32.mrf.mxu0
      %v3566 = vadd.f32 %v3477, %v3565
      %v3567 = vpop.f32.mrf.mxu0
      %v3568 = vadd.f32 %v3479, %v3567
      %3569 = vdwg.mxu0
      %3570 = vmatpush.bf16.msra.mxu0 %v3109
      %3571 = vmatpush.bf16.msra.mxu0 %v3108
      %3572 = vmatpush.bf16.msra.mxu0 %v3107
      %3573 = vmatpush.bf16.msra.mxu0 %v3106
      %3574 = vmatpush.bf16.msra.mxu0 %v3105
      %3575 = vmatpush.bf16.msra.mxu0 %v3104
      %3576 = vmatpush.bf16.msra.mxu0 %v3103
      %3577 = vmatpush.bf16.msra.mxu0 %v3102
      %3578 = vmatmul.bf16.gmra.mxu0 %v2498
      %v3579 = vpop.f32.mrf.mxu0
      %v3580 = vadd.f32 %v3491, %v3579
      %v3581 = vpop.f32.mrf.mxu0
      %v3582 = vadd.f32 %v3493, %v3581
      %3583 = vmatmul.bf16.gmra.mxu0 %v2507
      %v3584 = vpop.f32.mrf.mxu0
      %v3585 = vadd.f32 %v3496, %v3584
      %v3586 = vpop.f32.mrf.mxu0
      %v3587 = vadd.f32 %v3498, %v3586
      %3588 = vmatmul.bf16.gmra.mxu0 %v2516
      %v3589 = vpop.f32.mrf.mxu0
      %v3590 = vadd.f32 %v3501, %v3589
      %v3591 = vpop.f32.mrf.mxu0
      %v3592 = vadd.f32 %v3503, %v3591
      %3593 = vmatmul.bf16.gmra.mxu0 %v2525
      %v3594 = vpop.f32.mrf.mxu0
      %v3595 = vadd.f32 %v3506, %v3594
      %v3596 = vpop.f32.mrf.mxu0
      %v3597 = vadd.f32 %v3508, %v3596
      %3598 = vmatmul.bf16.gmra.mxu0 %v2534
      %v3599 = vpop.f32.mrf.mxu0
      %v3600 = vadd.f32 %v3511, %v3599
      %v3601 = vpop.f32.mrf.mxu0
      %v3602 = vadd.f32 %v3513, %v3601
      %3603 = vmatmul.bf16.gmra.mxu0 %v2543
      %v3604 = vpop.f32.mrf.mxu0
      %v3605 = vadd.f32 %v3516, %v3604
      %v3606 = vpop.f32.mrf.mxu0
      %v3607 = vadd.f32 %v3518, %v3606
      %3608 = vmatmul.bf16.gmra.mxu0 %v2552
      %v3609 = vpop.f32.mrf.mxu0
      %v3610 = vadd.f32 %v3521, %v3609
      %v3611 = vpop.f32.mrf.mxu0
      %v3612 = vadd.f32 %v3523, %v3611
      %3613 = vmatmul.bf16.gmra.mxu0 %v2561
      %v3614 = vpop.f32.mrf.mxu0
      %v3615 = vadd.f32 %v3526, %v3614
      %v3616 = vpop.f32.mrf.mxu0
      %v3617 = vadd.f32 %v3528, %v3616
      %3618 = vmatmul.bf16.gmra.mxu0 %v2570
      %v3619 = vpop.f32.mrf.mxu0
      %v3620 = vadd.f32 %v3531, %v3619
      %v3621 = vpop.f32.mrf.mxu0
      %v3622 = vadd.f32 %v3533, %v3621
      %3623 = vmatmul.bf16.gmra.mxu0 %v2579
      %v3624 = vpop.f32.mrf.mxu0
      %v3625 = vadd.f32 %v3536, %v3624
      %v3626 = vpop.f32.mrf.mxu0
      %v3627 = vadd.f32 %v3538, %v3626
      %3628 = vmatmul.bf16.gmra.mxu0 %v2588
      %v3629 = vpop.f32.mrf.mxu0
      %v3630 = vadd.f32 %v3541, %v3629
      %v3631 = vpop.f32.mrf.mxu0
      %v3632 = vadd.f32 %v3543, %v3631
      %3633 = vmatmul.bf16.gmra.mxu0 %v2597
      %v3634 = vpop.f32.mrf.mxu0
      %v3635 = vadd.f32 %v3546, %v3634
      %v3636 = vpop.f32.mrf.mxu0
      %v3637 = vadd.f32 %v3548, %v3636
      %3638 = vmatmul.bf16.gmra.mxu0 %v2606
      %v3639 = vpop.f32.mrf.mxu0
      %v3640 = vadd.f32 %v3551, %v3639
      %v3641 = vpop.f32.mrf.mxu0
      %v3642 = vadd.f32 %v3553, %v3641
      %3643 = vmatmul.bf16.gmra.mxu0 %v2615
      %v3644 = vpop.f32.mrf.mxu0
      %v3645 = vadd.f32 %v3556, %v3644
      %v3646 = vpop.f32.mrf.mxu0
      %v3647 = vadd.f32 %v3558, %v3646
      %3648 = vmatmul.bf16.gmra.mxu0 %v2624
      %v3649 = vpop.f32.mrf.mxu0
      %v3650 = vadd.f32 %v3561, %v3649
      %v3651 = vpop.f32.mrf.mxu0
      %v3652 = vadd.f32 %v3563, %v3651
      %3653 = vmatmul.bf16.gmra.mxu0 %v2633
      %v3654 = vpop.f32.mrf.mxu0
      %v3655 = vadd.f32 %v3566, %v3654
      %v3656 = vpop.f32.mrf.mxu0
      %v3657 = vadd.f32 %v3568, %v3656
      %3658 = vdwg.mxu0
      %3659 = vmatpush.bf16.msra.mxu0 %v3117
      %3660 = vmatpush.bf16.msra.mxu0 %v3116
      %3661 = vmatpush.bf16.msra.mxu0 %v3115
      %3662 = vmatpush.bf16.msra.mxu0 %v3114
      %3663 = vmatpush.bf16.msra.mxu0 %v3113
      %3664 = vmatpush.bf16.msra.mxu0 %v3112
      %3665 = vmatpush.bf16.msra.mxu0 %v3111
      %3666 = vmatpush.bf16.msra.mxu0 %v3110
      %3667 = vmatmul.bf16.gmra.mxu0 %v2499
      %v3668 = vpop.f32.mrf.mxu0
      %v3669 = vadd.f32 %v3580, %v3668
      %v3670 = vpop.f32.mrf.mxu0
      %v3671 = vadd.f32 %v3582, %v3670
      %3672 = vmatmul.bf16.gmra.mxu0 %v2508
      %v3673 = vpop.f32.mrf.mxu0
      %v3674 = vadd.f32 %v3585, %v3673
      %v3675 = vpop.f32.mrf.mxu0
      %v3676 = vadd.f32 %v3587, %v3675
      %3677 = vmatmul.bf16.gmra.mxu0 %v2517
      %v3678 = vpop.f32.mrf.mxu0
      %v3679 = vadd.f32 %v3590, %v3678
      %v3680 = vpop.f32.mrf.mxu0
      %v3681 = vadd.f32 %v3592, %v3680
      %3682 = vmatmul.bf16.gmra.mxu0 %v2526
      %v3683 = vpop.f32.mrf.mxu0
      %v3684 = vadd.f32 %v3595, %v3683
      %v3685 = vpop.f32.mrf.mxu0
      %v3686 = vadd.f32 %v3597, %v3685
      %3687 = vmatmul.bf16.gmra.mxu0 %v2535
      %v3688 = vpop.f32.mrf.mxu0
      %v3689 = vadd.f32 %v3600, %v3688
      %v3690 = vpop.f32.mrf.mxu0
      %v3691 = vadd.f32 %v3602, %v3690
      %3692 = vmatmul.bf16.gmra.mxu0 %v2544
      %v3693 = vpop.f32.mrf.mxu0
      %v3694 = vadd.f32 %v3605, %v3693
      %v3695 = vpop.f32.mrf.mxu0
      %v3696 = vadd.f32 %v3607, %v3695
      %3697 = vmatmul.bf16.gmra.mxu0 %v2553
      %v3698 = vpop.f32.mrf.mxu0
      %v3699 = vadd.f32 %v3610, %v3698
      %v3700 = vpop.f32.mrf.mxu0
      %v3701 = vadd.f32 %v3612, %v3700
      %3702 = vmatmul.bf16.gmra.mxu0 %v2562
      %v3703 = vpop.f32.mrf.mxu0
      %v3704 = vadd.f32 %v3615, %v3703
      %v3705 = vpop.f32.mrf.mxu0
      %v3706 = vadd.f32 %v3617, %v3705
      %3707 = vmatmul.bf16.gmra.mxu0 %v2571
      %v3708 = vpop.f32.mrf.mxu0
      %v3709 = vadd.f32 %v3620, %v3708
      %v3710 = vpop.f32.mrf.mxu0
      %v3711 = vadd.f32 %v3622, %v3710
      %3712 = vmatmul.bf16.gmra.mxu0 %v2580
      %v3713 = vpop.f32.mrf.mxu0
      %v3714 = vadd.f32 %v3625, %v3713
      %v3715 = vpop.f32.mrf.mxu0
      %v3716 = vadd.f32 %v3627, %v3715
      %3717 = vmatmul.bf16.gmra.mxu0 %v2589
      %v3718 = vpop.f32.mrf.mxu0
      %v3719 = vadd.f32 %v3630, %v3718
      %v3720 = vpop.f32.mrf.mxu0
      %v3721 = vadd.f32 %v3632, %v3720
      %3722 = vmatmul.bf16.gmra.mxu0 %v2598
      %v3723 = vpop.f32.mrf.mxu0
      %v3724 = vadd.f32 %v3635, %v3723
      %v3725 = vpop.f32.mrf.mxu0
      %v3726 = vadd.f32 %v3637, %v3725
      %3727 = vmatmul.bf16.gmra.mxu0 %v2607
      %v3728 = vpop.f32.mrf.mxu0
      %v3729 = vadd.f32 %v3640, %v3728
      %v3730 = vpop.f32.mrf.mxu0
      %v3731 = vadd.f32 %v3642, %v3730
      %3732 = vmatmul.bf16.gmra.mxu0 %v2616
      %v3733 = vpop.f32.mrf.mxu0
      %v3734 = vadd.f32 %v3645, %v3733
      %v3735 = vpop.f32.mrf.mxu0
      %v3736 = vadd.f32 %v3647, %v3735
      %3737 = vmatmul.bf16.gmra.mxu0 %v2625
      %v3738 = vpop.f32.mrf.mxu0
      %v3739 = vadd.f32 %v3650, %v3738
      %v3740 = vpop.f32.mrf.mxu0
      %v3741 = vadd.f32 %v3652, %v3740
      %3742 = vmatmul.bf16.gmra.mxu0 %v2634
      %v3743 = vpop.f32.mrf.mxu0
      %v3744 = vadd.f32 %v3655, %v3743
      %v3745 = vpop.f32.mrf.mxu0
      %v3746 = vadd.f32 %v3657, %v3745
      %3747 = vdwg.mxu0
      %3748 = vmatpush.bf16.msra.mxu0 %v3125
      %3749 = vmatpush.bf16.msra.mxu0 %v3124
      %3750 = vmatpush.bf16.msra.mxu0 %v3123
      %3751 = vmatpush.bf16.msra.mxu0 %v3122
      %3752 = vmatpush.bf16.msra.mxu0 %v3121
      %3753 = vmatpush.bf16.msra.mxu0 %v3120
      %3754 = vmatpush.bf16.msra.mxu0 %v3119
      %3755 = vmatpush.bf16.msra.mxu0 %v3118
      %3756 = vmatmul.bf16.gmra.mxu0 %v2500
      %v3757 = vpop.f32.mrf.mxu0
      %v3758 = vadd.f32 %v3669, %v3757
      %v3759 = vpop.f32.mrf.mxu0
      %v3760 = vadd.f32 %v3671, %v3759
      %3761 = vmatmul.bf16.gmra.mxu0 %v2509
      %v3762 = vpop.f32.mrf.mxu0
      %v3763 = vadd.f32 %v3674, %v3762
      %v3764 = vpop.f32.mrf.mxu0
      %v3765 = vadd.f32 %v3676, %v3764
      %3766 = vmatmul.bf16.gmra.mxu0 %v2518
      %v3767 = vpop.f32.mrf.mxu0
      %v3768 = vadd.f32 %v3679, %v3767
      %v3769 = vpop.f32.mrf.mxu0
      %v3770 = vadd.f32 %v3681, %v3769
      %3771 = vmatmul.bf16.gmra.mxu0 %v2527
      %v3772 = vpop.f32.mrf.mxu0
      %v3773 = vadd.f32 %v3684, %v3772
      %v3774 = vpop.f32.mrf.mxu0
      %v3775 = vadd.f32 %v3686, %v3774
      %3776 = vmatmul.bf16.gmra.mxu0 %v2536
      %v3777 = vpop.f32.mrf.mxu0
      %v3778 = vadd.f32 %v3689, %v3777
      %v3779 = vpop.f32.mrf.mxu0
      %v3780 = vadd.f32 %v3691, %v3779
      %3781 = vmatmul.bf16.gmra.mxu0 %v2545
      %v3782 = vpop.f32.mrf.mxu0
      %v3783 = vadd.f32 %v3694, %v3782
      %v3784 = vpop.f32.mrf.mxu0
      %v3785 = vadd.f32 %v3696, %v3784
      %3786 = vmatmul.bf16.gmra.mxu0 %v2554
      %v3787 = vpop.f32.mrf.mxu0
      %v3788 = vadd.f32 %v3699, %v3787
      %v3789 = vpop.f32.mrf.mxu0
      %v3790 = vadd.f32 %v3701, %v3789
      %3791 = vmatmul.bf16.gmra.mxu0 %v2563
      %v3792 = vpop.f32.mrf.mxu0
      %v3793 = vadd.f32 %v3704, %v3792
      %v3794 = vpop.f32.mrf.mxu0
      %v3795 = vadd.f32 %v3706, %v3794
      %3796 = vmatmul.bf16.gmra.mxu0 %v2572
      %v3797 = vpop.f32.mrf.mxu0
      %v3798 = vadd.f32 %v3709, %v3797
      %v3799 = vpop.f32.mrf.mxu0
      %v3800 = vadd.f32 %v3711, %v3799
      %3801 = vmatmul.bf16.gmra.mxu0 %v2581
      %v3802 = vpop.f32.mrf.mxu0
      %v3803 = vadd.f32 %v3714, %v3802
      %v3804 = vpop.f32.mrf.mxu0
      %v3805 = vadd.f32 %v3716, %v3804
      %3806 = vmatmul.bf16.gmra.mxu0 %v2590
      %v3807 = vpop.f32.mrf.mxu0
      %v3808 = vadd.f32 %v3719, %v3807
      %v3809 = vpop.f32.mrf.mxu0
      %v3810 = vadd.f32 %v3721, %v3809
      %3811 = vmatmul.bf16.gmra.mxu0 %v2599
      %v3812 = vpop.f32.mrf.mxu0
      %v3813 = vadd.f32 %v3724, %v3812
      %v3814 = vpop.f32.mrf.mxu0
      %v3815 = vadd.f32 %v3726, %v3814
      %3816 = vmatmul.bf16.gmra.mxu0 %v2608
      %v3817 = vpop.f32.mrf.mxu0
      %v3818 = vadd.f32 %v3729, %v3817
      %v3819 = vpop.f32.mrf.mxu0
      %v3820 = vadd.f32 %v3731, %v3819
      %3821 = vmatmul.bf16.gmra.mxu0 %v2617
      %v3822 = vpop.f32.mrf.mxu0
      %v3823 = vadd.f32 %v3734, %v3822
      %v3824 = vpop.f32.mrf.mxu0
      %v3825 = vadd.f32 %v3736, %v3824
      %3826 = vmatmul.bf16.gmra.mxu0 %v2626
      %v3827 = vpop.f32.mrf.mxu0
      %v3828 = vadd.f32 %v3739, %v3827
      %v3829 = vpop.f32.mrf.mxu0
      %v3830 = vadd.f32 %v3741, %v3829
      %3831 = vmatmul.bf16.gmra.mxu0 %v2635
      %v3832 = vpop.f32.mrf.mxu0
      %v3833 = vadd.f32 %v3744, %v3832
      %v3834 = vpop.f32.mrf.mxu0
      %v3835 = vadd.f32 %v3746, %v3834
      %3836 = vdwg.mxu0
      %3837 = vmatpush.bf16.msra.mxu0 %v3133
      %3838 = vmatpush.bf16.msra.mxu0 %v3132
      %3839 = vmatpush.bf16.msra.mxu0 %v3131
      %3840 = vmatpush.bf16.msra.mxu0 %v3130
      %3841 = vmatpush.bf16.msra.mxu0 %v3129
      %3842 = vmatpush.bf16.msra.mxu0 %v3128
      %3843 = vmatpush.bf16.msra.mxu0 %v3127
      %3844 = vmatpush.bf16.msra.mxu0 %v3126
      %3845 = vmatmul.bf16.gmra.mxu0 %v2501
      %v3846 = vpop.f32.mrf.mxu0
      %v3847 = vadd.f32 %v3758, %v3846
      %v3848 = vpop.f32.mrf.mxu0
      %v3849 = vadd.f32 %v3760, %v3848
      %3850 = vmatmul.bf16.gmra.mxu0 %v2510
      %v3851 = vpop.f32.mrf.mxu0
      %v3852 = vadd.f32 %v3763, %v3851
      %v3853 = vpop.f32.mrf.mxu0
      %v3854 = vadd.f32 %v3765, %v3853
      %3855 = vmatmul.bf16.gmra.mxu0 %v2519
      %v3856 = vpop.f32.mrf.mxu0
      %v3857 = vadd.f32 %v3768, %v3856
      %v3858 = vpop.f32.mrf.mxu0
      %v3859 = vadd.f32 %v3770, %v3858
      %3860 = vmatmul.bf16.gmra.mxu0 %v2528
      %v3861 = vpop.f32.mrf.mxu0
      %v3862 = vadd.f32 %v3773, %v3861
      %v3863 = vpop.f32.mrf.mxu0
      %v3864 = vadd.f32 %v3775, %v3863
      %3865 = vmatmul.bf16.gmra.mxu0 %v2537
      %v3866 = vpop.f32.mrf.mxu0
      %v3867 = vadd.f32 %v3778, %v3866
      %v3868 = vpop.f32.mrf.mxu0
      %v3869 = vadd.f32 %v3780, %v3868
      %3870 = vmatmul.bf16.gmra.mxu0 %v2546
      %v3871 = vpop.f32.mrf.mxu0
      %v3872 = vadd.f32 %v3783, %v3871
      %v3873 = vpop.f32.mrf.mxu0
      %v3874 = vadd.f32 %v3785, %v3873
      %3875 = vmatmul.bf16.gmra.mxu0 %v2555
      %v3876 = vpop.f32.mrf.mxu0
      %v3877 = vadd.f32 %v3788, %v3876
      %v3878 = vpop.f32.mrf.mxu0
      %v3879 = vadd.f32 %v3790, %v3878
      %3880 = vmatmul.bf16.gmra.mxu0 %v2564
      %v3881 = vpop.f32.mrf.mxu0
      %v3882 = vadd.f32 %v3793, %v3881
      %v3883 = vpop.f32.mrf.mxu0
      %v3884 = vadd.f32 %v3795, %v3883
      %3885 = vmatmul.bf16.gmra.mxu0 %v2573
      %v3886 = vpop.f32.mrf.mxu0
      %v3887 = vadd.f32 %v3798, %v3886
      %v3888 = vpop.f32.mrf.mxu0
      %v3889 = vadd.f32 %v3800, %v3888
      %3890 = vmatmul.bf16.gmra.mxu0 %v2582
      %v3891 = vpop.f32.mrf.mxu0
      %v3892 = vadd.f32 %v3803, %v3891
      %v3893 = vpop.f32.mrf.mxu0
      %v3894 = vadd.f32 %v3805, %v3893
      %3895 = vmatmul.bf16.gmra.mxu0 %v2591
      %v3896 = vpop.f32.mrf.mxu0
      %v3897 = vadd.f32 %v3808, %v3896
      %v3898 = vpop.f32.mrf.mxu0
      %v3899 = vadd.f32 %v3810, %v3898
      %3900 = vmatmul.bf16.gmra.mxu0 %v2600
      %v3901 = vpop.f32.mrf.mxu0
      %v3902 = vadd.f32 %v3813, %v3901
      %v3903 = vpop.f32.mrf.mxu0
      %v3904 = vadd.f32 %v3815, %v3903
      %3905 = vmatmul.bf16.gmra.mxu0 %v2609
      %v3906 = vpop.f32.mrf.mxu0
      %v3907 = vadd.f32 %v3818, %v3906
      %v3908 = vpop.f32.mrf.mxu0
      %v3909 = vadd.f32 %v3820, %v3908
      %3910 = vmatmul.bf16.gmra.mxu0 %v2618
      %v3911 = vpop.f32.mrf.mxu0
      %v3912 = vadd.f32 %v3823, %v3911
      %v3913 = vpop.f32.mrf.mxu0
      %v3914 = vadd.f32 %v3825, %v3913
      %3915 = vmatmul.bf16.gmra.mxu0 %v2627
      %v3916 = vpop.f32.mrf.mxu0
      %v3917 = vadd.f32 %v3828, %v3916
      %v3918 = vpop.f32.mrf.mxu0
      %v3919 = vadd.f32 %v3830, %v3918
      %3920 = vmatmul.bf16.gmra.mxu0 %v2636
      %v3921 = vpop.f32.mrf.mxu0
      %v3922 = vadd.f32 %v3833, %v3921
      %v3923 = vpop.f32.mrf.mxu0
      %v3924 = vadd.f32 %v3835, %v3923
      %3925 = vdwg.mxu0
      %3926 = vmatpush.bf16.msra.mxu0 %v3141
      %3927 = vmatpush.bf16.msra.mxu0 %v3140
      %3928 = vmatpush.bf16.msra.mxu0 %v3139
      %3929 = vmatpush.bf16.msra.mxu0 %v3138
      %3930 = vmatpush.bf16.msra.mxu0 %v3137
      %3931 = vmatpush.bf16.msra.mxu0 %v3136
      %3932 = vmatpush.bf16.msra.mxu0 %v3135
      %3933 = vmatpush.bf16.msra.mxu0 %v3134
      %3934 = vmatmul.bf16.gmra.mxu0 %v2502
      %v3935 = vpop.f32.mrf.mxu0
      %v3936 = vadd.f32 %v3847, %v3935
      %v3937 = vpop.f32.mrf.mxu0
      %v3938 = vadd.f32 %v3849, %v3937
      %3939 = vmatmul.bf16.gmra.mxu0 %v2511
      %v3940 = vpop.f32.mrf.mxu0
      %v3941 = vadd.f32 %v3852, %v3940
      %v3942 = vpop.f32.mrf.mxu0
      %v3943 = vadd.f32 %v3854, %v3942
      %3944 = vmatmul.bf16.gmra.mxu0 %v2520
      %v3945 = vpop.f32.mrf.mxu0
      %v3946 = vadd.f32 %v3857, %v3945
      %v3947 = vpop.f32.mrf.mxu0
      %v3948 = vadd.f32 %v3859, %v3947
      %3949 = vmatmul.bf16.gmra.mxu0 %v2529
      %v3950 = vpop.f32.mrf.mxu0
      %v3951 = vadd.f32 %v3862, %v3950
      %v3952 = vpop.f32.mrf.mxu0
      %v3953 = vadd.f32 %v3864, %v3952
      %3954 = vmatmul.bf16.gmra.mxu0 %v2538
      %v3955 = vpop.f32.mrf.mxu0
      %v3956 = vadd.f32 %v3867, %v3955
      %v3957 = vpop.f32.mrf.mxu0
      %v3958 = vadd.f32 %v3869, %v3957
      %3959 = vmatmul.bf16.gmra.mxu0 %v2547
      %v3960 = vpop.f32.mrf.mxu0
      %v3961 = vadd.f32 %v3872, %v3960
      %v3962 = vpop.f32.mrf.mxu0
      %v3963 = vadd.f32 %v3874, %v3962
      %3964 = vmatmul.bf16.gmra.mxu0 %v2556
      %v3965 = vpop.f32.mrf.mxu0
      %v3966 = vadd.f32 %v3877, %v3965
      %v3967 = vpop.f32.mrf.mxu0
      %v3968 = vadd.f32 %v3879, %v3967
      %3969 = vmatmul.bf16.gmra.mxu0 %v2565
      %v3970 = vpop.f32.mrf.mxu0
      %v3971 = vadd.f32 %v3882, %v3970
      %v3972 = vpop.f32.mrf.mxu0
      %v3973 = vadd.f32 %v3884, %v3972
      %3974 = vmatmul.bf16.gmra.mxu0 %v2574
      %v3975 = vpop.f32.mrf.mxu0
      %v3976 = vadd.f32 %v3887, %v3975
      %v3977 = vpop.f32.mrf.mxu0
      %v3978 = vadd.f32 %v3889, %v3977
      %3979 = vmatmul.bf16.gmra.mxu0 %v2583
      %v3980 = vpop.f32.mrf.mxu0
      %v3981 = vadd.f32 %v3892, %v3980
      %v3982 = vpop.f32.mrf.mxu0
      %v3983 = vadd.f32 %v3894, %v3982
      %3984 = vmatmul.bf16.gmra.mxu0 %v2592
      %v3985 = vpop.f32.mrf.mxu0
      %v3986 = vadd.f32 %v3897, %v3985
      %v3987 = vpop.f32.mrf.mxu0
      %v3988 = vadd.f32 %v3899, %v3987
      %3989 = vmatmul.bf16.gmra.mxu0 %v2601
      %v3990 = vpop.f32.mrf.mxu0
      %v3991 = vadd.f32 %v3902, %v3990
      %v3992 = vpop.f32.mrf.mxu0
      %v3993 = vadd.f32 %v3904, %v3992
      %3994 = vmatmul.bf16.gmra.mxu0 %v2610
      %v3995 = vpop.f32.mrf.mxu0
      %v3996 = vadd.f32 %v3907, %v3995
      %v3997 = vpop.f32.mrf.mxu0
      %v3998 = vadd.f32 %v3909, %v3997
      %3999 = vmatmul.bf16.gmra.mxu0 %v2619
      %v4000 = vpop.f32.mrf.mxu0
      %v4001 = vadd.f32 %v3912, %v4000
      %v4002 = vpop.f32.mrf.mxu0
      %v4003 = vadd.f32 %v3914, %v4002
      %4004 = vmatmul.bf16.gmra.mxu0 %v2628
      %v4005 = vpop.f32.mrf.mxu0
      %v4006 = vadd.f32 %v3917, %v4005
      %v4007 = vpop.f32.mrf.mxu0
      %v4008 = vadd.f32 %v3919, %v4007
      %4009 = vmatmul.bf16.gmra.mxu0 %v2637
      %v4010 = vpop.f32.mrf.mxu0
      %v4011 = vadd.f32 %v3922, %v4010
      %v4012 = vpop.f32.mrf.mxu0
      %v4013 = vadd.f32 %v3924, %v4012
      %4014 = vdwg.mxu0
      %v4015 = vpack.c.bf16 %v3936, %v3936
      %v4016 = vpack.c.bf16 %v3938, %v3938
      %v4017 = vpack.c.bf16 %v3941, %v3941
      %v4018 = vpack.c.bf16 %v3943, %v3943
      %v4019 = vpack.c.bf16 %v3946, %v3946
      %v4020 = vpack.c.bf16 %v3948, %v3948
      %v4021 = vpack.c.bf16 %v3951, %v3951
      %v4022 = vpack.c.bf16 %v3953, %v3953
      %v4023 = vpack.c.bf16 %v3956, %v3956
      %v4024 = vpack.c.bf16 %v3958, %v3958
      %v4025 = vpack.c.bf16 %v3961, %v3961
      %v4026 = vpack.c.bf16 %v3963, %v3963
      %v4027 = vpack.c.bf16 %v3966, %v3966
      %v4028 = vpack.c.bf16 %v3968, %v3968
      %v4029 = vpack.c.bf16 %v3971, %v3971
      %v4030 = vpack.c.bf16 %v3973, %v3973
      %v4031 = vpack.c.bf16 %v3976, %v3976
      %v4032 = vpack.c.bf16 %v3978, %v3978
      %v4033 = vpack.c.bf16 %v3981, %v3981
      %v4034 = vpack.c.bf16 %v3983, %v3983
      %v4035 = vpack.c.bf16 %v3986, %v3986
      %v4036 = vpack.c.bf16 %v3988, %v3988
      %v4037 = vpack.c.bf16 %v3991, %v3991
      %v4038 = vpack.c.bf16 %v3993, %v3993
      %v4039 = vpack.c.bf16 %v3996, %v3996
      %v4040 = vpack.c.bf16 %v3998, %v3998
      %v4041 = vpack.c.bf16 %v4001, %v4001
      %v4042 = vpack.c.bf16 %v4003, %v4003
      %v4043 = vpack.c.bf16 %v4006, %v4006
      %v4044 = vpack.c.bf16 %v4008, %v4008
      %v4045 = vpack.c.bf16 %v4011, %v4011
      %v4046 = vpack.c.bf16 %v4013, %v4013
      %4047 = vst [vmem:[%s231] sm:$0xf] %v4015
      %4048 = vst [vmem:[%s231 + $0x4] sm:$0xf] %v4016
      %4049 = vst [vmem:[%s231 + $0x8] sm:$0xf] %v4017
      %4050 = vst [vmem:[%s231 + $0xc] sm:$0xf] %v4018
      %4051 = vst [vmem:[%s231 + $0x10] sm:$0xf] %v4019
      %4052 = vst [vmem:[%s231 + $0x14] sm:$0xf] %v4020
      %4053 = vst [vmem:[%s231 + $0x18] sm:$0xf] %v4021
      %4054 = vst [vmem:[%s231 + $0x1c] sm:$0xf] %v4022
      %4055 = vst [vmem:[%s231 + $0x20] sm:$0xf] %v4023
      %4056 = vst [vmem:[%s231 + $0x24] sm:$0xf] %v4024
      %4057 = vst [vmem:[%s231 + $0x28] sm:$0xf] %v4025
      %4058 = vst [vmem:[%s231 + $0x2c] sm:$0xf] %v4026
      %4059 = vst [vmem:[%s231 + $0x30] sm:$0xf] %v4027
      %4060 = vst [vmem:[%s231 + $0x34] sm:$0xf] %v4028
      %4061 = vst [vmem:[%s231 + $0x38] sm:$0xf] %v4029
      %4062 = vst [vmem:[%s231 + $0x3c] sm:$0xf] %v4030
      %4063 = vst [vmem:[%s231 + $0x40] sm:$0xf] %v4031
      %4064 = vst [vmem:[%s231 + $0x44] sm:$0xf] %v4032
      %4065 = vst [vmem:[%s231 + $0x48] sm:$0xf] %v4033
      %4066 = vst [vmem:[%s231 + $0x4c] sm:$0xf] %v4034
      %4067 = vst [vmem:[%s231 + $0x50] sm:$0xf] %v4035
      %4068 = vst [vmem:[%s231 + $0x54] sm:$0xf] %v4036
      %4069 = vst [vmem:[%s231 + $0x58] sm:$0xf] %v4037
      %4070 = vst [vmem:[%s231 + $0x5c] sm:$0xf] %v4038
      %4071 = vst [vmem:[%s231 + $0x60] sm:$0xf] %v4039
      %4072 = vst [vmem:[%s231 + $0x64] sm:$0xf] %v4040
      %4073 = vst [vmem:[%s231 + $0x68] sm:$0xf] %v4041
      %4074 = vst [vmem:[%s231 + $0x6c] sm:$0xf] %v4042
      %4075 = vst [vmem:[%s231 + $0x70] sm:$0xf] %v4043
      %4076 = vst [vmem:[%s231 + $0x74] sm:$0xf] %v4044
      %4077 = vst [vmem:[%s231 + $0x78] sm:$0xf] %v4045
      %4078 = vst [vmem:[%s231 + $0x7c] sm:$0xf] %v4046
      %v4079 = vadd.f32 %v3936, %v3938
      %v4080 = vadd.f32 %v4079, %v3941
      %v4081 = vadd.f32 %v4080, %v3943
      %v4082 = vadd.f32 %v4081, %v3946
      %v4083 = vadd.f32 %v4082, %v3948
      %v4084 = vadd.f32 %v4083, %v3951
      %v4085 = vadd.f32 %v4084, %v3953
      %v4086 = vadd.f32 %v4085, %v3956
      %v4087 = vadd.f32 %v4086, %v3958
      %v4088 = vadd.f32 %v4087, %v3961
      %v4089 = vadd.f32 %v4088, %v3963
      %v4090 = vadd.f32 %v4089, %v3966
      %v4091 = vadd.f32 %v4090, %v3968
      %v4092 = vadd.f32 %v4091, %v3971
      %v4093 = vadd.f32 %v4092, %v3973
      %v4094 = vadd.f32 %v4093, %v3976
      %v4095 = vadd.f32 %v4094, %v3978
      %v4096 = vadd.f32 %v4095, %v3981
      %v4097 = vadd.f32 %v4096, %v3983
      %v4098 = vadd.f32 %v4097, %v3986
      %v4099 = vadd.f32 %v4098, %v3988
      %v4100 = vadd.f32 %v4099, %v3991
      %v4101 = vadd.f32 %v4100, %v3993
      %v4102 = vadd.f32 %v4101, %v3996
      %v4103 = vadd.f32 %v4102, %v3998
      %v4104 = vadd.f32 %v4103, %v4001
      %v4105 = vadd.f32 %v4104, %v4003
      %v4106 = vadd.f32 %v4105, %v4006
      %v4107 = vadd.f32 %v4106, %v4008
      %v4108 = vadd.f32 %v4107, %v4011
      %v4109 = vadd.f32 %v4108, %v4013
      %v4110 = vrot.slane %v4109, 4
      %v4111 = vadd.f32 %v4109, %v4110
      %v4112 = vrot.slane %v4111, 2
      %v4113 = vadd.f32 %v4111, %v4112
      %v4114 = vrot.slane %v4113, 1
      %v4115 = vadd.f32 %v4113, %v4114
      %v4116 = vmul.f32 %v3936, %v3936
      %v4117 = vmul.f32 %v3938, %v3938
      %v4118 = vmul.f32 %v3941, %v3941
      %v4119 = vmul.f32 %v3943, %v3943
      %v4120 = vmul.f32 %v3946, %v3946
      %v4121 = vmul.f32 %v3948, %v3948
      %v4122 = vmul.f32 %v3951, %v3951
      %v4123 = vmul.f32 %v3953, %v3953
      %v4124 = vmul.f32 %v3956, %v3956
      %v4125 = vmul.f32 %v3958, %v3958
      %v4126 = vmul.f32 %v3961, %v3961
      %v4127 = vmul.f32 %v3963, %v3963
      %v4128 = vmul.f32 %v3966, %v3966
      %v4129 = vmul.f32 %v3968, %v3968
      %v4130 = vmul.f32 %v3971, %v3971
      %v4131 = vmul.f32 %v3973, %v3973
      %v4132 = vmul.f32 %v3976, %v3976
      %v4133 = vmul.f32 %v3978, %v3978
      %v4134 = vmul.f32 %v3981, %v3981
      %v4135 = vmul.f32 %v3983, %v3983
      %v4136 = vmul.f32 %v3986, %v3986
      %v4137 = vmul.f32 %v3988, %v3988
      %v4138 = vmul.f32 %v3991, %v3991
      %v4139 = vmul.f32 %v3993, %v3993
      %v4140 = vmul.f32 %v3996, %v3996
      %v4141 = vmul.f32 %v3998, %v3998
      %v4142 = vmul.f32 %v4001, %v4001
      %v4143 = vmul.f32 %v4003, %v4003
      %v4144 = vmul.f32 %v4006, %v4006
      %v4145 = vmul.f32 %v4008, %v4008
      %v4146 = vmul.f32 %v4011, %v4011
      %v4147 = vmul.f32 %v4013, %v4013
      %v4148 = vadd.f32 %v4116, %v4117
      %v4149 = vadd.f32 %v4148, %v4118
      %v4150 = vadd.f32 %v4149, %v4119
      %v4151 = vadd.f32 %v4150, %v4120
      %v4152 = vadd.f32 %v4151, %v4121
      %v4153 = vadd.f32 %v4152, %v4122
      %v4154 = vadd.f32 %v4153, %v4123
      %v4155 = vadd.f32 %v4154, %v4124
      %v4156 = vadd.f32 %v4155, %v4125
      %v4157 = vadd.f32 %v4156, %v4126
      %v4158 = vadd.f32 %v4157, %v4127
      %v4159 = vadd.f32 %v4158, %v4128
      %v4160 = vadd.f32 %v4159, %v4129
      %v4161 = vadd.f32 %v4160, %v4130
      %v4162 = vadd.f32 %v4161, %v4131
      %v4163 = vadd.f32 %v4162, %v4132
      %v4164 = vadd.f32 %v4163, %v4133
      %v4165 = vadd.f32 %v4164, %v4134
      %v4166 = vadd.f32 %v4165, %v4135
      %v4167 = vadd.f32 %v4166, %v4136
      %v4168 = vadd.f32 %v4167, %v4137
      %v4169 = vadd.f32 %v4168, %v4138
      %v4170 = vadd.f32 %v4169, %v4139
      %v4171 = vadd.f32 %v4170, %v4140
      %v4172 = vadd.f32 %v4171, %v4141
      %v4173 = vadd.f32 %v4172, %v4142
      %v4174 = vadd.f32 %v4173, %v4143
      %v4175 = vadd.f32 %v4174, %v4144
      %v4176 = vadd.f32 %v4175, %v4145
      %v4177 = vadd.f32 %v4176, %v4146
      %v4178 = vadd.f32 %v4177, %v4147
      %v4179 = vrot.slane %v4178, 4
      %v4180 = vadd.f32 %v4178, %v4179
      %v4181 = vrot.slane %v4180, 2
      %v4182 = vadd.f32 %v4180, %v4181
      %v4183 = vrot.slane %v4182, 1
      %v4184 = vadd.f32 %v4182, %v4183
      %vm4185 = vcmask 1040384
      %v4186 = vsel %vm4185, %v4115, %v4184
      %4187 = vst [vmem:[%s235] sm:$0x3] %v4186
      %p4188 = scmp.lt.s32.totalorder %s17, 1
      %s4189 = scalar_select %p4188, %s17, 1
      %s4190 = smul.addr %s4189, 32
      %s4191 = smul.addr %s4190, 4
      %s4192 = scalar_lea.vmem %s4, %s4191
      %p4193 = scmp.lt.s32.totalorder %s17, 1
      %s4194 = scalar_select %p4193, %s17, 1
      %s4195 = smul.addr %s4194, 2
      %s4196 = scalar_lea.vmem %s5, %s4195
      // Predicated region
      $region37: #{fg_function_forward.4} parent=35 // pred_check
        %p4197 = pneg %p124
      $region38: #{fg_function_forward.4} parent=35 // pred_check_branch
        %4199 = sbr.rel (%p4197) target = $region40
      $region39: #{fg_function_forward.4} parent=35 // pred_region
        _
      $region40: #{fg_function_forward.4} parent=35 // pred_fallthru
        _
      // Predicated region
      $region41: #{fg_function_forward.4} parent=35 // pred_check
        %p4200 = pneg %p150
      $region42: #{fg_function_forward.4} parent=35 // pred_check_branch
        %4202 = sbr.rel (%p4200) target = $region44
      $region43: #{fg_function_forward.4} parent=35 // pred_region
        _
      $region44: #{fg_function_forward.4} parent=35 // pred_fallthru
        _
    $region36: #{fg_function_forward.4} parent=5 // pred_fallthru
      _
    %p4203 = scmp.le.s32.totalorder 2, %s12
    // Predicated region
    $region45: #{fg_function_forward.4} parent=5 // pred_check
      %p4204 = pneg %p4203
    $region46: #{fg_function_forward.4} parent=5 // pred_check_branch
      %4206 = sbr.rel (%p4204) target = $region48
    $region47: #{fg_function_forward.4} parent=5 // pred_region
      %s4207 = ssub.s32 %s12, 2
      // Predicated region
      $region49: #{fg_function_forward.4} parent=47 // pred_check
        %p4208 = pneg %p130
      $region50: #{fg_function_forward.4} parent=47 // pred_check_branch
        %4210 = sbr.rel (%p4208) target = $region52
      $region51: #{fg_function_forward.4} parent=47 // pred_region
        %p4211 = scmp.lt.s32.totalorder %s18, 1
        %s4212 = scalar_select %p4211, %s18, 1
        %s4213 = smul.addr %s4212, 32
        %s4214 = smul.addr %s4213, 4
        %s4215 = scalar_lea.vmem %s4, %s4214
      $region52: #{fg_function_forward.4} parent=47 // pred_fallthru
        _
      // Predicated region
      $region53: #{fg_function_forward.4} parent=47 // pred_check
        %p4216 = pneg %p156
      $region54: #{fg_function_forward.4} parent=47 // pred_check_branch
        %4218 = sbr.rel (%p4216) target = $region56
      $region55: #{fg_function_forward.4} parent=47 // pred_region
        %p4219 = scmp.lt.s32.totalorder %s18, 1
        %s4220 = scalar_select %p4219, %s18, 1
        %s4221 = smul.addr %s4220, 2
        %s4222 = scalar_lea.vmem %s5, %s4221
      $region56: #{fg_function_forward.4} parent=47 // pred_fallthru
        _
    $region48: #{fg_function_forward.4} parent=5 // pred_fallthru
      _
  $region6: #{fg_function_forward.4} parent=0 // loop_footer
    %s16 = sadd.s32 1, %s12
  $region7: #{fg_function_forward.4} parent=0 // loop_footer_branch
    %11 = sbr.rel target = $region3
  $region8: #{fg_function_forward.4} parent=0 // loop_exit
    _

</llo_original>
